<compile_context>
chip_gen: v5e
topology: v5e:2x2
jax: 0.10.0
libtpu: 0.0.40
codegen_flags: <defaults>
</compile_context>

<pallas_src>
import jax
import jax.numpy as jnp
from jax.experimental import pallas as pl
from jax.experimental.pallas import tpu as pltpu

IN_FEATURES = 4096
HIDDEN = 4096
OUT_FEATURES = 1000
OUT_PAD = 1024          # pad 1000 -> 1024 for clean lane (128) tiling
BATCH_PAD = 8           # pad batch 1 -> 8 (sublane multiple)

DROPOUT_P = 0.5

NC = 2                  # core-split of the hidden dim (parallel grid axis)
TK = 512                # hidden-block size (reduction grid axis)

VMEM_LIMIT_BYTES = 40 * 1024 * 1024


# ---------------------------------------------------------------------------
# Fused kernel: one hidden block of
#   acc += dropout(relu(x @ W1[:, blk] + b1[blk])) @ W2[blk, :]
# x stays resident; W1 / W2 / bias / mask blocks are streamed by BlockSpec.
# ---------------------------------------------------------------------------
def fused_mlp_kernel(x_ref, w1_ref, b1_ref, m_ref, w2_ref, o_ref, acc_ref):
    k = pl.program_id(1)

    @pl.when(k == 0)
    def _():
        acc_ref[...] = jnp.zeros_like(acc_ref)

    h = jnp.dot(x_ref[...], w1_ref[...], preferred_element_type=jnp.float32)
    h = jnp.maximum(h + b1_ref[...], 0.0) * m_ref[...]   # bias + ReLU + dropout
    acc_ref[...] += jnp.dot(h, w2_ref[...], preferred_element_type=jnp.float32)

    @pl.when(k == pl.num_programs(1) - 1)
    def _():
        o_ref[...] = acc_ref[...]


# ---------------------------------------------------------------------------
# Wrapper
# ---------------------------------------------------------------------------
def fused_mlp(x_pad, w1, b1_2d, mask, w2_pad, *, tk=TK):
    B, K = x_pad.shape          # (8, 4096)
    _, H = w1.shape             # (4096, 4096)
    _, N = w2_pad.shape         # (4096, 1024)
    kb = (H // NC) // tk        # hidden blocks per core

    return pl.pallas_call(
        fused_mlp_kernel,
        out_shape=jax.ShapeDtypeStruct((NC * B, N), jnp.float32),
        grid=(NC, kb),
        in_specs=[
            pl.BlockSpec((B, K), lambda c, k: (0, 0)),             # x resident
            pl.BlockSpec((K, tk), lambda c, k: (0, c * kb + k)),   # W1 col block
            pl.BlockSpec((1, tk), lambda c, k: (0, c * kb + k)),   # b1 block
            pl.BlockSpec((B, tk), lambda c, k: (0, c * kb + k)),   # dropout mask
            pl.BlockSpec((tk, N), lambda c, k: (c * kb + k, 0)),   # W2 row block
        ],
        out_specs=pl.BlockSpec((B, N), lambda c, k: (c, 0)),       # per-core slab
        scratch_shapes=[pltpu.VMEM((B, N), jnp.float32)],
        compiler_params=pltpu.CompilerParams(
            dimension_semantics=("parallel", "arbitrary"),
            vmem_limit_bytes=VMEM_LIMIT_BYTES,
        ),
    )(x_pad, w1, b1_2d, mask, w2_pad)


@jax.jit
def model_forward(x, w1, b1_2d, w2_pad, b2_2d, dropout_key):
    """y = Linear2(Dropout(ReLU(Linear1(x)))); x: (B, 4096) with B <= 8."""
    B = x.shape[0]
    x_pad = jnp.zeros((BATCH_PAD, IN_FEATURES), jnp.float32).at[:B].set(x)

    # Training-mode dropout (module default): keep w.p. 0.5, scale by 2.
    # TODO(synk): bit-exact torch RNG reproduction is not possible in JAX.
    keep = jax.random.bernoulli(dropout_key, 1.0 - DROPOUT_P, (BATCH_PAD, HIDDEN))
    mask = keep.astype(jnp.float32) * (1.0 / (1.0 - DROPOUT_P))

    partials = fused_mlp(x_pad, w1, b1_2d, mask, w2_pad)      # (2*8, 1024)
    y = partials[:BATCH_PAD] + partials[BATCH_PAD:] + b2_2d   # cross-core sum + b2
    return y[:B, :OUT_FEATURES]


def init_params(key):
    """nn.Linear-style U(-1/sqrt(fan_in), +1/sqrt(fan_in)) init.

    Weights stored as (in_features, out_features) (transpose of torch's
    Linear.weight) so the kernel computes y = x @ W + b directly.
    W2/b2 padded 1000 -> 1024 ONCE here.
    """
    k1, k2, k3, k4 = jax.random.split(key, 4)
    bound1 = 1.0 / (IN_FEATURES ** 0.5)
    bound2 = 1.0 / (HIDDEN ** 0.5)

    w1 = jax.random.uniform(k1, (IN_FEATURES, HIDDEN), jnp.float32, -bound1, bound1)
    b1 = jax.random.uniform(k2, (HIDDEN,), jnp.float32, -bound1, bound1)
    w2 = jax.random.uniform(k3, (HIDDEN, OUT_FEATURES), jnp.float32, -bound2, bound2)
    b2 = jax.random.uniform(k4, (OUT_FEATURES,), jnp.float32, -bound2, bound2)

    b1_2d = b1.reshape(1, HIDDEN)
    w2_pad = jnp.zeros((HIDDEN, OUT_PAD), jnp.float32).at[:, :OUT_FEATURES].set(w2)
    b2_2d = jnp.zeros((1, OUT_PAD), jnp.float32).at[0, :OUT_FEATURES].set(b2)
    return w1, b1_2d, w2_pad, b2_2d


if __name__ == "__main__":
    key = jax.random.PRNGKey(0)
    kx, kp, kd = jax.random.split(key, 3)

    x = jax.random.normal(kx, (1, IN_FEATURES), jnp.float32)   # matches x42
    w1, b1_2d, w2_pad, b2_2d = init_params(kp)

    y = model_forward(x, w1, b1_2d, w2_pad, b2_2d, kd)
    y = jax.block_until_ready(y)

    assert y.shape == (1, OUT_FEATURES), y.shape
    assert y.dtype == jnp.float32
    assert bool(jnp.all(jnp.isfinite(y)))
    print("KERNEL_OK")
</pallas_src>

<mosaic_0001>
module attributes {stable_mosaic.version = 11 : i64} {
  func.func @fused_mlp_kernel(%arg0: i32, %arg1: i32, %arg2: memref<8x4096xf32, #tpu.memory_space<vmem>>, %arg3: memref<4096x512xf32, #tpu.memory_space<vmem>>, %arg4: memref<1x512xf32, #tpu.memory_space<vmem>>, %arg5: memref<8x512xf32, #tpu.memory_space<vmem>>, %arg6: memref<512x1024xf32, #tpu.memory_space<vmem>>, %arg7: memref<8x1024xf32, #tpu.memory_space<vmem>>, %arg8: memref<8x1024xf32, #tpu.memory_space<vmem>>) attributes {dimension_semantics = [#tpu.dimension_semantics<parallel>, #tpu.dimension_semantics<arbitrary>], iteration_bounds = array<i64: 2, 4>, scalar_prefetch = 0 : i64, scratch_operands = 1 : i64, tpu.core_type = #tpu.core_type<tc>, window_params = [{pipeline_mode = #tpu.pipeline_mode<synchronous>, transform_indices = @transform_0, window_bounds = array<i64: 8, 4096>}, {transform_indices = @transform_1, window_bounds = array<i64: 4096, 512>}, {transform_indices = @transform_2, window_bounds = array<i64: 1, 512>}, {transform_indices = @transform_3, window_bounds = array<i64: 8, 512>}, {transform_indices = @transform_4, window_bounds = array<i64: 512, 1024>}, {transform_indices = @transform_5, window_bounds = array<i64: 8, 1024>}]} {
    %c0_i32 = arith.constant 0 : i32
    %0 = arith.cmpi eq, %arg1, %c0_i32 : i32
    %1 = arith.extui %0 : i1 to i32
    %c0_i32_0 = arith.constant 0 : i32
    %2 = arith.cmpi ne, %1, %c0_i32_0 : i32
    scf.if %2 {
      %cst_17 = arith.constant 0.000000e+00 : f32
      %21 = vector.broadcast %cst_17 : f32 to vector<8x1024xf32>
      %c0_18 = arith.constant 0 : index
      %c0_19 = arith.constant 0 : index
      %22 = vector.load %arg8[%c0_18, %c0_19] : memref<8x1024xf32, #tpu.memory_space<vmem>>, vector<8x1024xf32>
      tpu.vector_store %arg8[%c0_18, %c0_19], %21 {strides = array<i32>} : memref<8x1024xf32, #tpu.memory_space<vmem>>, vector<8x1024xf32>,
    } else {
    }
    %c0 = arith.constant 0 : index
    %c0_1 = arith.constant 0 : index
    %3 = vector.load %arg2[%c0, %c0_1] : memref<8x4096xf32, #tpu.memory_space<vmem>>, vector<8x4096xf32>
    %c0_2 = arith.constant 0 : index
    %c0_3 = arith.constant 0 : index
    %4 = vector.load %arg3[%c0_2, %c0_3] : memref<4096x512xf32, #tpu.memory_space<vmem>>, vector<4096x512xf32>
    %cst = arith.constant dense<0.000000e+00> : vector<8x512xf32>
    %5 = tpu.matmul %3, %4, %cst {dimension_numbers = #tpu.dot_dimension_numbers<[1], [0], [0], [1], [0, 0, 1, 1], [], []>} : vector<8x4096xf32>, vector<4096x512xf32>, vector<8x512xf32> -> vector<8x512xf32>
    %c0_4 = arith.constant 0 : index
    %c0_5 = arith.constant 0 : index
    %6 = vector.load %arg4[%c0_4, %c0_5] : memref<1x512xf32, #tpu.memory_space<vmem>>, vector<1x512xf32>
    %7 = vector.broadcast %6 : vector<1x512xf32> to vector<8x512xf32>
    %8 = arith.addf %5, %7 : vector<8x512xf32>
    %cst_6 = arith.constant 0.000000e+00 : f32
    %9 = vector.broadcast %cst_6 : f32 to vector<8x512xf32>
    %10 = arith.maximumf %8, %9 : vector<8x512xf32>
    %c0_7 = arith.constant 0 : index
    %c0_8 = arith.constant 0 : index
    %11 = vector.load %arg5[%c0_7, %c0_8] : memref<8x512xf32, #tpu.memory_space<vmem>>, vector<8x512xf32>
    %12 = arith.mulf %10, %11 : vector<8x512xf32>
    %c0_9 = arith.constant 0 : index
    %c0_10 = arith.constant 0 : index
    %13 = vector.load %arg8[%c0_9, %c0_10] : memref<8x1024xf32, #tpu.memory_space<vmem>>, vector<8x1024xf32>
    %c0_11 = arith.constant 0 : index
    %c0_12 = arith.constant 0 : index
    %14 = vector.load %arg6[%c0_11, %c0_12] : memref<512x1024xf32, #tpu.memory_space<vmem>>, vector<512x1024xf32>
    %cst_13 = arith.constant dense<0.000000e+00> : vector<8x1024xf32>
    %15 = tpu.matmul %12, %14, %cst_13 {dimension_numbers = #tpu.dot_dimension_numbers<[1], [0], [0], [1], [0, 0, 1, 1], [], []>} : vector<8x512xf32>, vector<512x1024xf32>, vector<8x1024xf32> -> vector<8x1024xf32>
    %16 = arith.addf %13, %15 : vector<8x1024xf32>
    %c0_14 = arith.constant 0 : index
    %c0_15 = arith.constant 0 : index
    %17 = vector.load %arg8[%c0_14, %c0_15] : memref<8x1024xf32, #tpu.memory_space<vmem>>, vector<8x1024xf32>
    tpu.vector_store %arg8[%c0_14, %c0_15], %16 {strides = array<i32>} : memref<8x1024xf32, #tpu.memory_space<vmem>>, vector<8x1024xf32>,
    %c3_i32 = arith.constant 3 : i32
    %18 = arith.cmpi eq, %arg1, %c3_i32 : i32
    %19 = arith.extui %18 : i1 to i32
    %c0_i32_16 = arith.constant 0 : i32
    %20 = arith.cmpi ne, %19, %c0_i32_16 : i32
    scf.if %20 {
      %c0_17 = arith.constant 0 : index
      %c0_18 = arith.constant 0 : index
      %21 = vector.load %arg8[%c0_17, %c0_18] : memref<8x1024xf32, #tpu.memory_space<vmem>>, vector<8x1024xf32>
      %c0_19 = arith.constant 0 : index
      %c0_20 = arith.constant 0 : index
      %22 = vector.load %arg7[%c0_19, %c0_20] : memref<8x1024xf32, #tpu.memory_space<vmem>>, vector<8x1024xf32>
      tpu.vector_store %arg7[%c0_19, %c0_20], %21 {strides = array<i32>} : memref<8x1024xf32, #tpu.memory_space<vmem>>, vector<8x1024xf32>,
    } else {
    }
    return
  }
  func.func @transform_0(%arg0: i32, %arg1: i32) -> (i32, i32) {
    %c0_i32 = arith.constant 0 : i32
    %c0_i32_0 = arith.constant 0 : i32
    %c0_i32_1 = arith.constant 0 : i32
    return %c0_i32, %c0_i32_0 : i32, i32
  }
  func.func @transform_1(%arg0: i32, %arg1: i32) -> (i32, i32) {
    %c4_i32 = arith.constant 4 : i32
    %0 = arith.muli %arg0, %c4_i32 : i32
    %1 = arith.addi %0, %arg1 : i32
    %c0_i32 = arith.constant 0 : i32
    %c0_i32_0 = arith.constant 0 : i32
    return %c0_i32, %1 : i32, i32
  }
  func.func @transform_2(%arg0: i32, %arg1: i32) -> (i32, i32) {
    %c4_i32 = arith.constant 4 : i32
    %0 = arith.muli %arg0, %c4_i32 : i32
    %1 = arith.addi %0, %arg1 : i32
    %c0_i32 = arith.constant 0 : i32
    %c0_i32_0 = arith.constant 0 : i32
    return %c0_i32, %1 : i32, i32
  }
  func.func @transform_3(%arg0: i32, %arg1: i32) -> (i32, i32) {
    %c4_i32 = arith.constant 4 : i32
    %0 = arith.muli %arg0, %c4_i32 : i32
    %1 = arith.addi %0, %arg1 : i32
    %c0_i32 = arith.constant 0 : i32
    %c0_i32_0 = arith.constant 0 : i32
    return %c0_i32, %1 : i32, i32
  }
  func.func @transform_4(%arg0: i32, %arg1: i32) -> (i32, i32) {
    %c4_i32 = arith.constant 4 : i32
    %0 = arith.muli %arg0, %c4_i32 : i32
    %1 = arith.addi %0, %arg1 : i32
    %c0_i32 = arith.constant 0 : i32
    %c0_i32_0 = arith.constant 0 : i32
    return %1, %c0_i32 : i32, i32
  }
  func.func @transform_5(%arg0: i32, %arg1: i32) -> (i32, i32) {
    %c0_i32 = arith.constant 0 : i32
    %c0_i32_0 = arith.constant 0 : i32
    return %arg0, %c0_i32 : i32, i32
  }
}

</mosaic_0001>

<llo_original>
// kernel: model_forward.1
$region0: #{model_forward.1}
  #allocation0 [shape = 'u32[]', space=smem, size = 0x4, offset = 0x4, fixed_abs, tag = 'smem constant byte address 0x4 - core index']
  #allocation1 [shape = 'u32[72,128]{1,0:T(1,128)}', space=vmem, size = 0x9000, scoped, tag = 'internal scratch']
  #allocation2 [shape = 'f32[8,1024]{1,0:T(8,128)}', space=vmem, size = 0x8000, scoped, tag = 'scratch operand']
  %s0 = inlined_call_operand.vmem [shape: f32[8,4096], index: 0, kind: input, shape index: {}]
  %s1 = inlined_call_operand.hbm [shape: f32[4096,4096], index: 1, kind: input, shape index: {}]
  %s2 = inlined_call_operand.hbm [shape: f32[1,4096], index: 2, kind: input, shape index: {}]
  %s3 = inlined_call_operand.vmem [shape: f32[8,4096], index: 3, kind: input, shape index: {}]
  %s4 = inlined_call_operand.hbm [shape: f32[4096,1024], index: 4, kind: input, shape index: {}]
  %s5 = inlined_call_operand.vmem [shape: f32[16,1024], index: 5, kind: output, shape index: {}]
  %s6 = sld [smem:[#allocation0]]
  $region73: #{model_forward.1} parent=0
    _
  %s8 = ssub.s32 1, %s6
  %s9 = scalar_select 0, %s8, %s6
  $region1: #{model_forward.1} parent=0
    #allocation3 [shape = 'u8[16777216]{0}', space=vmem, size = 0x1000000, scoped, tag = 'input window, operand 1']
    #allocation4 [shape = 's32[2]{0}', space=sflag, size = 0x8, scoped, tag = 'scoped memory for model_forward.1']
    #allocation5 [shape = 'u8[4096]{0}', space=vmem, size = 0x1000, scoped, tag = 'input window, operand 2']
    #allocation6 [shape = 's32[2]{0}', space=sflag, size = 0x8, scoped, tag = 'scoped memory for model_forward.1']
    #allocation7 [shape = 'u8[4194304]{0}', space=vmem, size = 0x400000, scoped, tag = 'input window, operand 4']
    %10 = vsyncpa [#allocation4], 0
    %s11 = scalar_lea.sflag [#allocation4], 1
    %12 = vsyncpa %s11, 0
    %13 = vsyncpa [#allocation6], 0
    %s14 = scalar_lea.sflag [#allocation6], 1
    %15 = vsyncpa %s14, 0
    loop: start=0, step=1, limit=10
    $region2: #{model_forward.1} parent=1 // loop_pre_header
      _
    $region3: #{model_forward.1} parent=1 // loop_header
      %s17 = sphi 0, %s21
      %p18 = scmp.ge.s32.totalorder %s17, 10
      %s24 = sphi 0, %s36
      %s25 = sphi 0, %s32
      %s26 = sphi 0, %s24
      %s27 = sphi 0, %s25
      %s28 = sphi 0, %s26
      %s29 = sphi 0, %s27
      %s37 = sphi 0, %s37
      %s39 = sphi 0, %s37
      %s40 = sphi 0, %s39
      %s54 = sphi 0, %s40
      %s64 = sphi 0, %s66
      %s67 = sphi 0, %s64
      %s68 = sphi 0, %s67
      %s84 = sphi 0, %s68
      %s94 = sphi 0, %s96
      %s97 = sphi 0, %s94
      %s98 = sphi 0, %s97
      %s114 = sphi 0, %s98
      %s124 = sphi 0, %s126
      %s127 = sphi 0, %s124
      %s128 = sphi 0, %s127
      %s144 = sphi 0, %s128
      %s154 = sphi 0, %s156
      %s157 = sphi 0, %s154
      %s158 = sphi 0, %s157
      %s174 = sphi 0, %s158
      %s180 = sphi 0, %s182
      %s183 = sphi 0, %s180
      %s184 = sphi 0, %s183
      %s200 = sphi 0, %s184
    $region4: #{model_forward.1} parent=1 // loop_header_branch
      %20 = sbr.rel (%p18) target = $region8
    $region5: #{model_forward.1} parent=1 // loop_body
      %s22 = ssub.s32 %s17, 1
      %s23 = ssub.s32 %s17, 2
      %s30 = sadd.s32 1, %s25
      %p31 = scmp.ge.s32.totalorder %s30, 4
      %s32 = scalar_select %p31, 0, %s30
      %s33 = sadd.s32 1, %s24
      %s34 = scalar_select %p31, %s33, %s24
      %p35 = scmp.ge.s32.totalorder %s34, 2
      %s36 = scalar_select %p35, 0, %s34
      %s38 = sadd.s32 %s37, 1
      %p41 = scmp.eq.s32.totalorder %s17, 7
      %p42 = scmp.ne.s32.totalorder %s37, %s39
      %p43 = scmp.eq.s32.totalorder %s17, 0
      %p44 = por %p42, %p43
      %p45 = scmp.ne.s32.totalorder %s37, %s39
      %p46 = scmp.eq.s32.totalorder %s22, 7
      %p47 = por %p45, %p46
      %p48 = scmp.ne.s32.totalorder %s39, %s40
      %p49 = scmp.eq.s32.totalorder %s22, 0
      %p50 = por %p48, %p49
      %p51 = scmp.ne.s32.totalorder %s39, %s40
      %p52 = scmp.eq.s32.totalorder %s23, 7
      %p53 = por %p51, %p52
      %p55 = scmp.ne.s32.totalorder %s40, %s54
      %p56 = scmp.eq.s32.totalorder %s23, 0
      %p57 = por %p55, %p56
      %s58 = smul.u32 %s24, 4
      %s59 = sadd.s32 %s58, %s25
      %s60 = smul.u32 %s36, 4
      %s61 = sadd.s32 %s60, %s32
      %s62 = ssub.s32 %s59, %s61
      %p63 = scmp.eq.s32.totalorder %s62, 0
      %s65 = sadd.s32 %s64, 1
      %s66 = scalar_select %p63, %s64, %s65
      %p69 = pneg %p63
      %p70 = scmp.eq.s32.totalorder %s17, 7
      %p71 = por %p69, %p70
      %p72 = scmp.ne.s32.totalorder %s64, %s67
      %p73 = scmp.eq.s32.totalorder %s17, 0
      %p74 = por %p72, %p73
      %p75 = scmp.ne.s32.totalorder %s64, %s67
      %p76 = scmp.eq.s32.totalorder %s22, 7
      %p77 = por %p75, %p76
      %p78 = scmp.ne.s32.totalorder %s67, %s68
      %p79 = scmp.eq.s32.totalorder %s22, 0
      %p80 = por %p78, %p79
      %p81 = scmp.ne.s32.totalorder %s67, %s68
      %p82 = scmp.eq.s32.totalorder %s23, 7
      %p83 = por %p81, %p82
      %p85 = scmp.ne.s32.totalorder %s68, %s84
      %p86 = scmp.eq.s32.totalorder %s23, 0
      %p87 = por %p85, %p86
      %s88 = smul.u32 %s24, 4
      %s89 = sadd.s32 %s88, %s25
      %s90 = smul.u32 %s36, 4
      %s91 = sadd.s32 %s90, %s32
      %s92 = ssub.s32 %s89, %s91
      %p93 = scmp.eq.s32.totalorder %s92, 0
      %s95 = sadd.s32 %s94, 1
      %s96 = scalar_select %p93, %s94, %s95
      %p99 = pneg %p93
      %p100 = scmp.eq.s32.totalorder %s17, 7
      %p101 = por %p99, %p100
      %p102 = scmp.ne.s32.totalorder %s94, %s97
      %p103 = scmp.eq.s32.totalorder %s17, 0
      %p104 = por %p102, %p103
      %p105 = scmp.ne.s32.totalorder %s94, %s97
      %p106 = scmp.eq.s32.totalorder %s22, 7
      %p107 = por %p105, %p106
      %p108 = scmp.ne.s32.totalorder %s97, %s98
      %p109 = scmp.eq.s32.totalorder %s22, 0
      %p110 = por %p108, %p109
      %p111 = scmp.ne.s32.totalorder %s97, %s98
      %p112 = scmp.eq.s32.totalorder %s23, 7
      %p113 = por %p111, %p112
      %p115 = scmp.ne.s32.totalorder %s98, %s114
      %p116 = scmp.eq.s32.totalorder %s23, 0
      %p117 = por %p115, %p116
      %s118 = smul.u32 %s24, 4
      %s119 = sadd.s32 %s118, %s25
      %s120 = smul.u32 %s36, 4
      %s121 = sadd.s32 %s120, %s32
      %s122 = ssub.s32 %s119, %s121
      %p123 = scmp.eq.s32.totalorder %s122, 0
      %s125 = sadd.s32 %s124, 1
      %s126 = scalar_select %p123, %s124, %s125
      %p129 = pneg %p123
      %p130 = scmp.eq.s32.totalorder %s17, 7
      %p131 = por %p129, %p130
      %p132 = scmp.ne.s32.totalorder %s124, %s127
      %p133 = scmp.eq.s32.totalorder %s17, 0
      %p134 = por %p132, %p133
      %p135 = scmp.ne.s32.totalorder %s124, %s127
      %p136 = scmp.eq.s32.totalorder %s22, 7
      %p137 = por %p135, %p136
      %p138 = scmp.ne.s32.totalorder %s127, %s128
      %p139 = scmp.eq.s32.totalorder %s22, 0
      %p140 = por %p138, %p139
      %p141 = scmp.ne.s32.totalorder %s127, %s128
      %p142 = scmp.eq.s32.totalorder %s23, 7
      %p143 = por %p141, %p142
      %p145 = scmp.ne.s32.totalorder %s128, %s144
      %p146 = scmp.eq.s32.totalorder %s23, 0
      %p147 = por %p145, %p146
      %s148 = smul.u32 %s24, 4
      %s149 = sadd.s32 %s148, %s25
      %s150 = smul.u32 %s36, 4
      %s151 = sadd.s32 %s150, %s32
      %s152 = ssub.s32 %s149, %s151
      %p153 = scmp.eq.s32.totalorder %s152, 0
      %s155 = sadd.s32 %s154, 1
      %s156 = scalar_select %p153, %s154, %s155
      %p159 = pneg %p153
      %p160 = scmp.eq.s32.totalorder %s17, 7
      %p161 = por %p159, %p160
      %p162 = scmp.ne.s32.totalorder %s154, %s157
      %p163 = scmp.eq.s32.totalorder %s17, 0
      %p164 = por %p162, %p163
      %p165 = scmp.ne.s32.totalorder %s154, %s157
      %p166 = scmp.eq.s32.totalorder %s22, 7
      %p167 = por %p165, %p166
      %p168 = scmp.ne.s32.totalorder %s157, %s158
      %p169 = scmp.eq.s32.totalorder %s22, 0
      %p170 = por %p168, %p169
      %p171 = scmp.ne.s32.totalorder %s157, %s158
      %p172 = scmp.eq.s32.totalorder %s23, 7
      %p173 = por %p171, %p172
      %p175 = scmp.ne.s32.totalorder %s158, %s174
      %p176 = scmp.eq.s32.totalorder %s23, 0
      %p177 = por %p175, %p176
      %s178 = ssub.s32 %s24, %s36
      %p179 = scmp.eq.s32.totalorder %s178, 0
      %s181 = sadd.s32 %s180, 1
      %s182 = scalar_select %p179, %s180, %s181
      %p185 = pneg %p179
      %p186 = scmp.eq.s32.totalorder %s17, 7
      %p187 = por %p185, %p186
      %p188 = scmp.ne.s32.totalorder %s180, %s183
      %p189 = scmp.eq.s32.totalorder %s17, 0
      %p190 = por %p188, %p189
      %p191 = scmp.ne.s32.totalorder %s180, %s183
      %p192 = scmp.eq.s32.totalorder %s22, 7
      %p193 = por %p191, %p192
      %p194 = scmp.ne.s32.totalorder %s183, %s184
      %p195 = scmp.eq.s32.totalorder %s22, 0
      %p196 = por %p194, %p195
      %p197 = scmp.ne.s32.totalorder %s183, %s184
      %p198 = scmp.eq.s32.totalorder %s23, 7
      %p199 = por %p197, %p198
      %p201 = scmp.ne.s32.totalorder %s184, %s200
      %p202 = scmp.eq.s32.totalorder %s23, 0
      %p203 = por %p201, %p202
      %p204 = scmp.le.s32.totalorder 1, %s17
      %p205 = scmp.lt.s32.totalorder %s17, 9
      %p206 = pnand %p204, %p205
      %p207 = pneg %p206
      // Predicated region
      $region9: #{model_forward.1} parent=5 // pred_check
        _
      $region10: #{model_forward.1} parent=5 // pred_check_branch
        %209 = sbr.rel (%p206) target = $region12
      $region11: #{model_forward.1} parent=5 // pred_region
        %s210 = ssub.s32 %s17, 1
        // Predicated region
        $region13: #{model_forward.1} parent=11 // pred_check
          %p211 = pneg %p50
        $region14: #{model_forward.1} parent=11 // pred_check_branch
          %213 = sbr.rel (%p211) target = $region16
        $region15: #{model_forward.1} parent=11 // pred_region
          _
        $region16: #{model_forward.1} parent=11 // pred_fallthru
          _
      $region12: #{model_forward.1} parent=5 // pred_fallthru
        _
      %p214 = scmp.lt.s32.totalorder %s17, 8
      // Predicated region
      $region17: #{model_forward.1} parent=5 // pred_check
        %p215 = pneg %p214
      $region18: #{model_forward.1} parent=5 // pred_check_branch
        %217 = sbr.rel (%p215) target = $region20
      $region19: #{model_forward.1} parent=5 // pred_region
        // Predicated region
        $region21: #{model_forward.1} parent=19 // pred_check
          %p218 = pneg %p74
        $region22: #{model_forward.1} parent=19 // pred_check_branch
          %220 = sbr.rel (%p218) target = $region24
        $region23: #{model_forward.1} parent=19 // pred_region
          %s221 = sand.u32 %s64, 1
          %s222 = scalar_lea.sflag [#allocation4], %s221
          %s223 = sand.u32 %s64, 1
          %s224 = smul.addr %s223, 16384
          %s225 = scalar_lea.vmem [#allocation3], %s224
          %s226 = smul.u32 %s24, 4
          %s227 = sadd.s32 %s226, %s25
          %s228 = smul.u32 4, %s227
          %230 = vsyncadd %s222, 0
          %s231 = smul.addr %s228, 8
          %s232 = scalar_lea.hbm %s1, %s231
          %s233 = sshll.u32 %s232, 4
          %s234 = int_to_ptr.hbm [resolvable:$true] %s233
          %s235 = sshll.u32 %s225, 4
          %s236 = int_to_ptr.vmem [resolvable:$true] %s235
          %241 = dma.hbm_to_vmem [thread:$0]  %s234, 262144, %s236, %s222, 4096, 512, 32
        $region24: #{model_forward.1} parent=19 // pred_fallthru
          _
        // Predicated region
        $region25: #{model_forward.1} parent=19 // pred_check
          %p242 = pneg %p104
        $region26: #{model_forward.1} parent=19 // pred_check_branch
          %244 = sbr.rel (%p242) target = $region28
        $region27: #{model_forward.1} parent=19 // pred_region
          %s245 = sand.u32 %s17, 1
          %s246 = scalar_lea.sflag [#allocation6], %s245
          %s247 = sand.u32 %s94, 1
          %s248 = smul.addr %s247, 4
          %s249 = scalar_lea.vmem [#allocation5], %s248
          %s250 = smul.u32 %s24, 4
          %s251 = sadd.s32 %s250, %s25
          %s252 = smul.u32 4, %s251
          %254 = vsyncadd %s246, 0
          %s255 = scalar_lea.hbm %s2, %s252
          %s257 = sshll.u32 %s255, 4
          %s258 = int_to_ptr.hbm [resolvable:$true] %s257
          %s259 = sshll.u32 %s249, 4
          %s260 = int_to_ptr.vmem [resolvable:$true] %s259
          %262 = dma.hbm_to_vmem [thread:$0]  %s258, 64, %s260, %s246
        $region28: #{model_forward.1} parent=19 // pred_fallthru
          _
        // Predicated region
        $region29: #{model_forward.1} parent=19 // pred_check
          %p263 = pneg %p134
        $region30: #{model_forward.1} parent=19 // pred_check_branch
          %265 = sbr.rel (%p263) target = $region32
        $region31: #{model_forward.1} parent=19 // pred_region
          %s266 = smul.u32 %s24, 4
          %s267 = sadd.s32 %s266, %s25
          %s268 = smul.u32 4, %s267
          %p269 = scmp.lt.s32.totalorder %s268, 31
          %s270 = scalar_select %p269, %s268, 31
          %s271 = smul.addr %s270, 8
          %s272 = scalar_lea.vmem %s3, %s271
          %s273 = smul.u32 %s24, 4
          %s274 = sadd.s32 %s273, %s25
          %s275 = smul.u32 4, %s274
        $region32: #{model_forward.1} parent=19 // pred_fallthru
          _
        // Predicated region
        $region33: #{model_forward.1} parent=19 // pred_check
          %p276 = pneg %p164
        $region34: #{model_forward.1} parent=19 // pred_check_branch
          %278 = sbr.rel (%p276) target = $region36
        $region35: #{model_forward.1} parent=19 // pred_region
          %s279 = sand.u32 %s17, 1
          %s280 = scalar_lea.sflag [#allocation6], %s279
          %s281 = sand.u32 %s154, 1
          %s282 = smul.addr %s281, 4096
          %s283 = scalar_lea.vmem [#allocation7], %s282
          %s284 = smul.u32 %s24, 4
          %s285 = sadd.s32 %s284, %s25
          %s286 = smul.u32 64, %s285
          %288 = vsyncadd %s280, 0
          %s289 = smul.addr %s286, 8
          %s290 = smul.addr %s289, 8
          %s291 = scalar_lea.hbm %s4, %s290
          %s292 = sshll.u32 %s291, 4
          %s293 = int_to_ptr.hbm [resolvable:$true] %s292
          %s294 = sshll.u32 %s283, 4
          %s295 = int_to_ptr.vmem [resolvable:$true] %s294
          %300 = dma.hbm_to_vmem [thread:$0]  %s293, 65536, %s295, %s280, 1024, 1024, 64
        $region36: #{model_forward.1} parent=19 // pred_fallthru
          _
      $region20: #{model_forward.1} parent=5 // pred_fallthru
        _
      %p301 = scmp.le.s32.totalorder 1, %s17
      %p302 = scmp.lt.s32.totalorder %s17, 9
      %p303 = pnand %p301, %p302
      %p304 = pneg %p303
      // Predicated region
      $region37: #{model_forward.1} parent=5 // pred_check
        _
      $region38: #{model_forward.1} parent=5 // pred_check_branch
        %306 = sbr.rel (%p303) target = $region40
      $region39: #{model_forward.1} parent=5 // pred_region
        %s307 = ssub.s32 %s17, 1
        %s308 = sand.u32 %s67, 1
        %s309 = scalar_lea.sflag [#allocation4], %s308
        %s310 = sand.u32 %s67, 1
        %s311 = smul.addr %s310, 16384
        %s312 = scalar_lea.vmem [#allocation3], %s311
        // Predicated region
        $region41: #{model_forward.1} parent=39 // pred_check
          %p313 = pneg %p80
        $region42: #{model_forward.1} parent=39 // pred_check_branch
          %315 = sbr.rel (%p313) target = $region44
        $region43: #{model_forward.1} parent=39 // pred_region
          %317 = dma.done %s309, 262144
        $region44: #{model_forward.1} parent=39 // pred_fallthru
          _
        %s318 = sand.u32 %s22, 1
        %s319 = scalar_lea.sflag [#allocation6], %s318
        %s320 = sand.u32 %s97, 1
        %s321 = smul.addr %s320, 4
        %s322 = scalar_lea.vmem [#allocation5], %s321
        // Predicated region
        $region45: #{model_forward.1} parent=39 // pred_check
          %p323 = pneg %p110
        $region46: #{model_forward.1} parent=39 // pred_check_branch
          %325 = sbr.rel (%p323) target = $region48
        $region47: #{model_forward.1} parent=39 // pred_region
          %327 = dma.done %s319, 64
        $region48: #{model_forward.1} parent=39 // pred_fallthru
          _
        %s328 = sand.u32 %s22, 1
        %s329 = scalar_lea.sflag [#allocation6], %s328
        %s330 = sand.u32 %s157, 1
        %s331 = smul.addr %s330, 4096
        %s332 = scalar_lea.vmem [#allocation7], %s331
        // Predicated region
        $region49: #{model_forward.1} parent=39 // pred_check
          %p333 = pneg %p170
        $region50: #{model_forward.1} parent=39 // pred_check_branch
          %335 = sbr.rel (%p333) target = $region52
        $region51: #{model_forward.1} parent=39 // pred_region
          %337 = dma.done %s329, 65536
        $region52: #{model_forward.1} parent=39 // pred_fallthru
          _
        %p338 = pneg %p50
        %p339 = pneg %p47
        %s340 = sand.u32 %s67, 1
        %s341 = scalar_lea.sflag [#allocation4], %s340
        %s342 = sand.u32 %s67, 1
        %s343 = smul.addr %s342, 16384
        %s344 = scalar_lea.vmem [#allocation3], %s343
        %p345 = pneg %p80
        %p346 = pneg %p77
        %s347 = sand.u32 %s22, 1
        %s348 = scalar_lea.sflag [#allocation6], %s347
        %s349 = sand.u32 %s97, 1
        %s350 = smul.addr %s349, 4
        %s351 = scalar_lea.vmem [#allocation5], %s350
        %p352 = pneg %p110
        %p353 = pneg %p107
        %s354 = smul.u32 %s26, 4
        %s355 = sadd.s32 %s354, %s27
        %s356 = smul.u32 4, %s355
        %p357 = scmp.lt.s32.totalorder %s356, 31
        %s358 = scalar_select %p357, %s356, 31
        %s359 = smul.addr %s358, 8
        %s360 = scalar_lea.vmem %s3, %s359
        %p361 = pneg %p140
        %p362 = pneg %p137
        %s363 = sand.u32 %s22, 1
        %s364 = scalar_lea.sflag [#allocation6], %s363
        %s365 = sand.u32 %s157, 1
        %s366 = smul.addr %s365, 4096
        %s367 = scalar_lea.vmem [#allocation7], %s366
        %p368 = pneg %p170
        %p369 = pneg %p167
        %p370 = pneg %p196
        %p371 = pneg %p193
        %p372 = scmp.lt.s32.totalorder %s26, 1
        %s373 = scalar_select %p372, %s26, 1
        %s374 = smul.addr %s373, 8
        %s375 = smul.addr %s374, 8
        %s376 = scalar_lea.vmem %s5, %s375
        %s377 = smul.u32 %s26, 4
        %s378 = sadd.s32 %s377, %s27
        %s379 = smul.u32 4, %s378
        %s380 = smul.u32 %s26, 4
        %s381 = sadd.s32 %s380, %s27
        %s382 = smul.u32 4, %s381
        %s383 = smul.u32 %s26, 4
        %s384 = sadd.s32 %s383, %s27
        %s385 = smul.u32 4, %s384
        %p386 = scmp.lt.s32.totalorder %s385, 31
        %s387 = scalar_select %p386, %s385, 31
        %s388 = smul.addr %s387, 8
        %s389 = scalar_lea.vmem %s3, %s388
        %s390 = smul.u32 %s26, 4
        %s391 = sadd.s32 %s390, %s27
        %s392 = smul.u32 4, %s391
        %s393 = smul.u32 %s26, 4
        %s394 = sadd.s32 %s393, %s27
        %s395 = smul.u32 64, %s394
        %p396 = scmp.lt.s32.totalorder %s26, 1
        %s397 = scalar_select %p396, %s26, 1
        %s398 = smul.addr %s397, 8
        %s399 = smul.addr %s398, 8
        %s400 = scalar_lea.vmem %s5, %s399
        %p401 = scmp.eq.s32.totalorder %s27, 0
        // Predicated region
        $region53: #{model_forward.1} parent=39 // pred_check
          %p402 = pneg %p401
        $region54: #{model_forward.1} parent=39 // pred_check_branch
          %404 = sbr.rel (%p402) target = $region56
        $region55: #{model_forward.1} parent=39 // pred_region
          %405 = vst [vmem:[#allocation2] sm:$0xff] 0.0
          %406 = vst [vmem:[#allocation2 + $0x8] sm:$0xff] 0.0
          %407 = vst [vmem:[#allocation2 + $0x10] sm:$0xff] 0.0
          %408 = vst [vmem:[#allocation2 + $0x18] sm:$0xff] 0.0
          %409 = vst [vmem:[#allocation2 + $0x20] sm:$0xff] 0.0
          %410 = vst [vmem:[#allocation2 + $0x28] sm:$0xff] 0.0
          %411 = vst [vmem:[#allocation2 + $0x30] sm:$0xff] 0.0
          %412 = vst [vmem:[#allocation2 + $0x38] sm:$0xff] 0.0
        $region56: #{model_forward.1} parent=39 // pred_fallthru
          _
        %v413 = vld [vmem:[%s0] sm:$0xff]
        %v414 = vld [vmem:[%s0 + $0x8] sm:$0xff]
        %v415 = vld [vmem:[%s0 + $0x10] sm:$0xff]
        %v416 = vld [vmem:[%s0 + $0x18] sm:$0xff]
        %v417 = vld [vmem:[%s0 + $0x20] sm:$0xff]
        %v418 = vld [vmem:[%s0 + $0x28] sm:$0xff]
        %v419 = vld [vmem:[%s0 + $0x30] sm:$0xff]
        %v420 = vld [vmem:[%s0 + $0x38] sm:$0xff]
        %v421 = vld [vmem:[%s0 + $0x40] sm:$0xff]
        %v422 = vld [vmem:[%s0 + $0x48] sm:$0xff]
        %v423 = vld [vmem:[%s0 + $0x50] sm:$0xff]
        %v424 = vld [vmem:[%s0 + $0x58] sm:$0xff]
        %v425 = vld [vmem:[%s0 + $0x60] sm:$0xff]
        %v426 = vld [vmem:[%s0 + $0x68] sm:$0xff]
        %v427 = vld [vmem:[%s0 + $0x70] sm:$0xff]
        %v428 = vld [vmem:[%s0 + $0x78] sm:$0xff]
        %v429 = vld [vmem:[%s0 + $0x80] sm:$0xff]
        %v430 = vld [vmem:[%s0 + $0x88] sm:$0xff]
        %v431 = vld [vmem:[%s0 + $0x90] sm:$0xff]
        %v432 = vld [vmem:[%s0 + $0x98] sm:$0xff]
        %v433 = vld [vmem:[%s0 + $0xa0] sm:$0xff]
        %v434 = vld [vmem:[%s0 + $0xa8] sm:$0xff]
        %v435 = vld [vmem:[%s0 + $0xb0] sm:$0xff]
        %v436 = vld [vmem:[%s0 + $0xb8] sm:$0xff]
        %v437 = vld [vmem:[%s0 + $0xc0] sm:$0xff]
        %v438 = vld [vmem:[%s0 + $0xc8] sm:$0xff]
        %v439 = vld [vmem:[%s0 + $0xd0] sm:$0xff]
        %v440 = vld [vmem:[%s0 + $0xd8] sm:$0xff]
        %v441 = vld [vmem:[%s0 + $0xe0] sm:$0xff]
        %v442 = vld [vmem:[%s0 + $0xe8] sm:$0xff]
        %v443 = vld [vmem:[%s0 + $0xf0] sm:$0xff]
        %v444 = vld [vmem:[%s0 + $0xf8] sm:$0xff]
        %v445 = vld [vmem:[%s312] sm:$0xff]
        %v446 = vld [vmem:[%s312 + $0x8] sm:$0xff]
        %v447 = vld [vmem:[%s312 + $0x10] sm:$0xff]
        %v448 = vld [vmem:[%s312 + $0x18] sm:$0xff]
        %v449 = vld [vmem:[%s312 + $0x20] sm:$0xff]
        %v450 = vld [vmem:[%s312 + $0x28] sm:$0xff]
        %v451 = vld [vmem:[%s312 + $0x30] sm:$0xff]
        %v452 = vld [vmem:[%s312 + $0x38] sm:$0xff]
        %v453 = vld [vmem:[%s312 + $0x40] sm:$0xff]
        %v454 = vld [vmem:[%s312 + $0x48] sm:$0xff]
        %v455 = vld [vmem:[%s312 + $0x50] sm:$0xff]
        %v456 = vld [vmem:[%s312 + $0x58] sm:$0xff]
        %v457 = vld [vmem:[%s312 + $0x60] sm:$0xff]
        %v458 = vld [vmem:[%s312 + $0x68] sm:$0xff]
        %v459 = vld [vmem:[%s312 + $0x70] sm:$0xff]
        %v460 = vld [vmem:[%s312 + $0x78] sm:$0xff]
        %v461 = vld [vmem:[%s312 + $0x80] sm:$0xff]
        %v462 = vld [vmem:[%s312 + $0x88] sm:$0xff]
        %v463 = vld [vmem:[%s312 + $0x90] sm:$0xff]
        %v464 = vld [vmem:[%s312 + $0x98] sm:$0xff]
        %v465 = vld [vmem:[%s312 + $0xa0] sm:$0xff]
        %v466 = vld [vmem:[%s312 + $0xa8] sm:$0xff]
        %v467 = vld [vmem:[%s312 + $0xb0] sm:$0xff]
        %v468 = vld [vmem:[%s312 + $0xb8] sm:$0xff]
        %v469 = vld [vmem:[%s312 + $0xc0] sm:$0xff]
        %v470 = vld [vmem:[%s312 + $0xc8] sm:$0xff]
        %v471 = vld [vmem:[%s312 + $0xd0] sm:$0xff]
        %v472 = vld [vmem:[%s312 + $0xd8] sm:$0xff]
        %v473 = vld [vmem:[%s312 + $0xe0] sm:$0xff]
        %v474 = vld [vmem:[%s312 + $0xe8] sm:$0xff]
        %v475 = vld [vmem:[%s312 + $0xf0] sm:$0xff]
        %v476 = vld [vmem:[%s312 + $0xf8] sm:$0xff]
        %v477 = vld [vmem:[%s312 + $0x100] sm:$0xff]
        %v478 = vld [vmem:[%s312 + $0x108] sm:$0xff]
        %v479 = vld [vmem:[%s312 + $0x110] sm:$0xff]
        %v480 = vld [vmem:[%s312 + $0x118] sm:$0xff]
        %v481 = vld [vmem:[%s312 + $0x120] sm:$0xff]
        %v482 = vld [vmem:[%s312 + $0x128] sm:$0xff]
        %v483 = vld [vmem:[%s312 + $0x130] sm:$0xff]
        %v484 = vld [vmem:[%s312 + $0x138] sm:$0xff]
        %v485 = vld [vmem:[%s312 + $0x140] sm:$0xff]
        %v486 = vld [vmem:[%s312 + $0x148] sm:$0xff]
        %v487 = vld [vmem:[%s312 + $0x150] sm:$0xff]
        %v488 = vld [vmem:[%s312 + $0x158] sm:$0xff]
        %v489 = vld [vmem:[%s312 + $0x160] sm:$0xff]
        %v490 = vld [vmem:[%s312 + $0x168] sm:$0xff]
        %v491 = vld [vmem:[%s312 + $0x170] sm:$0xff]
        %v492 = vld [vmem:[%s312 + $0x178] sm:$0xff]
        %v493 = vld [vmem:[%s312 + $0x180] sm:$0xff]
        %v494 = vld [vmem:[%s312 + $0x188] sm:$0xff]
        %v495 = vld [vmem:[%s312 + $0x190] sm:$0xff]
        %v496 = vld [vmem:[%s312 + $0x198] sm:$0xff]
        %v497 = vld [vmem:[%s312 + $0x1a0] sm:$0xff]
        %v498 = vld [vmem:[%s312 + $0x1a8] sm:$0xff]
        %v499 = vld [vmem:[%s312 + $0x1b0] sm:$0xff]
        %v500 = vld [vmem:[%s312 + $0x1b8] sm:$0xff]
        %v501 = vld [vmem:[%s312 + $0x1c0] sm:$0xff]
        %v502 = vld [vmem:[%s312 + $0x1c8] sm:$0xff]
        %v503 = vld [vmem:[%s312 + $0x1d0] sm:$0xff]
        %v504 = vld [vmem:[%s312 + $0x1d8] sm:$0xff]
        %v505 = vld [vmem:[%s312 + $0x1e0] sm:$0xff]
        %v506 = vld [vmem:[%s312 + $0x1e8] sm:$0xff]
        %v507 = vld [vmem:[%s312 + $0x1f0] sm:$0xff]
        %v508 = vld [vmem:[%s312 + $0x1f8] sm:$0xff]
        %v509 = vld [vmem:[%s312 + $0x200] sm:$0xff]
        %v510 = vld [vmem:[%s312 + $0x208] sm:$0xff]
        %v511 = vld [vmem:[%s312 + $0x210] sm:$0xff]
        %v512 = vld [vmem:[%s312 + $0x218] sm:$0xff]
        %v513 = vld [vmem:[%s312 + $0x220] sm:$0xff]
        %v514 = vld [vmem:[%s312 + $0x228] sm:$0xff]
        %v515 = vld [vmem:[%s312 + $0x230] sm:$0xff]
        %v516 = vld [vmem:[%s312 + $0x238] sm:$0xff]
        %v517 = vld [vmem:[%s312 + $0x240] sm:$0xff]
        %v518 = vld [vmem:[%s312 + $0x248] sm:$0xff]
        %v519 = vld [vmem:[%s312 + $0x250] sm:$0xff]
        %v520 = vld [vmem:[%s312 + $0x258] sm:$0xff]
        %v521 = vld [vmem:[%s312 + $0x260] sm:$0xff]
        %v522 = vld [vmem:[%s312 + $0x268] sm:$0xff]
        %v523 = vld [vmem:[%s312 + $0x270] sm:$0xff]
        %v524 = vld [vmem:[%s312 + $0x278] sm:$0xff]
        %v525 = vld [vmem:[%s312 + $0x280] sm:$0xff]
        %v526 = vld [vmem:[%s312 + $0x288] sm:$0xff]
        %v527 = vld [vmem:[%s312 + $0x290] sm:$0xff]
        %v528 = vld [vmem:[%s312 + $0x298] sm:$0xff]
        %v529 = vld [vmem:[%s312 + $0x2a0] sm:$0xff]
        %v530 = vld [vmem:[%s312 + $0x2a8] sm:$0xff]
        %v531 = vld [vmem:[%s312 + $0x2b0] sm:$0xff]
        %v532 = vld [vmem:[%s312 + $0x2b8] sm:$0xff]
        %v533 = vld [vmem:[%s312 + $0x2c0] sm:$0xff]
        %v534 = vld [vmem:[%s312 + $0x2c8] sm:$0xff]
        %v535 = vld [vmem:[%s312 + $0x2d0] sm:$0xff]
        %v536 = vld [vmem:[%s312 + $0x2d8] sm:$0xff]
        %v537 = vld [vmem:[%s312 + $0x2e0] sm:$0xff]
        %v538 = vld [vmem:[%s312 + $0x2e8] sm:$0xff]
        %v539 = vld [vmem:[%s312 + $0x2f0] sm:$0xff]
        %v540 = vld [vmem:[%s312 + $0x2f8] sm:$0xff]
        %v541 = vld [vmem:[%s312 + $0x300] sm:$0xff]
        %v542 = vld [vmem:[%s312 + $0x308] sm:$0xff]
        %v543 = vld [vmem:[%s312 + $0x310] sm:$0xff]
        %v544 = vld [vmem:[%s312 + $0x318] sm:$0xff]
        %v545 = vld [vmem:[%s312 + $0x320] sm:$0xff]
        %v546 = vld [vmem:[%s312 + $0x328] sm:$0xff]
        %v547 = vld [vmem:[%s312 + $0x330] sm:$0xff]
        %v548 = vld [vmem:[%s312 + $0x338] sm:$0xff]
        %v549 = vld [vmem:[%s312 + $0x340] sm:$0xff]
        %v550 = vld [vmem:[%s312 + $0x348] sm:$0xff]
        %v551 = vld [vmem:[%s312 + $0x350] sm:$0xff]
        %v552 = vld [vmem:[%s312 + $0x358] sm:$0xff]
        %v553 = vld [vmem:[%s312 + $0x360] sm:$0xff]
        %v554 = vld [vmem:[%s312 + $0x368] sm:$0xff]
        %v555 = vld [vmem:[%s312 + $0x370] sm:$0xff]
        %v556 = vld [vmem:[%s312 + $0x378] sm:$0xff]
        %v557 = vld [vmem:[%s312 + $0x380] sm:$0xff]
        %v558 = vld [vmem:[%s312 + $0x388] sm:$0xff]
        %v559 = vld [vmem:[%s312 + $0x390] sm:$0xff]
        %v560 = vld [vmem:[%s312 + $0x398] sm:$0xff]
        %v561 = vld [vmem:[%s312 + $0x3a0] sm:$0xff]
        %v562 = vld [vmem:[%s312 + $0x3a8] sm:$0xff]
        %v563 = vld [vmem:[%s312 + $0x3b0] sm:$0xff]
        %v564 = vld [vmem:[%s312 + $0x3b8] sm:$0xff]
        %v565 = vld [vmem:[%s312 + $0x3c0] sm:$0xff]
        %v566 = vld [vmem:[%s312 + $0x3c8] sm:$0xff]
        %v567 = vld [vmem:[%s312 + $0x3d0] sm:$0xff]
        %v568 = vld [vmem:[%s312 + $0x3d8] sm:$0xff]
        %v569 = vld [vmem:[%s312 + $0x3e0] sm:$0xff]
        %v570 = vld [vmem:[%s312 + $0x3e8] sm:$0xff]
        %v571 = vld [vmem:[%s312 + $0x3f0] sm:$0xff]
        %v572 = vld [vmem:[%s312 + $0x3f8] sm:$0xff]
        %v573 = vld [vmem:[%s312 + $0x400] sm:$0xff]
        %v574 = vld [vmem:[%s312 + $0x408] sm:$0xff]
        %v575 = vld [vmem:[%s312 + $0x410] sm:$0xff]
        %v576 = vld [vmem:[%s312 + $0x418] sm:$0xff]
        %v577 = vld [vmem:[%s312 + $0x420] sm:$0xff]
        %v578 = vld [vmem:[%s312 + $0x428] sm:$0xff]
        %v579 = vld [vmem:[%s312 + $0x430] sm:$0xff]
        %v580 = vld [vmem:[%s312 + $0x438] sm:$0xff]
        %v581 = vld [vmem:[%s312 + $0x440] sm:$0xff]
        %v582 = vld [vmem:[%s312 + $0x448] sm:$0xff]
        %v583 = vld [vmem:[%s312 + $0x450] sm:$0xff]
        %v584 = vld [vmem:[%s312 + $0x458] sm:$0xff]
        %v585 = vld [vmem:[%s312 + $0x460] sm:$0xff]
        %v586 = vld [vmem:[%s312 + $0x468] sm:$0xff]
        %v587 = vld [vmem:[%s312 + $0x470] sm:$0xff]
        %v588 = vld [vmem:[%s312 + $0x478] sm:$0xff]
        %v589 = vld [vmem:[%s312 + $0x480] sm:$0xff]
        %v590 = vld [vmem:[%s312 + $0x488] sm:$0xff]
        %v591 = vld [vmem:[%s312 + $0x490] sm:$0xff]
        %v592 = vld [vmem:[%s312 + $0x498] sm:$0xff]
        %v593 = vld [vmem:[%s312 + $0x4a0] sm:$0xff]
        %v594 = vld [vmem:[%s312 + $0x4a8] sm:$0xff]
        %v595 = vld [vmem:[%s312 + $0x4b0] sm:$0xff]
        %v596 = vld [vmem:[%s312 + $0x4b8] sm:$0xff]
        %v597 = vld [vmem:[%s312 + $0x4c0] sm:$0xff]
        %v598 = vld [vmem:[%s312 + $0x4c8] sm:$0xff]
        %v599 = vld [vmem:[%s312 + $0x4d0] sm:$0xff]
        %v600 = vld [vmem:[%s312 + $0x4d8] sm:$0xff]
        %v601 = vld [vmem:[%s312 + $0x4e0] sm:$0xff]
        %v602 = vld [vmem:[%s312 + $0x4e8] sm:$0xff]
        %v603 = vld [vmem:[%s312 + $0x4f0] sm:$0xff]
        %v604 = vld [vmem:[%s312 + $0x4f8] sm:$0xff]
        %v605 = vld [vmem:[%s312 + $0x500] sm:$0xff]
        %v606 = vld [vmem:[%s312 + $0x508] sm:$0xff]
        %v607 = vld [vmem:[%s312 + $0x510] sm:$0xff]
        %v608 = vld [vmem:[%s312 + $0x518] sm:$0xff]
        %v609 = vld [vmem:[%s312 + $0x520] sm:$0xff]
        %v610 = vld [vmem:[%s312 + $0x528] sm:$0xff]
        %v611 = vld [vmem:[%s312 + $0x530] sm:$0xff]
        %v612 = vld [vmem:[%s312 + $0x538] sm:$0xff]
        %v613 = vld [vmem:[%s312 + $0x540] sm:$0xff]
        %v614 = vld [vmem:[%s312 + $0x548] sm:$0xff]
        %v615 = vld [vmem:[%s312 + $0x550] sm:$0xff]
        %v616 = vld [vmem:[%s312 + $0x558] sm:$0xff]
        %v617 = vld [vmem:[%s312 + $0x560] sm:$0xff]
        %v618 = vld [vmem:[%s312 + $0x568] sm:$0xff]
        %v619 = vld [vmem:[%s312 + $0x570] sm:$0xff]
        %v620 = vld [vmem:[%s312 + $0x578] sm:$0xff]
        %v621 = vld [vmem:[%s312 + $0x580] sm:$0xff]
        %v622 = vld [vmem:[%s312 + $0x588] sm:$0xff]
        %v623 = vld [vmem:[%s312 + $0x590] sm:$0xff]
        %v624 = vld [vmem:[%s312 + $0x598] sm:$0xff]
        %v625 = vld [vmem:[%s312 + $0x5a0] sm:$0xff]
        %v626 = vld [vmem:[%s312 + $0x5a8] sm:$0xff]
        %v627 = vld [vmem:[%s312 + $0x5b0] sm:$0xff]
        %v628 = vld [vmem:[%s312 + $0x5b8] sm:$0xff]
        %v629 = vld [vmem:[%s312 + $0x5c0] sm:$0xff]
        %v630 = vld [vmem:[%s312 + $0x5c8] sm:$0xff]
        %v631 = vld [vmem:[%s312 + $0x5d0] sm:$0xff]
        %v632 = vld [vmem:[%s312 + $0x5d8] sm:$0xff]
        %v633 = vld [vmem:[%s312 + $0x5e0] sm:$0xff]
        %v634 = vld [vmem:[%s312 + $0x5e8] sm:$0xff]
        %v635 = vld [vmem:[%s312 + $0x5f0] sm:$0xff]
        %v636 = vld [vmem:[%s312 + $0x5f8] sm:$0xff]
        %v637 = vld [vmem:[%s312 + $0x600] sm:$0xff]
        %v638 = vld [vmem:[%s312 + $0x608] sm:$0xff]
        %v639 = vld [vmem:[%s312 + $0x610] sm:$0xff]
        %v640 = vld [vmem:[%s312 + $0x618] sm:$0xff]
        %v641 = vld [vmem:[%s312 + $0x620] sm:$0xff]
        %v642 = vld [vmem:[%s312 + $0x628] sm:$0xff]
        %v643 = vld [vmem:[%s312 + $0x630] sm:$0xff]
        %v644 = vld [vmem:[%s312 + $0x638] sm:$0xff]
        %v645 = vld [vmem:[%s312 + $0x640] sm:$0xff]
        %v646 = vld [vmem:[%s312 + $0x648] sm:$0xff]
        %v647 = vld [vmem:[%s312 + $0x650] sm:$0xff]
        %v648 = vld [vmem:[%s312 + $0x658] sm:$0xff]
        %v649 = vld [vmem:[%s312 + $0x660] sm:$0xff]
        %v650 = vld [vmem:[%s312 + $0x668] sm:$0xff]
        %v651 = vld [vmem:[%s312 + $0x670] sm:$0xff]
        %v652 = vld [vmem:[%s312 + $0x678] sm:$0xff]
        %v653 = vld [vmem:[%s312 + $0x680] sm:$0xff]
        %v654 = vld [vmem:[%s312 + $0x688] sm:$0xff]
        %v655 = vld [vmem:[%s312 + $0x690] sm:$0xff]
        %v656 = vld [vmem:[%s312 + $0x698] sm:$0xff]
        %v657 = vld [vmem:[%s312 + $0x6a0] sm:$0xff]
        %v658 = vld [vmem:[%s312 + $0x6a8] sm:$0xff]
        %v659 = vld [vmem:[%s312 + $0x6b0] sm:$0xff]
        %v660 = vld [vmem:[%s312 + $0x6b8] sm:$0xff]
        %v661 = vld [vmem:[%s312 + $0x6c0] sm:$0xff]
        %v662 = vld [vmem:[%s312 + $0x6c8] sm:$0xff]
        %v663 = vld [vmem:[%s312 + $0x6d0] sm:$0xff]
        %v664 = vld [vmem:[%s312 + $0x6d8] sm:$0xff]
        %v665 = vld [vmem:[%s312 + $0x6e0] sm:$0xff]
        %v666 = vld [vmem:[%s312 + $0x6e8] sm:$0xff]
        %v667 = vld [vmem:[%s312 + $0x6f0] sm:$0xff]
        %v668 = vld [vmem:[%s312 + $0x6f8] sm:$0xff]
        %v669 = vld [vmem:[%s312 + $0x700] sm:$0xff]
        %v670 = vld [vmem:[%s312 + $0x708] sm:$0xff]
        %v671 = vld [vmem:[%s312 + $0x710] sm:$0xff]
        %v672 = vld [vmem:[%s312 + $0x718] sm:$0xff]
        %v673 = vld [vmem:[%s312 + $0x720] sm:$0xff]
        %v674 = vld [vmem:[%s312 + $0x728] sm:$0xff]
        %v675 = vld [vmem:[%s312 + $0x730] sm:$0xff]
        %v676 = vld [vmem:[%s312 + $0x738] sm:$0xff]
        %v677 = vld [vmem:[%s312 + $0x740] sm:$0xff]
        %v678 = vld [vmem:[%s312 + $0x748] sm:$0xff]
        %v679 = vld [vmem:[%s312 + $0x750] sm:$0xff]
        %v680 = vld [vmem:[%s312 + $0x758] sm:$0xff]
        %v681 = vld [vmem:[%s312 + $0x760] sm:$0xff]
        %v682 = vld [vmem:[%s312 + $0x768] sm:$0xff]
        %v683 = vld [vmem:[%s312 + $0x770] sm:$0xff]
        %v684 = vld [vmem:[%s312 + $0x778] sm:$0xff]
        %v685 = vld [vmem:[%s312 + $0x780] sm:$0xff]
        %v686 = vld [vmem:[%s312 + $0x788] sm:$0xff]
        %v687 = vld [vmem:[%s312 + $0x790] sm:$0xff]
        %v688 = vld [vmem:[%s312 + $0x798] sm:$0xff]
        %v689 = vld [vmem:[%s312 + $0x7a0] sm:$0xff]
        %v690 = vld [vmem:[%s312 + $0x7a8] sm:$0xff]
        %v691 = vld [vmem:[%s312 + $0x7b0] sm:$0xff]
        %v692 = vld [vmem:[%s312 + $0x7b8] sm:$0xff]
        %v693 = vld [vmem:[%s312 + $0x7c0] sm:$0xff]
        %v694 = vld [vmem:[%s312 + $0x7c8] sm:$0xff]
        %v695 = vld [vmem:[%s312 + $0x7d0] sm:$0xff]
        %v696 = vld [vmem:[%s312 + $0x7d8] sm:$0xff]
        %v697 = vld [vmem:[%s312 + $0x7e0] sm:$0xff]
        %v698 = vld [vmem:[%s312 + $0x7e8] sm:$0xff]
        %v699 = vld [vmem:[%s312 + $0x7f0] sm:$0xff]
        %v700 = vld [vmem:[%s312 + $0x7f8] sm:$0xff]
        %v701 = vld [vmem:[%s312 + $0x800] sm:$0xff]
        %v702 = vld [vmem:[%s312 + $0x808] sm:$0xff]
        %v703 = vld [vmem:[%s312 + $0x810] sm:$0xff]
        %v704 = vld [vmem:[%s312 + $0x818] sm:$0xff]
        %v705 = vld [vmem:[%s312 + $0x820] sm:$0xff]
        %v706 = vld [vmem:[%s312 + $0x828] sm:$0xff]
        %v707 = vld [vmem:[%s312 + $0x830] sm:$0xff]
        %v708 = vld [vmem:[%s312 + $0x838] sm:$0xff]
        %v709 = vld [vmem:[%s312 + $0x840] sm:$0xff]
        %v710 = vld [vmem:[%s312 + $0x848] sm:$0xff]
        %v711 = vld [vmem:[%s312 + $0x850] sm:$0xff]
        %v712 = vld [vmem:[%s312 + $0x858] sm:$0xff]
        %v713 = vld [vmem:[%s312 + $0x860] sm:$0xff]
        %v714 = vld [vmem:[%s312 + $0x868] sm:$0xff]
        %v715 = vld [vmem:[%s312 + $0x870] sm:$0xff]
        %v716 = vld [vmem:[%s312 + $0x878] sm:$0xff]
        %v717 = vld [vmem:[%s312 + $0x880] sm:$0xff]
        %v718 = vld [vmem:[%s312 + $0x888] sm:$0xff]
        %v719 = vld [vmem:[%s312 + $0x890] sm:$0xff]
        %v720 = vld [vmem:[%s312 + $0x898] sm:$0xff]
        %v721 = vld [vmem:[%s312 + $0x8a0] sm:$0xff]
        %v722 = vld [vmem:[%s312 + $0x8a8] sm:$0xff]
        %v723 = vld [vmem:[%s312 + $0x8b0] sm:$0xff]
        %v724 = vld [vmem:[%s312 + $0x8b8] sm:$0xff]
        %v725 = vld [vmem:[%s312 + $0x8c0] sm:$0xff]
        %v726 = vld [vmem:[%s312 + $0x8c8] sm:$0xff]
        %v727 = vld [vmem:[%s312 + $0x8d0] sm:$0xff]
        %v728 = vld [vmem:[%s312 + $0x8d8] sm:$0xff]
        %v729 = vld [vmem:[%s312 + $0x8e0] sm:$0xff]
        %v730 = vld [vmem:[%s312 + $0x8e8] sm:$0xff]
        %v731 = vld [vmem:[%s312 + $0x8f0] sm:$0xff]
        %v732 = vld [vmem:[%s312 + $0x8f8] sm:$0xff]
        %v733 = vld [vmem:[%s312 + $0x900] sm:$0xff]
        %v734 = vld [vmem:[%s312 + $0x908] sm:$0xff]
        %v735 = vld [vmem:[%s312 + $0x910] sm:$0xff]
        %v736 = vld [vmem:[%s312 + $0x918] sm:$0xff]
        %v737 = vld [vmem:[%s312 + $0x920] sm:$0xff]
        %v738 = vld [vmem:[%s312 + $0x928] sm:$0xff]
        %v739 = vld [vmem:[%s312 + $0x930] sm:$0xff]
        %v740 = vld [vmem:[%s312 + $0x938] sm:$0xff]
        %v741 = vld [vmem:[%s312 + $0x940] sm:$0xff]
        %v742 = vld [vmem:[%s312 + $0x948] sm:$0xff]
        %v743 = vld [vmem:[%s312 + $0x950] sm:$0xff]
        %v744 = vld [vmem:[%s312 + $0x958] sm:$0xff]
        %v745 = vld [vmem:[%s312 + $0x960] sm:$0xff]
        %v746 = vld [vmem:[%s312 + $0x968] sm:$0xff]
        %v747 = vld [vmem:[%s312 + $0x970] sm:$0xff]
        %v748 = vld [vmem:[%s312 + $0x978] sm:$0xff]
        %v749 = vld [vmem:[%s312 + $0x980] sm:$0xff]
        %v750 = vld [vmem:[%s312 + $0x988] sm:$0xff]
        %v751 = vld [vmem:[%s312 + $0x990] sm:$0xff]
        %v752 = vld [vmem:[%s312 + $0x998] sm:$0xff]
        %v753 = vld [vmem:[%s312 + $0x9a0] sm:$0xff]
        %v754 = vld [vmem:[%s312 + $0x9a8] sm:$0xff]
        %v755 = vld [vmem:[%s312 + $0x9b0] sm:$0xff]
        %v756 = vld [vmem:[%s312 + $0x9b8] sm:$0xff]
        %v757 = vld [vmem:[%s312 + $0x9c0] sm:$0xff]
        %v758 = vld [vmem:[%s312 + $0x9c8] sm:$0xff]
        %v759 = vld [vmem:[%s312 + $0x9d0] sm:$0xff]
        %v760 = vld [vmem:[%s312 + $0x9d8] sm:$0xff]
        %v761 = vld [vmem:[%s312 + $0x9e0] sm:$0xff]
        %v762 = vld [vmem:[%s312 + $0x9e8] sm:$0xff]
        %v763 = vld [vmem:[%s312 + $0x9f0] sm:$0xff]
        %v764 = vld [vmem:[%s312 + $0x9f8] sm:$0xff]
        %v765 = vld [vmem:[%s312 + $0xa00] sm:$0xff]
        %v766 = vld [vmem:[%s312 + $0xa08] sm:$0xff]
        %v767 = vld [vmem:[%s312 + $0xa10] sm:$0xff]
        %v768 = vld [vmem:[%s312 + $0xa18] sm:$0xff]
        %v769 = vld [vmem:[%s312 + $0xa20] sm:$0xff]
        %v770 = vld [vmem:[%s312 + $0xa28] sm:$0xff]
        %v771 = vld [vmem:[%s312 + $0xa30] sm:$0xff]
        %v772 = vld [vmem:[%s312 + $0xa38] sm:$0xff]
        %v773 = vld [vmem:[%s312 + $0xa40] sm:$0xff]
        %v774 = vld [vmem:[%s312 + $0xa48] sm:$0xff]
        %v775 = vld [vmem:[%s312 + $0xa50] sm:$0xff]
        %v776 = vld [vmem:[%s312 + $0xa58] sm:$0xff]
        %v777 = vld [vmem:[%s312 + $0xa60] sm:$0xff]
        %v778 = vld [vmem:[%s312 + $0xa68] sm:$0xff]
        %v779 = vld [vmem:[%s312 + $0xa70] sm:$0xff]
        %v780 = vld [vmem:[%s312 + $0xa78] sm:$0xff]
        %v781 = vld [vmem:[%s312 + $0xa80] sm:$0xff]
        %v782 = vld [vmem:[%s312 + $0xa88] sm:$0xff]
        %v783 = vld [vmem:[%s312 + $0xa90] sm:$0xff]
        %v784 = vld [vmem:[%s312 + $0xa98] sm:$0xff]
        %v785 = vld [vmem:[%s312 + $0xaa0] sm:$0xff]
        %v786 = vld [vmem:[%s312 + $0xaa8] sm:$0xff]
        %v787 = vld [vmem:[%s312 + $0xab0] sm:$0xff]
        %v788 = vld [vmem:[%s312 + $0xab8] sm:$0xff]
        %v789 = vld [vmem:[%s312 + $0xac0] sm:$0xff]
        %v790 = vld [vmem:[%s312 + $0xac8] sm:$0xff]
        %v791 = vld [vmem:[%s312 + $0xad0] sm:$0xff]
        %v792 = vld [vmem:[%s312 + $0xad8] sm:$0xff]
        %v793 = vld [vmem:[%s312 + $0xae0] sm:$0xff]
        %v794 = vld [vmem:[%s312 + $0xae8] sm:$0xff]
        %v795 = vld [vmem:[%s312 + $0xaf0] sm:$0xff]
        %v796 = vld [vmem:[%s312 + $0xaf8] sm:$0xff]
        %v797 = vld [vmem:[%s312 + $0xb00] sm:$0xff]
        %v798 = vld [vmem:[%s312 + $0xb08] sm:$0xff]
        %v799 = vld [vmem:[%s312 + $0xb10] sm:$0xff]
        %v800 = vld [vmem:[%s312 + $0xb18] sm:$0xff]
        %v801 = vld [vmem:[%s312 + $0xb20] sm:$0xff]
        %v802 = vld [vmem:[%s312 + $0xb28] sm:$0xff]
        %v803 = vld [vmem:[%s312 + $0xb30] sm:$0xff]
        %v804 = vld [vmem:[%s312 + $0xb38] sm:$0xff]
        %v805 = vld [vmem:[%s312 + $0xb40] sm:$0xff]
        %v806 = vld [vmem:[%s312 + $0xb48] sm:$0xff]
        %v807 = vld [vmem:[%s312 + $0xb50] sm:$0xff]
        %v808 = vld [vmem:[%s312 + $0xb58] sm:$0xff]
        %v809 = vld [vmem:[%s312 + $0xb60] sm:$0xff]
        %v810 = vld [vmem:[%s312 + $0xb68] sm:$0xff]
        %v811 = vld [vmem:[%s312 + $0xb70] sm:$0xff]
        %v812 = vld [vmem:[%s312 + $0xb78] sm:$0xff]
        %v813 = vld [vmem:[%s312 + $0xb80] sm:$0xff]
        %v814 = vld [vmem:[%s312 + $0xb88] sm:$0xff]
        %v815 = vld [vmem:[%s312 + $0xb90] sm:$0xff]
        %v816 = vld [vmem:[%s312 + $0xb98] sm:$0xff]
        %v817 = vld [vmem:[%s312 + $0xba0] sm:$0xff]
        %v818 = vld [vmem:[%s312 + $0xba8] sm:$0xff]
        %v819 = vld [vmem:[%s312 + $0xbb0] sm:$0xff]
        %v820 = vld [vmem:[%s312 + $0xbb8] sm:$0xff]
        %v821 = vld [vmem:[%s312 + $0xbc0] sm:$0xff]
        %v822 = vld [vmem:[%s312 + $0xbc8] sm:$0xff]
        %v823 = vld [vmem:[%s312 + $0xbd0] sm:$0xff]
        %v824 = vld [vmem:[%s312 + $0xbd8] sm:$0xff]
        %v825 = vld [vmem:[%s312 + $0xbe0] sm:$0xff]
        %v826 = vld [vmem:[%s312 + $0xbe8] sm:$0xff]
        %v827 = vld [vmem:[%s312 + $0xbf0] sm:$0xff]
        %v828 = vld [vmem:[%s312 + $0xbf8] sm:$0xff]
        %v829 = vld [vmem:[%s312 + $0xc00] sm:$0xff]
        %v830 = vld [vmem:[%s312 + $0xc08] sm:$0xff]
        %v831 = vld [vmem:[%s312 + $0xc10] sm:$0xff]
        %v832 = vld [vmem:[%s312 + $0xc18] sm:$0xff]
        %v833 = vld [vmem:[%s312 + $0xc20] sm:$0xff]
        %v834 = vld [vmem:[%s312 + $0xc28] sm:$0xff]
        %v835 = vld [vmem:[%s312 + $0xc30] sm:$0xff]
        %v836 = vld [vmem:[%s312 + $0xc38] sm:$0xff]
        %v837 = vld [vmem:[%s312 + $0xc40] sm:$0xff]
        %v838 = vld [vmem:[%s312 + $0xc48] sm:$0xff]
        %v839 = vld [vmem:[%s312 + $0xc50] sm:$0xff]
        %v840 = vld [vmem:[%s312 + $0xc58] sm:$0xff]
        %v841 = vld [vmem:[%s312 + $0xc60] sm:$0xff]
        %v842 = vld [vmem:[%s312 + $0xc68] sm:$0xff]
        %v843 = vld [vmem:[%s312 + $0xc70] sm:$0xff]
        %v844 = vld [vmem:[%s312 + $0xc78] sm:$0xff]
        %v845 = vld [vmem:[%s312 + $0xc80] sm:$0xff]
        %v846 = vld [vmem:[%s312 + $0xc88] sm:$0xff]
        %v847 = vld [vmem:[%s312 + $0xc90] sm:$0xff]
        %v848 = vld [vmem:[%s312 + $0xc98] sm:$0xff]
        %v849 = vld [vmem:[%s312 + $0xca0] sm:$0xff]
        %v850 = vld [vmem:[%s312 + $0xca8] sm:$0xff]
        %v851 = vld [vmem:[%s312 + $0xcb0] sm:$0xff]
        %v852 = vld [vmem:[%s312 + $0xcb8] sm:$0xff]
        %v853 = vld [vmem:[%s312 + $0xcc0] sm:$0xff]
        %v854 = vld [vmem:[%s312 + $0xcc8] sm:$0xff]
        %v855 = vld [vmem:[%s312 + $0xcd0] sm:$0xff]
        %v856 = vld [vmem:[%s312 + $0xcd8] sm:$0xff]
        %v857 = vld [vmem:[%s312 + $0xce0] sm:$0xff]
        %v858 = vld [vmem:[%s312 + $0xce8] sm:$0xff]
        %v859 = vld [vmem:[%s312 + $0xcf0] sm:$0xff]
        %v860 = vld [vmem:[%s312 + $0xcf8] sm:$0xff]
        %v861 = vld [vmem:[%s312 + $0xd00] sm:$0xff]
        %v862 = vld [vmem:[%s312 + $0xd08] sm:$0xff]
        %v863 = vld [vmem:[%s312 + $0xd10] sm:$0xff]
        %v864 = vld [vmem:[%s312 + $0xd18] sm:$0xff]
        %v865 = vld [vmem:[%s312 + $0xd20] sm:$0xff]
        %v866 = vld [vmem:[%s312 + $0xd28] sm:$0xff]
        %v867 = vld [vmem:[%s312 + $0xd30] sm:$0xff]
        %v868 = vld [vmem:[%s312 + $0xd38] sm:$0xff]
        %v869 = vld [vmem:[%s312 + $0xd40] sm:$0xff]
        %v870 = vld [vmem:[%s312 + $0xd48] sm:$0xff]
        %v871 = vld [vmem:[%s312 + $0xd50] sm:$0xff]
        %v872 = vld [vmem:[%s312 + $0xd58] sm:$0xff]
        %v873 = vld [vmem:[%s312 + $0xd60] sm:$0xff]
        %v874 = vld [vmem:[%s312 + $0xd68] sm:$0xff]
        %v875 = vld [vmem:[%s312 + $0xd70] sm:$0xff]
        %v876 = vld [vmem:[%s312 + $0xd78] sm:$0xff]
        %v877 = vld [vmem:[%s312 + $0xd80] sm:$0xff]
        %v878 = vld [vmem:[%s312 + $0xd88] sm:$0xff]
        %v879 = vld [vmem:[%s312 + $0xd90] sm:$0xff]
        %v880 = vld [vmem:[%s312 + $0xd98] sm:$0xff]
        %v881 = vld [vmem:[%s312 + $0xda0] sm:$0xff]
        %v882 = vld [vmem:[%s312 + $0xda8] sm:$0xff]
        %v883 = vld [vmem:[%s312 + $0xdb0] sm:$0xff]
        %v884 = vld [vmem:[%s312 + $0xdb8] sm:$0xff]
        %v885 = vld [vmem:[%s312 + $0xdc0] sm:$0xff]
        %v886 = vld [vmem:[%s312 + $0xdc8] sm:$0xff]
        %v887 = vld [vmem:[%s312 + $0xdd0] sm:$0xff]
        %v888 = vld [vmem:[%s312 + $0xdd8] sm:$0xff]
        %v889 = vld [vmem:[%s312 + $0xde0] sm:$0xff]
        %v890 = vld [vmem:[%s312 + $0xde8] sm:$0xff]
        %v891 = vld [vmem:[%s312 + $0xdf0] sm:$0xff]
        %v892 = vld [vmem:[%s312 + $0xdf8] sm:$0xff]
        %v893 = vld [vmem:[%s312 + $0xe00] sm:$0xff]
        %v894 = vld [vmem:[%s312 + $0xe08] sm:$0xff]
        %v895 = vld [vmem:[%s312 + $0xe10] sm:$0xff]
        %v896 = vld [vmem:[%s312 + $0xe18] sm:$0xff]
        %v897 = vld [vmem:[%s312 + $0xe20] sm:$0xff]
        %v898 = vld [vmem:[%s312 + $0xe28] sm:$0xff]
        %v899 = vld [vmem:[%s312 + $0xe30] sm:$0xff]
        %v900 = vld [vmem:[%s312 + $0xe38] sm:$0xff]
        %v901 = vld [vmem:[%s312 + $0xe40] sm:$0xff]
        %v902 = vld [vmem:[%s312 + $0xe48] sm:$0xff]
        %v903 = vld [vmem:[%s312 + $0xe50] sm:$0xff]
        %v904 = vld [vmem:[%s312 + $0xe58] sm:$0xff]
        %v905 = vld [vmem:[%s312 + $0xe60] sm:$0xff]
        %v906 = vld [vmem:[%s312 + $0xe68] sm:$0xff]
        %v907 = vld [vmem:[%s312 + $0xe70] sm:$0xff]
        %v908 = vld [vmem:[%s312 + $0xe78] sm:$0xff]
        %v909 = vld [vmem:[%s312 + $0xe80] sm:$0xff]
        %v910 = vld [vmem:[%s312 + $0xe88] sm:$0xff]
        %v911 = vld [vmem:[%s312 + $0xe90] sm:$0xff]
        %v912 = vld [vmem:[%s312 + $0xe98] sm:$0xff]
        %v913 = vld [vmem:[%s312 + $0xea0] sm:$0xff]
        %v914 = vld [vmem:[%s312 + $0xea8] sm:$0xff]
        %v915 = vld [vmem:[%s312 + $0xeb0] sm:$0xff]
        %v916 = vld [vmem:[%s312 + $0xeb8] sm:$0xff]
        %v917 = vld [vmem:[%s312 + $0xec0] sm:$0xff]
        %v918 = vld [vmem:[%s312 + $0xec8] sm:$0xff]
        %v919 = vld [vmem:[%s312 + $0xed0] sm:$0xff]
        %v920 = vld [vmem:[%s312 + $0xed8] sm:$0xff]
        %v921 = vld [vmem:[%s312 + $0xee0] sm:$0xff]
        %v922 = vld [vmem:[%s312 + $0xee8] sm:$0xff]
        %v923 = vld [vmem:[%s312 + $0xef0] sm:$0xff]
        %v924 = vld [vmem:[%s312 + $0xef8] sm:$0xff]
        %v925 = vld [vmem:[%s312 + $0xf00] sm:$0xff]
        %v926 = vld [vmem:[%s312 + $0xf08] sm:$0xff]
        %v927 = vld [vmem:[%s312 + $0xf10] sm:$0xff]
        %v928 = vld [vmem:[%s312 + $0xf18] sm:$0xff]
        %v929 = vld [vmem:[%s312 + $0xf20] sm:$0xff]
        %v930 = vld [vmem:[%s312 + $0xf28] sm:$0xff]
        %v931 = vld [vmem:[%s312 + $0xf30] sm:$0xff]
        %v932 = vld [vmem:[%s312 + $0xf38] sm:$0xff]
        %v933 = vld [vmem:[%s312 + $0xf40] sm:$0xff]
        %v934 = vld [vmem:[%s312 + $0xf48] sm:$0xff]
        %v935 = vld [vmem:[%s312 + $0xf50] sm:$0xff]
        %v936 = vld [vmem:[%s312 + $0xf58] sm:$0xff]
        %v937 = vld [vmem:[%s312 + $0xf60] sm:$0xff]
        %v938 = vld [vmem:[%s312 + $0xf68] sm:$0xff]
        %v939 = vld [vmem:[%s312 + $0xf70] sm:$0xff]
        %v940 = vld [vmem:[%s312 + $0xf78] sm:$0xff]
        %v941 = vld [vmem:[%s312 + $0xf80] sm:$0xff]
        %v942 = vld [vmem:[%s312 + $0xf88] sm:$0xff]
        %v943 = vld [vmem:[%s312 + $0xf90] sm:$0xff]
        %v944 = vld [vmem:[%s312 + $0xf98] sm:$0xff]
        %v945 = vld [vmem:[%s312 + $0xfa0] sm:$0xff]
        %v946 = vld [vmem:[%s312 + $0xfa8] sm:$0xff]
        %v947 = vld [vmem:[%s312 + $0xfb0] sm:$0xff]
        %v948 = vld [vmem:[%s312 + $0xfb8] sm:$0xff]
        %v949 = vld [vmem:[%s312 + $0xfc0] sm:$0xff]
        %v950 = vld [vmem:[%s312 + $0xfc8] sm:$0xff]
        %v951 = vld [vmem:[%s312 + $0xfd0] sm:$0xff]
        %v952 = vld [vmem:[%s312 + $0xfd8] sm:$0xff]
        %v953 = vld [vmem:[%s312 + $0xfe0] sm:$0xff]
        %v954 = vld [vmem:[%s312 + $0xfe8] sm:$0xff]
        %v955 = vld [vmem:[%s312 + $0xff0] sm:$0xff]
        %v956 = vld [vmem:[%s312 + $0xff8] sm:$0xff]
        %v957 = vld [vmem:[%s312 + $0x1000] sm:$0xff]
        %v958 = vld [vmem:[%s312 + $0x1008] sm:$0xff]
        %v959 = vld [vmem:[%s312 + $0x1010] sm:$0xff]
        %v960 = vld [vmem:[%s312 + $0x1018] sm:$0xff]
        %v961 = vld [vmem:[%s312 + $0x1020] sm:$0xff]
        %v962 = vld [vmem:[%s312 + $0x1028] sm:$0xff]
        %v963 = vld [vmem:[%s312 + $0x1030] sm:$0xff]
        %v964 = vld [vmem:[%s312 + $0x1038] sm:$0xff]
        %v965 = vld [vmem:[%s312 + $0x1040] sm:$0xff]
        %v966 = vld [vmem:[%s312 + $0x1048] sm:$0xff]
        %v967 = vld [vmem:[%s312 + $0x1050] sm:$0xff]
        %v968 = vld [vmem:[%s312 + $0x1058] sm:$0xff]
        %v969 = vld [vmem:[%s312 + $0x1060] sm:$0xff]
        %v970 = vld [vmem:[%s312 + $0x1068] sm:$0xff]
        %v971 = vld [vmem:[%s312 + $0x1070] sm:$0xff]
        %v972 = vld [vmem:[%s312 + $0x1078] sm:$0xff]
        %v973 = vld [vmem:[%s312 + $0x1080] sm:$0xff]
        %v974 = vld [vmem:[%s312 + $0x1088] sm:$0xff]
        %v975 = vld [vmem:[%s312 + $0x1090] sm:$0xff]
        %v976 = vld [vmem:[%s312 + $0x1098] sm:$0xff]
        %v977 = vld [vmem:[%s312 + $0x10a0] sm:$0xff]
        %v978 = vld [vmem:[%s312 + $0x10a8] sm:$0xff]
        %v979 = vld [vmem:[%s312 + $0x10b0] sm:$0xff]
        %v980 = vld [vmem:[%s312 + $0x10b8] sm:$0xff]
        %v981 = vld [vmem:[%s312 + $0x10c0] sm:$0xff]
        %v982 = vld [vmem:[%s312 + $0x10c8] sm:$0xff]
        %v983 = vld [vmem:[%s312 + $0x10d0] sm:$0xff]
        %v984 = vld [vmem:[%s312 + $0x10d8] sm:$0xff]
        %v985 = vld [vmem:[%s312 + $0x10e0] sm:$0xff]
        %v986 = vld [vmem:[%s312 + $0x10e8] sm:$0xff]
        %v987 = vld [vmem:[%s312 + $0x10f0] sm:$0xff]
        %v988 = vld [vmem:[%s312 + $0x10f8] sm:$0xff]
        %v989 = vld [vmem:[%s312 + $0x1100] sm:$0xff]
        %v990 = vld [vmem:[%s312 + $0x1108] sm:$0xff]
        %v991 = vld [vmem:[%s312 + $0x1110] sm:$0xff]
        %v992 = vld [vmem:[%s312 + $0x1118] sm:$0xff]
        %v993 = vld [vmem:[%s312 + $0x1120] sm:$0xff]
        %v994 = vld [vmem:[%s312 + $0x1128] sm:$0xff]
        %v995 = vld [vmem:[%s312 + $0x1130] sm:$0xff]
        %v996 = vld [vmem:[%s312 + $0x1138] sm:$0xff]
        %v997 = vld [vmem:[%s312 + $0x1140] sm:$0xff]
        %v998 = vld [vmem:[%s312 + $0x1148] sm:$0xff]
        %v999 = vld [vmem:[%s312 + $0x1150] sm:$0xff]
        %v1000 = vld [vmem:[%s312 + $0x1158] sm:$0xff]
        %v1001 = vld [vmem:[%s312 + $0x1160] sm:$0xff]
        %v1002 = vld [vmem:[%s312 + $0x1168] sm:$0xff]
        %v1003 = vld [vmem:[%s312 + $0x1170] sm:$0xff]
        %v1004 = vld [vmem:[%s312 + $0x1178] sm:$0xff]
        %v1005 = vld [vmem:[%s312 + $0x1180] sm:$0xff]
        %v1006 = vld [vmem:[%s312 + $0x1188] sm:$0xff]
        %v1007 = vld [vmem:[%s312 + $0x1190] sm:$0xff]
        %v1008 = vld [vmem:[%s312 + $0x1198] sm:$0xff]
        %v1009 = vld [vmem:[%s312 + $0x11a0] sm:$0xff]
        %v1010 = vld [vmem:[%s312 + $0x11a8] sm:$0xff]
        %v1011 = vld [vmem:[%s312 + $0x11b0] sm:$0xff]
        %v1012 = vld [vmem:[%s312 + $0x11b8] sm:$0xff]
        %v1013 = vld [vmem:[%s312 + $0x11c0] sm:$0xff]
        %v1014 = vld [vmem:[%s312 + $0x11c8] sm:$0xff]
        %v1015 = vld [vmem:[%s312 + $0x11d0] sm:$0xff]
        %v1016 = vld [vmem:[%s312 + $0x11d8] sm:$0xff]
        %v1017 = vld [vmem:[%s312 + $0x11e0] sm:$0xff]
        %v1018 = vld [vmem:[%s312 + $0x11e8] sm:$0xff]
        %v1019 = vld [vmem:[%s312 + $0x11f0] sm:$0xff]
        %v1020 = vld [vmem:[%s312 + $0x11f8] sm:$0xff]
        %v1021 = vld [vmem:[%s312 + $0x1200] sm:$0xff]
        %v1022 = vld [vmem:[%s312 + $0x1208] sm:$0xff]
        %v1023 = vld [vmem:[%s312 + $0x1210] sm:$0xff]
        %v1024 = vld [vmem:[%s312 + $0x1218] sm:$0xff]
        %v1025 = vld [vmem:[%s312 + $0x1220] sm:$0xff]
        %v1026 = vld [vmem:[%s312 + $0x1228] sm:$0xff]
        %v1027 = vld [vmem:[%s312 + $0x1230] sm:$0xff]
        %v1028 = vld [vmem:[%s312 + $0x1238] sm:$0xff]
        %v1029 = vld [vmem:[%s312 + $0x1240] sm:$0xff]
        %v1030 = vld [vmem:[%s312 + $0x1248] sm:$0xff]
        %v1031 = vld [vmem:[%s312 + $0x1250] sm:$0xff]
        %v1032 = vld [vmem:[%s312 + $0x1258] sm:$0xff]
        %v1033 = vld [vmem:[%s312 + $0x1260] sm:$0xff]
        %v1034 = vld [vmem:[%s312 + $0x1268] sm:$0xff]
        %v1035 = vld [vmem:[%s312 + $0x1270] sm:$0xff]
        %v1036 = vld [vmem:[%s312 + $0x1278] sm:$0xff]
        %v1037 = vld [vmem:[%s312 + $0x1280] sm:$0xff]
        %v1038 = vld [vmem:[%s312 + $0x1288] sm:$0xff]
        %v1039 = vld [vmem:[%s312 + $0x1290] sm:$0xff]
        %v1040 = vld [vmem:[%s312 + $0x1298] sm:$0xff]
        %v1041 = vld [vmem:[%s312 + $0x12a0] sm:$0xff]
        %v1042 = vld [vmem:[%s312 + $0x12a8] sm:$0xff]
        %v1043 = vld [vmem:[%s312 + $0x12b0] sm:$0xff]
        %v1044 = vld [vmem:[%s312 + $0x12b8] sm:$0xff]
        %v1045 = vld [vmem:[%s312 + $0x12c0] sm:$0xff]
        %v1046 = vld [vmem:[%s312 + $0x12c8] sm:$0xff]
        %v1047 = vld [vmem:[%s312 + $0x12d0] sm:$0xff]
        %v1048 = vld [vmem:[%s312 + $0x12d8] sm:$0xff]
        %v1049 = vld [vmem:[%s312 + $0x12e0] sm:$0xff]
        %v1050 = vld [vmem:[%s312 + $0x12e8] sm:$0xff]
        %v1051 = vld [vmem:[%s312 + $0x12f0] sm:$0xff]
        %v1052 = vld [vmem:[%s312 + $0x12f8] sm:$0xff]
        %v1053 = vld [vmem:[%s312 + $0x1300] sm:$0xff]
        %v1054 = vld [vmem:[%s312 + $0x1308] sm:$0xff]
        %v1055 = vld [vmem:[%s312 + $0x1310] sm:$0xff]
        %v1056 = vld [vmem:[%s312 + $0x1318] sm:$0xff]
        %v1057 = vld [vmem:[%s312 + $0x1320] sm:$0xff]
        %v1058 = vld [vmem:[%s312 + $0x1328] sm:$0xff]
        %v1059 = vld [vmem:[%s312 + $0x1330] sm:$0xff]
        %v1060 = vld [vmem:[%s312 + $0x1338] sm:$0xff]
        %v1061 = vld [vmem:[%s312 + $0x1340] sm:$0xff]
        %v1062 = vld [vmem:[%s312 + $0x1348] sm:$0xff]
        %v1063 = vld [vmem:[%s312 + $0x1350] sm:$0xff]
        %v1064 = vld [vmem:[%s312 + $0x1358] sm:$0xff]
        %v1065 = vld [vmem:[%s312 + $0x1360] sm:$0xff]
        %v1066 = vld [vmem:[%s312 + $0x1368] sm:$0xff]
        %v1067 = vld [vmem:[%s312 + $0x1370] sm:$0xff]
        %v1068 = vld [vmem:[%s312 + $0x1378] sm:$0xff]
        %v1069 = vld [vmem:[%s312 + $0x1380] sm:$0xff]
        %v1070 = vld [vmem:[%s312 + $0x1388] sm:$0xff]
        %v1071 = vld [vmem:[%s312 + $0x1390] sm:$0xff]
        %v1072 = vld [vmem:[%s312 + $0x1398] sm:$0xff]
        %v1073 = vld [vmem:[%s312 + $0x13a0] sm:$0xff]
        %v1074 = vld [vmem:[%s312 + $0x13a8] sm:$0xff]
        %v1075 = vld [vmem:[%s312 + $0x13b0] sm:$0xff]
        %v1076 = vld [vmem:[%s312 + $0x13b8] sm:$0xff]
        %v1077 = vld [vmem:[%s312 + $0x13c0] sm:$0xff]
        %v1078 = vld [vmem:[%s312 + $0x13c8] sm:$0xff]
        %v1079 = vld [vmem:[%s312 + $0x13d0] sm:$0xff]
        %v1080 = vld [vmem:[%s312 + $0x13d8] sm:$0xff]
        %v1081 = vld [vmem:[%s312 + $0x13e0] sm:$0xff]
        %v1082 = vld [vmem:[%s312 + $0x13e8] sm:$0xff]
        %v1083 = vld [vmem:[%s312 + $0x13f0] sm:$0xff]
        %v1084 = vld [vmem:[%s312 + $0x13f8] sm:$0xff]
        %v1085 = vld [vmem:[%s312 + $0x1400] sm:$0xff]
        %v1086 = vld [vmem:[%s312 + $0x1408] sm:$0xff]
        %v1087 = vld [vmem:[%s312 + $0x1410] sm:$0xff]
        %v1088 = vld [vmem:[%s312 + $0x1418] sm:$0xff]
        %v1089 = vld [vmem:[%s312 + $0x1420] sm:$0xff]
        %v1090 = vld [vmem:[%s312 + $0x1428] sm:$0xff]
        %v1091 = vld [vmem:[%s312 + $0x1430] sm:$0xff]
        %v1092 = vld [vmem:[%s312 + $0x1438] sm:$0xff]
        %v1093 = vld [vmem:[%s312 + $0x1440] sm:$0xff]
        %v1094 = vld [vmem:[%s312 + $0x1448] sm:$0xff]
        %v1095 = vld [vmem:[%s312 + $0x1450] sm:$0xff]
        %v1096 = vld [vmem:[%s312 + $0x1458] sm:$0xff]
        %v1097 = vld [vmem:[%s312 + $0x1460] sm:$0xff]
        %v1098 = vld [vmem:[%s312 + $0x1468] sm:$0xff]
        %v1099 = vld [vmem:[%s312 + $0x1470] sm:$0xff]
        %v1100 = vld [vmem:[%s312 + $0x1478] sm:$0xff]
        %v1101 = vld [vmem:[%s312 + $0x1480] sm:$0xff]
        %v1102 = vld [vmem:[%s312 + $0x1488] sm:$0xff]
        %v1103 = vld [vmem:[%s312 + $0x1490] sm:$0xff]
        %v1104 = vld [vmem:[%s312 + $0x1498] sm:$0xff]
        %v1105 = vld [vmem:[%s312 + $0x14a0] sm:$0xff]
        %v1106 = vld [vmem:[%s312 + $0x14a8] sm:$0xff]
        %v1107 = vld [vmem:[%s312 + $0x14b0] sm:$0xff]
        %v1108 = vld [vmem:[%s312 + $0x14b8] sm:$0xff]
        %v1109 = vld [vmem:[%s312 + $0x14c0] sm:$0xff]
        %v1110 = vld [vmem:[%s312 + $0x14c8] sm:$0xff]
        %v1111 = vld [vmem:[%s312 + $0x14d0] sm:$0xff]
        %v1112 = vld [vmem:[%s312 + $0x14d8] sm:$0xff]
        %v1113 = vld [vmem:[%s312 + $0x14e0] sm:$0xff]
        %v1114 = vld [vmem:[%s312 + $0x14e8] sm:$0xff]
        %v1115 = vld [vmem:[%s312 + $0x14f0] sm:$0xff]
        %v1116 = vld [vmem:[%s312 + $0x14f8] sm:$0xff]
        %v1117 = vld [vmem:[%s312 + $0x1500] sm:$0xff]
        %v1118 = vld [vmem:[%s312 + $0x1508] sm:$0xff]
        %v1119 = vld [vmem:[%s312 + $0x1510] sm:$0xff]
        %v1120 = vld [vmem:[%s312 + $0x1518] sm:$0xff]
        %v1121 = vld [vmem:[%s312 + $0x1520] sm:$0xff]
        %v1122 = vld [vmem:[%s312 + $0x1528] sm:$0xff]
        %v1123 = vld [vmem:[%s312 + $0x1530] sm:$0xff]
        %v1124 = vld [vmem:[%s312 + $0x1538] sm:$0xff]
        %v1125 = vld [vmem:[%s312 + $0x1540] sm:$0xff]
        %v1126 = vld [vmem:[%s312 + $0x1548] sm:$0xff]
        %v1127 = vld [vmem:[%s312 + $0x1550] sm:$0xff]
        %v1128 = vld [vmem:[%s312 + $0x1558] sm:$0xff]
        %v1129 = vld [vmem:[%s312 + $0x1560] sm:$0xff]
        %v1130 = vld [vmem:[%s312 + $0x1568] sm:$0xff]
        %v1131 = vld [vmem:[%s312 + $0x1570] sm:$0xff]
        %v1132 = vld [vmem:[%s312 + $0x1578] sm:$0xff]
        %v1133 = vld [vmem:[%s312 + $0x1580] sm:$0xff]
        %v1134 = vld [vmem:[%s312 + $0x1588] sm:$0xff]
        %v1135 = vld [vmem:[%s312 + $0x1590] sm:$0xff]
        %v1136 = vld [vmem:[%s312 + $0x1598] sm:$0xff]
        %v1137 = vld [vmem:[%s312 + $0x15a0] sm:$0xff]
        %v1138 = vld [vmem:[%s312 + $0x15a8] sm:$0xff]
        %v1139 = vld [vmem:[%s312 + $0x15b0] sm:$0xff]
        %v1140 = vld [vmem:[%s312 + $0x15b8] sm:$0xff]
        %v1141 = vld [vmem:[%s312 + $0x15c0] sm:$0xff]
        %v1142 = vld [vmem:[%s312 + $0x15c8] sm:$0xff]
        %v1143 = vld [vmem:[%s312 + $0x15d0] sm:$0xff]
        %v1144 = vld [vmem:[%s312 + $0x15d8] sm:$0xff]
        %v1145 = vld [vmem:[%s312 + $0x15e0] sm:$0xff]
        %v1146 = vld [vmem:[%s312 + $0x15e8] sm:$0xff]
        %v1147 = vld [vmem:[%s312 + $0x15f0] sm:$0xff]
        %v1148 = vld [vmem:[%s312 + $0x15f8] sm:$0xff]
        %v1149 = vld [vmem:[%s312 + $0x1600] sm:$0xff]
        %v1150 = vld [vmem:[%s312 + $0x1608] sm:$0xff]
        %v1151 = vld [vmem:[%s312 + $0x1610] sm:$0xff]
        %v1152 = vld [vmem:[%s312 + $0x1618] sm:$0xff]
        %v1153 = vld [vmem:[%s312 + $0x1620] sm:$0xff]
        %v1154 = vld [vmem:[%s312 + $0x1628] sm:$0xff]
        %v1155 = vld [vmem:[%s312 + $0x1630] sm:$0xff]
        %v1156 = vld [vmem:[%s312 + $0x1638] sm:$0xff]
        %v1157 = vld [vmem:[%s312 + $0x1640] sm:$0xff]
        %v1158 = vld [vmem:[%s312 + $0x1648] sm:$0xff]
        %v1159 = vld [vmem:[%s312 + $0x1650] sm:$0xff]
        %v1160 = vld [vmem:[%s312 + $0x1658] sm:$0xff]
        %v1161 = vld [vmem:[%s312 + $0x1660] sm:$0xff]
        %v1162 = vld [vmem:[%s312 + $0x1668] sm:$0xff]
        %v1163 = vld [vmem:[%s312 + $0x1670] sm:$0xff]
        %v1164 = vld [vmem:[%s312 + $0x1678] sm:$0xff]
        %v1165 = vld [vmem:[%s312 + $0x1680] sm:$0xff]
        %v1166 = vld [vmem:[%s312 + $0x1688] sm:$0xff]
        %v1167 = vld [vmem:[%s312 + $0x1690] sm:$0xff]
        %v1168 = vld [vmem:[%s312 + $0x1698] sm:$0xff]
        %v1169 = vld [vmem:[%s312 + $0x16a0] sm:$0xff]
        %v1170 = vld [vmem:[%s312 + $0x16a8] sm:$0xff]
        %v1171 = vld [vmem:[%s312 + $0x16b0] sm:$0xff]
        %v1172 = vld [vmem:[%s312 + $0x16b8] sm:$0xff]
        %v1173 = vld [vmem:[%s312 + $0x16c0] sm:$0xff]
        %v1174 = vld [vmem:[%s312 + $0x16c8] sm:$0xff]
        %v1175 = vld [vmem:[%s312 + $0x16d0] sm:$0xff]
        %v1176 = vld [vmem:[%s312 + $0x16d8] sm:$0xff]
        %v1177 = vld [vmem:[%s312 + $0x16e0] sm:$0xff]
        %v1178 = vld [vmem:[%s312 + $0x16e8] sm:$0xff]
        %v1179 = vld [vmem:[%s312 + $0x16f0] sm:$0xff]
        %v1180 = vld [vmem:[%s312 + $0x16f8] sm:$0xff]
        %v1181 = vld [vmem:[%s312 + $0x1700] sm:$0xff]
        %v1182 = vld [vmem:[%s312 + $0x1708] sm:$0xff]
        %v1183 = vld [vmem:[%s312 + $0x1710] sm:$0xff]
        %v1184 = vld [vmem:[%s312 + $0x1718] sm:$0xff]
        %v1185 = vld [vmem:[%s312 + $0x1720] sm:$0xff]
        %v1186 = vld [vmem:[%s312 + $0x1728] sm:$0xff]
        %v1187 = vld [vmem:[%s312 + $0x1730] sm:$0xff]
        %v1188 = vld [vmem:[%s312 + $0x1738] sm:$0xff]
        %v1189 = vld [vmem:[%s312 + $0x1740] sm:$0xff]
        %v1190 = vld [vmem:[%s312 + $0x1748] sm:$0xff]
        %v1191 = vld [vmem:[%s312 + $0x1750] sm:$0xff]
        %v1192 = vld [vmem:[%s312 + $0x1758] sm:$0xff]
        %v1193 = vld [vmem:[%s312 + $0x1760] sm:$0xff]
        %v1194 = vld [vmem:[%s312 + $0x1768] sm:$0xff]
        %v1195 = vld [vmem:[%s312 + $0x1770] sm:$0xff]
        %v1196 = vld [vmem:[%s312 + $0x1778] sm:$0xff]
        %v1197 = vld [vmem:[%s312 + $0x1780] sm:$0xff]
        %v1198 = vld [vmem:[%s312 + $0x1788] sm:$0xff]
        %v1199 = vld [vmem:[%s312 + $0x1790] sm:$0xff]
        %v1200 = vld [vmem:[%s312 + $0x1798] sm:$0xff]
        %v1201 = vld [vmem:[%s312 + $0x17a0] sm:$0xff]
        %v1202 = vld [vmem:[%s312 + $0x17a8] sm:$0xff]
        %v1203 = vld [vmem:[%s312 + $0x17b0] sm:$0xff]
        %v1204 = vld [vmem:[%s312 + $0x17b8] sm:$0xff]
        %v1205 = vld [vmem:[%s312 + $0x17c0] sm:$0xff]
        %v1206 = vld [vmem:[%s312 + $0x17c8] sm:$0xff]
        %v1207 = vld [vmem:[%s312 + $0x17d0] sm:$0xff]
        %v1208 = vld [vmem:[%s312 + $0x17d8] sm:$0xff]
        %v1209 = vld [vmem:[%s312 + $0x17e0] sm:$0xff]
        %v1210 = vld [vmem:[%s312 + $0x17e8] sm:$0xff]
        %v1211 = vld [vmem:[%s312 + $0x17f0] sm:$0xff]
        %v1212 = vld [vmem:[%s312 + $0x17f8] sm:$0xff]
        %v1213 = vld [vmem:[%s312 + $0x1800] sm:$0xff]
        %v1214 = vld [vmem:[%s312 + $0x1808] sm:$0xff]
        %v1215 = vld [vmem:[%s312 + $0x1810] sm:$0xff]
        %v1216 = vld [vmem:[%s312 + $0x1818] sm:$0xff]
        %v1217 = vld [vmem:[%s312 + $0x1820] sm:$0xff]
        %v1218 = vld [vmem:[%s312 + $0x1828] sm:$0xff]
        %v1219 = vld [vmem:[%s312 + $0x1830] sm:$0xff]
        %v1220 = vld [vmem:[%s312 + $0x1838] sm:$0xff]
        %v1221 = vld [vmem:[%s312 + $0x1840] sm:$0xff]
        %v1222 = vld [vmem:[%s312 + $0x1848] sm:$0xff]
        %v1223 = vld [vmem:[%s312 + $0x1850] sm:$0xff]
        %v1224 = vld [vmem:[%s312 + $0x1858] sm:$0xff]
        %v1225 = vld [vmem:[%s312 + $0x1860] sm:$0xff]
        %v1226 = vld [vmem:[%s312 + $0x1868] sm:$0xff]
        %v1227 = vld [vmem:[%s312 + $0x1870] sm:$0xff]
        %v1228 = vld [vmem:[%s312 + $0x1878] sm:$0xff]
        %v1229 = vld [vmem:[%s312 + $0x1880] sm:$0xff]
        %v1230 = vld [vmem:[%s312 + $0x1888] sm:$0xff]
        %v1231 = vld [vmem:[%s312 + $0x1890] sm:$0xff]
        %v1232 = vld [vmem:[%s312 + $0x1898] sm:$0xff]
        %v1233 = vld [vmem:[%s312 + $0x18a0] sm:$0xff]
        %v1234 = vld [vmem:[%s312 + $0x18a8] sm:$0xff]
        %v1235 = vld [vmem:[%s312 + $0x18b0] sm:$0xff]
        %v1236 = vld [vmem:[%s312 + $0x18b8] sm:$0xff]
        %v1237 = vld [vmem:[%s312 + $0x18c0] sm:$0xff]
        %v1238 = vld [vmem:[%s312 + $0x18c8] sm:$0xff]
        %v1239 = vld [vmem:[%s312 + $0x18d0] sm:$0xff]
        %v1240 = vld [vmem:[%s312 + $0x18d8] sm:$0xff]
        %v1241 = vld [vmem:[%s312 + $0x18e0] sm:$0xff]
        %v1242 = vld [vmem:[%s312 + $0x18e8] sm:$0xff]
        %v1243 = vld [vmem:[%s312 + $0x18f0] sm:$0xff]
        %v1244 = vld [vmem:[%s312 + $0x18f8] sm:$0xff]
        %v1245 = vld [vmem:[%s312 + $0x1900] sm:$0xff]
        %v1246 = vld [vmem:[%s312 + $0x1908] sm:$0xff]
        %v1247 = vld [vmem:[%s312 + $0x1910] sm:$0xff]
        %v1248 = vld [vmem:[%s312 + $0x1918] sm:$0xff]
        %v1249 = vld [vmem:[%s312 + $0x1920] sm:$0xff]
        %v1250 = vld [vmem:[%s312 + $0x1928] sm:$0xff]
        %v1251 = vld [vmem:[%s312 + $0x1930] sm:$0xff]
        %v1252 = vld [vmem:[%s312 + $0x1938] sm:$0xff]
        %v1253 = vld [vmem:[%s312 + $0x1940] sm:$0xff]
        %v1254 = vld [vmem:[%s312 + $0x1948] sm:$0xff]
        %v1255 = vld [vmem:[%s312 + $0x1950] sm:$0xff]
        %v1256 = vld [vmem:[%s312 + $0x1958] sm:$0xff]
        %v1257 = vld [vmem:[%s312 + $0x1960] sm:$0xff]
        %v1258 = vld [vmem:[%s312 + $0x1968] sm:$0xff]
        %v1259 = vld [vmem:[%s312 + $0x1970] sm:$0xff]
        %v1260 = vld [vmem:[%s312 + $0x1978] sm:$0xff]
        %v1261 = vld [vmem:[%s312 + $0x1980] sm:$0xff]
        %v1262 = vld [vmem:[%s312 + $0x1988] sm:$0xff]
        %v1263 = vld [vmem:[%s312 + $0x1990] sm:$0xff]
        %v1264 = vld [vmem:[%s312 + $0x1998] sm:$0xff]
        %v1265 = vld [vmem:[%s312 + $0x19a0] sm:$0xff]
        %v1266 = vld [vmem:[%s312 + $0x19a8] sm:$0xff]
        %v1267 = vld [vmem:[%s312 + $0x19b0] sm:$0xff]
        %v1268 = vld [vmem:[%s312 + $0x19b8] sm:$0xff]
        %v1269 = vld [vmem:[%s312 + $0x19c0] sm:$0xff]
        %v1270 = vld [vmem:[%s312 + $0x19c8] sm:$0xff]
        %v1271 = vld [vmem:[%s312 + $0x19d0] sm:$0xff]
        %v1272 = vld [vmem:[%s312 + $0x19d8] sm:$0xff]
        %v1273 = vld [vmem:[%s312 + $0x19e0] sm:$0xff]
        %v1274 = vld [vmem:[%s312 + $0x19e8] sm:$0xff]
        %v1275 = vld [vmem:[%s312 + $0x19f0] sm:$0xff]
        %v1276 = vld [vmem:[%s312 + $0x19f8] sm:$0xff]
        %v1277 = vld [vmem:[%s312 + $0x1a00] sm:$0xff]
        %v1278 = vld [vmem:[%s312 + $0x1a08] sm:$0xff]
        %v1279 = vld [vmem:[%s312 + $0x1a10] sm:$0xff]
        %v1280 = vld [vmem:[%s312 + $0x1a18] sm:$0xff]
        %v1281 = vld [vmem:[%s312 + $0x1a20] sm:$0xff]
        %v1282 = vld [vmem:[%s312 + $0x1a28] sm:$0xff]
        %v1283 = vld [vmem:[%s312 + $0x1a30] sm:$0xff]
        %v1284 = vld [vmem:[%s312 + $0x1a38] sm:$0xff]
        %v1285 = vld [vmem:[%s312 + $0x1a40] sm:$0xff]
        %v1286 = vld [vmem:[%s312 + $0x1a48] sm:$0xff]
        %v1287 = vld [vmem:[%s312 + $0x1a50] sm:$0xff]
        %v1288 = vld [vmem:[%s312 + $0x1a58] sm:$0xff]
        %v1289 = vld [vmem:[%s312 + $0x1a60] sm:$0xff]
        %v1290 = vld [vmem:[%s312 + $0x1a68] sm:$0xff]
        %v1291 = vld [vmem:[%s312 + $0x1a70] sm:$0xff]
        %v1292 = vld [vmem:[%s312 + $0x1a78] sm:$0xff]
        %v1293 = vld [vmem:[%s312 + $0x1a80] sm:$0xff]
        %v1294 = vld [vmem:[%s312 + $0x1a88] sm:$0xff]
        %v1295 = vld [vmem:[%s312 + $0x1a90] sm:$0xff]
        %v1296 = vld [vmem:[%s312 + $0x1a98] sm:$0xff]
        %v1297 = vld [vmem:[%s312 + $0x1aa0] sm:$0xff]
        %v1298 = vld [vmem:[%s312 + $0x1aa8] sm:$0xff]
        %v1299 = vld [vmem:[%s312 + $0x1ab0] sm:$0xff]
        %v1300 = vld [vmem:[%s312 + $0x1ab8] sm:$0xff]
        %v1301 = vld [vmem:[%s312 + $0x1ac0] sm:$0xff]
        %v1302 = vld [vmem:[%s312 + $0x1ac8] sm:$0xff]
        %v1303 = vld [vmem:[%s312 + $0x1ad0] sm:$0xff]
        %v1304 = vld [vmem:[%s312 + $0x1ad8] sm:$0xff]
        %v1305 = vld [vmem:[%s312 + $0x1ae0] sm:$0xff]
        %v1306 = vld [vmem:[%s312 + $0x1ae8] sm:$0xff]
        %v1307 = vld [vmem:[%s312 + $0x1af0] sm:$0xff]
        %v1308 = vld [vmem:[%s312 + $0x1af8] sm:$0xff]
        %v1309 = vld [vmem:[%s312 + $0x1b00] sm:$0xff]
        %v1310 = vld [vmem:[%s312 + $0x1b08] sm:$0xff]
        %v1311 = vld [vmem:[%s312 + $0x1b10] sm:$0xff]
        %v1312 = vld [vmem:[%s312 + $0x1b18] sm:$0xff]
        %v1313 = vld [vmem:[%s312 + $0x1b20] sm:$0xff]
        %v1314 = vld [vmem:[%s312 + $0x1b28] sm:$0xff]
        %v1315 = vld [vmem:[%s312 + $0x1b30] sm:$0xff]
        %v1316 = vld [vmem:[%s312 + $0x1b38] sm:$0xff]
        %v1317 = vld [vmem:[%s312 + $0x1b40] sm:$0xff]
        %v1318 = vld [vmem:[%s312 + $0x1b48] sm:$0xff]
        %v1319 = vld [vmem:[%s312 + $0x1b50] sm:$0xff]
        %v1320 = vld [vmem:[%s312 + $0x1b58] sm:$0xff]
        %v1321 = vld [vmem:[%s312 + $0x1b60] sm:$0xff]
        %v1322 = vld [vmem:[%s312 + $0x1b68] sm:$0xff]
        %v1323 = vld [vmem:[%s312 + $0x1b70] sm:$0xff]
        %v1324 = vld [vmem:[%s312 + $0x1b78] sm:$0xff]
        %v1325 = vld [vmem:[%s312 + $0x1b80] sm:$0xff]
        %v1326 = vld [vmem:[%s312 + $0x1b88] sm:$0xff]
        %v1327 = vld [vmem:[%s312 + $0x1b90] sm:$0xff]
        %v1328 = vld [vmem:[%s312 + $0x1b98] sm:$0xff]
        %v1329 = vld [vmem:[%s312 + $0x1ba0] sm:$0xff]
        %v1330 = vld [vmem:[%s312 + $0x1ba8] sm:$0xff]
        %v1331 = vld [vmem:[%s312 + $0x1bb0] sm:$0xff]
        %v1332 = vld [vmem:[%s312 + $0x1bb8] sm:$0xff]
        %v1333 = vld [vmem:[%s312 + $0x1bc0] sm:$0xff]
        %v1334 = vld [vmem:[%s312 + $0x1bc8] sm:$0xff]
        %v1335 = vld [vmem:[%s312 + $0x1bd0] sm:$0xff]
        %v1336 = vld [vmem:[%s312 + $0x1bd8] sm:$0xff]
        %v1337 = vld [vmem:[%s312 + $0x1be0] sm:$0xff]
        %v1338 = vld [vmem:[%s312 + $0x1be8] sm:$0xff]
        %v1339 = vld [vmem:[%s312 + $0x1bf0] sm:$0xff]
        %v1340 = vld [vmem:[%s312 + $0x1bf8] sm:$0xff]
        %v1341 = vld [vmem:[%s312 + $0x1c00] sm:$0xff]
        %v1342 = vld [vmem:[%s312 + $0x1c08] sm:$0xff]
        %v1343 = vld [vmem:[%s312 + $0x1c10] sm:$0xff]
        %v1344 = vld [vmem:[%s312 + $0x1c18] sm:$0xff]
        %v1345 = vld [vmem:[%s312 + $0x1c20] sm:$0xff]
        %v1346 = vld [vmem:[%s312 + $0x1c28] sm:$0xff]
        %v1347 = vld [vmem:[%s312 + $0x1c30] sm:$0xff]
        %v1348 = vld [vmem:[%s312 + $0x1c38] sm:$0xff]
        %v1349 = vld [vmem:[%s312 + $0x1c40] sm:$0xff]
        %v1350 = vld [vmem:[%s312 + $0x1c48] sm:$0xff]
        %v1351 = vld [vmem:[%s312 + $0x1c50] sm:$0xff]
        %v1352 = vld [vmem:[%s312 + $0x1c58] sm:$0xff]
        %v1353 = vld [vmem:[%s312 + $0x1c60] sm:$0xff]
        %v1354 = vld [vmem:[%s312 + $0x1c68] sm:$0xff]
        %v1355 = vld [vmem:[%s312 + $0x1c70] sm:$0xff]
        %v1356 = vld [vmem:[%s312 + $0x1c78] sm:$0xff]
        %v1357 = vld [vmem:[%s312 + $0x1c80] sm:$0xff]
        %v1358 = vld [vmem:[%s312 + $0x1c88] sm:$0xff]
        %v1359 = vld [vmem:[%s312 + $0x1c90] sm:$0xff]
        %v1360 = vld [vmem:[%s312 + $0x1c98] sm:$0xff]
        %v1361 = vld [vmem:[%s312 + $0x1ca0] sm:$0xff]
        %v1362 = vld [vmem:[%s312 + $0x1ca8] sm:$0xff]
        %v1363 = vld [vmem:[%s312 + $0x1cb0] sm:$0xff]
        %v1364 = vld [vmem:[%s312 + $0x1cb8] sm:$0xff]
        %v1365 = vld [vmem:[%s312 + $0x1cc0] sm:$0xff]
        %v1366 = vld [vmem:[%s312 + $0x1cc8] sm:$0xff]
        %v1367 = vld [vmem:[%s312 + $0x1cd0] sm:$0xff]
        %v1368 = vld [vmem:[%s312 + $0x1cd8] sm:$0xff]
        %v1369 = vld [vmem:[%s312 + $0x1ce0] sm:$0xff]
        %v1370 = vld [vmem:[%s312 + $0x1ce8] sm:$0xff]
        %v1371 = vld [vmem:[%s312 + $0x1cf0] sm:$0xff]
        %v1372 = vld [vmem:[%s312 + $0x1cf8] sm:$0xff]
        %v1373 = vld [vmem:[%s312 + $0x1d00] sm:$0xff]
        %v1374 = vld [vmem:[%s312 + $0x1d08] sm:$0xff]
        %v1375 = vld [vmem:[%s312 + $0x1d10] sm:$0xff]
        %v1376 = vld [vmem:[%s312 + $0x1d18] sm:$0xff]
        %v1377 = vld [vmem:[%s312 + $0x1d20] sm:$0xff]
        %v1378 = vld [vmem:[%s312 + $0x1d28] sm:$0xff]
        %v1379 = vld [vmem:[%s312 + $0x1d30] sm:$0xff]
        %v1380 = vld [vmem:[%s312 + $0x1d38] sm:$0xff]
        %v1381 = vld [vmem:[%s312 + $0x1d40] sm:$0xff]
        %v1382 = vld [vmem:[%s312 + $0x1d48] sm:$0xff]
        %v1383 = vld [vmem:[%s312 + $0x1d50] sm:$0xff]
        %v1384 = vld [vmem:[%s312 + $0x1d58] sm:$0xff]
        %v1385 = vld [vmem:[%s312 + $0x1d60] sm:$0xff]
        %v1386 = vld [vmem:[%s312 + $0x1d68] sm:$0xff]
        %v1387 = vld [vmem:[%s312 + $0x1d70] sm:$0xff]
        %v1388 = vld [vmem:[%s312 + $0x1d78] sm:$0xff]
        %v1389 = vld [vmem:[%s312 + $0x1d80] sm:$0xff]
        %v1390 = vld [vmem:[%s312 + $0x1d88] sm:$0xff]
        %v1391 = vld [vmem:[%s312 + $0x1d90] sm:$0xff]
        %v1392 = vld [vmem:[%s312 + $0x1d98] sm:$0xff]
        %v1393 = vld [vmem:[%s312 + $0x1da0] sm:$0xff]
        %v1394 = vld [vmem:[%s312 + $0x1da8] sm:$0xff]
        %v1395 = vld [vmem:[%s312 + $0x1db0] sm:$0xff]
        %v1396 = vld [vmem:[%s312 + $0x1db8] sm:$0xff]
        %v1397 = vld [vmem:[%s312 + $0x1dc0] sm:$0xff]
        %v1398 = vld [vmem:[%s312 + $0x1dc8] sm:$0xff]
        %v1399 = vld [vmem:[%s312 + $0x1dd0] sm:$0xff]
        %v1400 = vld [vmem:[%s312 + $0x1dd8] sm:$0xff]
        %v1401 = vld [vmem:[%s312 + $0x1de0] sm:$0xff]
        %v1402 = vld [vmem:[%s312 + $0x1de8] sm:$0xff]
        %v1403 = vld [vmem:[%s312 + $0x1df0] sm:$0xff]
        %v1404 = vld [vmem:[%s312 + $0x1df8] sm:$0xff]
        %v1405 = vld [vmem:[%s312 + $0x1e00] sm:$0xff]
        %v1406 = vld [vmem:[%s312 + $0x1e08] sm:$0xff]
        %v1407 = vld [vmem:[%s312 + $0x1e10] sm:$0xff]
        %v1408 = vld [vmem:[%s312 + $0x1e18] sm:$0xff]
        %v1409 = vld [vmem:[%s312 + $0x1e20] sm:$0xff]
        %v1410 = vld [vmem:[%s312 + $0x1e28] sm:$0xff]
        %v1411 = vld [vmem:[%s312 + $0x1e30] sm:$0xff]
        %v1412 = vld [vmem:[%s312 + $0x1e38] sm:$0xff]
        %v1413 = vld [vmem:[%s312 + $0x1e40] sm:$0xff]
        %v1414 = vld [vmem:[%s312 + $0x1e48] sm:$0xff]
        %v1415 = vld [vmem:[%s312 + $0x1e50] sm:$0xff]
        %v1416 = vld [vmem:[%s312 + $0x1e58] sm:$0xff]
        %v1417 = vld [vmem:[%s312 + $0x1e60] sm:$0xff]
        %v1418 = vld [vmem:[%s312 + $0x1e68] sm:$0xff]
        %v1419 = vld [vmem:[%s312 + $0x1e70] sm:$0xff]
        %v1420 = vld [vmem:[%s312 + $0x1e78] sm:$0xff]
        %v1421 = vld [vmem:[%s312 + $0x1e80] sm:$0xff]
        %v1422 = vld [vmem:[%s312 + $0x1e88] sm:$0xff]
        %v1423 = vld [vmem:[%s312 + $0x1e90] sm:$0xff]
        %v1424 = vld [vmem:[%s312 + $0x1e98] sm:$0xff]
        %v1425 = vld [vmem:[%s312 + $0x1ea0] sm:$0xff]
        %v1426 = vld [vmem:[%s312 + $0x1ea8] sm:$0xff]
        %v1427 = vld [vmem:[%s312 + $0x1eb0] sm:$0xff]
        %v1428 = vld [vmem:[%s312 + $0x1eb8] sm:$0xff]
        %v1429 = vld [vmem:[%s312 + $0x1ec0] sm:$0xff]
        %v1430 = vld [vmem:[%s312 + $0x1ec8] sm:$0xff]
        %v1431 = vld [vmem:[%s312 + $0x1ed0] sm:$0xff]
        %v1432 = vld [vmem:[%s312 + $0x1ed8] sm:$0xff]
        %v1433 = vld [vmem:[%s312 + $0x1ee0] sm:$0xff]
        %v1434 = vld [vmem:[%s312 + $0x1ee8] sm:$0xff]
        %v1435 = vld [vmem:[%s312 + $0x1ef0] sm:$0xff]
        %v1436 = vld [vmem:[%s312 + $0x1ef8] sm:$0xff]
        %v1437 = vld [vmem:[%s312 + $0x1f00] sm:$0xff]
        %v1438 = vld [vmem:[%s312 + $0x1f08] sm:$0xff]
        %v1439 = vld [vmem:[%s312 + $0x1f10] sm:$0xff]
        %v1440 = vld [vmem:[%s312 + $0x1f18] sm:$0xff]
        %v1441 = vld [vmem:[%s312 + $0x1f20] sm:$0xff]
        %v1442 = vld [vmem:[%s312 + $0x1f28] sm:$0xff]
        %v1443 = vld [vmem:[%s312 + $0x1f30] sm:$0xff]
        %v1444 = vld [vmem:[%s312 + $0x1f38] sm:$0xff]
        %v1445 = vld [vmem:[%s312 + $0x1f40] sm:$0xff]
        %v1446 = vld [vmem:[%s312 + $0x1f48] sm:$0xff]
        %v1447 = vld [vmem:[%s312 + $0x1f50] sm:$0xff]
        %v1448 = vld [vmem:[%s312 + $0x1f58] sm:$0xff]
        %v1449 = vld [vmem:[%s312 + $0x1f60] sm:$0xff]
        %v1450 = vld [vmem:[%s312 + $0x1f68] sm:$0xff]
        %v1451 = vld [vmem:[%s312 + $0x1f70] sm:$0xff]
        %v1452 = vld [vmem:[%s312 + $0x1f78] sm:$0xff]
        %v1453 = vld [vmem:[%s312 + $0x1f80] sm:$0xff]
        %v1454 = vld [vmem:[%s312 + $0x1f88] sm:$0xff]
        %v1455 = vld [vmem:[%s312 + $0x1f90] sm:$0xff]
        %v1456 = vld [vmem:[%s312 + $0x1f98] sm:$0xff]
        %v1457 = vld [vmem:[%s312 + $0x1fa0] sm:$0xff]
        %v1458 = vld [vmem:[%s312 + $0x1fa8] sm:$0xff]
        %v1459 = vld [vmem:[%s312 + $0x1fb0] sm:$0xff]
        %v1460 = vld [vmem:[%s312 + $0x1fb8] sm:$0xff]
        %v1461 = vld [vmem:[%s312 + $0x1fc0] sm:$0xff]
        %v1462 = vld [vmem:[%s312 + $0x1fc8] sm:$0xff]
        %v1463 = vld [vmem:[%s312 + $0x1fd0] sm:$0xff]
        %v1464 = vld [vmem:[%s312 + $0x1fd8] sm:$0xff]
        %v1465 = vld [vmem:[%s312 + $0x1fe0] sm:$0xff]
        %v1466 = vld [vmem:[%s312 + $0x1fe8] sm:$0xff]
        %v1467 = vld [vmem:[%s312 + $0x1ff0] sm:$0xff]
        %v1468 = vld [vmem:[%s312 + $0x1ff8] sm:$0xff]
        %v1469 = vld [vmem:[%s312 + $0x2000] sm:$0xff]
        %v1470 = vld [vmem:[%s312 + $0x2008] sm:$0xff]
        %v1471 = vld [vmem:[%s312 + $0x2010] sm:$0xff]
        %v1472 = vld [vmem:[%s312 + $0x2018] sm:$0xff]
        %v1473 = vld [vmem:[%s312 + $0x2020] sm:$0xff]
        %v1474 = vld [vmem:[%s312 + $0x2028] sm:$0xff]
        %v1475 = vld [vmem:[%s312 + $0x2030] sm:$0xff]
        %v1476 = vld [vmem:[%s312 + $0x2038] sm:$0xff]
        %v1477 = vld [vmem:[%s312 + $0x2040] sm:$0xff]
        %v1478 = vld [vmem:[%s312 + $0x2048] sm:$0xff]
        %v1479 = vld [vmem:[%s312 + $0x2050] sm:$0xff]
        %v1480 = vld [vmem:[%s312 + $0x2058] sm:$0xff]
        %v1481 = vld [vmem:[%s312 + $0x2060] sm:$0xff]
        %v1482 = vld [vmem:[%s312 + $0x2068] sm:$0xff]
        %v1483 = vld [vmem:[%s312 + $0x2070] sm:$0xff]
        %v1484 = vld [vmem:[%s312 + $0x2078] sm:$0xff]
        %v1485 = vld [vmem:[%s312 + $0x2080] sm:$0xff]
        %v1486 = vld [vmem:[%s312 + $0x2088] sm:$0xff]
        %v1487 = vld [vmem:[%s312 + $0x2090] sm:$0xff]
        %v1488 = vld [vmem:[%s312 + $0x2098] sm:$0xff]
        %v1489 = vld [vmem:[%s312 + $0x20a0] sm:$0xff]
        %v1490 = vld [vmem:[%s312 + $0x20a8] sm:$0xff]
        %v1491 = vld [vmem:[%s312 + $0x20b0] sm:$0xff]
        %v1492 = vld [vmem:[%s312 + $0x20b8] sm:$0xff]
        %v1493 = vld [vmem:[%s312 + $0x20c0] sm:$0xff]
        %v1494 = vld [vmem:[%s312 + $0x20c8] sm:$0xff]
        %v1495 = vld [vmem:[%s312 + $0x20d0] sm:$0xff]
        %v1496 = vld [vmem:[%s312 + $0x20d8] sm:$0xff]
        %v1497 = vld [vmem:[%s312 + $0x20e0] sm:$0xff]
        %v1498 = vld [vmem:[%s312 + $0x20e8] sm:$0xff]
        %v1499 = vld [vmem:[%s312 + $0x20f0] sm:$0xff]
        %v1500 = vld [vmem:[%s312 + $0x20f8] sm:$0xff]
        %v1501 = vld [vmem:[%s312 + $0x2100] sm:$0xff]
        %v1502 = vld [vmem:[%s312 + $0x2108] sm:$0xff]
        %v1503 = vld [vmem:[%s312 + $0x2110] sm:$0xff]
        %v1504 = vld [vmem:[%s312 + $0x2118] sm:$0xff]
        %v1505 = vld [vmem:[%s312 + $0x2120] sm:$0xff]
        %v1506 = vld [vmem:[%s312 + $0x2128] sm:$0xff]
        %v1507 = vld [vmem:[%s312 + $0x2130] sm:$0xff]
        %v1508 = vld [vmem:[%s312 + $0x2138] sm:$0xff]
        %v1509 = vld [vmem:[%s312 + $0x2140] sm:$0xff]
        %v1510 = vld [vmem:[%s312 + $0x2148] sm:$0xff]
        %v1511 = vld [vmem:[%s312 + $0x2150] sm:$0xff]
        %v1512 = vld [vmem:[%s312 + $0x2158] sm:$0xff]
        %v1513 = vld [vmem:[%s312 + $0x2160] sm:$0xff]
        %v1514 = vld [vmem:[%s312 + $0x2168] sm:$0xff]
        %v1515 = vld [vmem:[%s312 + $0x2170] sm:$0xff]
        %v1516 = vld [vmem:[%s312 + $0x2178] sm:$0xff]
        %v1517 = vld [vmem:[%s312 + $0x2180] sm:$0xff]
        %v1518 = vld [vmem:[%s312 + $0x2188] sm:$0xff]
        %v1519 = vld [vmem:[%s312 + $0x2190] sm:$0xff]
        %v1520 = vld [vmem:[%s312 + $0x2198] sm:$0xff]
        %v1521 = vld [vmem:[%s312 + $0x21a0] sm:$0xff]
        %v1522 = vld [vmem:[%s312 + $0x21a8] sm:$0xff]
        %v1523 = vld [vmem:[%s312 + $0x21b0] sm:$0xff]
        %v1524 = vld [vmem:[%s312 + $0x21b8] sm:$0xff]
        %v1525 = vld [vmem:[%s312 + $0x21c0] sm:$0xff]
        %v1526 = vld [vmem:[%s312 + $0x21c8] sm:$0xff]
        %v1527 = vld [vmem:[%s312 + $0x21d0] sm:$0xff]
        %v1528 = vld [vmem:[%s312 + $0x21d8] sm:$0xff]
        %v1529 = vld [vmem:[%s312 + $0x21e0] sm:$0xff]
        %v1530 = vld [vmem:[%s312 + $0x21e8] sm:$0xff]
        %v1531 = vld [vmem:[%s312 + $0x21f0] sm:$0xff]
        %v1532 = vld [vmem:[%s312 + $0x21f8] sm:$0xff]
        %v1533 = vld [vmem:[%s312 + $0x2200] sm:$0xff]
        %v1534 = vld [vmem:[%s312 + $0x2208] sm:$0xff]
        %v1535 = vld [vmem:[%s312 + $0x2210] sm:$0xff]
        %v1536 = vld [vmem:[%s312 + $0x2218] sm:$0xff]
        %v1537 = vld [vmem:[%s312 + $0x2220] sm:$0xff]
        %v1538 = vld [vmem:[%s312 + $0x2228] sm:$0xff]
        %v1539 = vld [vmem:[%s312 + $0x2230] sm:$0xff]
        %v1540 = vld [vmem:[%s312 + $0x2238] sm:$0xff]
        %v1541 = vld [vmem:[%s312 + $0x2240] sm:$0xff]
        %v1542 = vld [vmem:[%s312 + $0x2248] sm:$0xff]
        %v1543 = vld [vmem:[%s312 + $0x2250] sm:$0xff]
        %v1544 = vld [vmem:[%s312 + $0x2258] sm:$0xff]
        %v1545 = vld [vmem:[%s312 + $0x2260] sm:$0xff]
        %v1546 = vld [vmem:[%s312 + $0x2268] sm:$0xff]
        %v1547 = vld [vmem:[%s312 + $0x2270] sm:$0xff]
        %v1548 = vld [vmem:[%s312 + $0x2278] sm:$0xff]
        %v1549 = vld [vmem:[%s312 + $0x2280] sm:$0xff]
        %v1550 = vld [vmem:[%s312 + $0x2288] sm:$0xff]
        %v1551 = vld [vmem:[%s312 + $0x2290] sm:$0xff]
        %v1552 = vld [vmem:[%s312 + $0x2298] sm:$0xff]
        %v1553 = vld [vmem:[%s312 + $0x22a0] sm:$0xff]
        %v1554 = vld [vmem:[%s312 + $0x22a8] sm:$0xff]
        %v1555 = vld [vmem:[%s312 + $0x22b0] sm:$0xff]
        %v1556 = vld [vmem:[%s312 + $0x22b8] sm:$0xff]
        %v1557 = vld [vmem:[%s312 + $0x22c0] sm:$0xff]
        %v1558 = vld [vmem:[%s312 + $0x22c8] sm:$0xff]
        %v1559 = vld [vmem:[%s312 + $0x22d0] sm:$0xff]
        %v1560 = vld [vmem:[%s312 + $0x22d8] sm:$0xff]
        %v1561 = vld [vmem:[%s312 + $0x22e0] sm:$0xff]
        %v1562 = vld [vmem:[%s312 + $0x22e8] sm:$0xff]
        %v1563 = vld [vmem:[%s312 + $0x22f0] sm:$0xff]
        %v1564 = vld [vmem:[%s312 + $0x22f8] sm:$0xff]
        %v1565 = vld [vmem:[%s312 + $0x2300] sm:$0xff]
        %v1566 = vld [vmem:[%s312 + $0x2308] sm:$0xff]
        %v1567 = vld [vmem:[%s312 + $0x2310] sm:$0xff]
        %v1568 = vld [vmem:[%s312 + $0x2318] sm:$0xff]
        %v1569 = vld [vmem:[%s312 + $0x2320] sm:$0xff]
        %v1570 = vld [vmem:[%s312 + $0x2328] sm:$0xff]
        %v1571 = vld [vmem:[%s312 + $0x2330] sm:$0xff]
        %v1572 = vld [vmem:[%s312 + $0x2338] sm:$0xff]
        %v1573 = vld [vmem:[%s312 + $0x2340] sm:$0xff]
        %v1574 = vld [vmem:[%s312 + $0x2348] sm:$0xff]
        %v1575 = vld [vmem:[%s312 + $0x2350] sm:$0xff]
        %v1576 = vld [vmem:[%s312 + $0x2358] sm:$0xff]
        %v1577 = vld [vmem:[%s312 + $0x2360] sm:$0xff]
        %v1578 = vld [vmem:[%s312 + $0x2368] sm:$0xff]
        %v1579 = vld [vmem:[%s312 + $0x2370] sm:$0xff]
        %v1580 = vld [vmem:[%s312 + $0x2378] sm:$0xff]
        %v1581 = vld [vmem:[%s312 + $0x2380] sm:$0xff]
        %v1582 = vld [vmem:[%s312 + $0x2388] sm:$0xff]
        %v1583 = vld [vmem:[%s312 + $0x2390] sm:$0xff]
        %v1584 = vld [vmem:[%s312 + $0x2398] sm:$0xff]
        %v1585 = vld [vmem:[%s312 + $0x23a0] sm:$0xff]
        %v1586 = vld [vmem:[%s312 + $0x23a8] sm:$0xff]
        %v1587 = vld [vmem:[%s312 + $0x23b0] sm:$0xff]
        %v1588 = vld [vmem:[%s312 + $0x23b8] sm:$0xff]
        %v1589 = vld [vmem:[%s312 + $0x23c0] sm:$0xff]
        %v1590 = vld [vmem:[%s312 + $0x23c8] sm:$0xff]
        %v1591 = vld [vmem:[%s312 + $0x23d0] sm:$0xff]
        %v1592 = vld [vmem:[%s312 + $0x23d8] sm:$0xff]
        %v1593 = vld [vmem:[%s312 + $0x23e0] sm:$0xff]
        %v1594 = vld [vmem:[%s312 + $0x23e8] sm:$0xff]
        %v1595 = vld [vmem:[%s312 + $0x23f0] sm:$0xff]
        %v1596 = vld [vmem:[%s312 + $0x23f8] sm:$0xff]
        %v1597 = vld [vmem:[%s312 + $0x2400] sm:$0xff]
        %v1598 = vld [vmem:[%s312 + $0x2408] sm:$0xff]
        %v1599 = vld [vmem:[%s312 + $0x2410] sm:$0xff]
        %v1600 = vld [vmem:[%s312 + $0x2418] sm:$0xff]
        %v1601 = vld [vmem:[%s312 + $0x2420] sm:$0xff]
        %v1602 = vld [vmem:[%s312 + $0x2428] sm:$0xff]
        %v1603 = vld [vmem:[%s312 + $0x2430] sm:$0xff]
        %v1604 = vld [vmem:[%s312 + $0x2438] sm:$0xff]
        %v1605 = vld [vmem:[%s312 + $0x2440] sm:$0xff]
        %v1606 = vld [vmem:[%s312 + $0x2448] sm:$0xff]
        %v1607 = vld [vmem:[%s312 + $0x2450] sm:$0xff]
        %v1608 = vld [vmem:[%s312 + $0x2458] sm:$0xff]
        %v1609 = vld [vmem:[%s312 + $0x2460] sm:$0xff]
        %v1610 = vld [vmem:[%s312 + $0x2468] sm:$0xff]
        %v1611 = vld [vmem:[%s312 + $0x2470] sm:$0xff]
        %v1612 = vld [vmem:[%s312 + $0x2478] sm:$0xff]
        %v1613 = vld [vmem:[%s312 + $0x2480] sm:$0xff]
        %v1614 = vld [vmem:[%s312 + $0x2488] sm:$0xff]
        %v1615 = vld [vmem:[%s312 + $0x2490] sm:$0xff]
        %v1616 = vld [vmem:[%s312 + $0x2498] sm:$0xff]
        %v1617 = vld [vmem:[%s312 + $0x24a0] sm:$0xff]
        %v1618 = vld [vmem:[%s312 + $0x24a8] sm:$0xff]
        %v1619 = vld [vmem:[%s312 + $0x24b0] sm:$0xff]
        %v1620 = vld [vmem:[%s312 + $0x24b8] sm:$0xff]
        %v1621 = vld [vmem:[%s312 + $0x24c0] sm:$0xff]
        %v1622 = vld [vmem:[%s312 + $0x24c8] sm:$0xff]
        %v1623 = vld [vmem:[%s312 + $0x24d0] sm:$0xff]
        %v1624 = vld [vmem:[%s312 + $0x24d8] sm:$0xff]
        %v1625 = vld [vmem:[%s312 + $0x24e0] sm:$0xff]
        %v1626 = vld [vmem:[%s312 + $0x24e8] sm:$0xff]
        %v1627 = vld [vmem:[%s312 + $0x24f0] sm:$0xff]
        %v1628 = vld [vmem:[%s312 + $0x24f8] sm:$0xff]
        %v1629 = vld [vmem:[%s312 + $0x2500] sm:$0xff]
        %v1630 = vld [vmem:[%s312 + $0x2508] sm:$0xff]
        %v1631 = vld [vmem:[%s312 + $0x2510] sm:$0xff]
        %v1632 = vld [vmem:[%s312 + $0x2518] sm:$0xff]
        %v1633 = vld [vmem:[%s312 + $0x2520] sm:$0xff]
        %v1634 = vld [vmem:[%s312 + $0x2528] sm:$0xff]
        %v1635 = vld [vmem:[%s312 + $0x2530] sm:$0xff]
        %v1636 = vld [vmem:[%s312 + $0x2538] sm:$0xff]
        %v1637 = vld [vmem:[%s312 + $0x2540] sm:$0xff]
        %v1638 = vld [vmem:[%s312 + $0x2548] sm:$0xff]
        %v1639 = vld [vmem:[%s312 + $0x2550] sm:$0xff]
        %v1640 = vld [vmem:[%s312 + $0x2558] sm:$0xff]
        %v1641 = vld [vmem:[%s312 + $0x2560] sm:$0xff]
        %v1642 = vld [vmem:[%s312 + $0x2568] sm:$0xff]
        %v1643 = vld [vmem:[%s312 + $0x2570] sm:$0xff]
        %v1644 = vld [vmem:[%s312 + $0x2578] sm:$0xff]
        %v1645 = vld [vmem:[%s312 + $0x2580] sm:$0xff]
        %v1646 = vld [vmem:[%s312 + $0x2588] sm:$0xff]
        %v1647 = vld [vmem:[%s312 + $0x2590] sm:$0xff]
        %v1648 = vld [vmem:[%s312 + $0x2598] sm:$0xff]
        %v1649 = vld [vmem:[%s312 + $0x25a0] sm:$0xff]
        %v1650 = vld [vmem:[%s312 + $0x25a8] sm:$0xff]
        %v1651 = vld [vmem:[%s312 + $0x25b0] sm:$0xff]
        %v1652 = vld [vmem:[%s312 + $0x25b8] sm:$0xff]
        %v1653 = vld [vmem:[%s312 + $0x25c0] sm:$0xff]
        %v1654 = vld [vmem:[%s312 + $0x25c8] sm:$0xff]
        %v1655 = vld [vmem:[%s312 + $0x25d0] sm:$0xff]
        %v1656 = vld [vmem:[%s312 + $0x25d8] sm:$0xff]
        %v1657 = vld [vmem:[%s312 + $0x25e0] sm:$0xff]
        %v1658 = vld [vmem:[%s312 + $0x25e8] sm:$0xff]
        %v1659 = vld [vmem:[%s312 + $0x25f0] sm:$0xff]
        %v1660 = vld [vmem:[%s312 + $0x25f8] sm:$0xff]
        %v1661 = vld [vmem:[%s312 + $0x2600] sm:$0xff]
        %v1662 = vld [vmem:[%s312 + $0x2608] sm:$0xff]
        %v1663 = vld [vmem:[%s312 + $0x2610] sm:$0xff]
        %v1664 = vld [vmem:[%s312 + $0x2618] sm:$0xff]
        %v1665 = vld [vmem:[%s312 + $0x2620] sm:$0xff]
        %v1666 = vld [vmem:[%s312 + $0x2628] sm:$0xff]
        %v1667 = vld [vmem:[%s312 + $0x2630] sm:$0xff]
        %v1668 = vld [vmem:[%s312 + $0x2638] sm:$0xff]
        %v1669 = vld [vmem:[%s312 + $0x2640] sm:$0xff]
        %v1670 = vld [vmem:[%s312 + $0x2648] sm:$0xff]
        %v1671 = vld [vmem:[%s312 + $0x2650] sm:$0xff]
        %v1672 = vld [vmem:[%s312 + $0x2658] sm:$0xff]
        %v1673 = vld [vmem:[%s312 + $0x2660] sm:$0xff]
        %v1674 = vld [vmem:[%s312 + $0x2668] sm:$0xff]
        %v1675 = vld [vmem:[%s312 + $0x2670] sm:$0xff]
        %v1676 = vld [vmem:[%s312 + $0x2678] sm:$0xff]
        %v1677 = vld [vmem:[%s312 + $0x2680] sm:$0xff]
        %v1678 = vld [vmem:[%s312 + $0x2688] sm:$0xff]
        %v1679 = vld [vmem:[%s312 + $0x2690] sm:$0xff]
        %v1680 = vld [vmem:[%s312 + $0x2698] sm:$0xff]
        %v1681 = vld [vmem:[%s312 + $0x26a0] sm:$0xff]
        %v1682 = vld [vmem:[%s312 + $0x26a8] sm:$0xff]
        %v1683 = vld [vmem:[%s312 + $0x26b0] sm:$0xff]
        %v1684 = vld [vmem:[%s312 + $0x26b8] sm:$0xff]
        %v1685 = vld [vmem:[%s312 + $0x26c0] sm:$0xff]
        %v1686 = vld [vmem:[%s312 + $0x26c8] sm:$0xff]
        %v1687 = vld [vmem:[%s312 + $0x26d0] sm:$0xff]
        %v1688 = vld [vmem:[%s312 + $0x26d8] sm:$0xff]
        %v1689 = vld [vmem:[%s312 + $0x26e0] sm:$0xff]
        %v1690 = vld [vmem:[%s312 + $0x26e8] sm:$0xff]
        %v1691 = vld [vmem:[%s312 + $0x26f0] sm:$0xff]
        %v1692 = vld [vmem:[%s312 + $0x26f8] sm:$0xff]
        %v1693 = vld [vmem:[%s312 + $0x2700] sm:$0xff]
        %v1694 = vld [vmem:[%s312 + $0x2708] sm:$0xff]
        %v1695 = vld [vmem:[%s312 + $0x2710] sm:$0xff]
        %v1696 = vld [vmem:[%s312 + $0x2718] sm:$0xff]
        %v1697 = vld [vmem:[%s312 + $0x2720] sm:$0xff]
        %v1698 = vld [vmem:[%s312 + $0x2728] sm:$0xff]
        %v1699 = vld [vmem:[%s312 + $0x2730] sm:$0xff]
        %v1700 = vld [vmem:[%s312 + $0x2738] sm:$0xff]
        %v1701 = vld [vmem:[%s312 + $0x2740] sm:$0xff]
        %v1702 = vld [vmem:[%s312 + $0x2748] sm:$0xff]
        %v1703 = vld [vmem:[%s312 + $0x2750] sm:$0xff]
        %v1704 = vld [vmem:[%s312 + $0x2758] sm:$0xff]
        %v1705 = vld [vmem:[%s312 + $0x2760] sm:$0xff]
        %v1706 = vld [vmem:[%s312 + $0x2768] sm:$0xff]
        %v1707 = vld [vmem:[%s312 + $0x2770] sm:$0xff]
        %v1708 = vld [vmem:[%s312 + $0x2778] sm:$0xff]
        %v1709 = vld [vmem:[%s312 + $0x2780] sm:$0xff]
        %v1710 = vld [vmem:[%s312 + $0x2788] sm:$0xff]
        %v1711 = vld [vmem:[%s312 + $0x2790] sm:$0xff]
        %v1712 = vld [vmem:[%s312 + $0x2798] sm:$0xff]
        %v1713 = vld [vmem:[%s312 + $0x27a0] sm:$0xff]
        %v1714 = vld [vmem:[%s312 + $0x27a8] sm:$0xff]
        %v1715 = vld [vmem:[%s312 + $0x27b0] sm:$0xff]
        %v1716 = vld [vmem:[%s312 + $0x27b8] sm:$0xff]
        %v1717 = vld [vmem:[%s312 + $0x27c0] sm:$0xff]
        %v1718 = vld [vmem:[%s312 + $0x27c8] sm:$0xff]
        %v1719 = vld [vmem:[%s312 + $0x27d0] sm:$0xff]
        %v1720 = vld [vmem:[%s312 + $0x27d8] sm:$0xff]
        %v1721 = vld [vmem:[%s312 + $0x27e0] sm:$0xff]
        %v1722 = vld [vmem:[%s312 + $0x27e8] sm:$0xff]
        %v1723 = vld [vmem:[%s312 + $0x27f0] sm:$0xff]
        %v1724 = vld [vmem:[%s312 + $0x27f8] sm:$0xff]
        %v1725 = vld [vmem:[%s312 + $0x2800] sm:$0xff]
        %v1726 = vld [vmem:[%s312 + $0x2808] sm:$0xff]
        %v1727 = vld [vmem:[%s312 + $0x2810] sm:$0xff]
        %v1728 = vld [vmem:[%s312 + $0x2818] sm:$0xff]
        %v1729 = vld [vmem:[%s312 + $0x2820] sm:$0xff]
        %v1730 = vld [vmem:[%s312 + $0x2828] sm:$0xff]
        %v1731 = vld [vmem:[%s312 + $0x2830] sm:$0xff]
        %v1732 = vld [vmem:[%s312 + $0x2838] sm:$0xff]
        %v1733 = vld [vmem:[%s312 + $0x2840] sm:$0xff]
        %v1734 = vld [vmem:[%s312 + $0x2848] sm:$0xff]
        %v1735 = vld [vmem:[%s312 + $0x2850] sm:$0xff]
        %v1736 = vld [vmem:[%s312 + $0x2858] sm:$0xff]
        %v1737 = vld [vmem:[%s312 + $0x2860] sm:$0xff]
        %v1738 = vld [vmem:[%s312 + $0x2868] sm:$0xff]
        %v1739 = vld [vmem:[%s312 + $0x2870] sm:$0xff]
        %v1740 = vld [vmem:[%s312 + $0x2878] sm:$0xff]
        %v1741 = vld [vmem:[%s312 + $0x2880] sm:$0xff]
        %v1742 = vld [vmem:[%s312 + $0x2888] sm:$0xff]
        %v1743 = vld [vmem:[%s312 + $0x2890] sm:$0xff]
        %v1744 = vld [vmem:[%s312 + $0x2898] sm:$0xff]
        %v1745 = vld [vmem:[%s312 + $0x28a0] sm:$0xff]
        %v1746 = vld [vmem:[%s312 + $0x28a8] sm:$0xff]
        %v1747 = vld [vmem:[%s312 + $0x28b0] sm:$0xff]
        %v1748 = vld [vmem:[%s312 + $0x28b8] sm:$0xff]
        %v1749 = vld [vmem:[%s312 + $0x28c0] sm:$0xff]
        %v1750 = vld [vmem:[%s312 + $0x28c8] sm:$0xff]
        %v1751 = vld [vmem:[%s312 + $0x28d0] sm:$0xff]
        %v1752 = vld [vmem:[%s312 + $0x28d8] sm:$0xff]
        %v1753 = vld [vmem:[%s312 + $0x28e0] sm:$0xff]
        %v1754 = vld [vmem:[%s312 + $0x28e8] sm:$0xff]
        %v1755 = vld [vmem:[%s312 + $0x28f0] sm:$0xff]
        %v1756 = vld [vmem:[%s312 + $0x28f8] sm:$0xff]
        %v1757 = vld [vmem:[%s312 + $0x2900] sm:$0xff]
        %v1758 = vld [vmem:[%s312 + $0x2908] sm:$0xff]
        %v1759 = vld [vmem:[%s312 + $0x2910] sm:$0xff]
        %v1760 = vld [vmem:[%s312 + $0x2918] sm:$0xff]
        %v1761 = vld [vmem:[%s312 + $0x2920] sm:$0xff]
        %v1762 = vld [vmem:[%s312 + $0x2928] sm:$0xff]
        %v1763 = vld [vmem:[%s312 + $0x2930] sm:$0xff]
        %v1764 = vld [vmem:[%s312 + $0x2938] sm:$0xff]
        %v1765 = vld [vmem:[%s312 + $0x2940] sm:$0xff]
        %v1766 = vld [vmem:[%s312 + $0x2948] sm:$0xff]
        %v1767 = vld [vmem:[%s312 + $0x2950] sm:$0xff]
        %v1768 = vld [vmem:[%s312 + $0x2958] sm:$0xff]
        %v1769 = vld [vmem:[%s312 + $0x2960] sm:$0xff]
        %v1770 = vld [vmem:[%s312 + $0x2968] sm:$0xff]
        %v1771 = vld [vmem:[%s312 + $0x2970] sm:$0xff]
        %v1772 = vld [vmem:[%s312 + $0x2978] sm:$0xff]
        %v1773 = vld [vmem:[%s312 + $0x2980] sm:$0xff]
        %v1774 = vld [vmem:[%s312 + $0x2988] sm:$0xff]
        %v1775 = vld [vmem:[%s312 + $0x2990] sm:$0xff]
        %v1776 = vld [vmem:[%s312 + $0x2998] sm:$0xff]
        %v1777 = vld [vmem:[%s312 + $0x29a0] sm:$0xff]
        %v1778 = vld [vmem:[%s312 + $0x29a8] sm:$0xff]
        %v1779 = vld [vmem:[%s312 + $0x29b0] sm:$0xff]
        %v1780 = vld [vmem:[%s312 + $0x29b8] sm:$0xff]
        %v1781 = vld [vmem:[%s312 + $0x29c0] sm:$0xff]
        %v1782 = vld [vmem:[%s312 + $0x29c8] sm:$0xff]
        %v1783 = vld [vmem:[%s312 + $0x29d0] sm:$0xff]
        %v1784 = vld [vmem:[%s312 + $0x29d8] sm:$0xff]
        %v1785 = vld [vmem:[%s312 + $0x29e0] sm:$0xff]
        %v1786 = vld [vmem:[%s312 + $0x29e8] sm:$0xff]
        %v1787 = vld [vmem:[%s312 + $0x29f0] sm:$0xff]
        %v1788 = vld [vmem:[%s312 + $0x29f8] sm:$0xff]
        %v1789 = vld [vmem:[%s312 + $0x2a00] sm:$0xff]
        %v1790 = vld [vmem:[%s312 + $0x2a08] sm:$0xff]
        %v1791 = vld [vmem:[%s312 + $0x2a10] sm:$0xff]
        %v1792 = vld [vmem:[%s312 + $0x2a18] sm:$0xff]
        %v1793 = vld [vmem:[%s312 + $0x2a20] sm:$0xff]
        %v1794 = vld [vmem:[%s312 + $0x2a28] sm:$0xff]
        %v1795 = vld [vmem:[%s312 + $0x2a30] sm:$0xff]
        %v1796 = vld [vmem:[%s312 + $0x2a38] sm:$0xff]
        %v1797 = vld [vmem:[%s312 + $0x2a40] sm:$0xff]
        %v1798 = vld [vmem:[%s312 + $0x2a48] sm:$0xff]
        %v1799 = vld [vmem:[%s312 + $0x2a50] sm:$0xff]
        %v1800 = vld [vmem:[%s312 + $0x2a58] sm:$0xff]
        %v1801 = vld [vmem:[%s312 + $0x2a60] sm:$0xff]
        %v1802 = vld [vmem:[%s312 + $0x2a68] sm:$0xff]
        %v1803 = vld [vmem:[%s312 + $0x2a70] sm:$0xff]
        %v1804 = vld [vmem:[%s312 + $0x2a78] sm:$0xff]
        %v1805 = vld [vmem:[%s312 + $0x2a80] sm:$0xff]
        %v1806 = vld [vmem:[%s312 + $0x2a88] sm:$0xff]
        %v1807 = vld [vmem:[%s312 + $0x2a90] sm:$0xff]
        %v1808 = vld [vmem:[%s312 + $0x2a98] sm:$0xff]
        %v1809 = vld [vmem:[%s312 + $0x2aa0] sm:$0xff]
        %v1810 = vld [vmem:[%s312 + $0x2aa8] sm:$0xff]
        %v1811 = vld [vmem:[%s312 + $0x2ab0] sm:$0xff]
        %v1812 = vld [vmem:[%s312 + $0x2ab8] sm:$0xff]
        %v1813 = vld [vmem:[%s312 + $0x2ac0] sm:$0xff]
        %v1814 = vld [vmem:[%s312 + $0x2ac8] sm:$0xff]
        %v1815 = vld [vmem:[%s312 + $0x2ad0] sm:$0xff]
        %v1816 = vld [vmem:[%s312 + $0x2ad8] sm:$0xff]
        %v1817 = vld [vmem:[%s312 + $0x2ae0] sm:$0xff]
        %v1818 = vld [vmem:[%s312 + $0x2ae8] sm:$0xff]
        %v1819 = vld [vmem:[%s312 + $0x2af0] sm:$0xff]
        %v1820 = vld [vmem:[%s312 + $0x2af8] sm:$0xff]
        %v1821 = vld [vmem:[%s312 + $0x2b00] sm:$0xff]
        %v1822 = vld [vmem:[%s312 + $0x2b08] sm:$0xff]
        %v1823 = vld [vmem:[%s312 + $0x2b10] sm:$0xff]
        %v1824 = vld [vmem:[%s312 + $0x2b18] sm:$0xff]
        %v1825 = vld [vmem:[%s312 + $0x2b20] sm:$0xff]
        %v1826 = vld [vmem:[%s312 + $0x2b28] sm:$0xff]
        %v1827 = vld [vmem:[%s312 + $0x2b30] sm:$0xff]
        %v1828 = vld [vmem:[%s312 + $0x2b38] sm:$0xff]
        %v1829 = vld [vmem:[%s312 + $0x2b40] sm:$0xff]
        %v1830 = vld [vmem:[%s312 + $0x2b48] sm:$0xff]
        %v1831 = vld [vmem:[%s312 + $0x2b50] sm:$0xff]
        %v1832 = vld [vmem:[%s312 + $0x2b58] sm:$0xff]
        %v1833 = vld [vmem:[%s312 + $0x2b60] sm:$0xff]
        %v1834 = vld [vmem:[%s312 + $0x2b68] sm:$0xff]
        %v1835 = vld [vmem:[%s312 + $0x2b70] sm:$0xff]
        %v1836 = vld [vmem:[%s312 + $0x2b78] sm:$0xff]
        %v1837 = vld [vmem:[%s312 + $0x2b80] sm:$0xff]
        %v1838 = vld [vmem:[%s312 + $0x2b88] sm:$0xff]
        %v1839 = vld [vmem:[%s312 + $0x2b90] sm:$0xff]
        %v1840 = vld [vmem:[%s312 + $0x2b98] sm:$0xff]
        %v1841 = vld [vmem:[%s312 + $0x2ba0] sm:$0xff]
        %v1842 = vld [vmem:[%s312 + $0x2ba8] sm:$0xff]
        %v1843 = vld [vmem:[%s312 + $0x2bb0] sm:$0xff]
        %v1844 = vld [vmem:[%s312 + $0x2bb8] sm:$0xff]
        %v1845 = vld [vmem:[%s312 + $0x2bc0] sm:$0xff]
        %v1846 = vld [vmem:[%s312 + $0x2bc8] sm:$0xff]
        %v1847 = vld [vmem:[%s312 + $0x2bd0] sm:$0xff]
        %v1848 = vld [vmem:[%s312 + $0x2bd8] sm:$0xff]
        %v1849 = vld [vmem:[%s312 + $0x2be0] sm:$0xff]
        %v1850 = vld [vmem:[%s312 + $0x2be8] sm:$0xff]
        %v1851 = vld [vmem:[%s312 + $0x2bf0] sm:$0xff]
        %v1852 = vld [vmem:[%s312 + $0x2bf8] sm:$0xff]
        %v1853 = vld [vmem:[%s312 + $0x2c00] sm:$0xff]
        %v1854 = vld [vmem:[%s312 + $0x2c08] sm:$0xff]
        %v1855 = vld [vmem:[%s312 + $0x2c10] sm:$0xff]
        %v1856 = vld [vmem:[%s312 + $0x2c18] sm:$0xff]
        %v1857 = vld [vmem:[%s312 + $0x2c20] sm:$0xff]
        %v1858 = vld [vmem:[%s312 + $0x2c28] sm:$0xff]
        %v1859 = vld [vmem:[%s312 + $0x2c30] sm:$0xff]
        %v1860 = vld [vmem:[%s312 + $0x2c38] sm:$0xff]
        %v1861 = vld [vmem:[%s312 + $0x2c40] sm:$0xff]
        %v1862 = vld [vmem:[%s312 + $0x2c48] sm:$0xff]
        %v1863 = vld [vmem:[%s312 + $0x2c50] sm:$0xff]
        %v1864 = vld [vmem:[%s312 + $0x2c58] sm:$0xff]
        %v1865 = vld [vmem:[%s312 + $0x2c60] sm:$0xff]
        %v1866 = vld [vmem:[%s312 + $0x2c68] sm:$0xff]
        %v1867 = vld [vmem:[%s312 + $0x2c70] sm:$0xff]
        %v1868 = vld [vmem:[%s312 + $0x2c78] sm:$0xff]
        %v1869 = vld [vmem:[%s312 + $0x2c80] sm:$0xff]
        %v1870 = vld [vmem:[%s312 + $0x2c88] sm:$0xff]
        %v1871 = vld [vmem:[%s312 + $0x2c90] sm:$0xff]
        %v1872 = vld [vmem:[%s312 + $0x2c98] sm:$0xff]
        %v1873 = vld [vmem:[%s312 + $0x2ca0] sm:$0xff]
        %v1874 = vld [vmem:[%s312 + $0x2ca8] sm:$0xff]
        %v1875 = vld [vmem:[%s312 + $0x2cb0] sm:$0xff]
        %v1876 = vld [vmem:[%s312 + $0x2cb8] sm:$0xff]
        %v1877 = vld [vmem:[%s312 + $0x2cc0] sm:$0xff]
        %v1878 = vld [vmem:[%s312 + $0x2cc8] sm:$0xff]
        %v1879 = vld [vmem:[%s312 + $0x2cd0] sm:$0xff]
        %v1880 = vld [vmem:[%s312 + $0x2cd8] sm:$0xff]
        %v1881 = vld [vmem:[%s312 + $0x2ce0] sm:$0xff]
        %v1882 = vld [vmem:[%s312 + $0x2ce8] sm:$0xff]
        %v1883 = vld [vmem:[%s312 + $0x2cf0] sm:$0xff]
        %v1884 = vld [vmem:[%s312 + $0x2cf8] sm:$0xff]
        %v1885 = vld [vmem:[%s312 + $0x2d00] sm:$0xff]
        %v1886 = vld [vmem:[%s312 + $0x2d08] sm:$0xff]
        %v1887 = vld [vmem:[%s312 + $0x2d10] sm:$0xff]
        %v1888 = vld [vmem:[%s312 + $0x2d18] sm:$0xff]
        %v1889 = vld [vmem:[%s312 + $0x2d20] sm:$0xff]
        %v1890 = vld [vmem:[%s312 + $0x2d28] sm:$0xff]
        %v1891 = vld [vmem:[%s312 + $0x2d30] sm:$0xff]
        %v1892 = vld [vmem:[%s312 + $0x2d38] sm:$0xff]
        %v1893 = vld [vmem:[%s312 + $0x2d40] sm:$0xff]
        %v1894 = vld [vmem:[%s312 + $0x2d48] sm:$0xff]
        %v1895 = vld [vmem:[%s312 + $0x2d50] sm:$0xff]
        %v1896 = vld [vmem:[%s312 + $0x2d58] sm:$0xff]
        %v1897 = vld [vmem:[%s312 + $0x2d60] sm:$0xff]
        %v1898 = vld [vmem:[%s312 + $0x2d68] sm:$0xff]
        %v1899 = vld [vmem:[%s312 + $0x2d70] sm:$0xff]
        %v1900 = vld [vmem:[%s312 + $0x2d78] sm:$0xff]
        %v1901 = vld [vmem:[%s312 + $0x2d80] sm:$0xff]
        %v1902 = vld [vmem:[%s312 + $0x2d88] sm:$0xff]
        %v1903 = vld [vmem:[%s312 + $0x2d90] sm:$0xff]
        %v1904 = vld [vmem:[%s312 + $0x2d98] sm:$0xff]
        %v1905 = vld [vmem:[%s312 + $0x2da0] sm:$0xff]
        %v1906 = vld [vmem:[%s312 + $0x2da8] sm:$0xff]
        %v1907 = vld [vmem:[%s312 + $0x2db0] sm:$0xff]
        %v1908 = vld [vmem:[%s312 + $0x2db8] sm:$0xff]
        %v1909 = vld [vmem:[%s312 + $0x2dc0] sm:$0xff]
        %v1910 = vld [vmem:[%s312 + $0x2dc8] sm:$0xff]
        %v1911 = vld [vmem:[%s312 + $0x2dd0] sm:$0xff]
        %v1912 = vld [vmem:[%s312 + $0x2dd8] sm:$0xff]
        %v1913 = vld [vmem:[%s312 + $0x2de0] sm:$0xff]
        %v1914 = vld [vmem:[%s312 + $0x2de8] sm:$0xff]
        %v1915 = vld [vmem:[%s312 + $0x2df0] sm:$0xff]
        %v1916 = vld [vmem:[%s312 + $0x2df8] sm:$0xff]
        %v1917 = vld [vmem:[%s312 + $0x2e00] sm:$0xff]
        %v1918 = vld [vmem:[%s312 + $0x2e08] sm:$0xff]
        %v1919 = vld [vmem:[%s312 + $0x2e10] sm:$0xff]
        %v1920 = vld [vmem:[%s312 + $0x2e18] sm:$0xff]
        %v1921 = vld [vmem:[%s312 + $0x2e20] sm:$0xff]
        %v1922 = vld [vmem:[%s312 + $0x2e28] sm:$0xff]
        %v1923 = vld [vmem:[%s312 + $0x2e30] sm:$0xff]
        %v1924 = vld [vmem:[%s312 + $0x2e38] sm:$0xff]
        %v1925 = vld [vmem:[%s312 + $0x2e40] sm:$0xff]
        %v1926 = vld [vmem:[%s312 + $0x2e48] sm:$0xff]
        %v1927 = vld [vmem:[%s312 + $0x2e50] sm:$0xff]
        %v1928 = vld [vmem:[%s312 + $0x2e58] sm:$0xff]
        %v1929 = vld [vmem:[%s312 + $0x2e60] sm:$0xff]
        %v1930 = vld [vmem:[%s312 + $0x2e68] sm:$0xff]
        %v1931 = vld [vmem:[%s312 + $0x2e70] sm:$0xff]
        %v1932 = vld [vmem:[%s312 + $0x2e78] sm:$0xff]
        %v1933 = vld [vmem:[%s312 + $0x2e80] sm:$0xff]
        %v1934 = vld [vmem:[%s312 + $0x2e88] sm:$0xff]
        %v1935 = vld [vmem:[%s312 + $0x2e90] sm:$0xff]
        %v1936 = vld [vmem:[%s312 + $0x2e98] sm:$0xff]
        %v1937 = vld [vmem:[%s312 + $0x2ea0] sm:$0xff]
        %v1938 = vld [vmem:[%s312 + $0x2ea8] sm:$0xff]
        %v1939 = vld [vmem:[%s312 + $0x2eb0] sm:$0xff]
        %v1940 = vld [vmem:[%s312 + $0x2eb8] sm:$0xff]
        %v1941 = vld [vmem:[%s312 + $0x2ec0] sm:$0xff]
        %v1942 = vld [vmem:[%s312 + $0x2ec8] sm:$0xff]
        %v1943 = vld [vmem:[%s312 + $0x2ed0] sm:$0xff]
        %v1944 = vld [vmem:[%s312 + $0x2ed8] sm:$0xff]
        %v1945 = vld [vmem:[%s312 + $0x2ee0] sm:$0xff]
        %v1946 = vld [vmem:[%s312 + $0x2ee8] sm:$0xff]
        %v1947 = vld [vmem:[%s312 + $0x2ef0] sm:$0xff]
        %v1948 = vld [vmem:[%s312 + $0x2ef8] sm:$0xff]
        %v1949 = vld [vmem:[%s312 + $0x2f00] sm:$0xff]
        %v1950 = vld [vmem:[%s312 + $0x2f08] sm:$0xff]
        %v1951 = vld [vmem:[%s312 + $0x2f10] sm:$0xff]
        %v1952 = vld [vmem:[%s312 + $0x2f18] sm:$0xff]
        %v1953 = vld [vmem:[%s312 + $0x2f20] sm:$0xff]
        %v1954 = vld [vmem:[%s312 + $0x2f28] sm:$0xff]
        %v1955 = vld [vmem:[%s312 + $0x2f30] sm:$0xff]
        %v1956 = vld [vmem:[%s312 + $0x2f38] sm:$0xff]
        %v1957 = vld [vmem:[%s312 + $0x2f40] sm:$0xff]
        %v1958 = vld [vmem:[%s312 + $0x2f48] sm:$0xff]
        %v1959 = vld [vmem:[%s312 + $0x2f50] sm:$0xff]
        %v1960 = vld [vmem:[%s312 + $0x2f58] sm:$0xff]
        %v1961 = vld [vmem:[%s312 + $0x2f60] sm:$0xff]
        %v1962 = vld [vmem:[%s312 + $0x2f68] sm:$0xff]
        %v1963 = vld [vmem:[%s312 + $0x2f70] sm:$0xff]
        %v1964 = vld [vmem:[%s312 + $0x2f78] sm:$0xff]
        %v1965 = vld [vmem:[%s312 + $0x2f80] sm:$0xff]
        %v1966 = vld [vmem:[%s312 + $0x2f88] sm:$0xff]
        %v1967 = vld [vmem:[%s312 + $0x2f90] sm:$0xff]
        %v1968 = vld [vmem:[%s312 + $0x2f98] sm:$0xff]
        %v1969 = vld [vmem:[%s312 + $0x2fa0] sm:$0xff]
        %v1970 = vld [vmem:[%s312 + $0x2fa8] sm:$0xff]
        %v1971 = vld [vmem:[%s312 + $0x2fb0] sm:$0xff]
        %v1972 = vld [vmem:[%s312 + $0x2fb8] sm:$0xff]
        %v1973 = vld [vmem:[%s312 + $0x2fc0] sm:$0xff]
        %v1974 = vld [vmem:[%s312 + $0x2fc8] sm:$0xff]
        %v1975 = vld [vmem:[%s312 + $0x2fd0] sm:$0xff]
        %v1976 = vld [vmem:[%s312 + $0x2fd8] sm:$0xff]
        %v1977 = vld [vmem:[%s312 + $0x2fe0] sm:$0xff]
        %v1978 = vld [vmem:[%s312 + $0x2fe8] sm:$0xff]
        %v1979 = vld [vmem:[%s312 + $0x2ff0] sm:$0xff]
        %v1980 = vld [vmem:[%s312 + $0x2ff8] sm:$0xff]
        %v1981 = vld [vmem:[%s312 + $0x3000] sm:$0xff]
        %v1982 = vld [vmem:[%s312 + $0x3008] sm:$0xff]
        %v1983 = vld [vmem:[%s312 + $0x3010] sm:$0xff]
        %v1984 = vld [vmem:[%s312 + $0x3018] sm:$0xff]
        %v1985 = vld [vmem:[%s312 + $0x3020] sm:$0xff]
        %v1986 = vld [vmem:[%s312 + $0x3028] sm:$0xff]
        %v1987 = vld [vmem:[%s312 + $0x3030] sm:$0xff]
        %v1988 = vld [vmem:[%s312 + $0x3038] sm:$0xff]
        %v1989 = vld [vmem:[%s312 + $0x3040] sm:$0xff]
        %v1990 = vld [vmem:[%s312 + $0x3048] sm:$0xff]
        %v1991 = vld [vmem:[%s312 + $0x3050] sm:$0xff]
        %v1992 = vld [vmem:[%s312 + $0x3058] sm:$0xff]
        %v1993 = vld [vmem:[%s312 + $0x3060] sm:$0xff]
        %v1994 = vld [vmem:[%s312 + $0x3068] sm:$0xff]
        %v1995 = vld [vmem:[%s312 + $0x3070] sm:$0xff]
        %v1996 = vld [vmem:[%s312 + $0x3078] sm:$0xff]
        %v1997 = vld [vmem:[%s312 + $0x3080] sm:$0xff]
        %v1998 = vld [vmem:[%s312 + $0x3088] sm:$0xff]
        %v1999 = vld [vmem:[%s312 + $0x3090] sm:$0xff]
        %v2000 = vld [vmem:[%s312 + $0x3098] sm:$0xff]
        %v2001 = vld [vmem:[%s312 + $0x30a0] sm:$0xff]
        %v2002 = vld [vmem:[%s312 + $0x30a8] sm:$0xff]
        %v2003 = vld [vmem:[%s312 + $0x30b0] sm:$0xff]
        %v2004 = vld [vmem:[%s312 + $0x30b8] sm:$0xff]
        %v2005 = vld [vmem:[%s312 + $0x30c0] sm:$0xff]
        %v2006 = vld [vmem:[%s312 + $0x30c8] sm:$0xff]
        %v2007 = vld [vmem:[%s312 + $0x30d0] sm:$0xff]
        %v2008 = vld [vmem:[%s312 + $0x30d8] sm:$0xff]
        %v2009 = vld [vmem:[%s312 + $0x30e0] sm:$0xff]
        %v2010 = vld [vmem:[%s312 + $0x30e8] sm:$0xff]
        %v2011 = vld [vmem:[%s312 + $0x30f0] sm:$0xff]
        %v2012 = vld [vmem:[%s312 + $0x30f8] sm:$0xff]
        %v2013 = vld [vmem:[%s312 + $0x3100] sm:$0xff]
        %v2014 = vld [vmem:[%s312 + $0x3108] sm:$0xff]
        %v2015 = vld [vmem:[%s312 + $0x3110] sm:$0xff]
        %v2016 = vld [vmem:[%s312 + $0x3118] sm:$0xff]
        %v2017 = vld [vmem:[%s312 + $0x3120] sm:$0xff]
        %v2018 = vld [vmem:[%s312 + $0x3128] sm:$0xff]
        %v2019 = vld [vmem:[%s312 + $0x3130] sm:$0xff]
        %v2020 = vld [vmem:[%s312 + $0x3138] sm:$0xff]
        %v2021 = vld [vmem:[%s312 + $0x3140] sm:$0xff]
        %v2022 = vld [vmem:[%s312 + $0x3148] sm:$0xff]
        %v2023 = vld [vmem:[%s312 + $0x3150] sm:$0xff]
        %v2024 = vld [vmem:[%s312 + $0x3158] sm:$0xff]
        %v2025 = vld [vmem:[%s312 + $0x3160] sm:$0xff]
        %v2026 = vld [vmem:[%s312 + $0x3168] sm:$0xff]
        %v2027 = vld [vmem:[%s312 + $0x3170] sm:$0xff]
        %v2028 = vld [vmem:[%s312 + $0x3178] sm:$0xff]
        %v2029 = vld [vmem:[%s312 + $0x3180] sm:$0xff]
        %v2030 = vld [vmem:[%s312 + $0x3188] sm:$0xff]
        %v2031 = vld [vmem:[%s312 + $0x3190] sm:$0xff]
        %v2032 = vld [vmem:[%s312 + $0x3198] sm:$0xff]
        %v2033 = vld [vmem:[%s312 + $0x31a0] sm:$0xff]
        %v2034 = vld [vmem:[%s312 + $0x31a8] sm:$0xff]
        %v2035 = vld [vmem:[%s312 + $0x31b0] sm:$0xff]
        %v2036 = vld [vmem:[%s312 + $0x31b8] sm:$0xff]
        %v2037 = vld [vmem:[%s312 + $0x31c0] sm:$0xff]
        %v2038 = vld [vmem:[%s312 + $0x31c8] sm:$0xff]
        %v2039 = vld [vmem:[%s312 + $0x31d0] sm:$0xff]
        %v2040 = vld [vmem:[%s312 + $0x31d8] sm:$0xff]
        %v2041 = vld [vmem:[%s312 + $0x31e0] sm:$0xff]
        %v2042 = vld [vmem:[%s312 + $0x31e8] sm:$0xff]
        %v2043 = vld [vmem:[%s312 + $0x31f0] sm:$0xff]
        %v2044 = vld [vmem:[%s312 + $0x31f8] sm:$0xff]
        %v2045 = vld [vmem:[%s312 + $0x3200] sm:$0xff]
        %v2046 = vld [vmem:[%s312 + $0x3208] sm:$0xff]
        %v2047 = vld [vmem:[%s312 + $0x3210] sm:$0xff]
        %v2048 = vld [vmem:[%s312 + $0x3218] sm:$0xff]
        %v2049 = vld [vmem:[%s312 + $0x3220] sm:$0xff]
        %v2050 = vld [vmem:[%s312 + $0x3228] sm:$0xff]
        %v2051 = vld [vmem:[%s312 + $0x3230] sm:$0xff]
        %v2052 = vld [vmem:[%s312 + $0x3238] sm:$0xff]
        %v2053 = vld [vmem:[%s312 + $0x3240] sm:$0xff]
        %v2054 = vld [vmem:[%s312 + $0x3248] sm:$0xff]
        %v2055 = vld [vmem:[%s312 + $0x3250] sm:$0xff]
        %v2056 = vld [vmem:[%s312 + $0x3258] sm:$0xff]
        %v2057 = vld [vmem:[%s312 + $0x3260] sm:$0xff]
        %v2058 = vld [vmem:[%s312 + $0x3268] sm:$0xff]
        %v2059 = vld [vmem:[%s312 + $0x3270] sm:$0xff]
        %v2060 = vld [vmem:[%s312 + $0x3278] sm:$0xff]
        %v2061 = vld [vmem:[%s312 + $0x3280] sm:$0xff]
        %v2062 = vld [vmem:[%s312 + $0x3288] sm:$0xff]
        %v2063 = vld [vmem:[%s312 + $0x3290] sm:$0xff]
        %v2064 = vld [vmem:[%s312 + $0x3298] sm:$0xff]
        %v2065 = vld [vmem:[%s312 + $0x32a0] sm:$0xff]
        %v2066 = vld [vmem:[%s312 + $0x32a8] sm:$0xff]
        %v2067 = vld [vmem:[%s312 + $0x32b0] sm:$0xff]
        %v2068 = vld [vmem:[%s312 + $0x32b8] sm:$0xff]
        %v2069 = vld [vmem:[%s312 + $0x32c0] sm:$0xff]
        %v2070 = vld [vmem:[%s312 + $0x32c8] sm:$0xff]
        %v2071 = vld [vmem:[%s312 + $0x32d0] sm:$0xff]
        %v2072 = vld [vmem:[%s312 + $0x32d8] sm:$0xff]
        %v2073 = vld [vmem:[%s312 + $0x32e0] sm:$0xff]
        %v2074 = vld [vmem:[%s312 + $0x32e8] sm:$0xff]
        %v2075 = vld [vmem:[%s312 + $0x32f0] sm:$0xff]
        %v2076 = vld [vmem:[%s312 + $0x32f8] sm:$0xff]
        %v2077 = vld [vmem:[%s312 + $0x3300] sm:$0xff]
        %v2078 = vld [vmem:[%s312 + $0x3308] sm:$0xff]
        %v2079 = vld [vmem:[%s312 + $0x3310] sm:$0xff]
        %v2080 = vld [vmem:[%s312 + $0x3318] sm:$0xff]
        %v2081 = vld [vmem:[%s312 + $0x3320] sm:$0xff]
        %v2082 = vld [vmem:[%s312 + $0x3328] sm:$0xff]
        %v2083 = vld [vmem:[%s312 + $0x3330] sm:$0xff]
        %v2084 = vld [vmem:[%s312 + $0x3338] sm:$0xff]
        %v2085 = vld [vmem:[%s312 + $0x3340] sm:$0xff]
        %v2086 = vld [vmem:[%s312 + $0x3348] sm:$0xff]
        %v2087 = vld [vmem:[%s312 + $0x3350] sm:$0xff]
        %v2088 = vld [vmem:[%s312 + $0x3358] sm:$0xff]
        %v2089 = vld [vmem:[%s312 + $0x3360] sm:$0xff]
        %v2090 = vld [vmem:[%s312 + $0x3368] sm:$0xff]
        %v2091 = vld [vmem:[%s312 + $0x3370] sm:$0xff]
        %v2092 = vld [vmem:[%s312 + $0x3378] sm:$0xff]
        %v2093 = vld [vmem:[%s312 + $0x3380] sm:$0xff]
        %v2094 = vld [vmem:[%s312 + $0x3388] sm:$0xff]
        %v2095 = vld [vmem:[%s312 + $0x3390] sm:$0xff]
        %v2096 = vld [vmem:[%s312 + $0x3398] sm:$0xff]
        %v2097 = vld [vmem:[%s312 + $0x33a0] sm:$0xff]
        %v2098 = vld [vmem:[%s312 + $0x33a8] sm:$0xff]
        %v2099 = vld [vmem:[%s312 + $0x33b0] sm:$0xff]
        %v2100 = vld [vmem:[%s312 + $0x33b8] sm:$0xff]
        %v2101 = vld [vmem:[%s312 + $0x33c0] sm:$0xff]
        %v2102 = vld [vmem:[%s312 + $0x33c8] sm:$0xff]
        %v2103 = vld [vmem:[%s312 + $0x33d0] sm:$0xff]
        %v2104 = vld [vmem:[%s312 + $0x33d8] sm:$0xff]
        %v2105 = vld [vmem:[%s312 + $0x33e0] sm:$0xff]
        %v2106 = vld [vmem:[%s312 + $0x33e8] sm:$0xff]
        %v2107 = vld [vmem:[%s312 + $0x33f0] sm:$0xff]
        %v2108 = vld [vmem:[%s312 + $0x33f8] sm:$0xff]
        %v2109 = vld [vmem:[%s312 + $0x3400] sm:$0xff]
        %v2110 = vld [vmem:[%s312 + $0x3408] sm:$0xff]
        %v2111 = vld [vmem:[%s312 + $0x3410] sm:$0xff]
        %v2112 = vld [vmem:[%s312 + $0x3418] sm:$0xff]
        %v2113 = vld [vmem:[%s312 + $0x3420] sm:$0xff]
        %v2114 = vld [vmem:[%s312 + $0x3428] sm:$0xff]
        %v2115 = vld [vmem:[%s312 + $0x3430] sm:$0xff]
        %v2116 = vld [vmem:[%s312 + $0x3438] sm:$0xff]
        %v2117 = vld [vmem:[%s312 + $0x3440] sm:$0xff]
        %v2118 = vld [vmem:[%s312 + $0x3448] sm:$0xff]
        %v2119 = vld [vmem:[%s312 + $0x3450] sm:$0xff]
        %v2120 = vld [vmem:[%s312 + $0x3458] sm:$0xff]
        %v2121 = vld [vmem:[%s312 + $0x3460] sm:$0xff]
        %v2122 = vld [vmem:[%s312 + $0x3468] sm:$0xff]
        %v2123 = vld [vmem:[%s312 + $0x3470] sm:$0xff]
        %v2124 = vld [vmem:[%s312 + $0x3478] sm:$0xff]
        %v2125 = vld [vmem:[%s312 + $0x3480] sm:$0xff]
        %v2126 = vld [vmem:[%s312 + $0x3488] sm:$0xff]
        %v2127 = vld [vmem:[%s312 + $0x3490] sm:$0xff]
        %v2128 = vld [vmem:[%s312 + $0x3498] sm:$0xff]
        %v2129 = vld [vmem:[%s312 + $0x34a0] sm:$0xff]
        %v2130 = vld [vmem:[%s312 + $0x34a8] sm:$0xff]
        %v2131 = vld [vmem:[%s312 + $0x34b0] sm:$0xff]
        %v2132 = vld [vmem:[%s312 + $0x34b8] sm:$0xff]
        %v2133 = vld [vmem:[%s312 + $0x34c0] sm:$0xff]
        %v2134 = vld [vmem:[%s312 + $0x34c8] sm:$0xff]
        %v2135 = vld [vmem:[%s312 + $0x34d0] sm:$0xff]
        %v2136 = vld [vmem:[%s312 + $0x34d8] sm:$0xff]
        %v2137 = vld [vmem:[%s312 + $0x34e0] sm:$0xff]
        %v2138 = vld [vmem:[%s312 + $0x34e8] sm:$0xff]
        %v2139 = vld [vmem:[%s312 + $0x34f0] sm:$0xff]
        %v2140 = vld [vmem:[%s312 + $0x34f8] sm:$0xff]
        %v2141 = vld [vmem:[%s312 + $0x3500] sm:$0xff]
        %v2142 = vld [vmem:[%s312 + $0x3508] sm:$0xff]
        %v2143 = vld [vmem:[%s312 + $0x3510] sm:$0xff]
        %v2144 = vld [vmem:[%s312 + $0x3518] sm:$0xff]
        %v2145 = vld [vmem:[%s312 + $0x3520] sm:$0xff]
        %v2146 = vld [vmem:[%s312 + $0x3528] sm:$0xff]
        %v2147 = vld [vmem:[%s312 + $0x3530] sm:$0xff]
        %v2148 = vld [vmem:[%s312 + $0x3538] sm:$0xff]
        %v2149 = vld [vmem:[%s312 + $0x3540] sm:$0xff]
        %v2150 = vld [vmem:[%s312 + $0x3548] sm:$0xff]
        %v2151 = vld [vmem:[%s312 + $0x3550] sm:$0xff]
        %v2152 = vld [vmem:[%s312 + $0x3558] sm:$0xff]
        %v2153 = vld [vmem:[%s312 + $0x3560] sm:$0xff]
        %v2154 = vld [vmem:[%s312 + $0x3568] sm:$0xff]
        %v2155 = vld [vmem:[%s312 + $0x3570] sm:$0xff]
        %v2156 = vld [vmem:[%s312 + $0x3578] sm:$0xff]
        %v2157 = vld [vmem:[%s312 + $0x3580] sm:$0xff]
        %v2158 = vld [vmem:[%s312 + $0x3588] sm:$0xff]
        %v2159 = vld [vmem:[%s312 + $0x3590] sm:$0xff]
        %v2160 = vld [vmem:[%s312 + $0x3598] sm:$0xff]
        %v2161 = vld [vmem:[%s312 + $0x35a0] sm:$0xff]
        %v2162 = vld [vmem:[%s312 + $0x35a8] sm:$0xff]
        %v2163 = vld [vmem:[%s312 + $0x35b0] sm:$0xff]
        %v2164 = vld [vmem:[%s312 + $0x35b8] sm:$0xff]
        %v2165 = vld [vmem:[%s312 + $0x35c0] sm:$0xff]
        %v2166 = vld [vmem:[%s312 + $0x35c8] sm:$0xff]
        %v2167 = vld [vmem:[%s312 + $0x35d0] sm:$0xff]
        %v2168 = vld [vmem:[%s312 + $0x35d8] sm:$0xff]
        %v2169 = vld [vmem:[%s312 + $0x35e0] sm:$0xff]
        %v2170 = vld [vmem:[%s312 + $0x35e8] sm:$0xff]
        %v2171 = vld [vmem:[%s312 + $0x35f0] sm:$0xff]
        %v2172 = vld [vmem:[%s312 + $0x35f8] sm:$0xff]
        %v2173 = vld [vmem:[%s312 + $0x3600] sm:$0xff]
        %v2174 = vld [vmem:[%s312 + $0x3608] sm:$0xff]
        %v2175 = vld [vmem:[%s312 + $0x3610] sm:$0xff]
        %v2176 = vld [vmem:[%s312 + $0x3618] sm:$0xff]
        %v2177 = vld [vmem:[%s312 + $0x3620] sm:$0xff]
        %v2178 = vld [vmem:[%s312 + $0x3628] sm:$0xff]
        %v2179 = vld [vmem:[%s312 + $0x3630] sm:$0xff]
        %v2180 = vld [vmem:[%s312 + $0x3638] sm:$0xff]
        %v2181 = vld [vmem:[%s312 + $0x3640] sm:$0xff]
        %v2182 = vld [vmem:[%s312 + $0x3648] sm:$0xff]
        %v2183 = vld [vmem:[%s312 + $0x3650] sm:$0xff]
        %v2184 = vld [vmem:[%s312 + $0x3658] sm:$0xff]
        %v2185 = vld [vmem:[%s312 + $0x3660] sm:$0xff]
        %v2186 = vld [vmem:[%s312 + $0x3668] sm:$0xff]
        %v2187 = vld [vmem:[%s312 + $0x3670] sm:$0xff]
        %v2188 = vld [vmem:[%s312 + $0x3678] sm:$0xff]
        %v2189 = vld [vmem:[%s312 + $0x3680] sm:$0xff]
        %v2190 = vld [vmem:[%s312 + $0x3688] sm:$0xff]
        %v2191 = vld [vmem:[%s312 + $0x3690] sm:$0xff]
        %v2192 = vld [vmem:[%s312 + $0x3698] sm:$0xff]
        %v2193 = vld [vmem:[%s312 + $0x36a0] sm:$0xff]
        %v2194 = vld [vmem:[%s312 + $0x36a8] sm:$0xff]
        %v2195 = vld [vmem:[%s312 + $0x36b0] sm:$0xff]
        %v2196 = vld [vmem:[%s312 + $0x36b8] sm:$0xff]
        %v2197 = vld [vmem:[%s312 + $0x36c0] sm:$0xff]
        %v2198 = vld [vmem:[%s312 + $0x36c8] sm:$0xff]
        %v2199 = vld [vmem:[%s312 + $0x36d0] sm:$0xff]
        %v2200 = vld [vmem:[%s312 + $0x36d8] sm:$0xff]
        %v2201 = vld [vmem:[%s312 + $0x36e0] sm:$0xff]
        %v2202 = vld [vmem:[%s312 + $0x36e8] sm:$0xff]
        %v2203 = vld [vmem:[%s312 + $0x36f0] sm:$0xff]
        %v2204 = vld [vmem:[%s312 + $0x36f8] sm:$0xff]
        %v2205 = vld [vmem:[%s312 + $0x3700] sm:$0xff]
        %v2206 = vld [vmem:[%s312 + $0x3708] sm:$0xff]
        %v2207 = vld [vmem:[%s312 + $0x3710] sm:$0xff]
        %v2208 = vld [vmem:[%s312 + $0x3718] sm:$0xff]
        %v2209 = vld [vmem:[%s312 + $0x3720] sm:$0xff]
        %v2210 = vld [vmem:[%s312 + $0x3728] sm:$0xff]
        %v2211 = vld [vmem:[%s312 + $0x3730] sm:$0xff]
        %v2212 = vld [vmem:[%s312 + $0x3738] sm:$0xff]
        %v2213 = vld [vmem:[%s312 + $0x3740] sm:$0xff]
        %v2214 = vld [vmem:[%s312 + $0x3748] sm:$0xff]
        %v2215 = vld [vmem:[%s312 + $0x3750] sm:$0xff]
        %v2216 = vld [vmem:[%s312 + $0x3758] sm:$0xff]
        %v2217 = vld [vmem:[%s312 + $0x3760] sm:$0xff]
        %v2218 = vld [vmem:[%s312 + $0x3768] sm:$0xff]
        %v2219 = vld [vmem:[%s312 + $0x3770] sm:$0xff]
        %v2220 = vld [vmem:[%s312 + $0x3778] sm:$0xff]
        %v2221 = vld [vmem:[%s312 + $0x3780] sm:$0xff]
        %v2222 = vld [vmem:[%s312 + $0x3788] sm:$0xff]
        %v2223 = vld [vmem:[%s312 + $0x3790] sm:$0xff]
        %v2224 = vld [vmem:[%s312 + $0x3798] sm:$0xff]
        %v2225 = vld [vmem:[%s312 + $0x37a0] sm:$0xff]
        %v2226 = vld [vmem:[%s312 + $0x37a8] sm:$0xff]
        %v2227 = vld [vmem:[%s312 + $0x37b0] sm:$0xff]
        %v2228 = vld [vmem:[%s312 + $0x37b8] sm:$0xff]
        %v2229 = vld [vmem:[%s312 + $0x37c0] sm:$0xff]
        %v2230 = vld [vmem:[%s312 + $0x37c8] sm:$0xff]
        %v2231 = vld [vmem:[%s312 + $0x37d0] sm:$0xff]
        %v2232 = vld [vmem:[%s312 + $0x37d8] sm:$0xff]
        %v2233 = vld [vmem:[%s312 + $0x37e0] sm:$0xff]
        %v2234 = vld [vmem:[%s312 + $0x37e8] sm:$0xff]
        %v2235 = vld [vmem:[%s312 + $0x37f0] sm:$0xff]
        %v2236 = vld [vmem:[%s312 + $0x37f8] sm:$0xff]
        %v2237 = vld [vmem:[%s312 + $0x3800] sm:$0xff]
        %v2238 = vld [vmem:[%s312 + $0x3808] sm:$0xff]
        %v2239 = vld [vmem:[%s312 + $0x3810] sm:$0xff]
        %v2240 = vld [vmem:[%s312 + $0x3818] sm:$0xff]
        %v2241 = vld [vmem:[%s312 + $0x3820] sm:$0xff]
        %v2242 = vld [vmem:[%s312 + $0x3828] sm:$0xff]
        %v2243 = vld [vmem:[%s312 + $0x3830] sm:$0xff]
        %v2244 = vld [vmem:[%s312 + $0x3838] sm:$0xff]
        %v2245 = vld [vmem:[%s312 + $0x3840] sm:$0xff]
        %v2246 = vld [vmem:[%s312 + $0x3848] sm:$0xff]
        %v2247 = vld [vmem:[%s312 + $0x3850] sm:$0xff]
        %v2248 = vld [vmem:[%s312 + $0x3858] sm:$0xff]
        %v2249 = vld [vmem:[%s312 + $0x3860] sm:$0xff]
        %v2250 = vld [vmem:[%s312 + $0x3868] sm:$0xff]
        %v2251 = vld [vmem:[%s312 + $0x3870] sm:$0xff]
        %v2252 = vld [vmem:[%s312 + $0x3878] sm:$0xff]
        %v2253 = vld [vmem:[%s312 + $0x3880] sm:$0xff]
        %v2254 = vld [vmem:[%s312 + $0x3888] sm:$0xff]
        %v2255 = vld [vmem:[%s312 + $0x3890] sm:$0xff]
        %v2256 = vld [vmem:[%s312 + $0x3898] sm:$0xff]
        %v2257 = vld [vmem:[%s312 + $0x38a0] sm:$0xff]
        %v2258 = vld [vmem:[%s312 + $0x38a8] sm:$0xff]
        %v2259 = vld [vmem:[%s312 + $0x38b0] sm:$0xff]
        %v2260 = vld [vmem:[%s312 + $0x38b8] sm:$0xff]
        %v2261 = vld [vmem:[%s312 + $0x38c0] sm:$0xff]
        %v2262 = vld [vmem:[%s312 + $0x38c8] sm:$0xff]
        %v2263 = vld [vmem:[%s312 + $0x38d0] sm:$0xff]
        %v2264 = vld [vmem:[%s312 + $0x38d8] sm:$0xff]
        %v2265 = vld [vmem:[%s312 + $0x38e0] sm:$0xff]
        %v2266 = vld [vmem:[%s312 + $0x38e8] sm:$0xff]
        %v2267 = vld [vmem:[%s312 + $0x38f0] sm:$0xff]
        %v2268 = vld [vmem:[%s312 + $0x38f8] sm:$0xff]
        %v2269 = vld [vmem:[%s312 + $0x3900] sm:$0xff]
        %v2270 = vld [vmem:[%s312 + $0x3908] sm:$0xff]
        %v2271 = vld [vmem:[%s312 + $0x3910] sm:$0xff]
        %v2272 = vld [vmem:[%s312 + $0x3918] sm:$0xff]
        %v2273 = vld [vmem:[%s312 + $0x3920] sm:$0xff]
        %v2274 = vld [vmem:[%s312 + $0x3928] sm:$0xff]
        %v2275 = vld [vmem:[%s312 + $0x3930] sm:$0xff]
        %v2276 = vld [vmem:[%s312 + $0x3938] sm:$0xff]
        %v2277 = vld [vmem:[%s312 + $0x3940] sm:$0xff]
        %v2278 = vld [vmem:[%s312 + $0x3948] sm:$0xff]
        %v2279 = vld [vmem:[%s312 + $0x3950] sm:$0xff]
        %v2280 = vld [vmem:[%s312 + $0x3958] sm:$0xff]
        %v2281 = vld [vmem:[%s312 + $0x3960] sm:$0xff]
        %v2282 = vld [vmem:[%s312 + $0x3968] sm:$0xff]
        %v2283 = vld [vmem:[%s312 + $0x3970] sm:$0xff]
        %v2284 = vld [vmem:[%s312 + $0x3978] sm:$0xff]
        %v2285 = vld [vmem:[%s312 + $0x3980] sm:$0xff]
        %v2286 = vld [vmem:[%s312 + $0x3988] sm:$0xff]
        %v2287 = vld [vmem:[%s312 + $0x3990] sm:$0xff]
        %v2288 = vld [vmem:[%s312 + $0x3998] sm:$0xff]
        %v2289 = vld [vmem:[%s312 + $0x39a0] sm:$0xff]
        %v2290 = vld [vmem:[%s312 + $0x39a8] sm:$0xff]
        %v2291 = vld [vmem:[%s312 + $0x39b0] sm:$0xff]
        %v2292 = vld [vmem:[%s312 + $0x39b8] sm:$0xff]
        %v2293 = vld [vmem:[%s312 + $0x39c0] sm:$0xff]
        %v2294 = vld [vmem:[%s312 + $0x39c8] sm:$0xff]
        %v2295 = vld [vmem:[%s312 + $0x39d0] sm:$0xff]
        %v2296 = vld [vmem:[%s312 + $0x39d8] sm:$0xff]
        %v2297 = vld [vmem:[%s312 + $0x39e0] sm:$0xff]
        %v2298 = vld [vmem:[%s312 + $0x39e8] sm:$0xff]
        %v2299 = vld [vmem:[%s312 + $0x39f0] sm:$0xff]
        %v2300 = vld [vmem:[%s312 + $0x39f8] sm:$0xff]
        %v2301 = vld [vmem:[%s312 + $0x3a00] sm:$0xff]
        %v2302 = vld [vmem:[%s312 + $0x3a08] sm:$0xff]
        %v2303 = vld [vmem:[%s312 + $0x3a10] sm:$0xff]
        %v2304 = vld [vmem:[%s312 + $0x3a18] sm:$0xff]
        %v2305 = vld [vmem:[%s312 + $0x3a20] sm:$0xff]
        %v2306 = vld [vmem:[%s312 + $0x3a28] sm:$0xff]
        %v2307 = vld [vmem:[%s312 + $0x3a30] sm:$0xff]
        %v2308 = vld [vmem:[%s312 + $0x3a38] sm:$0xff]
        %v2309 = vld [vmem:[%s312 + $0x3a40] sm:$0xff]
        %v2310 = vld [vmem:[%s312 + $0x3a48] sm:$0xff]
        %v2311 = vld [vmem:[%s312 + $0x3a50] sm:$0xff]
        %v2312 = vld [vmem:[%s312 + $0x3a58] sm:$0xff]
        %v2313 = vld [vmem:[%s312 + $0x3a60] sm:$0xff]
        %v2314 = vld [vmem:[%s312 + $0x3a68] sm:$0xff]
        %v2315 = vld [vmem:[%s312 + $0x3a70] sm:$0xff]
        %v2316 = vld [vmem:[%s312 + $0x3a78] sm:$0xff]
        %v2317 = vld [vmem:[%s312 + $0x3a80] sm:$0xff]
        %v2318 = vld [vmem:[%s312 + $0x3a88] sm:$0xff]
        %v2319 = vld [vmem:[%s312 + $0x3a90] sm:$0xff]
        %v2320 = vld [vmem:[%s312 + $0x3a98] sm:$0xff]
        %v2321 = vld [vmem:[%s312 + $0x3aa0] sm:$0xff]
        %v2322 = vld [vmem:[%s312 + $0x3aa8] sm:$0xff]
        %v2323 = vld [vmem:[%s312 + $0x3ab0] sm:$0xff]
        %v2324 = vld [vmem:[%s312 + $0x3ab8] sm:$0xff]
        %v2325 = vld [vmem:[%s312 + $0x3ac0] sm:$0xff]
        %v2326 = vld [vmem:[%s312 + $0x3ac8] sm:$0xff]
        %v2327 = vld [vmem:[%s312 + $0x3ad0] sm:$0xff]
        %v2328 = vld [vmem:[%s312 + $0x3ad8] sm:$0xff]
        %v2329 = vld [vmem:[%s312 + $0x3ae0] sm:$0xff]
        %v2330 = vld [vmem:[%s312 + $0x3ae8] sm:$0xff]
        %v2331 = vld [vmem:[%s312 + $0x3af0] sm:$0xff]
        %v2332 = vld [vmem:[%s312 + $0x3af8] sm:$0xff]
        %v2333 = vld [vmem:[%s312 + $0x3b00] sm:$0xff]
        %v2334 = vld [vmem:[%s312 + $0x3b08] sm:$0xff]
        %v2335 = vld [vmem:[%s312 + $0x3b10] sm:$0xff]
        %v2336 = vld [vmem:[%s312 + $0x3b18] sm:$0xff]
        %v2337 = vld [vmem:[%s312 + $0x3b20] sm:$0xff]
        %v2338 = vld [vmem:[%s312 + $0x3b28] sm:$0xff]
        %v2339 = vld [vmem:[%s312 + $0x3b30] sm:$0xff]
        %v2340 = vld [vmem:[%s312 + $0x3b38] sm:$0xff]
        %v2341 = vld [vmem:[%s312 + $0x3b40] sm:$0xff]
        %v2342 = vld [vmem:[%s312 + $0x3b48] sm:$0xff]
        %v2343 = vld [vmem:[%s312 + $0x3b50] sm:$0xff]
        %v2344 = vld [vmem:[%s312 + $0x3b58] sm:$0xff]
        %v2345 = vld [vmem:[%s312 + $0x3b60] sm:$0xff]
        %v2346 = vld [vmem:[%s312 + $0x3b68] sm:$0xff]
        %v2347 = vld [vmem:[%s312 + $0x3b70] sm:$0xff]
        %v2348 = vld [vmem:[%s312 + $0x3b78] sm:$0xff]
        %v2349 = vld [vmem:[%s312 + $0x3b80] sm:$0xff]
        %v2350 = vld [vmem:[%s312 + $0x3b88] sm:$0xff]
        %v2351 = vld [vmem:[%s312 + $0x3b90] sm:$0xff]
        %v2352 = vld [vmem:[%s312 + $0x3b98] sm:$0xff]
        %v2353 = vld [vmem:[%s312 + $0x3ba0] sm:$0xff]
        %v2354 = vld [vmem:[%s312 + $0x3ba8] sm:$0xff]
        %v2355 = vld [vmem:[%s312 + $0x3bb0] sm:$0xff]
        %v2356 = vld [vmem:[%s312 + $0x3bb8] sm:$0xff]
        %v2357 = vld [vmem:[%s312 + $0x3bc0] sm:$0xff]
        %v2358 = vld [vmem:[%s312 + $0x3bc8] sm:$0xff]
        %v2359 = vld [vmem:[%s312 + $0x3bd0] sm:$0xff]
        %v2360 = vld [vmem:[%s312 + $0x3bd8] sm:$0xff]
        %v2361 = vld [vmem:[%s312 + $0x3be0] sm:$0xff]
        %v2362 = vld [vmem:[%s312 + $0x3be8] sm:$0xff]
        %v2363 = vld [vmem:[%s312 + $0x3bf0] sm:$0xff]
        %v2364 = vld [vmem:[%s312 + $0x3bf8] sm:$0xff]
        %v2365 = vld [vmem:[%s312 + $0x3c00] sm:$0xff]
        %v2366 = vld [vmem:[%s312 + $0x3c08] sm:$0xff]
        %v2367 = vld [vmem:[%s312 + $0x3c10] sm:$0xff]
        %v2368 = vld [vmem:[%s312 + $0x3c18] sm:$0xff]
        %v2369 = vld [vmem:[%s312 + $0x3c20] sm:$0xff]
        %v2370 = vld [vmem:[%s312 + $0x3c28] sm:$0xff]
        %v2371 = vld [vmem:[%s312 + $0x3c30] sm:$0xff]
        %v2372 = vld [vmem:[%s312 + $0x3c38] sm:$0xff]
        %v2373 = vld [vmem:[%s312 + $0x3c40] sm:$0xff]
        %v2374 = vld [vmem:[%s312 + $0x3c48] sm:$0xff]
        %v2375 = vld [vmem:[%s312 + $0x3c50] sm:$0xff]
        %v2376 = vld [vmem:[%s312 + $0x3c58] sm:$0xff]
        %v2377 = vld [vmem:[%s312 + $0x3c60] sm:$0xff]
        %v2378 = vld [vmem:[%s312 + $0x3c68] sm:$0xff]
        %v2379 = vld [vmem:[%s312 + $0x3c70] sm:$0xff]
        %v2380 = vld [vmem:[%s312 + $0x3c78] sm:$0xff]
        %v2381 = vld [vmem:[%s312 + $0x3c80] sm:$0xff]
        %v2382 = vld [vmem:[%s312 + $0x3c88] sm:$0xff]
        %v2383 = vld [vmem:[%s312 + $0x3c90] sm:$0xff]
        %v2384 = vld [vmem:[%s312 + $0x3c98] sm:$0xff]
        %v2385 = vld [vmem:[%s312 + $0x3ca0] sm:$0xff]
        %v2386 = vld [vmem:[%s312 + $0x3ca8] sm:$0xff]
        %v2387 = vld [vmem:[%s312 + $0x3cb0] sm:$0xff]
        %v2388 = vld [vmem:[%s312 + $0x3cb8] sm:$0xff]
        %v2389 = vld [vmem:[%s312 + $0x3cc0] sm:$0xff]
        %v2390 = vld [vmem:[%s312 + $0x3cc8] sm:$0xff]
        %v2391 = vld [vmem:[%s312 + $0x3cd0] sm:$0xff]
        %v2392 = vld [vmem:[%s312 + $0x3cd8] sm:$0xff]
        %v2393 = vld [vmem:[%s312 + $0x3ce0] sm:$0xff]
        %v2394 = vld [vmem:[%s312 + $0x3ce8] sm:$0xff]
        %v2395 = vld [vmem:[%s312 + $0x3cf0] sm:$0xff]
        %v2396 = vld [vmem:[%s312 + $0x3cf8] sm:$0xff]
        %v2397 = vld [vmem:[%s312 + $0x3d00] sm:$0xff]
        %v2398 = vld [vmem:[%s312 + $0x3d08] sm:$0xff]
        %v2399 = vld [vmem:[%s312 + $0x3d10] sm:$0xff]
        %v2400 = vld [vmem:[%s312 + $0x3d18] sm:$0xff]
        %v2401 = vld [vmem:[%s312 + $0x3d20] sm:$0xff]
        %v2402 = vld [vmem:[%s312 + $0x3d28] sm:$0xff]
        %v2403 = vld [vmem:[%s312 + $0x3d30] sm:$0xff]
        %v2404 = vld [vmem:[%s312 + $0x3d38] sm:$0xff]
        %v2405 = vld [vmem:[%s312 + $0x3d40] sm:$0xff]
        %v2406 = vld [vmem:[%s312 + $0x3d48] sm:$0xff]
        %v2407 = vld [vmem:[%s312 + $0x3d50] sm:$0xff]
        %v2408 = vld [vmem:[%s312 + $0x3d58] sm:$0xff]
        %v2409 = vld [vmem:[%s312 + $0x3d60] sm:$0xff]
        %v2410 = vld [vmem:[%s312 + $0x3d68] sm:$0xff]
        %v2411 = vld [vmem:[%s312 + $0x3d70] sm:$0xff]
        %v2412 = vld [vmem:[%s312 + $0x3d78] sm:$0xff]
        %v2413 = vld [vmem:[%s312 + $0x3d80] sm:$0xff]
        %v2414 = vld [vmem:[%s312 + $0x3d88] sm:$0xff]
        %v2415 = vld [vmem:[%s312 + $0x3d90] sm:$0xff]
        %v2416 = vld [vmem:[%s312 + $0x3d98] sm:$0xff]
        %v2417 = vld [vmem:[%s312 + $0x3da0] sm:$0xff]
        %v2418 = vld [vmem:[%s312 + $0x3da8] sm:$0xff]
        %v2419 = vld [vmem:[%s312 + $0x3db0] sm:$0xff]
        %v2420 = vld [vmem:[%s312 + $0x3db8] sm:$0xff]
        %v2421 = vld [vmem:[%s312 + $0x3dc0] sm:$0xff]
        %v2422 = vld [vmem:[%s312 + $0x3dc8] sm:$0xff]
        %v2423 = vld [vmem:[%s312 + $0x3dd0] sm:$0xff]
        %v2424 = vld [vmem:[%s312 + $0x3dd8] sm:$0xff]
        %v2425 = vld [vmem:[%s312 + $0x3de0] sm:$0xff]
        %v2426 = vld [vmem:[%s312 + $0x3de8] sm:$0xff]
        %v2427 = vld [vmem:[%s312 + $0x3df0] sm:$0xff]
        %v2428 = vld [vmem:[%s312 + $0x3df8] sm:$0xff]
        %v2429 = vld [vmem:[%s312 + $0x3e00] sm:$0xff]
        %v2430 = vld [vmem:[%s312 + $0x3e08] sm:$0xff]
        %v2431 = vld [vmem:[%s312 + $0x3e10] sm:$0xff]
        %v2432 = vld [vmem:[%s312 + $0x3e18] sm:$0xff]
        %v2433 = vld [vmem:[%s312 + $0x3e20] sm:$0xff]
        %v2434 = vld [vmem:[%s312 + $0x3e28] sm:$0xff]
        %v2435 = vld [vmem:[%s312 + $0x3e30] sm:$0xff]
        %v2436 = vld [vmem:[%s312 + $0x3e38] sm:$0xff]
        %v2437 = vld [vmem:[%s312 + $0x3e40] sm:$0xff]
        %v2438 = vld [vmem:[%s312 + $0x3e48] sm:$0xff]
        %v2439 = vld [vmem:[%s312 + $0x3e50] sm:$0xff]
        %v2440 = vld [vmem:[%s312 + $0x3e58] sm:$0xff]
        %v2441 = vld [vmem:[%s312 + $0x3e60] sm:$0xff]
        %v2442 = vld [vmem:[%s312 + $0x3e68] sm:$0xff]
        %v2443 = vld [vmem:[%s312 + $0x3e70] sm:$0xff]
        %v2444 = vld [vmem:[%s312 + $0x3e78] sm:$0xff]
        %v2445 = vld [vmem:[%s312 + $0x3e80] sm:$0xff]
        %v2446 = vld [vmem:[%s312 + $0x3e88] sm:$0xff]
        %v2447 = vld [vmem:[%s312 + $0x3e90] sm:$0xff]
        %v2448 = vld [vmem:[%s312 + $0x3e98] sm:$0xff]
        %v2449 = vld [vmem:[%s312 + $0x3ea0] sm:$0xff]
        %v2450 = vld [vmem:[%s312 + $0x3ea8] sm:$0xff]
        %v2451 = vld [vmem:[%s312 + $0x3eb0] sm:$0xff]
        %v2452 = vld [vmem:[%s312 + $0x3eb8] sm:$0xff]
        %v2453 = vld [vmem:[%s312 + $0x3ec0] sm:$0xff]
        %v2454 = vld [vmem:[%s312 + $0x3ec8] sm:$0xff]
        %v2455 = vld [vmem:[%s312 + $0x3ed0] sm:$0xff]
        %v2456 = vld [vmem:[%s312 + $0x3ed8] sm:$0xff]
        %v2457 = vld [vmem:[%s312 + $0x3ee0] sm:$0xff]
        %v2458 = vld [vmem:[%s312 + $0x3ee8] sm:$0xff]
        %v2459 = vld [vmem:[%s312 + $0x3ef0] sm:$0xff]
        %v2460 = vld [vmem:[%s312 + $0x3ef8] sm:$0xff]
        %v2461 = vld [vmem:[%s312 + $0x3f00] sm:$0xff]
        %v2462 = vld [vmem:[%s312 + $0x3f08] sm:$0xff]
        %v2463 = vld [vmem:[%s312 + $0x3f10] sm:$0xff]
        %v2464 = vld [vmem:[%s312 + $0x3f18] sm:$0xff]
        %v2465 = vld [vmem:[%s312 + $0x3f20] sm:$0xff]
        %v2466 = vld [vmem:[%s312 + $0x3f28] sm:$0xff]
        %v2467 = vld [vmem:[%s312 + $0x3f30] sm:$0xff]
        %v2468 = vld [vmem:[%s312 + $0x3f38] sm:$0xff]
        %v2469 = vld [vmem:[%s312 + $0x3f40] sm:$0xff]
        %v2470 = vld [vmem:[%s312 + $0x3f48] sm:$0xff]
        %v2471 = vld [vmem:[%s312 + $0x3f50] sm:$0xff]
        %v2472 = vld [vmem:[%s312 + $0x3f58] sm:$0xff]
        %v2473 = vld [vmem:[%s312 + $0x3f60] sm:$0xff]
        %v2474 = vld [vmem:[%s312 + $0x3f68] sm:$0xff]
        %v2475 = vld [vmem:[%s312 + $0x3f70] sm:$0xff]
        %v2476 = vld [vmem:[%s312 + $0x3f78] sm:$0xff]
        %v2477 = vld [vmem:[%s312 + $0x3f80] sm:$0xff]
        %v2478 = vld [vmem:[%s312 + $0x3f88] sm:$0xff]
        %v2479 = vld [vmem:[%s312 + $0x3f90] sm:$0xff]
        %v2480 = vld [vmem:[%s312 + $0x3f98] sm:$0xff]
        %v2481 = vld [vmem:[%s312 + $0x3fa0] sm:$0xff]
        %v2482 = vld [vmem:[%s312 + $0x3fa8] sm:$0xff]
        %v2483 = vld [vmem:[%s312 + $0x3fb0] sm:$0xff]
        %v2484 = vld [vmem:[%s312 + $0x3fb8] sm:$0xff]
        %v2485 = vld [vmem:[%s312 + $0x3fc0] sm:$0xff]
        %v2486 = vld [vmem:[%s312 + $0x3fc8] sm:$0xff]
        %v2487 = vld [vmem:[%s312 + $0x3fd0] sm:$0xff]
        %v2488 = vld [vmem:[%s312 + $0x3fd8] sm:$0xff]
        %v2489 = vld [vmem:[%s312 + $0x3fe0] sm:$0xff]
        %v2490 = vld [vmem:[%s312 + $0x3fe8] sm:$0xff]
        %v2491 = vld [vmem:[%s312 + $0x3ff0] sm:$0xff]
        %v2492 = vld [vmem:[%s312 + $0x3ff8] sm:$0xff]
        %v2493 = vld [vmem:[%s322] sm:$0xf]
        %v2495 = vperm.slane %v2493, 0
        %v2496 = vperm.slane %v2493, 1
        %v2497 = vperm.slane %v2493, 2
        %v2498 = vperm.slane %v2493, 3
        %2503 = vmatpush.msra.mxu0 %v505
        %2504 = vmatpush.msra.mxu0 %v501
        %2505 = vmatpush.msra.mxu0 %v497
        %2506 = vmatpush.msra.mxu0 %v493
        %2507 = vmatpush.msra.mxu0 %v489
        %2508 = vmatpush.msra.mxu0 %v485
        %2509 = vmatpush.msra.mxu0 %v481
        %2510 = vmatpush.msra.mxu0 %v477
        %2511 = vmatpush.msra.mxu0 %v473
        %2512 = vmatpush.msra.mxu0 %v469
        %2513 = vmatpush.msra.mxu0 %v465
        %2514 = vmatpush.msra.mxu0 %v461
        %2515 = vmatpush.msra.mxu0 %v457
        %2516 = vmatpush.msra.mxu0 %v453
        %2517 = vmatpush.msra.mxu0 %v449
        %2518 = vmatpush.msra.mxu0 %v445
        %2519 = vmatmul.f32.gmra.mxu0 %v413
        %v2520 = vpop.f32.mrf.mxu0
        %v2521 = vadd.f32 %v2495, %v2520
        %2522 = vdwg.mxu0
        %2523 = vmatpush.msra.mxu0 %v569
        %2524 = vmatpush.msra.mxu0 %v565
        %2525 = vmatpush.msra.mxu0 %v561
        %2526 = vmatpush.msra.mxu0 %v557
        %2527 = vmatpush.msra.mxu0 %v553
        %2528 = vmatpush.msra.mxu0 %v549
        %2529 = vmatpush.msra.mxu0 %v545
        %2530 = vmatpush.msra.mxu0 %v541
        %2531 = vmatpush.msra.mxu0 %v537
        %2532 = vmatpush.msra.mxu0 %v533
        %2533 = vmatpush.msra.mxu0 %v529
        %2534 = vmatpush.msra.mxu0 %v525
        %2535 = vmatpush.msra.mxu0 %v521
        %2536 = vmatpush.msra.mxu0 %v517
        %2537 = vmatpush.msra.mxu0 %v513
        %2538 = vmatpush.msra.mxu0 %v509
        %2539 = vmatmul.f32.gmra.mxu0 %v414
        %v2540 = vpop.f32.mrf.mxu0
        %v2541 = vadd.f32 %v2521, %v2540
        %2542 = vdwg.mxu0
        %2543 = vmatpush.msra.mxu0 %v633
        %2544 = vmatpush.msra.mxu0 %v629
        %2545 = vmatpush.msra.mxu0 %v625
        %2546 = vmatpush.msra.mxu0 %v621
        %2547 = vmatpush.msra.mxu0 %v617
        %2548 = vmatpush.msra.mxu0 %v613
        %2549 = vmatpush.msra.mxu0 %v609
        %2550 = vmatpush.msra.mxu0 %v605
        %2551 = vmatpush.msra.mxu0 %v601
        %2552 = vmatpush.msra.mxu0 %v597
        %2553 = vmatpush.msra.mxu0 %v593
        %2554 = vmatpush.msra.mxu0 %v589
        %2555 = vmatpush.msra.mxu0 %v585
        %2556 = vmatpush.msra.mxu0 %v581
        %2557 = vmatpush.msra.mxu0 %v577
        %2558 = vmatpush.msra.mxu0 %v573
        %2559 = vmatmul.f32.gmra.mxu0 %v415
        %v2560 = vpop.f32.mrf.mxu0
        %v2561 = vadd.f32 %v2541, %v2560
        %2562 = vdwg.mxu0
        %2563 = vmatpush.msra.mxu0 %v697
        %2564 = vmatpush.msra.mxu0 %v693
        %2565 = vmatpush.msra.mxu0 %v689
        %2566 = vmatpush.msra.mxu0 %v685
        %2567 = vmatpush.msra.mxu0 %v681
        %2568 = vmatpush.msra.mxu0 %v677
        %2569 = vmatpush.msra.mxu0 %v673
        %2570 = vmatpush.msra.mxu0 %v669
        %2571 = vmatpush.msra.mxu0 %v665
        %2572 = vmatpush.msra.mxu0 %v661
        %2573 = vmatpush.msra.mxu0 %v657
        %2574 = vmatpush.msra.mxu0 %v653
        %2575 = vmatpush.msra.mxu0 %v649
        %2576 = vmatpush.msra.mxu0 %v645
        %2577 = vmatpush.msra.mxu0 %v641
        %2578 = vmatpush.msra.mxu0 %v637
        %2579 = vmatmul.f32.gmra.mxu0 %v416
        %v2580 = vpop.f32.mrf.mxu0
        %v2581 = vadd.f32 %v2561, %v2580
        %2582 = vdwg.mxu0
        %2583 = vmatpush.msra.mxu0 %v761
        %2584 = vmatpush.msra.mxu0 %v757
        %2585 = vmatpush.msra.mxu0 %v753
        %2586 = vmatpush.msra.mxu0 %v749
        %2587 = vmatpush.msra.mxu0 %v745
        %2588 = vmatpush.msra.mxu0 %v741
        %2589 = vmatpush.msra.mxu0 %v737
        %2590 = vmatpush.msra.mxu0 %v733
        %2591 = vmatpush.msra.mxu0 %v729
        %2592 = vmatpush.msra.mxu0 %v725
        %2593 = vmatpush.msra.mxu0 %v721
        %2594 = vmatpush.msra.mxu0 %v717
        %2595 = vmatpush.msra.mxu0 %v713
        %2596 = vmatpush.msra.mxu0 %v709
        %2597 = vmatpush.msra.mxu0 %v705
        %2598 = vmatpush.msra.mxu0 %v701
        %2599 = vmatmul.f32.gmra.mxu0 %v417
        %v2600 = vpop.f32.mrf.mxu0
        %v2601 = vadd.f32 %v2581, %v2600
        %2602 = vdwg.mxu0
        %2603 = vmatpush.msra.mxu0 %v825
        %2604 = vmatpush.msra.mxu0 %v821
        %2605 = vmatpush.msra.mxu0 %v817
        %2606 = vmatpush.msra.mxu0 %v813
        %2607 = vmatpush.msra.mxu0 %v809
        %2608 = vmatpush.msra.mxu0 %v805
        %2609 = vmatpush.msra.mxu0 %v801
        %2610 = vmatpush.msra.mxu0 %v797
        %2611 = vmatpush.msra.mxu0 %v793
        %2612 = vmatpush.msra.mxu0 %v789
        %2613 = vmatpush.msra.mxu0 %v785
        %2614 = vmatpush.msra.mxu0 %v781
        %2615 = vmatpush.msra.mxu0 %v777
        %2616 = vmatpush.msra.mxu0 %v773
        %2617 = vmatpush.msra.mxu0 %v769
        %2618 = vmatpush.msra.mxu0 %v765
        %2619 = vmatmul.f32.gmra.mxu0 %v418
        %v2620 = vpop.f32.mrf.mxu0
        %v2621 = vadd.f32 %v2601, %v2620
        %2622 = vdwg.mxu0
        %2623 = vmatpush.msra.mxu0 %v889
        %2624 = vmatpush.msra.mxu0 %v885
        %2625 = vmatpush.msra.mxu0 %v881
        %2626 = vmatpush.msra.mxu0 %v877
        %2627 = vmatpush.msra.mxu0 %v873
        %2628 = vmatpush.msra.mxu0 %v869
        %2629 = vmatpush.msra.mxu0 %v865
        %2630 = vmatpush.msra.mxu0 %v861
        %2631 = vmatpush.msra.mxu0 %v857
        %2632 = vmatpush.msra.mxu0 %v853
        %2633 = vmatpush.msra.mxu0 %v849
        %2634 = vmatpush.msra.mxu0 %v845
        %2635 = vmatpush.msra.mxu0 %v841
        %2636 = vmatpush.msra.mxu0 %v837
        %2637 = vmatpush.msra.mxu0 %v833
        %2638 = vmatpush.msra.mxu0 %v829
        %2639 = vmatmul.f32.gmra.mxu0 %v419
        %v2640 = vpop.f32.mrf.mxu0
        %v2641 = vadd.f32 %v2621, %v2640
        %2642 = vdwg.mxu0
        %2643 = vmatpush.msra.mxu0 %v953
        %2644 = vmatpush.msra.mxu0 %v949
        %2645 = vmatpush.msra.mxu0 %v945
        %2646 = vmatpush.msra.mxu0 %v941
        %2647 = vmatpush.msra.mxu0 %v937
        %2648 = vmatpush.msra.mxu0 %v933
        %2649 = vmatpush.msra.mxu0 %v929
        %2650 = vmatpush.msra.mxu0 %v925
        %2651 = vmatpush.msra.mxu0 %v921
        %2652 = vmatpush.msra.mxu0 %v917
        %2653 = vmatpush.msra.mxu0 %v913
        %2654 = vmatpush.msra.mxu0 %v909
        %2655 = vmatpush.msra.mxu0 %v905
        %2656 = vmatpush.msra.mxu0 %v901
        %2657 = vmatpush.msra.mxu0 %v897
        %2658 = vmatpush.msra.mxu0 %v893
        %2659 = vmatmul.f32.gmra.mxu0 %v420
        %v2660 = vpop.f32.mrf.mxu0
        %v2661 = vadd.f32 %v2641, %v2660
        %2662 = vdwg.mxu0
        %2663 = vmatpush.msra.mxu0 %v1017
        %2664 = vmatpush.msra.mxu0 %v1013
        %2665 = vmatpush.msra.mxu0 %v1009
        %2666 = vmatpush.msra.mxu0 %v1005
        %2667 = vmatpush.msra.mxu0 %v1001
        %2668 = vmatpush.msra.mxu0 %v997
        %2669 = vmatpush.msra.mxu0 %v993
        %2670 = vmatpush.msra.mxu0 %v989
        %2671 = vmatpush.msra.mxu0 %v985
        %2672 = vmatpush.msra.mxu0 %v981
        %2673 = vmatpush.msra.mxu0 %v977
        %2674 = vmatpush.msra.mxu0 %v973
        %2675 = vmatpush.msra.mxu0 %v969
        %2676 = vmatpush.msra.mxu0 %v965
        %2677 = vmatpush.msra.mxu0 %v961
        %2678 = vmatpush.msra.mxu0 %v957
        %2679 = vmatmul.f32.gmra.mxu0 %v421
        %v2680 = vpop.f32.mrf.mxu0
        %v2681 = vadd.f32 %v2661, %v2680
        %2682 = vdwg.mxu0
        %2683 = vmatpush.msra.mxu0 %v1081
        %2684 = vmatpush.msra.mxu0 %v1077
        %2685 = vmatpush.msra.mxu0 %v1073
        %2686 = vmatpush.msra.mxu0 %v1069
        %2687 = vmatpush.msra.mxu0 %v1065
        %2688 = vmatpush.msra.mxu0 %v1061
        %2689 = vmatpush.msra.mxu0 %v1057
        %2690 = vmatpush.msra.mxu0 %v1053
        %2691 = vmatpush.msra.mxu0 %v1049
        %2692 = vmatpush.msra.mxu0 %v1045
        %2693 = vmatpush.msra.mxu0 %v1041
        %2694 = vmatpush.msra.mxu0 %v1037
        %2695 = vmatpush.msra.mxu0 %v1033
        %2696 = vmatpush.msra.mxu0 %v1029
        %2697 = vmatpush.msra.mxu0 %v1025
        %2698 = vmatpush.msra.mxu0 %v1021
        %2699 = vmatmul.f32.gmra.mxu0 %v422
        %v2700 = vpop.f32.mrf.mxu0
        %v2701 = vadd.f32 %v2681, %v2700
        %2702 = vdwg.mxu0
        %2703 = vmatpush.msra.mxu0 %v1145
        %2704 = vmatpush.msra.mxu0 %v1141
        %2705 = vmatpush.msra.mxu0 %v1137
        %2706 = vmatpush.msra.mxu0 %v1133
        %2707 = vmatpush.msra.mxu0 %v1129
        %2708 = vmatpush.msra.mxu0 %v1125
        %2709 = vmatpush.msra.mxu0 %v1121
        %2710 = vmatpush.msra.mxu0 %v1117
        %2711 = vmatpush.msra.mxu0 %v1113
        %2712 = vmatpush.msra.mxu0 %v1109
        %2713 = vmatpush.msra.mxu0 %v1105
        %2714 = vmatpush.msra.mxu0 %v1101
        %2715 = vmatpush.msra.mxu0 %v1097
        %2716 = vmatpush.msra.mxu0 %v1093
        %2717 = vmatpush.msra.mxu0 %v1089
        %2718 = vmatpush.msra.mxu0 %v1085
        %2719 = vmatmul.f32.gmra.mxu0 %v423
        %v2720 = vpop.f32.mrf.mxu0
        %v2721 = vadd.f32 %v2701, %v2720
        %2722 = vdwg.mxu0
        %2723 = vmatpush.msra.mxu0 %v1209
        %2724 = vmatpush.msra.mxu0 %v1205
        %2725 = vmatpush.msra.mxu0 %v1201
        %2726 = vmatpush.msra.mxu0 %v1197
        %2727 = vmatpush.msra.mxu0 %v1193
        %2728 = vmatpush.msra.mxu0 %v1189
        %2729 = vmatpush.msra.mxu0 %v1185
        %2730 = vmatpush.msra.mxu0 %v1181
        %2731 = vmatpush.msra.mxu0 %v1177
        %2732 = vmatpush.msra.mxu0 %v1173
        %2733 = vmatpush.msra.mxu0 %v1169
        %2734 = vmatpush.msra.mxu0 %v1165
        %2735 = vmatpush.msra.mxu0 %v1161
        %2736 = vmatpush.msra.mxu0 %v1157
        %2737 = vmatpush.msra.mxu0 %v1153
        %2738 = vmatpush.msra.mxu0 %v1149
        %2739 = vmatmul.f32.gmra.mxu0 %v424
        %v2740 = vpop.f32.mrf.mxu0
        %v2741 = vadd.f32 %v2721, %v2740
        %2742 = vdwg.mxu0
        %2743 = vmatpush.msra.mxu0 %v1273
        %2744 = vmatpush.msra.mxu0 %v1269
        %2745 = vmatpush.msra.mxu0 %v1265
        %2746 = vmatpush.msra.mxu0 %v1261
        %2747 = vmatpush.msra.mxu0 %v1257
        %2748 = vmatpush.msra.mxu0 %v1253
        %2749 = vmatpush.msra.mxu0 %v1249
        %2750 = vmatpush.msra.mxu0 %v1245
        %2751 = vmatpush.msra.mxu0 %v1241
        %2752 = vmatpush.msra.mxu0 %v1237
        %2753 = vmatpush.msra.mxu0 %v1233
        %2754 = vmatpush.msra.mxu0 %v1229
        %2755 = vmatpush.msra.mxu0 %v1225
        %2756 = vmatpush.msra.mxu0 %v1221
        %2757 = vmatpush.msra.mxu0 %v1217
        %2758 = vmatpush.msra.mxu0 %v1213
        %2759 = vmatmul.f32.gmra.mxu0 %v425
        %v2760 = vpop.f32.mrf.mxu0
        %v2761 = vadd.f32 %v2741, %v2760
        %2762 = vdwg.mxu0
        %2763 = vmatpush.msra.mxu0 %v1337
        %2764 = vmatpush.msra.mxu0 %v1333
        %2765 = vmatpush.msra.mxu0 %v1329
        %2766 = vmatpush.msra.mxu0 %v1325
        %2767 = vmatpush.msra.mxu0 %v1321
        %2768 = vmatpush.msra.mxu0 %v1317
        %2769 = vmatpush.msra.mxu0 %v1313
        %2770 = vmatpush.msra.mxu0 %v1309
        %2771 = vmatpush.msra.mxu0 %v1305
        %2772 = vmatpush.msra.mxu0 %v1301
        %2773 = vmatpush.msra.mxu0 %v1297
        %2774 = vmatpush.msra.mxu0 %v1293
        %2775 = vmatpush.msra.mxu0 %v1289
        %2776 = vmatpush.msra.mxu0 %v1285
        %2777 = vmatpush.msra.mxu0 %v1281
        %2778 = vmatpush.msra.mxu0 %v1277
        %2779 = vmatmul.f32.gmra.mxu0 %v426
        %v2780 = vpop.f32.mrf.mxu0
        %v2781 = vadd.f32 %v2761, %v2780
        %2782 = vdwg.mxu0
        %2783 = vmatpush.msra.mxu0 %v1401
        %2784 = vmatpush.msra.mxu0 %v1397
        %2785 = vmatpush.msra.mxu0 %v1393
        %2786 = vmatpush.msra.mxu0 %v1389
        %2787 = vmatpush.msra.mxu0 %v1385
        %2788 = vmatpush.msra.mxu0 %v1381
        %2789 = vmatpush.msra.mxu0 %v1377
        %2790 = vmatpush.msra.mxu0 %v1373
        %2791 = vmatpush.msra.mxu0 %v1369
        %2792 = vmatpush.msra.mxu0 %v1365
        %2793 = vmatpush.msra.mxu0 %v1361
        %2794 = vmatpush.msra.mxu0 %v1357
        %2795 = vmatpush.msra.mxu0 %v1353
        %2796 = vmatpush.msra.mxu0 %v1349
        %2797 = vmatpush.msra.mxu0 %v1345
        %2798 = vmatpush.msra.mxu0 %v1341
        %2799 = vmatmul.f32.gmra.mxu0 %v427
        %v2800 = vpop.f32.mrf.mxu0
        %v2801 = vadd.f32 %v2781, %v2800
        %2802 = vdwg.mxu0
        %2803 = vmatpush.msra.mxu0 %v1465
        %2804 = vmatpush.msra.mxu0 %v1461
        %2805 = vmatpush.msra.mxu0 %v1457
        %2806 = vmatpush.msra.mxu0 %v1453
        %2807 = vmatpush.msra.mxu0 %v1449
        %2808 = vmatpush.msra.mxu0 %v1445
        %2809 = vmatpush.msra.mxu0 %v1441
        %2810 = vmatpush.msra.mxu0 %v1437
        %2811 = vmatpush.msra.mxu0 %v1433
        %2812 = vmatpush.msra.mxu0 %v1429
        %2813 = vmatpush.msra.mxu0 %v1425
        %2814 = vmatpush.msra.mxu0 %v1421
        %2815 = vmatpush.msra.mxu0 %v1417
        %2816 = vmatpush.msra.mxu0 %v1413
        %2817 = vmatpush.msra.mxu0 %v1409
        %2818 = vmatpush.msra.mxu0 %v1405
        %2819 = vmatmul.f32.gmra.mxu0 %v428
        %v2820 = vpop.f32.mrf.mxu0
        %v2821 = vadd.f32 %v2801, %v2820
        %2822 = vdwg.mxu0
        %2823 = vmatpush.msra.mxu0 %v1529
        %2824 = vmatpush.msra.mxu0 %v1525
        %2825 = vmatpush.msra.mxu0 %v1521
        %2826 = vmatpush.msra.mxu0 %v1517
        %2827 = vmatpush.msra.mxu0 %v1513
        %2828 = vmatpush.msra.mxu0 %v1509
        %2829 = vmatpush.msra.mxu0 %v1505
        %2830 = vmatpush.msra.mxu0 %v1501
        %2831 = vmatpush.msra.mxu0 %v1497
        %2832 = vmatpush.msra.mxu0 %v1493
        %2833 = vmatpush.msra.mxu0 %v1489
        %2834 = vmatpush.msra.mxu0 %v1485
        %2835 = vmatpush.msra.mxu0 %v1481
        %2836 = vmatpush.msra.mxu0 %v1477
        %2837 = vmatpush.msra.mxu0 %v1473
        %2838 = vmatpush.msra.mxu0 %v1469
        %2839 = vmatmul.f32.gmra.mxu0 %v429
        %v2840 = vpop.f32.mrf.mxu0
        %v2841 = vadd.f32 %v2821, %v2840
        %2842 = vdwg.mxu0
        %2843 = vmatpush.msra.mxu0 %v1593
        %2844 = vmatpush.msra.mxu0 %v1589
        %2845 = vmatpush.msra.mxu0 %v1585
        %2846 = vmatpush.msra.mxu0 %v1581
        %2847 = vmatpush.msra.mxu0 %v1577
        %2848 = vmatpush.msra.mxu0 %v1573
        %2849 = vmatpush.msra.mxu0 %v1569
        %2850 = vmatpush.msra.mxu0 %v1565
        %2851 = vmatpush.msra.mxu0 %v1561
        %2852 = vmatpush.msra.mxu0 %v1557
        %2853 = vmatpush.msra.mxu0 %v1553
        %2854 = vmatpush.msra.mxu0 %v1549
        %2855 = vmatpush.msra.mxu0 %v1545
        %2856 = vmatpush.msra.mxu0 %v1541
        %2857 = vmatpush.msra.mxu0 %v1537
        %2858 = vmatpush.msra.mxu0 %v1533
        %2859 = vmatmul.f32.gmra.mxu0 %v430
        %v2860 = vpop.f32.mrf.mxu0
        %v2861 = vadd.f32 %v2841, %v2860
        %2862 = vdwg.mxu0
        %2863 = vmatpush.msra.mxu0 %v1657
        %2864 = vmatpush.msra.mxu0 %v1653
        %2865 = vmatpush.msra.mxu0 %v1649
        %2866 = vmatpush.msra.mxu0 %v1645
        %2867 = vmatpush.msra.mxu0 %v1641
        %2868 = vmatpush.msra.mxu0 %v1637
        %2869 = vmatpush.msra.mxu0 %v1633
        %2870 = vmatpush.msra.mxu0 %v1629
        %2871 = vmatpush.msra.mxu0 %v1625
        %2872 = vmatpush.msra.mxu0 %v1621
        %2873 = vmatpush.msra.mxu0 %v1617
        %2874 = vmatpush.msra.mxu0 %v1613
        %2875 = vmatpush.msra.mxu0 %v1609
        %2876 = vmatpush.msra.mxu0 %v1605
        %2877 = vmatpush.msra.mxu0 %v1601
        %2878 = vmatpush.msra.mxu0 %v1597
        %2879 = vmatmul.f32.gmra.mxu0 %v431
        %v2880 = vpop.f32.mrf.mxu0
        %v2881 = vadd.f32 %v2861, %v2880
        %2882 = vdwg.mxu0
        %2883 = vmatpush.msra.mxu0 %v1721
        %2884 = vmatpush.msra.mxu0 %v1717
        %2885 = vmatpush.msra.mxu0 %v1713
        %2886 = vmatpush.msra.mxu0 %v1709
        %2887 = vmatpush.msra.mxu0 %v1705
        %2888 = vmatpush.msra.mxu0 %v1701
        %2889 = vmatpush.msra.mxu0 %v1697
        %2890 = vmatpush.msra.mxu0 %v1693
        %2891 = vmatpush.msra.mxu0 %v1689
        %2892 = vmatpush.msra.mxu0 %v1685
        %2893 = vmatpush.msra.mxu0 %v1681
        %2894 = vmatpush.msra.mxu0 %v1677
        %2895 = vmatpush.msra.mxu0 %v1673
        %2896 = vmatpush.msra.mxu0 %v1669
        %2897 = vmatpush.msra.mxu0 %v1665
        %2898 = vmatpush.msra.mxu0 %v1661
        %2899 = vmatmul.f32.gmra.mxu0 %v432
        %v2900 = vpop.f32.mrf.mxu0
        %v2901 = vadd.f32 %v2881, %v2900
        %2902 = vdwg.mxu0
        %2903 = vmatpush.msra.mxu0 %v1785
        %2904 = vmatpush.msra.mxu0 %v1781
        %2905 = vmatpush.msra.mxu0 %v1777
        %2906 = vmatpush.msra.mxu0 %v1773
        %2907 = vmatpush.msra.mxu0 %v1769
        %2908 = vmatpush.msra.mxu0 %v1765
        %2909 = vmatpush.msra.mxu0 %v1761
        %2910 = vmatpush.msra.mxu0 %v1757
        %2911 = vmatpush.msra.mxu0 %v1753
        %2912 = vmatpush.msra.mxu0 %v1749
        %2913 = vmatpush.msra.mxu0 %v1745
        %2914 = vmatpush.msra.mxu0 %v1741
        %2915 = vmatpush.msra.mxu0 %v1737
        %2916 = vmatpush.msra.mxu0 %v1733
        %2917 = vmatpush.msra.mxu0 %v1729
        %2918 = vmatpush.msra.mxu0 %v1725
        %2919 = vmatmul.f32.gmra.mxu0 %v433
        %v2920 = vpop.f32.mrf.mxu0
        %v2921 = vadd.f32 %v2901, %v2920
        %2922 = vdwg.mxu0
        %2923 = vmatpush.msra.mxu0 %v1849
        %2924 = vmatpush.msra.mxu0 %v1845
        %2925 = vmatpush.msra.mxu0 %v1841
        %2926 = vmatpush.msra.mxu0 %v1837
        %2927 = vmatpush.msra.mxu0 %v1833
        %2928 = vmatpush.msra.mxu0 %v1829
        %2929 = vmatpush.msra.mxu0 %v1825
        %2930 = vmatpush.msra.mxu0 %v1821
        %2931 = vmatpush.msra.mxu0 %v1817
        %2932 = vmatpush.msra.mxu0 %v1813
        %2933 = vmatpush.msra.mxu0 %v1809
        %2934 = vmatpush.msra.mxu0 %v1805
        %2935 = vmatpush.msra.mxu0 %v1801
        %2936 = vmatpush.msra.mxu0 %v1797
        %2937 = vmatpush.msra.mxu0 %v1793
        %2938 = vmatpush.msra.mxu0 %v1789
        %2939 = vmatmul.f32.gmra.mxu0 %v434
        %v2940 = vpop.f32.mrf.mxu0
        %v2941 = vadd.f32 %v2921, %v2940
        %2942 = vdwg.mxu0
        %2943 = vmatpush.msra.mxu0 %v1913
        %2944 = vmatpush.msra.mxu0 %v1909
        %2945 = vmatpush.msra.mxu0 %v1905
        %2946 = vmatpush.msra.mxu0 %v1901
        %2947 = vmatpush.msra.mxu0 %v1897
        %2948 = vmatpush.msra.mxu0 %v1893
        %2949 = vmatpush.msra.mxu0 %v1889
        %2950 = vmatpush.msra.mxu0 %v1885
        %2951 = vmatpush.msra.mxu0 %v1881
        %2952 = vmatpush.msra.mxu0 %v1877
        %2953 = vmatpush.msra.mxu0 %v1873
        %2954 = vmatpush.msra.mxu0 %v1869
        %2955 = vmatpush.msra.mxu0 %v1865
        %2956 = vmatpush.msra.mxu0 %v1861
        %2957 = vmatpush.msra.mxu0 %v1857
        %2958 = vmatpush.msra.mxu0 %v1853
        %2959 = vmatmul.f32.gmra.mxu0 %v435
        %v2960 = vpop.f32.mrf.mxu0
        %v2961 = vadd.f32 %v2941, %v2960
        %2962 = vdwg.mxu0
        %2963 = vmatpush.msra.mxu0 %v1977
        %2964 = vmatpush.msra.mxu0 %v1973
        %2965 = vmatpush.msra.mxu0 %v1969
        %2966 = vmatpush.msra.mxu0 %v1965
        %2967 = vmatpush.msra.mxu0 %v1961
        %2968 = vmatpush.msra.mxu0 %v1957
        %2969 = vmatpush.msra.mxu0 %v1953
        %2970 = vmatpush.msra.mxu0 %v1949
        %2971 = vmatpush.msra.mxu0 %v1945
        %2972 = vmatpush.msra.mxu0 %v1941
        %2973 = vmatpush.msra.mxu0 %v1937
        %2974 = vmatpush.msra.mxu0 %v1933
        %2975 = vmatpush.msra.mxu0 %v1929
        %2976 = vmatpush.msra.mxu0 %v1925
        %2977 = vmatpush.msra.mxu0 %v1921
        %2978 = vmatpush.msra.mxu0 %v1917
        %2979 = vmatmul.f32.gmra.mxu0 %v436
        %v2980 = vpop.f32.mrf.mxu0
        %v2981 = vadd.f32 %v2961, %v2980
        %2982 = vdwg.mxu0
        %2983 = vmatpush.msra.mxu0 %v2041
        %2984 = vmatpush.msra.mxu0 %v2037
        %2985 = vmatpush.msra.mxu0 %v2033
        %2986 = vmatpush.msra.mxu0 %v2029
        %2987 = vmatpush.msra.mxu0 %v2025
        %2988 = vmatpush.msra.mxu0 %v2021
        %2989 = vmatpush.msra.mxu0 %v2017
        %2990 = vmatpush.msra.mxu0 %v2013
        %2991 = vmatpush.msra.mxu0 %v2009
        %2992 = vmatpush.msra.mxu0 %v2005
        %2993 = vmatpush.msra.mxu0 %v2001
        %2994 = vmatpush.msra.mxu0 %v1997
        %2995 = vmatpush.msra.mxu0 %v1993
        %2996 = vmatpush.msra.mxu0 %v1989
        %2997 = vmatpush.msra.mxu0 %v1985
        %2998 = vmatpush.msra.mxu0 %v1981
        %2999 = vmatmul.f32.gmra.mxu0 %v437
        %v3000 = vpop.f32.mrf.mxu0
        %v3001 = vadd.f32 %v2981, %v3000
        %3002 = vdwg.mxu0
        %3003 = vmatpush.msra.mxu0 %v2105
        %3004 = vmatpush.msra.mxu0 %v2101
        %3005 = vmatpush.msra.mxu0 %v2097
        %3006 = vmatpush.msra.mxu0 %v2093
        %3007 = vmatpush.msra.mxu0 %v2089
        %3008 = vmatpush.msra.mxu0 %v2085
        %3009 = vmatpush.msra.mxu0 %v2081
        %3010 = vmatpush.msra.mxu0 %v2077
        %3011 = vmatpush.msra.mxu0 %v2073
        %3012 = vmatpush.msra.mxu0 %v2069
        %3013 = vmatpush.msra.mxu0 %v2065
        %3014 = vmatpush.msra.mxu0 %v2061
        %3015 = vmatpush.msra.mxu0 %v2057
        %3016 = vmatpush.msra.mxu0 %v2053
        %3017 = vmatpush.msra.mxu0 %v2049
        %3018 = vmatpush.msra.mxu0 %v2045
        %3019 = vmatmul.f32.gmra.mxu0 %v438
        %v3020 = vpop.f32.mrf.mxu0
        %v3021 = vadd.f32 %v3001, %v3020
        %3022 = vdwg.mxu0
        %3023 = vmatpush.msra.mxu0 %v2169
        %3024 = vmatpush.msra.mxu0 %v2165
        %3025 = vmatpush.msra.mxu0 %v2161
        %3026 = vmatpush.msra.mxu0 %v2157
        %3027 = vmatpush.msra.mxu0 %v2153
        %3028 = vmatpush.msra.mxu0 %v2149
        %3029 = vmatpush.msra.mxu0 %v2145
        %3030 = vmatpush.msra.mxu0 %v2141
        %3031 = vmatpush.msra.mxu0 %v2137
        %3032 = vmatpush.msra.mxu0 %v2133
        %3033 = vmatpush.msra.mxu0 %v2129
        %3034 = vmatpush.msra.mxu0 %v2125
        %3035 = vmatpush.msra.mxu0 %v2121
        %3036 = vmatpush.msra.mxu0 %v2117
        %3037 = vmatpush.msra.mxu0 %v2113
        %3038 = vmatpush.msra.mxu0 %v2109
        %3039 = vmatmul.f32.gmra.mxu0 %v439
        %v3040 = vpop.f32.mrf.mxu0
        %v3041 = vadd.f32 %v3021, %v3040
        %3042 = vdwg.mxu0
        %3043 = vmatpush.msra.mxu0 %v2233
        %3044 = vmatpush.msra.mxu0 %v2229
        %3045 = vmatpush.msra.mxu0 %v2225
        %3046 = vmatpush.msra.mxu0 %v2221
        %3047 = vmatpush.msra.mxu0 %v2217
        %3048 = vmatpush.msra.mxu0 %v2213
        %3049 = vmatpush.msra.mxu0 %v2209
        %3050 = vmatpush.msra.mxu0 %v2205
        %3051 = vmatpush.msra.mxu0 %v2201
        %3052 = vmatpush.msra.mxu0 %v2197
        %3053 = vmatpush.msra.mxu0 %v2193
        %3054 = vmatpush.msra.mxu0 %v2189
        %3055 = vmatpush.msra.mxu0 %v2185
        %3056 = vmatpush.msra.mxu0 %v2181
        %3057 = vmatpush.msra.mxu0 %v2177
        %3058 = vmatpush.msra.mxu0 %v2173
        %3059 = vmatmul.f32.gmra.mxu0 %v440
        %v3060 = vpop.f32.mrf.mxu0
        %v3061 = vadd.f32 %v3041, %v3060
        %3062 = vdwg.mxu0
        %3063 = vmatpush.msra.mxu0 %v2297
        %3064 = vmatpush.msra.mxu0 %v2293
        %3065 = vmatpush.msra.mxu0 %v2289
        %3066 = vmatpush.msra.mxu0 %v2285
        %3067 = vmatpush.msra.mxu0 %v2281
        %3068 = vmatpush.msra.mxu0 %v2277
        %3069 = vmatpush.msra.mxu0 %v2273
        %3070 = vmatpush.msra.mxu0 %v2269
        %3071 = vmatpush.msra.mxu0 %v2265
        %3072 = vmatpush.msra.mxu0 %v2261
        %3073 = vmatpush.msra.mxu0 %v2257
        %3074 = vmatpush.msra.mxu0 %v2253
        %3075 = vmatpush.msra.mxu0 %v2249
        %3076 = vmatpush.msra.mxu0 %v2245
        %3077 = vmatpush.msra.mxu0 %v2241
        %3078 = vmatpush.msra.mxu0 %v2237
        %3079 = vmatmul.f32.gmra.mxu0 %v441
        %v3080 = vpop.f32.mrf.mxu0
        %v3081 = vadd.f32 %v3061, %v3080
        %3082 = vdwg.mxu0
        %3083 = vmatpush.msra.mxu0 %v2361
        %3084 = vmatpush.msra.mxu0 %v2357
        %3085 = vmatpush.msra.mxu0 %v2353
        %3086 = vmatpush.msra.mxu0 %v2349
        %3087 = vmatpush.msra.mxu0 %v2345
        %3088 = vmatpush.msra.mxu0 %v2341
        %3089 = vmatpush.msra.mxu0 %v2337
        %3090 = vmatpush.msra.mxu0 %v2333
        %3091 = vmatpush.msra.mxu0 %v2329
        %3092 = vmatpush.msra.mxu0 %v2325
        %3093 = vmatpush.msra.mxu0 %v2321
        %3094 = vmatpush.msra.mxu0 %v2317
        %3095 = vmatpush.msra.mxu0 %v2313
        %3096 = vmatpush.msra.mxu0 %v2309
        %3097 = vmatpush.msra.mxu0 %v2305
        %3098 = vmatpush.msra.mxu0 %v2301
        %3099 = vmatmul.f32.gmra.mxu0 %v442
        %v3100 = vpop.f32.mrf.mxu0
        %v3101 = vadd.f32 %v3081, %v3100
        %3102 = vdwg.mxu0
        %3103 = vmatpush.msra.mxu0 %v2425
        %3104 = vmatpush.msra.mxu0 %v2421
        %3105 = vmatpush.msra.mxu0 %v2417
        %3106 = vmatpush.msra.mxu0 %v2413
        %3107 = vmatpush.msra.mxu0 %v2409
        %3108 = vmatpush.msra.mxu0 %v2405
        %3109 = vmatpush.msra.mxu0 %v2401
        %3110 = vmatpush.msra.mxu0 %v2397
        %3111 = vmatpush.msra.mxu0 %v2393
        %3112 = vmatpush.msra.mxu0 %v2389
        %3113 = vmatpush.msra.mxu0 %v2385
        %3114 = vmatpush.msra.mxu0 %v2381
        %3115 = vmatpush.msra.mxu0 %v2377
        %3116 = vmatpush.msra.mxu0 %v2373
        %3117 = vmatpush.msra.mxu0 %v2369
        %3118 = vmatpush.msra.mxu0 %v2365
        %3119 = vmatmul.f32.gmra.mxu0 %v443
        %v3120 = vpop.f32.mrf.mxu0
        %v3121 = vadd.f32 %v3101, %v3120
        %3122 = vdwg.mxu0
        %3123 = vmatpush.msra.mxu0 %v2489
        %3124 = vmatpush.msra.mxu0 %v2485
        %3125 = vmatpush.msra.mxu0 %v2481
        %3126 = vmatpush.msra.mxu0 %v2477
        %3127 = vmatpush.msra.mxu0 %v2473
        %3128 = vmatpush.msra.mxu0 %v2469
        %3129 = vmatpush.msra.mxu0 %v2465
        %3130 = vmatpush.msra.mxu0 %v2461
        %3131 = vmatpush.msra.mxu0 %v2457
        %3132 = vmatpush.msra.mxu0 %v2453
        %3133 = vmatpush.msra.mxu0 %v2449
        %3134 = vmatpush.msra.mxu0 %v2445
        %3135 = vmatpush.msra.mxu0 %v2441
        %3136 = vmatpush.msra.mxu0 %v2437
        %3137 = vmatpush.msra.mxu0 %v2433
        %3138 = vmatpush.msra.mxu0 %v2429
        %3139 = vmatmul.f32.gmra.mxu0 %v444
        %v3140 = vpop.f32.mrf.mxu0
        %v3141 = vadd.f32 %v3121, %v3140
        %3142 = vdwg.mxu0
        %3143 = vmatpush.msra.mxu0 %v506
        %3144 = vmatpush.msra.mxu0 %v502
        %3145 = vmatpush.msra.mxu0 %v498
        %3146 = vmatpush.msra.mxu0 %v494
        %3147 = vmatpush.msra.mxu0 %v490
        %3148 = vmatpush.msra.mxu0 %v486
        %3149 = vmatpush.msra.mxu0 %v482
        %3150 = vmatpush.msra.mxu0 %v478
        %3151 = vmatpush.msra.mxu0 %v474
        %3152 = vmatpush.msra.mxu0 %v470
        %3153 = vmatpush.msra.mxu0 %v466
        %3154 = vmatpush.msra.mxu0 %v462
        %3155 = vmatpush.msra.mxu0 %v458
        %3156 = vmatpush.msra.mxu0 %v454
        %3157 = vmatpush.msra.mxu0 %v450
        %3158 = vmatpush.msra.mxu0 %v446
        %3159 = vmatmul.f32.gmra.mxu0 %v413
        %v3160 = vpop.f32.mrf.mxu0
        %v3161 = vadd.f32 %v2496, %v3160
        %3162 = vdwg.mxu0
        %3163 = vmatpush.msra.mxu0 %v570
        %3164 = vmatpush.msra.mxu0 %v566
        %3165 = vmatpush.msra.mxu0 %v562
        %3166 = vmatpush.msra.mxu0 %v558
        %3167 = vmatpush.msra.mxu0 %v554
        %3168 = vmatpush.msra.mxu0 %v550
        %3169 = vmatpush.msra.mxu0 %v546
        %3170 = vmatpush.msra.mxu0 %v542
        %3171 = vmatpush.msra.mxu0 %v538
        %3172 = vmatpush.msra.mxu0 %v534
        %3173 = vmatpush.msra.mxu0 %v530
        %3174 = vmatpush.msra.mxu0 %v526
        %3175 = vmatpush.msra.mxu0 %v522
        %3176 = vmatpush.msra.mxu0 %v518
        %3177 = vmatpush.msra.mxu0 %v514
        %3178 = vmatpush.msra.mxu0 %v510
        %3179 = vmatmul.f32.gmra.mxu0 %v414
        %v3180 = vpop.f32.mrf.mxu0
        %v3181 = vadd.f32 %v3161, %v3180
        %3182 = vdwg.mxu0
        %3183 = vmatpush.msra.mxu0 %v634
        %3184 = vmatpush.msra.mxu0 %v630
        %3185 = vmatpush.msra.mxu0 %v626
        %3186 = vmatpush.msra.mxu0 %v622
        %3187 = vmatpush.msra.mxu0 %v618
        %3188 = vmatpush.msra.mxu0 %v614
        %3189 = vmatpush.msra.mxu0 %v610
        %3190 = vmatpush.msra.mxu0 %v606
        %3191 = vmatpush.msra.mxu0 %v602
        %3192 = vmatpush.msra.mxu0 %v598
        %3193 = vmatpush.msra.mxu0 %v594
        %3194 = vmatpush.msra.mxu0 %v590
        %3195 = vmatpush.msra.mxu0 %v586
        %3196 = vmatpush.msra.mxu0 %v582
        %3197 = vmatpush.msra.mxu0 %v578
        %3198 = vmatpush.msra.mxu0 %v574
        %3199 = vmatmul.f32.gmra.mxu0 %v415
        %v3200 = vpop.f32.mrf.mxu0
        %v3201 = vadd.f32 %v3181, %v3200
        %3202 = vdwg.mxu0
        %3203 = vmatpush.msra.mxu0 %v698
        %3204 = vmatpush.msra.mxu0 %v694
        %3205 = vmatpush.msra.mxu0 %v690
        %3206 = vmatpush.msra.mxu0 %v686
        %3207 = vmatpush.msra.mxu0 %v682
        %3208 = vmatpush.msra.mxu0 %v678
        %3209 = vmatpush.msra.mxu0 %v674
        %3210 = vmatpush.msra.mxu0 %v670
        %3211 = vmatpush.msra.mxu0 %v666
        %3212 = vmatpush.msra.mxu0 %v662
        %3213 = vmatpush.msra.mxu0 %v658
        %3214 = vmatpush.msra.mxu0 %v654
        %3215 = vmatpush.msra.mxu0 %v650
        %3216 = vmatpush.msra.mxu0 %v646
        %3217 = vmatpush.msra.mxu0 %v642
        %3218 = vmatpush.msra.mxu0 %v638
        %3219 = vmatmul.f32.gmra.mxu0 %v416
        %v3220 = vpop.f32.mrf.mxu0
        %v3221 = vadd.f32 %v3201, %v3220
        %3222 = vdwg.mxu0
        %3223 = vmatpush.msra.mxu0 %v762
        %3224 = vmatpush.msra.mxu0 %v758
        %3225 = vmatpush.msra.mxu0 %v754
        %3226 = vmatpush.msra.mxu0 %v750
        %3227 = vmatpush.msra.mxu0 %v746
        %3228 = vmatpush.msra.mxu0 %v742
        %3229 = vmatpush.msra.mxu0 %v738
        %3230 = vmatpush.msra.mxu0 %v734
        %3231 = vmatpush.msra.mxu0 %v730
        %3232 = vmatpush.msra.mxu0 %v726
        %3233 = vmatpush.msra.mxu0 %v722
        %3234 = vmatpush.msra.mxu0 %v718
        %3235 = vmatpush.msra.mxu0 %v714
        %3236 = vmatpush.msra.mxu0 %v710
        %3237 = vmatpush.msra.mxu0 %v706
        %3238 = vmatpush.msra.mxu0 %v702
        %3239 = vmatmul.f32.gmra.mxu0 %v417
        %v3240 = vpop.f32.mrf.mxu0
        %v3241 = vadd.f32 %v3221, %v3240
        %3242 = vdwg.mxu0
        %3243 = vmatpush.msra.mxu0 %v826
        %3244 = vmatpush.msra.mxu0 %v822
        %3245 = vmatpush.msra.mxu0 %v818
        %3246 = vmatpush.msra.mxu0 %v814
        %3247 = vmatpush.msra.mxu0 %v810
        %3248 = vmatpush.msra.mxu0 %v806
        %3249 = vmatpush.msra.mxu0 %v802
        %3250 = vmatpush.msra.mxu0 %v798
        %3251 = vmatpush.msra.mxu0 %v794
        %3252 = vmatpush.msra.mxu0 %v790
        %3253 = vmatpush.msra.mxu0 %v786
        %3254 = vmatpush.msra.mxu0 %v782
        %3255 = vmatpush.msra.mxu0 %v778
        %3256 = vmatpush.msra.mxu0 %v774
        %3257 = vmatpush.msra.mxu0 %v770
        %3258 = vmatpush.msra.mxu0 %v766
        %3259 = vmatmul.f32.gmra.mxu0 %v418
        %v3260 = vpop.f32.mrf.mxu0
        %v3261 = vadd.f32 %v3241, %v3260
        %3262 = vdwg.mxu0
        %3263 = vmatpush.msra.mxu0 %v890
        %3264 = vmatpush.msra.mxu0 %v886
        %3265 = vmatpush.msra.mxu0 %v882
        %3266 = vmatpush.msra.mxu0 %v878
        %3267 = vmatpush.msra.mxu0 %v874
        %3268 = vmatpush.msra.mxu0 %v870
        %3269 = vmatpush.msra.mxu0 %v866
        %3270 = vmatpush.msra.mxu0 %v862
        %3271 = vmatpush.msra.mxu0 %v858
        %3272 = vmatpush.msra.mxu0 %v854
        %3273 = vmatpush.msra.mxu0 %v850
        %3274 = vmatpush.msra.mxu0 %v846
        %3275 = vmatpush.msra.mxu0 %v842
        %3276 = vmatpush.msra.mxu0 %v838
        %3277 = vmatpush.msra.mxu0 %v834
        %3278 = vmatpush.msra.mxu0 %v830
        %3279 = vmatmul.f32.gmra.mxu0 %v419
        %v3280 = vpop.f32.mrf.mxu0
        %v3281 = vadd.f32 %v3261, %v3280
        %3282 = vdwg.mxu0
        %3283 = vmatpush.msra.mxu0 %v954
        %3284 = vmatpush.msra.mxu0 %v950
        %3285 = vmatpush.msra.mxu0 %v946
        %3286 = vmatpush.msra.mxu0 %v942
        %3287 = vmatpush.msra.mxu0 %v938
        %3288 = vmatpush.msra.mxu0 %v934
        %3289 = vmatpush.msra.mxu0 %v930
        %3290 = vmatpush.msra.mxu0 %v926
        %3291 = vmatpush.msra.mxu0 %v922
        %3292 = vmatpush.msra.mxu0 %v918
        %3293 = vmatpush.msra.mxu0 %v914
        %3294 = vmatpush.msra.mxu0 %v910
        %3295 = vmatpush.msra.mxu0 %v906
        %3296 = vmatpush.msra.mxu0 %v902
        %3297 = vmatpush.msra.mxu0 %v898
        %3298 = vmatpush.msra.mxu0 %v894
        %3299 = vmatmul.f32.gmra.mxu0 %v420
        %v3300 = vpop.f32.mrf.mxu0
        %v3301 = vadd.f32 %v3281, %v3300
        %3302 = vdwg.mxu0
        %3303 = vmatpush.msra.mxu0 %v1018
        %3304 = vmatpush.msra.mxu0 %v1014
        %3305 = vmatpush.msra.mxu0 %v1010
        %3306 = vmatpush.msra.mxu0 %v1006
        %3307 = vmatpush.msra.mxu0 %v1002
        %3308 = vmatpush.msra.mxu0 %v998
        %3309 = vmatpush.msra.mxu0 %v994
        %3310 = vmatpush.msra.mxu0 %v990
        %3311 = vmatpush.msra.mxu0 %v986
        %3312 = vmatpush.msra.mxu0 %v982
        %3313 = vmatpush.msra.mxu0 %v978
        %3314 = vmatpush.msra.mxu0 %v974
        %3315 = vmatpush.msra.mxu0 %v970
        %3316 = vmatpush.msra.mxu0 %v966
        %3317 = vmatpush.msra.mxu0 %v962
        %3318 = vmatpush.msra.mxu0 %v958
        %3319 = vmatmul.f32.gmra.mxu0 %v421
        %v3320 = vpop.f32.mrf.mxu0
        %v3321 = vadd.f32 %v3301, %v3320
        %3322 = vdwg.mxu0
        %3323 = vmatpush.msra.mxu0 %v1082
        %3324 = vmatpush.msra.mxu0 %v1078
        %3325 = vmatpush.msra.mxu0 %v1074
        %3326 = vmatpush.msra.mxu0 %v1070
        %3327 = vmatpush.msra.mxu0 %v1066
        %3328 = vmatpush.msra.mxu0 %v1062
        %3329 = vmatpush.msra.mxu0 %v1058
        %3330 = vmatpush.msra.mxu0 %v1054
        %3331 = vmatpush.msra.mxu0 %v1050
        %3332 = vmatpush.msra.mxu0 %v1046
        %3333 = vmatpush.msra.mxu0 %v1042
        %3334 = vmatpush.msra.mxu0 %v1038
        %3335 = vmatpush.msra.mxu0 %v1034
        %3336 = vmatpush.msra.mxu0 %v1030
        %3337 = vmatpush.msra.mxu0 %v1026
        %3338 = vmatpush.msra.mxu0 %v1022
        %3339 = vmatmul.f32.gmra.mxu0 %v422
        %v3340 = vpop.f32.mrf.mxu0
        %v3341 = vadd.f32 %v3321, %v3340
        %3342 = vdwg.mxu0
        %3343 = vmatpush.msra.mxu0 %v1146
        %3344 = vmatpush.msra.mxu0 %v1142
        %3345 = vmatpush.msra.mxu0 %v1138
        %3346 = vmatpush.msra.mxu0 %v1134
        %3347 = vmatpush.msra.mxu0 %v1130
        %3348 = vmatpush.msra.mxu0 %v1126
        %3349 = vmatpush.msra.mxu0 %v1122
        %3350 = vmatpush.msra.mxu0 %v1118
        %3351 = vmatpush.msra.mxu0 %v1114
        %3352 = vmatpush.msra.mxu0 %v1110
        %3353 = vmatpush.msra.mxu0 %v1106
        %3354 = vmatpush.msra.mxu0 %v1102
        %3355 = vmatpush.msra.mxu0 %v1098
        %3356 = vmatpush.msra.mxu0 %v1094
        %3357 = vmatpush.msra.mxu0 %v1090
        %3358 = vmatpush.msra.mxu0 %v1086
        %3359 = vmatmul.f32.gmra.mxu0 %v423
        %v3360 = vpop.f32.mrf.mxu0
        %v3361 = vadd.f32 %v3341, %v3360
        %3362 = vdwg.mxu0
        %3363 = vmatpush.msra.mxu0 %v1210
        %3364 = vmatpush.msra.mxu0 %v1206
        %3365 = vmatpush.msra.mxu0 %v1202
        %3366 = vmatpush.msra.mxu0 %v1198
        %3367 = vmatpush.msra.mxu0 %v1194
        %3368 = vmatpush.msra.mxu0 %v1190
        %3369 = vmatpush.msra.mxu0 %v1186
        %3370 = vmatpush.msra.mxu0 %v1182
        %3371 = vmatpush.msra.mxu0 %v1178
        %3372 = vmatpush.msra.mxu0 %v1174
        %3373 = vmatpush.msra.mxu0 %v1170
        %3374 = vmatpush.msra.mxu0 %v1166
        %3375 = vmatpush.msra.mxu0 %v1162
        %3376 = vmatpush.msra.mxu0 %v1158
        %3377 = vmatpush.msra.mxu0 %v1154
        %3378 = vmatpush.msra.mxu0 %v1150
        %3379 = vmatmul.f32.gmra.mxu0 %v424
        %v3380 = vpop.f32.mrf.mxu0
        %v3381 = vadd.f32 %v3361, %v3380
        %3382 = vdwg.mxu0
        %3383 = vmatpush.msra.mxu0 %v1274
        %3384 = vmatpush.msra.mxu0 %v1270
        %3385 = vmatpush.msra.mxu0 %v1266
        %3386 = vmatpush.msra.mxu0 %v1262
        %3387 = vmatpush.msra.mxu0 %v1258
        %3388 = vmatpush.msra.mxu0 %v1254
        %3389 = vmatpush.msra.mxu0 %v1250
        %3390 = vmatpush.msra.mxu0 %v1246
        %3391 = vmatpush.msra.mxu0 %v1242
        %3392 = vmatpush.msra.mxu0 %v1238
        %3393 = vmatpush.msra.mxu0 %v1234
        %3394 = vmatpush.msra.mxu0 %v1230
        %3395 = vmatpush.msra.mxu0 %v1226
        %3396 = vmatpush.msra.mxu0 %v1222
        %3397 = vmatpush.msra.mxu0 %v1218
        %3398 = vmatpush.msra.mxu0 %v1214
        %3399 = vmatmul.f32.gmra.mxu0 %v425
        %v3400 = vpop.f32.mrf.mxu0
        %v3401 = vadd.f32 %v3381, %v3400
        %3402 = vdwg.mxu0
        %3403 = vmatpush.msra.mxu0 %v1338
        %3404 = vmatpush.msra.mxu0 %v1334
        %3405 = vmatpush.msra.mxu0 %v1330
        %3406 = vmatpush.msra.mxu0 %v1326
        %3407 = vmatpush.msra.mxu0 %v1322
        %3408 = vmatpush.msra.mxu0 %v1318
        %3409 = vmatpush.msra.mxu0 %v1314
        %3410 = vmatpush.msra.mxu0 %v1310
        %3411 = vmatpush.msra.mxu0 %v1306
        %3412 = vmatpush.msra.mxu0 %v1302
        %3413 = vmatpush.msra.mxu0 %v1298
        %3414 = vmatpush.msra.mxu0 %v1294
        %3415 = vmatpush.msra.mxu0 %v1290
        %3416 = vmatpush.msra.mxu0 %v1286
        %3417 = vmatpush.msra.mxu0 %v1282
        %3418 = vmatpush.msra.mxu0 %v1278
        %3419 = vmatmul.f32.gmra.mxu0 %v426
        %v3420 = vpop.f32.mrf.mxu0
        %v3421 = vadd.f32 %v3401, %v3420
        %3422 = vdwg.mxu0
        %3423 = vmatpush.msra.mxu0 %v1402
        %3424 = vmatpush.msra.mxu0 %v1398
        %3425 = vmatpush.msra.mxu0 %v1394
        %3426 = vmatpush.msra.mxu0 %v1390
        %3427 = vmatpush.msra.mxu0 %v1386
        %3428 = vmatpush.msra.mxu0 %v1382
        %3429 = vmatpush.msra.mxu0 %v1378
        %3430 = vmatpush.msra.mxu0 %v1374
        %3431 = vmatpush.msra.mxu0 %v1370
        %3432 = vmatpush.msra.mxu0 %v1366
        %3433 = vmatpush.msra.mxu0 %v1362
        %3434 = vmatpush.msra.mxu0 %v1358
        %3435 = vmatpush.msra.mxu0 %v1354
        %3436 = vmatpush.msra.mxu0 %v1350
        %3437 = vmatpush.msra.mxu0 %v1346
        %3438 = vmatpush.msra.mxu0 %v1342
        %3439 = vmatmul.f32.gmra.mxu0 %v427
        %v3440 = vpop.f32.mrf.mxu0
        %v3441 = vadd.f32 %v3421, %v3440
        %3442 = vdwg.mxu0
        %3443 = vmatpush.msra.mxu0 %v1466
        %3444 = vmatpush.msra.mxu0 %v1462
        %3445 = vmatpush.msra.mxu0 %v1458
        %3446 = vmatpush.msra.mxu0 %v1454
        %3447 = vmatpush.msra.mxu0 %v1450
        %3448 = vmatpush.msra.mxu0 %v1446
        %3449 = vmatpush.msra.mxu0 %v1442
        %3450 = vmatpush.msra.mxu0 %v1438
        %3451 = vmatpush.msra.mxu0 %v1434
        %3452 = vmatpush.msra.mxu0 %v1430
        %3453 = vmatpush.msra.mxu0 %v1426
        %3454 = vmatpush.msra.mxu0 %v1422
        %3455 = vmatpush.msra.mxu0 %v1418
        %3456 = vmatpush.msra.mxu0 %v1414
        %3457 = vmatpush.msra.mxu0 %v1410
        %3458 = vmatpush.msra.mxu0 %v1406
        %3459 = vmatmul.f32.gmra.mxu0 %v428
        %v3460 = vpop.f32.mrf.mxu0
        %v3461 = vadd.f32 %v3441, %v3460
        %3462 = vdwg.mxu0
        %3463 = vmatpush.msra.mxu0 %v1530
        %3464 = vmatpush.msra.mxu0 %v1526
        %3465 = vmatpush.msra.mxu0 %v1522
        %3466 = vmatpush.msra.mxu0 %v1518
        %3467 = vmatpush.msra.mxu0 %v1514
        %3468 = vmatpush.msra.mxu0 %v1510
        %3469 = vmatpush.msra.mxu0 %v1506
        %3470 = vmatpush.msra.mxu0 %v1502
        %3471 = vmatpush.msra.mxu0 %v1498
        %3472 = vmatpush.msra.mxu0 %v1494
        %3473 = vmatpush.msra.mxu0 %v1490
        %3474 = vmatpush.msra.mxu0 %v1486
        %3475 = vmatpush.msra.mxu0 %v1482
        %3476 = vmatpush.msra.mxu0 %v1478
        %3477 = vmatpush.msra.mxu0 %v1474
        %3478 = vmatpush.msra.mxu0 %v1470
        %3479 = vmatmul.f32.gmra.mxu0 %v429
        %v3480 = vpop.f32.mrf.mxu0
        %v3481 = vadd.f32 %v3461, %v3480
        %3482 = vdwg.mxu0
        %3483 = vmatpush.msra.mxu0 %v1594
        %3484 = vmatpush.msra.mxu0 %v1590
        %3485 = vmatpush.msra.mxu0 %v1586
        %3486 = vmatpush.msra.mxu0 %v1582
        %3487 = vmatpush.msra.mxu0 %v1578
        %3488 = vmatpush.msra.mxu0 %v1574
        %3489 = vmatpush.msra.mxu0 %v1570
        %3490 = vmatpush.msra.mxu0 %v1566
        %3491 = vmatpush.msra.mxu0 %v1562
        %3492 = vmatpush.msra.mxu0 %v1558
        %3493 = vmatpush.msra.mxu0 %v1554
        %3494 = vmatpush.msra.mxu0 %v1550
        %3495 = vmatpush.msra.mxu0 %v1546
        %3496 = vmatpush.msra.mxu0 %v1542
        %3497 = vmatpush.msra.mxu0 %v1538
        %3498 = vmatpush.msra.mxu0 %v1534
        %3499 = vmatmul.f32.gmra.mxu0 %v430
        %v3500 = vpop.f32.mrf.mxu0
        %v3501 = vadd.f32 %v3481, %v3500
        %3502 = vdwg.mxu0
        %3503 = vmatpush.msra.mxu0 %v1658
        %3504 = vmatpush.msra.mxu0 %v1654
        %3505 = vmatpush.msra.mxu0 %v1650
        %3506 = vmatpush.msra.mxu0 %v1646
        %3507 = vmatpush.msra.mxu0 %v1642
        %3508 = vmatpush.msra.mxu0 %v1638
        %3509 = vmatpush.msra.mxu0 %v1634
        %3510 = vmatpush.msra.mxu0 %v1630
        %3511 = vmatpush.msra.mxu0 %v1626
        %3512 = vmatpush.msra.mxu0 %v1622
        %3513 = vmatpush.msra.mxu0 %v1618
        %3514 = vmatpush.msra.mxu0 %v1614
        %3515 = vmatpush.msra.mxu0 %v1610
        %3516 = vmatpush.msra.mxu0 %v1606
        %3517 = vmatpush.msra.mxu0 %v1602
        %3518 = vmatpush.msra.mxu0 %v1598
        %3519 = vmatmul.f32.gmra.mxu0 %v431
        %v3520 = vpop.f32.mrf.mxu0
        %v3521 = vadd.f32 %v3501, %v3520
        %3522 = vdwg.mxu0
        %3523 = vmatpush.msra.mxu0 %v1722
        %3524 = vmatpush.msra.mxu0 %v1718
        %3525 = vmatpush.msra.mxu0 %v1714
        %3526 = vmatpush.msra.mxu0 %v1710
        %3527 = vmatpush.msra.mxu0 %v1706
        %3528 = vmatpush.msra.mxu0 %v1702
        %3529 = vmatpush.msra.mxu0 %v1698
        %3530 = vmatpush.msra.mxu0 %v1694
        %3531 = vmatpush.msra.mxu0 %v1690
        %3532 = vmatpush.msra.mxu0 %v1686
        %3533 = vmatpush.msra.mxu0 %v1682
        %3534 = vmatpush.msra.mxu0 %v1678
        %3535 = vmatpush.msra.mxu0 %v1674
        %3536 = vmatpush.msra.mxu0 %v1670
        %3537 = vmatpush.msra.mxu0 %v1666
        %3538 = vmatpush.msra.mxu0 %v1662
        %3539 = vmatmul.f32.gmra.mxu0 %v432
        %v3540 = vpop.f32.mrf.mxu0
        %v3541 = vadd.f32 %v3521, %v3540
        %3542 = vdwg.mxu0
        %3543 = vmatpush.msra.mxu0 %v1786
        %3544 = vmatpush.msra.mxu0 %v1782
        %3545 = vmatpush.msra.mxu0 %v1778
        %3546 = vmatpush.msra.mxu0 %v1774
        %3547 = vmatpush.msra.mxu0 %v1770
        %3548 = vmatpush.msra.mxu0 %v1766
        %3549 = vmatpush.msra.mxu0 %v1762
        %3550 = vmatpush.msra.mxu0 %v1758
        %3551 = vmatpush.msra.mxu0 %v1754
        %3552 = vmatpush.msra.mxu0 %v1750
        %3553 = vmatpush.msra.mxu0 %v1746
        %3554 = vmatpush.msra.mxu0 %v1742
        %3555 = vmatpush.msra.mxu0 %v1738
        %3556 = vmatpush.msra.mxu0 %v1734
        %3557 = vmatpush.msra.mxu0 %v1730
        %3558 = vmatpush.msra.mxu0 %v1726
        %3559 = vmatmul.f32.gmra.mxu0 %v433
        %v3560 = vpop.f32.mrf.mxu0
        %v3561 = vadd.f32 %v3541, %v3560
        %3562 = vdwg.mxu0
        %3563 = vmatpush.msra.mxu0 %v1850
        %3564 = vmatpush.msra.mxu0 %v1846
        %3565 = vmatpush.msra.mxu0 %v1842
        %3566 = vmatpush.msra.mxu0 %v1838
        %3567 = vmatpush.msra.mxu0 %v1834
        %3568 = vmatpush.msra.mxu0 %v1830
        %3569 = vmatpush.msra.mxu0 %v1826
        %3570 = vmatpush.msra.mxu0 %v1822
        %3571 = vmatpush.msra.mxu0 %v1818
        %3572 = vmatpush.msra.mxu0 %v1814
        %3573 = vmatpush.msra.mxu0 %v1810
        %3574 = vmatpush.msra.mxu0 %v1806
        %3575 = vmatpush.msra.mxu0 %v1802
        %3576 = vmatpush.msra.mxu0 %v1798
        %3577 = vmatpush.msra.mxu0 %v1794
        %3578 = vmatpush.msra.mxu0 %v1790
        %3579 = vmatmul.f32.gmra.mxu0 %v434
        %v3580 = vpop.f32.mrf.mxu0
        %v3581 = vadd.f32 %v3561, %v3580
        %3582 = vdwg.mxu0
        %3583 = vmatpush.msra.mxu0 %v1914
        %3584 = vmatpush.msra.mxu0 %v1910
        %3585 = vmatpush.msra.mxu0 %v1906
        %3586 = vmatpush.msra.mxu0 %v1902
        %3587 = vmatpush.msra.mxu0 %v1898
        %3588 = vmatpush.msra.mxu0 %v1894
        %3589 = vmatpush.msra.mxu0 %v1890
        %3590 = vmatpush.msra.mxu0 %v1886
        %3591 = vmatpush.msra.mxu0 %v1882
        %3592 = vmatpush.msra.mxu0 %v1878
        %3593 = vmatpush.msra.mxu0 %v1874
        %3594 = vmatpush.msra.mxu0 %v1870
        %3595 = vmatpush.msra.mxu0 %v1866
        %3596 = vmatpush.msra.mxu0 %v1862
        %3597 = vmatpush.msra.mxu0 %v1858
        %3598 = vmatpush.msra.mxu0 %v1854
        %3599 = vmatmul.f32.gmra.mxu0 %v435
        %v3600 = vpop.f32.mrf.mxu0
        %v3601 = vadd.f32 %v3581, %v3600
        %3602 = vdwg.mxu0
        %3603 = vmatpush.msra.mxu0 %v1978
        %3604 = vmatpush.msra.mxu0 %v1974
        %3605 = vmatpush.msra.mxu0 %v1970
        %3606 = vmatpush.msra.mxu0 %v1966
        %3607 = vmatpush.msra.mxu0 %v1962
        %3608 = vmatpush.msra.mxu0 %v1958
        %3609 = vmatpush.msra.mxu0 %v1954
        %3610 = vmatpush.msra.mxu0 %v1950
        %3611 = vmatpush.msra.mxu0 %v1946
        %3612 = vmatpush.msra.mxu0 %v1942
        %3613 = vmatpush.msra.mxu0 %v1938
        %3614 = vmatpush.msra.mxu0 %v1934
        %3615 = vmatpush.msra.mxu0 %v1930
        %3616 = vmatpush.msra.mxu0 %v1926
        %3617 = vmatpush.msra.mxu0 %v1922
        %3618 = vmatpush.msra.mxu0 %v1918
        %3619 = vmatmul.f32.gmra.mxu0 %v436
        %v3620 = vpop.f32.mrf.mxu0
        %v3621 = vadd.f32 %v3601, %v3620
        %3622 = vdwg.mxu0
        %3623 = vmatpush.msra.mxu0 %v2042
        %3624 = vmatpush.msra.mxu0 %v2038
        %3625 = vmatpush.msra.mxu0 %v2034
        %3626 = vmatpush.msra.mxu0 %v2030
        %3627 = vmatpush.msra.mxu0 %v2026
        %3628 = vmatpush.msra.mxu0 %v2022
        %3629 = vmatpush.msra.mxu0 %v2018
        %3630 = vmatpush.msra.mxu0 %v2014
        %3631 = vmatpush.msra.mxu0 %v2010
        %3632 = vmatpush.msra.mxu0 %v2006
        %3633 = vmatpush.msra.mxu0 %v2002
        %3634 = vmatpush.msra.mxu0 %v1998
        %3635 = vmatpush.msra.mxu0 %v1994
        %3636 = vmatpush.msra.mxu0 %v1990
        %3637 = vmatpush.msra.mxu0 %v1986
        %3638 = vmatpush.msra.mxu0 %v1982
        %3639 = vmatmul.f32.gmra.mxu0 %v437
        %v3640 = vpop.f32.mrf.mxu0
        %v3641 = vadd.f32 %v3621, %v3640
        %3642 = vdwg.mxu0
        %3643 = vmatpush.msra.mxu0 %v2106
        %3644 = vmatpush.msra.mxu0 %v2102
        %3645 = vmatpush.msra.mxu0 %v2098
        %3646 = vmatpush.msra.mxu0 %v2094
        %3647 = vmatpush.msra.mxu0 %v2090
        %3648 = vmatpush.msra.mxu0 %v2086
        %3649 = vmatpush.msra.mxu0 %v2082
        %3650 = vmatpush.msra.mxu0 %v2078
        %3651 = vmatpush.msra.mxu0 %v2074
        %3652 = vmatpush.msra.mxu0 %v2070
        %3653 = vmatpush.msra.mxu0 %v2066
        %3654 = vmatpush.msra.mxu0 %v2062
        %3655 = vmatpush.msra.mxu0 %v2058
        %3656 = vmatpush.msra.mxu0 %v2054
        %3657 = vmatpush.msra.mxu0 %v2050
        %3658 = vmatpush.msra.mxu0 %v2046
        %3659 = vmatmul.f32.gmra.mxu0 %v438
        %v3660 = vpop.f32.mrf.mxu0
        %v3661 = vadd.f32 %v3641, %v3660
        %3662 = vdwg.mxu0
        %3663 = vmatpush.msra.mxu0 %v2170
        %3664 = vmatpush.msra.mxu0 %v2166
        %3665 = vmatpush.msra.mxu0 %v2162
        %3666 = vmatpush.msra.mxu0 %v2158
        %3667 = vmatpush.msra.mxu0 %v2154
        %3668 = vmatpush.msra.mxu0 %v2150
        %3669 = vmatpush.msra.mxu0 %v2146
        %3670 = vmatpush.msra.mxu0 %v2142
        %3671 = vmatpush.msra.mxu0 %v2138
        %3672 = vmatpush.msra.mxu0 %v2134
        %3673 = vmatpush.msra.mxu0 %v2130
        %3674 = vmatpush.msra.mxu0 %v2126
        %3675 = vmatpush.msra.mxu0 %v2122
        %3676 = vmatpush.msra.mxu0 %v2118
        %3677 = vmatpush.msra.mxu0 %v2114
        %3678 = vmatpush.msra.mxu0 %v2110
        %3679 = vmatmul.f32.gmra.mxu0 %v439
        %v3680 = vpop.f32.mrf.mxu0
        %v3681 = vadd.f32 %v3661, %v3680
        %3682 = vdwg.mxu0
        %3683 = vmatpush.msra.mxu0 %v2234
        %3684 = vmatpush.msra.mxu0 %v2230
        %3685 = vmatpush.msra.mxu0 %v2226
        %3686 = vmatpush.msra.mxu0 %v2222
        %3687 = vmatpush.msra.mxu0 %v2218
        %3688 = vmatpush.msra.mxu0 %v2214
        %3689 = vmatpush.msra.mxu0 %v2210
        %3690 = vmatpush.msra.mxu0 %v2206
        %3691 = vmatpush.msra.mxu0 %v2202
        %3692 = vmatpush.msra.mxu0 %v2198
        %3693 = vmatpush.msra.mxu0 %v2194
        %3694 = vmatpush.msra.mxu0 %v2190
        %3695 = vmatpush.msra.mxu0 %v2186
        %3696 = vmatpush.msra.mxu0 %v2182
        %3697 = vmatpush.msra.mxu0 %v2178
        %3698 = vmatpush.msra.mxu0 %v2174
        %3699 = vmatmul.f32.gmra.mxu0 %v440
        %v3700 = vpop.f32.mrf.mxu0
        %v3701 = vadd.f32 %v3681, %v3700
        %3702 = vdwg.mxu0
        %3703 = vmatpush.msra.mxu0 %v2298
        %3704 = vmatpush.msra.mxu0 %v2294
        %3705 = vmatpush.msra.mxu0 %v2290
        %3706 = vmatpush.msra.mxu0 %v2286
        %3707 = vmatpush.msra.mxu0 %v2282
        %3708 = vmatpush.msra.mxu0 %v2278
        %3709 = vmatpush.msra.mxu0 %v2274
        %3710 = vmatpush.msra.mxu0 %v2270
        %3711 = vmatpush.msra.mxu0 %v2266
        %3712 = vmatpush.msra.mxu0 %v2262
        %3713 = vmatpush.msra.mxu0 %v2258
        %3714 = vmatpush.msra.mxu0 %v2254
        %3715 = vmatpush.msra.mxu0 %v2250
        %3716 = vmatpush.msra.mxu0 %v2246
        %3717 = vmatpush.msra.mxu0 %v2242
        %3718 = vmatpush.msra.mxu0 %v2238
        %3719 = vmatmul.f32.gmra.mxu0 %v441
        %v3720 = vpop.f32.mrf.mxu0
        %v3721 = vadd.f32 %v3701, %v3720
        %3722 = vdwg.mxu0
        %3723 = vmatpush.msra.mxu0 %v2362
        %3724 = vmatpush.msra.mxu0 %v2358
        %3725 = vmatpush.msra.mxu0 %v2354
        %3726 = vmatpush.msra.mxu0 %v2350
        %3727 = vmatpush.msra.mxu0 %v2346
        %3728 = vmatpush.msra.mxu0 %v2342
        %3729 = vmatpush.msra.mxu0 %v2338
        %3730 = vmatpush.msra.mxu0 %v2334
        %3731 = vmatpush.msra.mxu0 %v2330
        %3732 = vmatpush.msra.mxu0 %v2326
        %3733 = vmatpush.msra.mxu0 %v2322
        %3734 = vmatpush.msra.mxu0 %v2318
        %3735 = vmatpush.msra.mxu0 %v2314
        %3736 = vmatpush.msra.mxu0 %v2310
        %3737 = vmatpush.msra.mxu0 %v2306
        %3738 = vmatpush.msra.mxu0 %v2302
        %3739 = vmatmul.f32.gmra.mxu0 %v442
        %v3740 = vpop.f32.mrf.mxu0
        %v3741 = vadd.f32 %v3721, %v3740
        %3742 = vdwg.mxu0
        %3743 = vmatpush.msra.mxu0 %v2426
        %3744 = vmatpush.msra.mxu0 %v2422
        %3745 = vmatpush.msra.mxu0 %v2418
        %3746 = vmatpush.msra.mxu0 %v2414
        %3747 = vmatpush.msra.mxu0 %v2410
        %3748 = vmatpush.msra.mxu0 %v2406
        %3749 = vmatpush.msra.mxu0 %v2402
        %3750 = vmatpush.msra.mxu0 %v2398
        %3751 = vmatpush.msra.mxu0 %v2394
        %3752 = vmatpush.msra.mxu0 %v2390
        %3753 = vmatpush.msra.mxu0 %v2386
        %3754 = vmatpush.msra.mxu0 %v2382
        %3755 = vmatpush.msra.mxu0 %v2378
        %3756 = vmatpush.msra.mxu0 %v2374
        %3757 = vmatpush.msra.mxu0 %v2370
        %3758 = vmatpush.msra.mxu0 %v2366
        %3759 = vmatmul.f32.gmra.mxu0 %v443
        %v3760 = vpop.f32.mrf.mxu0
        %v3761 = vadd.f32 %v3741, %v3760
        %3762 = vdwg.mxu0
        %3763 = vmatpush.msra.mxu0 %v2490
        %3764 = vmatpush.msra.mxu0 %v2486
        %3765 = vmatpush.msra.mxu0 %v2482
        %3766 = vmatpush.msra.mxu0 %v2478
        %3767 = vmatpush.msra.mxu0 %v2474
        %3768 = vmatpush.msra.mxu0 %v2470
        %3769 = vmatpush.msra.mxu0 %v2466
        %3770 = vmatpush.msra.mxu0 %v2462
        %3771 = vmatpush.msra.mxu0 %v2458
        %3772 = vmatpush.msra.mxu0 %v2454
        %3773 = vmatpush.msra.mxu0 %v2450
        %3774 = vmatpush.msra.mxu0 %v2446
        %3775 = vmatpush.msra.mxu0 %v2442
        %3776 = vmatpush.msra.mxu0 %v2438
        %3777 = vmatpush.msra.mxu0 %v2434
        %3778 = vmatpush.msra.mxu0 %v2430
        %3779 = vmatmul.f32.gmra.mxu0 %v444
        %v3780 = vpop.f32.mrf.mxu0
        %v3781 = vadd.f32 %v3761, %v3780
        %3782 = vdwg.mxu0
        %3783 = vmatpush.msra.mxu0 %v507
        %3784 = vmatpush.msra.mxu0 %v503
        %3785 = vmatpush.msra.mxu0 %v499
        %3786 = vmatpush.msra.mxu0 %v495
        %3787 = vmatpush.msra.mxu0 %v491
        %3788 = vmatpush.msra.mxu0 %v487
        %3789 = vmatpush.msra.mxu0 %v483
        %3790 = vmatpush.msra.mxu0 %v479
        %3791 = vmatpush.msra.mxu0 %v475
        %3792 = vmatpush.msra.mxu0 %v471
        %3793 = vmatpush.msra.mxu0 %v467
        %3794 = vmatpush.msra.mxu0 %v463
        %3795 = vmatpush.msra.mxu0 %v459
        %3796 = vmatpush.msra.mxu0 %v455
        %3797 = vmatpush.msra.mxu0 %v451
        %3798 = vmatpush.msra.mxu0 %v447
        %3799 = vmatmul.f32.gmra.mxu0 %v413
        %v3800 = vpop.f32.mrf.mxu0
        %v3801 = vadd.f32 %v2497, %v3800
        %3802 = vdwg.mxu0
        %3803 = vmatpush.msra.mxu0 %v571
        %3804 = vmatpush.msra.mxu0 %v567
        %3805 = vmatpush.msra.mxu0 %v563
        %3806 = vmatpush.msra.mxu0 %v559
        %3807 = vmatpush.msra.mxu0 %v555
        %3808 = vmatpush.msra.mxu0 %v551
        %3809 = vmatpush.msra.mxu0 %v547
        %3810 = vmatpush.msra.mxu0 %v543
        %3811 = vmatpush.msra.mxu0 %v539
        %3812 = vmatpush.msra.mxu0 %v535
        %3813 = vmatpush.msra.mxu0 %v531
        %3814 = vmatpush.msra.mxu0 %v527
        %3815 = vmatpush.msra.mxu0 %v523
        %3816 = vmatpush.msra.mxu0 %v519
        %3817 = vmatpush.msra.mxu0 %v515
        %3818 = vmatpush.msra.mxu0 %v511
        %3819 = vmatmul.f32.gmra.mxu0 %v414
        %v3820 = vpop.f32.mrf.mxu0
        %v3821 = vadd.f32 %v3801, %v3820
        %3822 = vdwg.mxu0
        %3823 = vmatpush.msra.mxu0 %v635
        %3824 = vmatpush.msra.mxu0 %v631
        %3825 = vmatpush.msra.mxu0 %v627
        %3826 = vmatpush.msra.mxu0 %v623
        %3827 = vmatpush.msra.mxu0 %v619
        %3828 = vmatpush.msra.mxu0 %v615
        %3829 = vmatpush.msra.mxu0 %v611
        %3830 = vmatpush.msra.mxu0 %v607
        %3831 = vmatpush.msra.mxu0 %v603
        %3832 = vmatpush.msra.mxu0 %v599
        %3833 = vmatpush.msra.mxu0 %v595
        %3834 = vmatpush.msra.mxu0 %v591
        %3835 = vmatpush.msra.mxu0 %v587
        %3836 = vmatpush.msra.mxu0 %v583
        %3837 = vmatpush.msra.mxu0 %v579
        %3838 = vmatpush.msra.mxu0 %v575
        %3839 = vmatmul.f32.gmra.mxu0 %v415
        %v3840 = vpop.f32.mrf.mxu0
        %v3841 = vadd.f32 %v3821, %v3840
        %3842 = vdwg.mxu0
        %3843 = vmatpush.msra.mxu0 %v699
        %3844 = vmatpush.msra.mxu0 %v695
        %3845 = vmatpush.msra.mxu0 %v691
        %3846 = vmatpush.msra.mxu0 %v687
        %3847 = vmatpush.msra.mxu0 %v683
        %3848 = vmatpush.msra.mxu0 %v679
        %3849 = vmatpush.msra.mxu0 %v675
        %3850 = vmatpush.msra.mxu0 %v671
        %3851 = vmatpush.msra.mxu0 %v667
        %3852 = vmatpush.msra.mxu0 %v663
        %3853 = vmatpush.msra.mxu0 %v659
        %3854 = vmatpush.msra.mxu0 %v655
        %3855 = vmatpush.msra.mxu0 %v651
        %3856 = vmatpush.msra.mxu0 %v647
        %3857 = vmatpush.msra.mxu0 %v643
        %3858 = vmatpush.msra.mxu0 %v639
        %3859 = vmatmul.f32.gmra.mxu0 %v416
        %v3860 = vpop.f32.mrf.mxu0
        %v3861 = vadd.f32 %v3841, %v3860
        %3862 = vdwg.mxu0
        %3863 = vmatpush.msra.mxu0 %v763
        %3864 = vmatpush.msra.mxu0 %v759
        %3865 = vmatpush.msra.mxu0 %v755
        %3866 = vmatpush.msra.mxu0 %v751
        %3867 = vmatpush.msra.mxu0 %v747
        %3868 = vmatpush.msra.mxu0 %v743
        %3869 = vmatpush.msra.mxu0 %v739
        %3870 = vmatpush.msra.mxu0 %v735
        %3871 = vmatpush.msra.mxu0 %v731
        %3872 = vmatpush.msra.mxu0 %v727
        %3873 = vmatpush.msra.mxu0 %v723
        %3874 = vmatpush.msra.mxu0 %v719
        %3875 = vmatpush.msra.mxu0 %v715
        %3876 = vmatpush.msra.mxu0 %v711
        %3877 = vmatpush.msra.mxu0 %v707
        %3878 = vmatpush.msra.mxu0 %v703
        %3879 = vmatmul.f32.gmra.mxu0 %v417
        %v3880 = vpop.f32.mrf.mxu0
        %v3881 = vadd.f32 %v3861, %v3880
        %3882 = vdwg.mxu0
        %3883 = vmatpush.msra.mxu0 %v827
        %3884 = vmatpush.msra.mxu0 %v823
        %3885 = vmatpush.msra.mxu0 %v819
        %3886 = vmatpush.msra.mxu0 %v815
        %3887 = vmatpush.msra.mxu0 %v811
        %3888 = vmatpush.msra.mxu0 %v807
        %3889 = vmatpush.msra.mxu0 %v803
        %3890 = vmatpush.msra.mxu0 %v799
        %3891 = vmatpush.msra.mxu0 %v795
        %3892 = vmatpush.msra.mxu0 %v791
        %3893 = vmatpush.msra.mxu0 %v787
        %3894 = vmatpush.msra.mxu0 %v783
        %3895 = vmatpush.msra.mxu0 %v779
        %3896 = vmatpush.msra.mxu0 %v775
        %3897 = vmatpush.msra.mxu0 %v771
        %3898 = vmatpush.msra.mxu0 %v767
        %3899 = vmatmul.f32.gmra.mxu0 %v418
        %v3900 = vpop.f32.mrf.mxu0
        %v3901 = vadd.f32 %v3881, %v3900
        %3902 = vdwg.mxu0
        %3903 = vmatpush.msra.mxu0 %v891
        %3904 = vmatpush.msra.mxu0 %v887
        %3905 = vmatpush.msra.mxu0 %v883
        %3906 = vmatpush.msra.mxu0 %v879
        %3907 = vmatpush.msra.mxu0 %v875
        %3908 = vmatpush.msra.mxu0 %v871
        %3909 = vmatpush.msra.mxu0 %v867
        %3910 = vmatpush.msra.mxu0 %v863
        %3911 = vmatpush.msra.mxu0 %v859
        %3912 = vmatpush.msra.mxu0 %v855
        %3913 = vmatpush.msra.mxu0 %v851
        %3914 = vmatpush.msra.mxu0 %v847
        %3915 = vmatpush.msra.mxu0 %v843
        %3916 = vmatpush.msra.mxu0 %v839
        %3917 = vmatpush.msra.mxu0 %v835
        %3918 = vmatpush.msra.mxu0 %v831
        %3919 = vmatmul.f32.gmra.mxu0 %v419
        %v3920 = vpop.f32.mrf.mxu0
        %v3921 = vadd.f32 %v3901, %v3920
        %3922 = vdwg.mxu0
        %3923 = vmatpush.msra.mxu0 %v955
        %3924 = vmatpush.msra.mxu0 %v951
        %3925 = vmatpush.msra.mxu0 %v947
        %3926 = vmatpush.msra.mxu0 %v943
        %3927 = vmatpush.msra.mxu0 %v939
        %3928 = vmatpush.msra.mxu0 %v935
        %3929 = vmatpush.msra.mxu0 %v931
        %3930 = vmatpush.msra.mxu0 %v927
        %3931 = vmatpush.msra.mxu0 %v923
        %3932 = vmatpush.msra.mxu0 %v919
        %3933 = vmatpush.msra.mxu0 %v915
        %3934 = vmatpush.msra.mxu0 %v911
        %3935 = vmatpush.msra.mxu0 %v907
        %3936 = vmatpush.msra.mxu0 %v903
        %3937 = vmatpush.msra.mxu0 %v899
        %3938 = vmatpush.msra.mxu0 %v895
        %3939 = vmatmul.f32.gmra.mxu0 %v420
        %v3940 = vpop.f32.mrf.mxu0
        %v3941 = vadd.f32 %v3921, %v3940
        %3942 = vdwg.mxu0
        %3943 = vmatpush.msra.mxu0 %v1019
        %3944 = vmatpush.msra.mxu0 %v1015
        %3945 = vmatpush.msra.mxu0 %v1011
        %3946 = vmatpush.msra.mxu0 %v1007
        %3947 = vmatpush.msra.mxu0 %v1003
        %3948 = vmatpush.msra.mxu0 %v999
        %3949 = vmatpush.msra.mxu0 %v995
        %3950 = vmatpush.msra.mxu0 %v991
        %3951 = vmatpush.msra.mxu0 %v987
        %3952 = vmatpush.msra.mxu0 %v983
        %3953 = vmatpush.msra.mxu0 %v979
        %3954 = vmatpush.msra.mxu0 %v975
        %3955 = vmatpush.msra.mxu0 %v971
        %3956 = vmatpush.msra.mxu0 %v967
        %3957 = vmatpush.msra.mxu0 %v963
        %3958 = vmatpush.msra.mxu0 %v959
        %3959 = vmatmul.f32.gmra.mxu0 %v421
        %v3960 = vpop.f32.mrf.mxu0
        %v3961 = vadd.f32 %v3941, %v3960
        %3962 = vdwg.mxu0
        %3963 = vmatpush.msra.mxu0 %v1083
        %3964 = vmatpush.msra.mxu0 %v1079
        %3965 = vmatpush.msra.mxu0 %v1075
        %3966 = vmatpush.msra.mxu0 %v1071
        %3967 = vmatpush.msra.mxu0 %v1067
        %3968 = vmatpush.msra.mxu0 %v1063
        %3969 = vmatpush.msra.mxu0 %v1059
        %3970 = vmatpush.msra.mxu0 %v1055
        %3971 = vmatpush.msra.mxu0 %v1051
        %3972 = vmatpush.msra.mxu0 %v1047
        %3973 = vmatpush.msra.mxu0 %v1043
        %3974 = vmatpush.msra.mxu0 %v1039
        %3975 = vmatpush.msra.mxu0 %v1035
        %3976 = vmatpush.msra.mxu0 %v1031
        %3977 = vmatpush.msra.mxu0 %v1027
        %3978 = vmatpush.msra.mxu0 %v1023
        %3979 = vmatmul.f32.gmra.mxu0 %v422
        %v3980 = vpop.f32.mrf.mxu0
        %v3981 = vadd.f32 %v3961, %v3980
        %3982 = vdwg.mxu0
        %3983 = vmatpush.msra.mxu0 %v1147
        %3984 = vmatpush.msra.mxu0 %v1143
        %3985 = vmatpush.msra.mxu0 %v1139
        %3986 = vmatpush.msra.mxu0 %v1135
        %3987 = vmatpush.msra.mxu0 %v1131
        %3988 = vmatpush.msra.mxu0 %v1127
        %3989 = vmatpush.msra.mxu0 %v1123
        %3990 = vmatpush.msra.mxu0 %v1119
        %3991 = vmatpush.msra.mxu0 %v1115
        %3992 = vmatpush.msra.mxu0 %v1111
        %3993 = vmatpush.msra.mxu0 %v1107
        %3994 = vmatpush.msra.mxu0 %v1103
        %3995 = vmatpush.msra.mxu0 %v1099
        %3996 = vmatpush.msra.mxu0 %v1095
        %3997 = vmatpush.msra.mxu0 %v1091
        %3998 = vmatpush.msra.mxu0 %v1087
        %3999 = vmatmul.f32.gmra.mxu0 %v423
        %v4000 = vpop.f32.mrf.mxu0
        %v4001 = vadd.f32 %v3981, %v4000
        %4002 = vdwg.mxu0
        %4003 = vmatpush.msra.mxu0 %v1211
        %4004 = vmatpush.msra.mxu0 %v1207
        %4005 = vmatpush.msra.mxu0 %v1203
        %4006 = vmatpush.msra.mxu0 %v1199
        %4007 = vmatpush.msra.mxu0 %v1195
        %4008 = vmatpush.msra.mxu0 %v1191
        %4009 = vmatpush.msra.mxu0 %v1187
        %4010 = vmatpush.msra.mxu0 %v1183
        %4011 = vmatpush.msra.mxu0 %v1179
        %4012 = vmatpush.msra.mxu0 %v1175
        %4013 = vmatpush.msra.mxu0 %v1171
        %4014 = vmatpush.msra.mxu0 %v1167
        %4015 = vmatpush.msra.mxu0 %v1163
        %4016 = vmatpush.msra.mxu0 %v1159
        %4017 = vmatpush.msra.mxu0 %v1155
        %4018 = vmatpush.msra.mxu0 %v1151
        %4019 = vmatmul.f32.gmra.mxu0 %v424
        %v4020 = vpop.f32.mrf.mxu0
        %v4021 = vadd.f32 %v4001, %v4020
        %4022 = vdwg.mxu0
        %4023 = vmatpush.msra.mxu0 %v1275
        %4024 = vmatpush.msra.mxu0 %v1271
        %4025 = vmatpush.msra.mxu0 %v1267
        %4026 = vmatpush.msra.mxu0 %v1263
        %4027 = vmatpush.msra.mxu0 %v1259
        %4028 = vmatpush.msra.mxu0 %v1255
        %4029 = vmatpush.msra.mxu0 %v1251
        %4030 = vmatpush.msra.mxu0 %v1247
        %4031 = vmatpush.msra.mxu0 %v1243
        %4032 = vmatpush.msra.mxu0 %v1239
        %4033 = vmatpush.msra.mxu0 %v1235
        %4034 = vmatpush.msra.mxu0 %v1231
        %4035 = vmatpush.msra.mxu0 %v1227
        %4036 = vmatpush.msra.mxu0 %v1223
        %4037 = vmatpush.msra.mxu0 %v1219
        %4038 = vmatpush.msra.mxu0 %v1215
        %4039 = vmatmul.f32.gmra.mxu0 %v425
        %v4040 = vpop.f32.mrf.mxu0
        %v4041 = vadd.f32 %v4021, %v4040
        %4042 = vdwg.mxu0
        %4043 = vmatpush.msra.mxu0 %v1339
        %4044 = vmatpush.msra.mxu0 %v1335
        %4045 = vmatpush.msra.mxu0 %v1331
        %4046 = vmatpush.msra.mxu0 %v1327
        %4047 = vmatpush.msra.mxu0 %v1323
        %4048 = vmatpush.msra.mxu0 %v1319
        %4049 = vmatpush.msra.mxu0 %v1315
        %4050 = vmatpush.msra.mxu0 %v1311
        %4051 = vmatpush.msra.mxu0 %v1307
        %4052 = vmatpush.msra.mxu0 %v1303
        %4053 = vmatpush.msra.mxu0 %v1299
        %4054 = vmatpush.msra.mxu0 %v1295
        %4055 = vmatpush.msra.mxu0 %v1291
        %4056 = vmatpush.msra.mxu0 %v1287
        %4057 = vmatpush.msra.mxu0 %v1283
        %4058 = vmatpush.msra.mxu0 %v1279
        %4059 = vmatmul.f32.gmra.mxu0 %v426
        %v4060 = vpop.f32.mrf.mxu0
        %v4061 = vadd.f32 %v4041, %v4060
        %4062 = vdwg.mxu0
        %4063 = vmatpush.msra.mxu0 %v1403
        %4064 = vmatpush.msra.mxu0 %v1399
        %4065 = vmatpush.msra.mxu0 %v1395
        %4066 = vmatpush.msra.mxu0 %v1391
        %4067 = vmatpush.msra.mxu0 %v1387
        %4068 = vmatpush.msra.mxu0 %v1383
        %4069 = vmatpush.msra.mxu0 %v1379
        %4070 = vmatpush.msra.mxu0 %v1375
        %4071 = vmatpush.msra.mxu0 %v1371
        %4072 = vmatpush.msra.mxu0 %v1367
        %4073 = vmatpush.msra.mxu0 %v1363
        %4074 = vmatpush.msra.mxu0 %v1359
        %4075 = vmatpush.msra.mxu0 %v1355
        %4076 = vmatpush.msra.mxu0 %v1351
        %4077 = vmatpush.msra.mxu0 %v1347
        %4078 = vmatpush.msra.mxu0 %v1343
        %4079 = vmatmul.f32.gmra.mxu0 %v427
        %v4080 = vpop.f32.mrf.mxu0
        %v4081 = vadd.f32 %v4061, %v4080
        %4082 = vdwg.mxu0
        %4083 = vmatpush.msra.mxu0 %v1467
        %4084 = vmatpush.msra.mxu0 %v1463
        %4085 = vmatpush.msra.mxu0 %v1459
        %4086 = vmatpush.msra.mxu0 %v1455
        %4087 = vmatpush.msra.mxu0 %v1451
        %4088 = vmatpush.msra.mxu0 %v1447
        %4089 = vmatpush.msra.mxu0 %v1443
        %4090 = vmatpush.msra.mxu0 %v1439
        %4091 = vmatpush.msra.mxu0 %v1435
        %4092 = vmatpush.msra.mxu0 %v1431
        %4093 = vmatpush.msra.mxu0 %v1427
        %4094 = vmatpush.msra.mxu0 %v1423
        %4095 = vmatpush.msra.mxu0 %v1419
        %4096 = vmatpush.msra.mxu0 %v1415
        %4097 = vmatpush.msra.mxu0 %v1411
        %4098 = vmatpush.msra.mxu0 %v1407
        %4099 = vmatmul.f32.gmra.mxu0 %v428
        %v4100 = vpop.f32.mrf.mxu0
        %v4101 = vadd.f32 %v4081, %v4100
        %4102 = vdwg.mxu0
        %4103 = vmatpush.msra.mxu0 %v1531
        %4104 = vmatpush.msra.mxu0 %v1527
        %4105 = vmatpush.msra.mxu0 %v1523
        %4106 = vmatpush.msra.mxu0 %v1519
        %4107 = vmatpush.msra.mxu0 %v1515
        %4108 = vmatpush.msra.mxu0 %v1511
        %4109 = vmatpush.msra.mxu0 %v1507
        %4110 = vmatpush.msra.mxu0 %v1503
        %4111 = vmatpush.msra.mxu0 %v1499
        %4112 = vmatpush.msra.mxu0 %v1495
        %4113 = vmatpush.msra.mxu0 %v1491
        %4114 = vmatpush.msra.mxu0 %v1487
        %4115 = vmatpush.msra.mxu0 %v1483
        %4116 = vmatpush.msra.mxu0 %v1479
        %4117 = vmatpush.msra.mxu0 %v1475
        %4118 = vmatpush.msra.mxu0 %v1471
        %4119 = vmatmul.f32.gmra.mxu0 %v429
        %v4120 = vpop.f32.mrf.mxu0
        %v4121 = vadd.f32 %v4101, %v4120
        %4122 = vdwg.mxu0
        %4123 = vmatpush.msra.mxu0 %v1595
        %4124 = vmatpush.msra.mxu0 %v1591
        %4125 = vmatpush.msra.mxu0 %v1587
        %4126 = vmatpush.msra.mxu0 %v1583
        %4127 = vmatpush.msra.mxu0 %v1579
        %4128 = vmatpush.msra.mxu0 %v1575
        %4129 = vmatpush.msra.mxu0 %v1571
        %4130 = vmatpush.msra.mxu0 %v1567
        %4131 = vmatpush.msra.mxu0 %v1563
        %4132 = vmatpush.msra.mxu0 %v1559
        %4133 = vmatpush.msra.mxu0 %v1555
        %4134 = vmatpush.msra.mxu0 %v1551
        %4135 = vmatpush.msra.mxu0 %v1547
        %4136 = vmatpush.msra.mxu0 %v1543
        %4137 = vmatpush.msra.mxu0 %v1539
        %4138 = vmatpush.msra.mxu0 %v1535
        %4139 = vmatmul.f32.gmra.mxu0 %v430
        %v4140 = vpop.f32.mrf.mxu0
        %v4141 = vadd.f32 %v4121, %v4140
        %4142 = vdwg.mxu0
        %4143 = vmatpush.msra.mxu0 %v1659
        %4144 = vmatpush.msra.mxu0 %v1655
        %4145 = vmatpush.msra.mxu0 %v1651
        %4146 = vmatpush.msra.mxu0 %v1647
        %4147 = vmatpush.msra.mxu0 %v1643
        %4148 = vmatpush.msra.mxu0 %v1639
        %4149 = vmatpush.msra.mxu0 %v1635
        %4150 = vmatpush.msra.mxu0 %v1631
        %4151 = vmatpush.msra.mxu0 %v1627
        %4152 = vmatpush.msra.mxu0 %v1623
        %4153 = vmatpush.msra.mxu0 %v1619
        %4154 = vmatpush.msra.mxu0 %v1615
        %4155 = vmatpush.msra.mxu0 %v1611
        %4156 = vmatpush.msra.mxu0 %v1607
        %4157 = vmatpush.msra.mxu0 %v1603
        %4158 = vmatpush.msra.mxu0 %v1599
        %4159 = vmatmul.f32.gmra.mxu0 %v431
        %v4160 = vpop.f32.mrf.mxu0
        %v4161 = vadd.f32 %v4141, %v4160
        %4162 = vdwg.mxu0
        %4163 = vmatpush.msra.mxu0 %v1723
        %4164 = vmatpush.msra.mxu0 %v1719
        %4165 = vmatpush.msra.mxu0 %v1715
        %4166 = vmatpush.msra.mxu0 %v1711
        %4167 = vmatpush.msra.mxu0 %v1707
        %4168 = vmatpush.msra.mxu0 %v1703
        %4169 = vmatpush.msra.mxu0 %v1699
        %4170 = vmatpush.msra.mxu0 %v1695
        %4171 = vmatpush.msra.mxu0 %v1691
        %4172 = vmatpush.msra.mxu0 %v1687
        %4173 = vmatpush.msra.mxu0 %v1683
        %4174 = vmatpush.msra.mxu0 %v1679
        %4175 = vmatpush.msra.mxu0 %v1675
        %4176 = vmatpush.msra.mxu0 %v1671
        %4177 = vmatpush.msra.mxu0 %v1667
        %4178 = vmatpush.msra.mxu0 %v1663
        %4179 = vmatmul.f32.gmra.mxu0 %v432
        %v4180 = vpop.f32.mrf.mxu0
        %v4181 = vadd.f32 %v4161, %v4180
        %4182 = vdwg.mxu0
        %4183 = vmatpush.msra.mxu0 %v1787
        %4184 = vmatpush.msra.mxu0 %v1783
        %4185 = vmatpush.msra.mxu0 %v1779
        %4186 = vmatpush.msra.mxu0 %v1775
        %4187 = vmatpush.msra.mxu0 %v1771
        %4188 = vmatpush.msra.mxu0 %v1767
        %4189 = vmatpush.msra.mxu0 %v1763
        %4190 = vmatpush.msra.mxu0 %v1759
        %4191 = vmatpush.msra.mxu0 %v1755
        %4192 = vmatpush.msra.mxu0 %v1751
        %4193 = vmatpush.msra.mxu0 %v1747
        %4194 = vmatpush.msra.mxu0 %v1743
        %4195 = vmatpush.msra.mxu0 %v1739
        %4196 = vmatpush.msra.mxu0 %v1735
        %4197 = vmatpush.msra.mxu0 %v1731
        %4198 = vmatpush.msra.mxu0 %v1727
        %4199 = vmatmul.f32.gmra.mxu0 %v433
        %v4200 = vpop.f32.mrf.mxu0
        %v4201 = vadd.f32 %v4181, %v4200
        %4202 = vdwg.mxu0
        %4203 = vmatpush.msra.mxu0 %v1851
        %4204 = vmatpush.msra.mxu0 %v1847
        %4205 = vmatpush.msra.mxu0 %v1843
        %4206 = vmatpush.msra.mxu0 %v1839
        %4207 = vmatpush.msra.mxu0 %v1835
        %4208 = vmatpush.msra.mxu0 %v1831
        %4209 = vmatpush.msra.mxu0 %v1827
        %4210 = vmatpush.msra.mxu0 %v1823
        %4211 = vmatpush.msra.mxu0 %v1819
        %4212 = vmatpush.msra.mxu0 %v1815
        %4213 = vmatpush.msra.mxu0 %v1811
        %4214 = vmatpush.msra.mxu0 %v1807
        %4215 = vmatpush.msra.mxu0 %v1803
        %4216 = vmatpush.msra.mxu0 %v1799
        %4217 = vmatpush.msra.mxu0 %v1795
        %4218 = vmatpush.msra.mxu0 %v1791
        %4219 = vmatmul.f32.gmra.mxu0 %v434
        %v4220 = vpop.f32.mrf.mxu0
        %v4221 = vadd.f32 %v4201, %v4220
        %4222 = vdwg.mxu0
        %4223 = vmatpush.msra.mxu0 %v1915
        %4224 = vmatpush.msra.mxu0 %v1911
        %4225 = vmatpush.msra.mxu0 %v1907
        %4226 = vmatpush.msra.mxu0 %v1903
        %4227 = vmatpush.msra.mxu0 %v1899
        %4228 = vmatpush.msra.mxu0 %v1895
        %4229 = vmatpush.msra.mxu0 %v1891
        %4230 = vmatpush.msra.mxu0 %v1887
        %4231 = vmatpush.msra.mxu0 %v1883
        %4232 = vmatpush.msra.mxu0 %v1879
        %4233 = vmatpush.msra.mxu0 %v1875
        %4234 = vmatpush.msra.mxu0 %v1871
        %4235 = vmatpush.msra.mxu0 %v1867
        %4236 = vmatpush.msra.mxu0 %v1863
        %4237 = vmatpush.msra.mxu0 %v1859
        %4238 = vmatpush.msra.mxu0 %v1855
        %4239 = vmatmul.f32.gmra.mxu0 %v435
        %v4240 = vpop.f32.mrf.mxu0
        %v4241 = vadd.f32 %v4221, %v4240
        %4242 = vdwg.mxu0
        %4243 = vmatpush.msra.mxu0 %v1979
        %4244 = vmatpush.msra.mxu0 %v1975
        %4245 = vmatpush.msra.mxu0 %v1971
        %4246 = vmatpush.msra.mxu0 %v1967
        %4247 = vmatpush.msra.mxu0 %v1963
        %4248 = vmatpush.msra.mxu0 %v1959
        %4249 = vmatpush.msra.mxu0 %v1955
        %4250 = vmatpush.msra.mxu0 %v1951
        %4251 = vmatpush.msra.mxu0 %v1947
        %4252 = vmatpush.msra.mxu0 %v1943
        %4253 = vmatpush.msra.mxu0 %v1939
        %4254 = vmatpush.msra.mxu0 %v1935
        %4255 = vmatpush.msra.mxu0 %v1931
        %4256 = vmatpush.msra.mxu0 %v1927
        %4257 = vmatpush.msra.mxu0 %v1923
        %4258 = vmatpush.msra.mxu0 %v1919
        %4259 = vmatmul.f32.gmra.mxu0 %v436
        %v4260 = vpop.f32.mrf.mxu0
        %v4261 = vadd.f32 %v4241, %v4260
        %4262 = vdwg.mxu0
        %4263 = vmatpush.msra.mxu0 %v2043
        %4264 = vmatpush.msra.mxu0 %v2039
        %4265 = vmatpush.msra.mxu0 %v2035
        %4266 = vmatpush.msra.mxu0 %v2031
        %4267 = vmatpush.msra.mxu0 %v2027
        %4268 = vmatpush.msra.mxu0 %v2023
        %4269 = vmatpush.msra.mxu0 %v2019
        %4270 = vmatpush.msra.mxu0 %v2015
        %4271 = vmatpush.msra.mxu0 %v2011
        %4272 = vmatpush.msra.mxu0 %v2007
        %4273 = vmatpush.msra.mxu0 %v2003
        %4274 = vmatpush.msra.mxu0 %v1999
        %4275 = vmatpush.msra.mxu0 %v1995
        %4276 = vmatpush.msra.mxu0 %v1991
        %4277 = vmatpush.msra.mxu0 %v1987
        %4278 = vmatpush.msra.mxu0 %v1983
        %4279 = vmatmul.f32.gmra.mxu0 %v437
        %v4280 = vpop.f32.mrf.mxu0
        %v4281 = vadd.f32 %v4261, %v4280
        %4282 = vdwg.mxu0
        %4283 = vmatpush.msra.mxu0 %v2107
        %4284 = vmatpush.msra.mxu0 %v2103
        %4285 = vmatpush.msra.mxu0 %v2099
        %4286 = vmatpush.msra.mxu0 %v2095
        %4287 = vmatpush.msra.mxu0 %v2091
        %4288 = vmatpush.msra.mxu0 %v2087
        %4289 = vmatpush.msra.mxu0 %v2083
        %4290 = vmatpush.msra.mxu0 %v2079
        %4291 = vmatpush.msra.mxu0 %v2075
        %4292 = vmatpush.msra.mxu0 %v2071
        %4293 = vmatpush.msra.mxu0 %v2067
        %4294 = vmatpush.msra.mxu0 %v2063
        %4295 = vmatpush.msra.mxu0 %v2059
        %4296 = vmatpush.msra.mxu0 %v2055
        %4297 = vmatpush.msra.mxu0 %v2051
        %4298 = vmatpush.msra.mxu0 %v2047
        %4299 = vmatmul.f32.gmra.mxu0 %v438
        %v4300 = vpop.f32.mrf.mxu0
        %v4301 = vadd.f32 %v4281, %v4300
        %4302 = vdwg.mxu0
        %4303 = vmatpush.msra.mxu0 %v2171
        %4304 = vmatpush.msra.mxu0 %v2167
        %4305 = vmatpush.msra.mxu0 %v2163
        %4306 = vmatpush.msra.mxu0 %v2159
        %4307 = vmatpush.msra.mxu0 %v2155
        %4308 = vmatpush.msra.mxu0 %v2151
        %4309 = vmatpush.msra.mxu0 %v2147
        %4310 = vmatpush.msra.mxu0 %v2143
        %4311 = vmatpush.msra.mxu0 %v2139
        %4312 = vmatpush.msra.mxu0 %v2135
        %4313 = vmatpush.msra.mxu0 %v2131
        %4314 = vmatpush.msra.mxu0 %v2127
        %4315 = vmatpush.msra.mxu0 %v2123
        %4316 = vmatpush.msra.mxu0 %v2119
        %4317 = vmatpush.msra.mxu0 %v2115
        %4318 = vmatpush.msra.mxu0 %v2111
        %4319 = vmatmul.f32.gmra.mxu0 %v439
        %v4320 = vpop.f32.mrf.mxu0
        %v4321 = vadd.f32 %v4301, %v4320
        %4322 = vdwg.mxu0
        %4323 = vmatpush.msra.mxu0 %v2235
        %4324 = vmatpush.msra.mxu0 %v2231
        %4325 = vmatpush.msra.mxu0 %v2227
        %4326 = vmatpush.msra.mxu0 %v2223
        %4327 = vmatpush.msra.mxu0 %v2219
        %4328 = vmatpush.msra.mxu0 %v2215
        %4329 = vmatpush.msra.mxu0 %v2211
        %4330 = vmatpush.msra.mxu0 %v2207
        %4331 = vmatpush.msra.mxu0 %v2203
        %4332 = vmatpush.msra.mxu0 %v2199
        %4333 = vmatpush.msra.mxu0 %v2195
        %4334 = vmatpush.msra.mxu0 %v2191
        %4335 = vmatpush.msra.mxu0 %v2187
        %4336 = vmatpush.msra.mxu0 %v2183
        %4337 = vmatpush.msra.mxu0 %v2179
        %4338 = vmatpush.msra.mxu0 %v2175
        %4339 = vmatmul.f32.gmra.mxu0 %v440
        %v4340 = vpop.f32.mrf.mxu0
        %v4341 = vadd.f32 %v4321, %v4340
        %4342 = vdwg.mxu0
        %4343 = vmatpush.msra.mxu0 %v2299
        %4344 = vmatpush.msra.mxu0 %v2295
        %4345 = vmatpush.msra.mxu0 %v2291
        %4346 = vmatpush.msra.mxu0 %v2287
        %4347 = vmatpush.msra.mxu0 %v2283
        %4348 = vmatpush.msra.mxu0 %v2279
        %4349 = vmatpush.msra.mxu0 %v2275
        %4350 = vmatpush.msra.mxu0 %v2271
        %4351 = vmatpush.msra.mxu0 %v2267
        %4352 = vmatpush.msra.mxu0 %v2263
        %4353 = vmatpush.msra.mxu0 %v2259
        %4354 = vmatpush.msra.mxu0 %v2255
        %4355 = vmatpush.msra.mxu0 %v2251
        %4356 = vmatpush.msra.mxu0 %v2247
        %4357 = vmatpush.msra.mxu0 %v2243
        %4358 = vmatpush.msra.mxu0 %v2239
        %4359 = vmatmul.f32.gmra.mxu0 %v441
        %v4360 = vpop.f32.mrf.mxu0
        %v4361 = vadd.f32 %v4341, %v4360
        %4362 = vdwg.mxu0
        %4363 = vmatpush.msra.mxu0 %v2363
        %4364 = vmatpush.msra.mxu0 %v2359
        %4365 = vmatpush.msra.mxu0 %v2355
        %4366 = vmatpush.msra.mxu0 %v2351
        %4367 = vmatpush.msra.mxu0 %v2347
        %4368 = vmatpush.msra.mxu0 %v2343
        %4369 = vmatpush.msra.mxu0 %v2339
        %4370 = vmatpush.msra.mxu0 %v2335
        %4371 = vmatpush.msra.mxu0 %v2331
        %4372 = vmatpush.msra.mxu0 %v2327
        %4373 = vmatpush.msra.mxu0 %v2323
        %4374 = vmatpush.msra.mxu0 %v2319
        %4375 = vmatpush.msra.mxu0 %v2315
        %4376 = vmatpush.msra.mxu0 %v2311
        %4377 = vmatpush.msra.mxu0 %v2307
        %4378 = vmatpush.msra.mxu0 %v2303
        %4379 = vmatmul.f32.gmra.mxu0 %v442
        %v4380 = vpop.f32.mrf.mxu0
        %v4381 = vadd.f32 %v4361, %v4380
        %4382 = vdwg.mxu0
        %4383 = vmatpush.msra.mxu0 %v2427
        %4384 = vmatpush.msra.mxu0 %v2423
        %4385 = vmatpush.msra.mxu0 %v2419
        %4386 = vmatpush.msra.mxu0 %v2415
        %4387 = vmatpush.msra.mxu0 %v2411
        %4388 = vmatpush.msra.mxu0 %v2407
        %4389 = vmatpush.msra.mxu0 %v2403
        %4390 = vmatpush.msra.mxu0 %v2399
        %4391 = vmatpush.msra.mxu0 %v2395
        %4392 = vmatpush.msra.mxu0 %v2391
        %4393 = vmatpush.msra.mxu0 %v2387
        %4394 = vmatpush.msra.mxu0 %v2383
        %4395 = vmatpush.msra.mxu0 %v2379
        %4396 = vmatpush.msra.mxu0 %v2375
        %4397 = vmatpush.msra.mxu0 %v2371
        %4398 = vmatpush.msra.mxu0 %v2367
        %4399 = vmatmul.f32.gmra.mxu0 %v443
        %v4400 = vpop.f32.mrf.mxu0
        %v4401 = vadd.f32 %v4381, %v4400
        %4402 = vdwg.mxu0
        %4403 = vmatpush.msra.mxu0 %v2491
        %4404 = vmatpush.msra.mxu0 %v2487
        %4405 = vmatpush.msra.mxu0 %v2483
        %4406 = vmatpush.msra.mxu0 %v2479
        %4407 = vmatpush.msra.mxu0 %v2475
        %4408 = vmatpush.msra.mxu0 %v2471
        %4409 = vmatpush.msra.mxu0 %v2467
        %4410 = vmatpush.msra.mxu0 %v2463
        %4411 = vmatpush.msra.mxu0 %v2459
        %4412 = vmatpush.msra.mxu0 %v2455
        %4413 = vmatpush.msra.mxu0 %v2451
        %4414 = vmatpush.msra.mxu0 %v2447
        %4415 = vmatpush.msra.mxu0 %v2443
        %4416 = vmatpush.msra.mxu0 %v2439
        %4417 = vmatpush.msra.mxu0 %v2435
        %4418 = vmatpush.msra.mxu0 %v2431
        %4419 = vmatmul.f32.gmra.mxu0 %v444
        %v4420 = vpop.f32.mrf.mxu0
        %v4421 = vadd.f32 %v4401, %v4420
        %4422 = vdwg.mxu0
        %4423 = vmatpush.msra.mxu0 %v508
        %4424 = vmatpush.msra.mxu0 %v504
        %4425 = vmatpush.msra.mxu0 %v500
        %4426 = vmatpush.msra.mxu0 %v496
        %4427 = vmatpush.msra.mxu0 %v492
        %4428 = vmatpush.msra.mxu0 %v488
        %4429 = vmatpush.msra.mxu0 %v484
        %4430 = vmatpush.msra.mxu0 %v480
        %4431 = vmatpush.msra.mxu0 %v476
        %4432 = vmatpush.msra.mxu0 %v472
        %4433 = vmatpush.msra.mxu0 %v468
        %4434 = vmatpush.msra.mxu0 %v464
        %4435 = vmatpush.msra.mxu0 %v460
        %4436 = vmatpush.msra.mxu0 %v456
        %4437 = vmatpush.msra.mxu0 %v452
        %4438 = vmatpush.msra.mxu0 %v448
        %4439 = vmatmul.f32.gmra.mxu0 %v413
        %v4440 = vpop.f32.mrf.mxu0
        %v4441 = vadd.f32 %v2498, %v4440
        %4442 = vdwg.mxu0
        %4443 = vmatpush.msra.mxu0 %v572
        %4444 = vmatpush.msra.mxu0 %v568
        %4445 = vmatpush.msra.mxu0 %v564
        %4446 = vmatpush.msra.mxu0 %v560
        %4447 = vmatpush.msra.mxu0 %v556
        %4448 = vmatpush.msra.mxu0 %v552
        %4449 = vmatpush.msra.mxu0 %v548
        %4450 = vmatpush.msra.mxu0 %v544
        %4451 = vmatpush.msra.mxu0 %v540
        %4452 = vmatpush.msra.mxu0 %v536
        %4453 = vmatpush.msra.mxu0 %v532
        %4454 = vmatpush.msra.mxu0 %v528
        %4455 = vmatpush.msra.mxu0 %v524
        %4456 = vmatpush.msra.mxu0 %v520
        %4457 = vmatpush.msra.mxu0 %v516
        %4458 = vmatpush.msra.mxu0 %v512
        %4459 = vmatmul.f32.gmra.mxu0 %v414
        %v4460 = vpop.f32.mrf.mxu0
        %v4461 = vadd.f32 %v4441, %v4460
        %4462 = vdwg.mxu0
        %4463 = vmatpush.msra.mxu0 %v636
        %4464 = vmatpush.msra.mxu0 %v632
        %4465 = vmatpush.msra.mxu0 %v628
        %4466 = vmatpush.msra.mxu0 %v624
        %4467 = vmatpush.msra.mxu0 %v620
        %4468 = vmatpush.msra.mxu0 %v616
        %4469 = vmatpush.msra.mxu0 %v612
        %4470 = vmatpush.msra.mxu0 %v608
        %4471 = vmatpush.msra.mxu0 %v604
        %4472 = vmatpush.msra.mxu0 %v600
        %4473 = vmatpush.msra.mxu0 %v596
        %4474 = vmatpush.msra.mxu0 %v592
        %4475 = vmatpush.msra.mxu0 %v588
        %4476 = vmatpush.msra.mxu0 %v584
        %4477 = vmatpush.msra.mxu0 %v580
        %4478 = vmatpush.msra.mxu0 %v576
        %4479 = vmatmul.f32.gmra.mxu0 %v415
        %v4480 = vpop.f32.mrf.mxu0
        %v4481 = vadd.f32 %v4461, %v4480
        %4482 = vdwg.mxu0
        %4483 = vmatpush.msra.mxu0 %v700
        %4484 = vmatpush.msra.mxu0 %v696
        %4485 = vmatpush.msra.mxu0 %v692
        %4486 = vmatpush.msra.mxu0 %v688
        %4487 = vmatpush.msra.mxu0 %v684
        %4488 = vmatpush.msra.mxu0 %v680
        %4489 = vmatpush.msra.mxu0 %v676
        %4490 = vmatpush.msra.mxu0 %v672
        %4491 = vmatpush.msra.mxu0 %v668
        %4492 = vmatpush.msra.mxu0 %v664
        %4493 = vmatpush.msra.mxu0 %v660
        %4494 = vmatpush.msra.mxu0 %v656
        %4495 = vmatpush.msra.mxu0 %v652
        %4496 = vmatpush.msra.mxu0 %v648
        %4497 = vmatpush.msra.mxu0 %v644
        %4498 = vmatpush.msra.mxu0 %v640
        %4499 = vmatmul.f32.gmra.mxu0 %v416
        %v4500 = vpop.f32.mrf.mxu0
        %v4501 = vadd.f32 %v4481, %v4500
        %4502 = vdwg.mxu0
        %4503 = vmatpush.msra.mxu0 %v764
        %4504 = vmatpush.msra.mxu0 %v760
        %4505 = vmatpush.msra.mxu0 %v756
        %4506 = vmatpush.msra.mxu0 %v752
        %4507 = vmatpush.msra.mxu0 %v748
        %4508 = vmatpush.msra.mxu0 %v744
        %4509 = vmatpush.msra.mxu0 %v740
        %4510 = vmatpush.msra.mxu0 %v736
        %4511 = vmatpush.msra.mxu0 %v732
        %4512 = vmatpush.msra.mxu0 %v728
        %4513 = vmatpush.msra.mxu0 %v724
        %4514 = vmatpush.msra.mxu0 %v720
        %4515 = vmatpush.msra.mxu0 %v716
        %4516 = vmatpush.msra.mxu0 %v712
        %4517 = vmatpush.msra.mxu0 %v708
        %4518 = vmatpush.msra.mxu0 %v704
        %4519 = vmatmul.f32.gmra.mxu0 %v417
        %v4520 = vpop.f32.mrf.mxu0
        %v4521 = vadd.f32 %v4501, %v4520
        %4522 = vdwg.mxu0
        %4523 = vmatpush.msra.mxu0 %v828
        %4524 = vmatpush.msra.mxu0 %v824
        %4525 = vmatpush.msra.mxu0 %v820
        %4526 = vmatpush.msra.mxu0 %v816
        %4527 = vmatpush.msra.mxu0 %v812
        %4528 = vmatpush.msra.mxu0 %v808
        %4529 = vmatpush.msra.mxu0 %v804
        %4530 = vmatpush.msra.mxu0 %v800
        %4531 = vmatpush.msra.mxu0 %v796
        %4532 = vmatpush.msra.mxu0 %v792
        %4533 = vmatpush.msra.mxu0 %v788
        %4534 = vmatpush.msra.mxu0 %v784
        %4535 = vmatpush.msra.mxu0 %v780
        %4536 = vmatpush.msra.mxu0 %v776
        %4537 = vmatpush.msra.mxu0 %v772
        %4538 = vmatpush.msra.mxu0 %v768
        %4539 = vmatmul.f32.gmra.mxu0 %v418
        %v4540 = vpop.f32.mrf.mxu0
        %v4541 = vadd.f32 %v4521, %v4540
        %4542 = vdwg.mxu0
        %4543 = vmatpush.msra.mxu0 %v892
        %4544 = vmatpush.msra.mxu0 %v888
        %4545 = vmatpush.msra.mxu0 %v884
        %4546 = vmatpush.msra.mxu0 %v880
        %4547 = vmatpush.msra.mxu0 %v876
        %4548 = vmatpush.msra.mxu0 %v872
        %4549 = vmatpush.msra.mxu0 %v868
        %4550 = vmatpush.msra.mxu0 %v864
        %4551 = vmatpush.msra.mxu0 %v860
        %4552 = vmatpush.msra.mxu0 %v856
        %4553 = vmatpush.msra.mxu0 %v852
        %4554 = vmatpush.msra.mxu0 %v848
        %4555 = vmatpush.msra.mxu0 %v844
        %4556 = vmatpush.msra.mxu0 %v840
        %4557 = vmatpush.msra.mxu0 %v836
        %4558 = vmatpush.msra.mxu0 %v832
        %4559 = vmatmul.f32.gmra.mxu0 %v419
        %v4560 = vpop.f32.mrf.mxu0
        %v4561 = vadd.f32 %v4541, %v4560
        %4562 = vdwg.mxu0
        %4563 = vmatpush.msra.mxu0 %v956
        %4564 = vmatpush.msra.mxu0 %v952
        %4565 = vmatpush.msra.mxu0 %v948
        %4566 = vmatpush.msra.mxu0 %v944
        %4567 = vmatpush.msra.mxu0 %v940
        %4568 = vmatpush.msra.mxu0 %v936
        %4569 = vmatpush.msra.mxu0 %v932
        %4570 = vmatpush.msra.mxu0 %v928
        %4571 = vmatpush.msra.mxu0 %v924
        %4572 = vmatpush.msra.mxu0 %v920
        %4573 = vmatpush.msra.mxu0 %v916
        %4574 = vmatpush.msra.mxu0 %v912
        %4575 = vmatpush.msra.mxu0 %v908
        %4576 = vmatpush.msra.mxu0 %v904
        %4577 = vmatpush.msra.mxu0 %v900
        %4578 = vmatpush.msra.mxu0 %v896
        %4579 = vmatmul.f32.gmra.mxu0 %v420
        %v4580 = vpop.f32.mrf.mxu0
        %v4581 = vadd.f32 %v4561, %v4580
        %4582 = vdwg.mxu0
        %4583 = vmatpush.msra.mxu0 %v1020
        %4584 = vmatpush.msra.mxu0 %v1016
        %4585 = vmatpush.msra.mxu0 %v1012
        %4586 = vmatpush.msra.mxu0 %v1008
        %4587 = vmatpush.msra.mxu0 %v1004
        %4588 = vmatpush.msra.mxu0 %v1000
        %4589 = vmatpush.msra.mxu0 %v996
        %4590 = vmatpush.msra.mxu0 %v992
        %4591 = vmatpush.msra.mxu0 %v988
        %4592 = vmatpush.msra.mxu0 %v984
        %4593 = vmatpush.msra.mxu0 %v980
        %4594 = vmatpush.msra.mxu0 %v976
        %4595 = vmatpush.msra.mxu0 %v972
        %4596 = vmatpush.msra.mxu0 %v968
        %4597 = vmatpush.msra.mxu0 %v964
        %4598 = vmatpush.msra.mxu0 %v960
        %4599 = vmatmul.f32.gmra.mxu0 %v421
        %v4600 = vpop.f32.mrf.mxu0
        %v4601 = vadd.f32 %v4581, %v4600
        %4602 = vdwg.mxu0
        %4603 = vmatpush.msra.mxu0 %v1084
        %4604 = vmatpush.msra.mxu0 %v1080
        %4605 = vmatpush.msra.mxu0 %v1076
        %4606 = vmatpush.msra.mxu0 %v1072
        %4607 = vmatpush.msra.mxu0 %v1068
        %4608 = vmatpush.msra.mxu0 %v1064
        %4609 = vmatpush.msra.mxu0 %v1060
        %4610 = vmatpush.msra.mxu0 %v1056
        %4611 = vmatpush.msra.mxu0 %v1052
        %4612 = vmatpush.msra.mxu0 %v1048
        %4613 = vmatpush.msra.mxu0 %v1044
        %4614 = vmatpush.msra.mxu0 %v1040
        %4615 = vmatpush.msra.mxu0 %v1036
        %4616 = vmatpush.msra.mxu0 %v1032
        %4617 = vmatpush.msra.mxu0 %v1028
        %4618 = vmatpush.msra.mxu0 %v1024
        %4619 = vmatmul.f32.gmra.mxu0 %v422
        %v4620 = vpop.f32.mrf.mxu0
        %v4621 = vadd.f32 %v4601, %v4620
        %4622 = vdwg.mxu0
        %4623 = vmatpush.msra.mxu0 %v1148
        %4624 = vmatpush.msra.mxu0 %v1144
        %4625 = vmatpush.msra.mxu0 %v1140
        %4626 = vmatpush.msra.mxu0 %v1136
        %4627 = vmatpush.msra.mxu0 %v1132
        %4628 = vmatpush.msra.mxu0 %v1128
        %4629 = vmatpush.msra.mxu0 %v1124
        %4630 = vmatpush.msra.mxu0 %v1120
        %4631 = vmatpush.msra.mxu0 %v1116
        %4632 = vmatpush.msra.mxu0 %v1112
        %4633 = vmatpush.msra.mxu0 %v1108
        %4634 = vmatpush.msra.mxu0 %v1104
        %4635 = vmatpush.msra.mxu0 %v1100
        %4636 = vmatpush.msra.mxu0 %v1096
        %4637 = vmatpush.msra.mxu0 %v1092
        %4638 = vmatpush.msra.mxu0 %v1088
        %4639 = vmatmul.f32.gmra.mxu0 %v423
        %v4640 = vpop.f32.mrf.mxu0
        %v4641 = vadd.f32 %v4621, %v4640
        %4642 = vdwg.mxu0
        %4643 = vmatpush.msra.mxu0 %v1212
        %4644 = vmatpush.msra.mxu0 %v1208
        %4645 = vmatpush.msra.mxu0 %v1204
        %4646 = vmatpush.msra.mxu0 %v1200
        %4647 = vmatpush.msra.mxu0 %v1196
        %4648 = vmatpush.msra.mxu0 %v1192
        %4649 = vmatpush.msra.mxu0 %v1188
        %4650 = vmatpush.msra.mxu0 %v1184
        %4651 = vmatpush.msra.mxu0 %v1180
        %4652 = vmatpush.msra.mxu0 %v1176
        %4653 = vmatpush.msra.mxu0 %v1172
        %4654 = vmatpush.msra.mxu0 %v1168
        %4655 = vmatpush.msra.mxu0 %v1164
        %4656 = vmatpush.msra.mxu0 %v1160
        %4657 = vmatpush.msra.mxu0 %v1156
        %4658 = vmatpush.msra.mxu0 %v1152
        %4659 = vmatmul.f32.gmra.mxu0 %v424
        %v4660 = vpop.f32.mrf.mxu0
        %v4661 = vadd.f32 %v4641, %v4660
        %4662 = vdwg.mxu0
        %4663 = vmatpush.msra.mxu0 %v1276
        %4664 = vmatpush.msra.mxu0 %v1272
        %4665 = vmatpush.msra.mxu0 %v1268
        %4666 = vmatpush.msra.mxu0 %v1264
        %4667 = vmatpush.msra.mxu0 %v1260
        %4668 = vmatpush.msra.mxu0 %v1256
        %4669 = vmatpush.msra.mxu0 %v1252
        %4670 = vmatpush.msra.mxu0 %v1248
        %4671 = vmatpush.msra.mxu0 %v1244
        %4672 = vmatpush.msra.mxu0 %v1240
        %4673 = vmatpush.msra.mxu0 %v1236
        %4674 = vmatpush.msra.mxu0 %v1232
        %4675 = vmatpush.msra.mxu0 %v1228
        %4676 = vmatpush.msra.mxu0 %v1224
        %4677 = vmatpush.msra.mxu0 %v1220
        %4678 = vmatpush.msra.mxu0 %v1216
        %4679 = vmatmul.f32.gmra.mxu0 %v425
        %v4680 = vpop.f32.mrf.mxu0
        %v4681 = vadd.f32 %v4661, %v4680
        %4682 = vdwg.mxu0
        %4683 = vmatpush.msra.mxu0 %v1340
        %4684 = vmatpush.msra.mxu0 %v1336
        %4685 = vmatpush.msra.mxu0 %v1332
        %4686 = vmatpush.msra.mxu0 %v1328
        %4687 = vmatpush.msra.mxu0 %v1324
        %4688 = vmatpush.msra.mxu0 %v1320
        %4689 = vmatpush.msra.mxu0 %v1316
        %4690 = vmatpush.msra.mxu0 %v1312
        %4691 = vmatpush.msra.mxu0 %v1308
        %4692 = vmatpush.msra.mxu0 %v1304
        %4693 = vmatpush.msra.mxu0 %v1300
        %4694 = vmatpush.msra.mxu0 %v1296
        %4695 = vmatpush.msra.mxu0 %v1292
        %4696 = vmatpush.msra.mxu0 %v1288
        %4697 = vmatpush.msra.mxu0 %v1284
        %4698 = vmatpush.msra.mxu0 %v1280
        %4699 = vmatmul.f32.gmra.mxu0 %v426
        %v4700 = vpop.f32.mrf.mxu0
        %v4701 = vadd.f32 %v4681, %v4700
        %4702 = vdwg.mxu0
        %4703 = vmatpush.msra.mxu0 %v1404
        %4704 = vmatpush.msra.mxu0 %v1400
        %4705 = vmatpush.msra.mxu0 %v1396
        %4706 = vmatpush.msra.mxu0 %v1392
        %4707 = vmatpush.msra.mxu0 %v1388
        %4708 = vmatpush.msra.mxu0 %v1384
        %4709 = vmatpush.msra.mxu0 %v1380
        %4710 = vmatpush.msra.mxu0 %v1376
        %4711 = vmatpush.msra.mxu0 %v1372
        %4712 = vmatpush.msra.mxu0 %v1368
        %4713 = vmatpush.msra.mxu0 %v1364
        %4714 = vmatpush.msra.mxu0 %v1360
        %4715 = vmatpush.msra.mxu0 %v1356
        %4716 = vmatpush.msra.mxu0 %v1352
        %4717 = vmatpush.msra.mxu0 %v1348
        %4718 = vmatpush.msra.mxu0 %v1344
        %4719 = vmatmul.f32.gmra.mxu0 %v427
        %v4720 = vpop.f32.mrf.mxu0
        %v4721 = vadd.f32 %v4701, %v4720
        %4722 = vdwg.mxu0
        %4723 = vmatpush.msra.mxu0 %v1468
        %4724 = vmatpush.msra.mxu0 %v1464
        %4725 = vmatpush.msra.mxu0 %v1460
        %4726 = vmatpush.msra.mxu0 %v1456
        %4727 = vmatpush.msra.mxu0 %v1452
        %4728 = vmatpush.msra.mxu0 %v1448
        %4729 = vmatpush.msra.mxu0 %v1444
        %4730 = vmatpush.msra.mxu0 %v1440
        %4731 = vmatpush.msra.mxu0 %v1436
        %4732 = vmatpush.msra.mxu0 %v1432
        %4733 = vmatpush.msra.mxu0 %v1428
        %4734 = vmatpush.msra.mxu0 %v1424
        %4735 = vmatpush.msra.mxu0 %v1420
        %4736 = vmatpush.msra.mxu0 %v1416
        %4737 = vmatpush.msra.mxu0 %v1412
        %4738 = vmatpush.msra.mxu0 %v1408
        %4739 = vmatmul.f32.gmra.mxu0 %v428
        %v4740 = vpop.f32.mrf.mxu0
        %v4741 = vadd.f32 %v4721, %v4740
        %4742 = vdwg.mxu0
        %4743 = vmatpush.msra.mxu0 %v1532
        %4744 = vmatpush.msra.mxu0 %v1528
        %4745 = vmatpush.msra.mxu0 %v1524
        %4746 = vmatpush.msra.mxu0 %v1520
        %4747 = vmatpush.msra.mxu0 %v1516
        %4748 = vmatpush.msra.mxu0 %v1512
        %4749 = vmatpush.msra.mxu0 %v1508
        %4750 = vmatpush.msra.mxu0 %v1504
        %4751 = vmatpush.msra.mxu0 %v1500
        %4752 = vmatpush.msra.mxu0 %v1496
        %4753 = vmatpush.msra.mxu0 %v1492
        %4754 = vmatpush.msra.mxu0 %v1488
        %4755 = vmatpush.msra.mxu0 %v1484
        %4756 = vmatpush.msra.mxu0 %v1480
        %4757 = vmatpush.msra.mxu0 %v1476
        %4758 = vmatpush.msra.mxu0 %v1472
        %4759 = vmatmul.f32.gmra.mxu0 %v429
        %v4760 = vpop.f32.mrf.mxu0
        %v4761 = vadd.f32 %v4741, %v4760
        %4762 = vdwg.mxu0
        %4763 = vmatpush.msra.mxu0 %v1596
        %4764 = vmatpush.msra.mxu0 %v1592
        %4765 = vmatpush.msra.mxu0 %v1588
        %4766 = vmatpush.msra.mxu0 %v1584
        %4767 = vmatpush.msra.mxu0 %v1580
        %4768 = vmatpush.msra.mxu0 %v1576
        %4769 = vmatpush.msra.mxu0 %v1572
        %4770 = vmatpush.msra.mxu0 %v1568
        %4771 = vmatpush.msra.mxu0 %v1564
        %4772 = vmatpush.msra.mxu0 %v1560
        %4773 = vmatpush.msra.mxu0 %v1556
        %4774 = vmatpush.msra.mxu0 %v1552
        %4775 = vmatpush.msra.mxu0 %v1548
        %4776 = vmatpush.msra.mxu0 %v1544
        %4777 = vmatpush.msra.mxu0 %v1540
        %4778 = vmatpush.msra.mxu0 %v1536
        %4779 = vmatmul.f32.gmra.mxu0 %v430
        %v4780 = vpop.f32.mrf.mxu0
        %v4781 = vadd.f32 %v4761, %v4780
        %4782 = vdwg.mxu0
        %4783 = vmatpush.msra.mxu0 %v1660
        %4784 = vmatpush.msra.mxu0 %v1656
        %4785 = vmatpush.msra.mxu0 %v1652
        %4786 = vmatpush.msra.mxu0 %v1648
        %4787 = vmatpush.msra.mxu0 %v1644
        %4788 = vmatpush.msra.mxu0 %v1640
        %4789 = vmatpush.msra.mxu0 %v1636
        %4790 = vmatpush.msra.mxu0 %v1632
        %4791 = vmatpush.msra.mxu0 %v1628
        %4792 = vmatpush.msra.mxu0 %v1624
        %4793 = vmatpush.msra.mxu0 %v1620
        %4794 = vmatpush.msra.mxu0 %v1616
        %4795 = vmatpush.msra.mxu0 %v1612
        %4796 = vmatpush.msra.mxu0 %v1608
        %4797 = vmatpush.msra.mxu0 %v1604
        %4798 = vmatpush.msra.mxu0 %v1600
        %4799 = vmatmul.f32.gmra.mxu0 %v431
        %v4800 = vpop.f32.mrf.mxu0
        %v4801 = vadd.f32 %v4781, %v4800
        %4802 = vdwg.mxu0
        %4803 = vmatpush.msra.mxu0 %v1724
        %4804 = vmatpush.msra.mxu0 %v1720
        %4805 = vmatpush.msra.mxu0 %v1716
        %4806 = vmatpush.msra.mxu0 %v1712
        %4807 = vmatpush.msra.mxu0 %v1708
        %4808 = vmatpush.msra.mxu0 %v1704
        %4809 = vmatpush.msra.mxu0 %v1700
        %4810 = vmatpush.msra.mxu0 %v1696
        %4811 = vmatpush.msra.mxu0 %v1692
        %4812 = vmatpush.msra.mxu0 %v1688
        %4813 = vmatpush.msra.mxu0 %v1684
        %4814 = vmatpush.msra.mxu0 %v1680
        %4815 = vmatpush.msra.mxu0 %v1676
        %4816 = vmatpush.msra.mxu0 %v1672
        %4817 = vmatpush.msra.mxu0 %v1668
        %4818 = vmatpush.msra.mxu0 %v1664
        %4819 = vmatmul.f32.gmra.mxu0 %v432
        %v4820 = vpop.f32.mrf.mxu0
        %v4821 = vadd.f32 %v4801, %v4820
        %4822 = vdwg.mxu0
        %4823 = vmatpush.msra.mxu0 %v1788
        %4824 = vmatpush.msra.mxu0 %v1784
        %4825 = vmatpush.msra.mxu0 %v1780
        %4826 = vmatpush.msra.mxu0 %v1776
        %4827 = vmatpush.msra.mxu0 %v1772
        %4828 = vmatpush.msra.mxu0 %v1768
        %4829 = vmatpush.msra.mxu0 %v1764
        %4830 = vmatpush.msra.mxu0 %v1760
        %4831 = vmatpush.msra.mxu0 %v1756
        %4832 = vmatpush.msra.mxu0 %v1752
        %4833 = vmatpush.msra.mxu0 %v1748
        %4834 = vmatpush.msra.mxu0 %v1744
        %4835 = vmatpush.msra.mxu0 %v1740
        %4836 = vmatpush.msra.mxu0 %v1736
        %4837 = vmatpush.msra.mxu0 %v1732
        %4838 = vmatpush.msra.mxu0 %v1728
        %4839 = vmatmul.f32.gmra.mxu0 %v433
        %v4840 = vpop.f32.mrf.mxu0
        %v4841 = vadd.f32 %v4821, %v4840
        %4842 = vdwg.mxu0
        %4843 = vmatpush.msra.mxu0 %v1852
        %4844 = vmatpush.msra.mxu0 %v1848
        %4845 = vmatpush.msra.mxu0 %v1844
        %4846 = vmatpush.msra.mxu0 %v1840
        %4847 = vmatpush.msra.mxu0 %v1836
        %4848 = vmatpush.msra.mxu0 %v1832
        %4849 = vmatpush.msra.mxu0 %v1828
        %4850 = vmatpush.msra.mxu0 %v1824
        %4851 = vmatpush.msra.mxu0 %v1820
        %4852 = vmatpush.msra.mxu0 %v1816
        %4853 = vmatpush.msra.mxu0 %v1812
        %4854 = vmatpush.msra.mxu0 %v1808
        %4855 = vmatpush.msra.mxu0 %v1804
        %4856 = vmatpush.msra.mxu0 %v1800
        %4857 = vmatpush.msra.mxu0 %v1796
        %4858 = vmatpush.msra.mxu0 %v1792
        %4859 = vmatmul.f32.gmra.mxu0 %v434
        %v4860 = vpop.f32.mrf.mxu0
        %v4861 = vadd.f32 %v4841, %v4860
        %4862 = vdwg.mxu0
        %4863 = vmatpush.msra.mxu0 %v1916
        %4864 = vmatpush.msra.mxu0 %v1912
        %4865 = vmatpush.msra.mxu0 %v1908
        %4866 = vmatpush.msra.mxu0 %v1904
        %4867 = vmatpush.msra.mxu0 %v1900
        %4868 = vmatpush.msra.mxu0 %v1896
        %4869 = vmatpush.msra.mxu0 %v1892
        %4870 = vmatpush.msra.mxu0 %v1888
        %4871 = vmatpush.msra.mxu0 %v1884
        %4872 = vmatpush.msra.mxu0 %v1880
        %4873 = vmatpush.msra.mxu0 %v1876
        %4874 = vmatpush.msra.mxu0 %v1872
        %4875 = vmatpush.msra.mxu0 %v1868
        %4876 = vmatpush.msra.mxu0 %v1864
        %4877 = vmatpush.msra.mxu0 %v1860
        %4878 = vmatpush.msra.mxu0 %v1856
        %4879 = vmatmul.f32.gmra.mxu0 %v435
        %v4880 = vpop.f32.mrf.mxu0
        %v4881 = vadd.f32 %v4861, %v4880
        %4882 = vdwg.mxu0
        %4883 = vmatpush.msra.mxu0 %v1980
        %4884 = vmatpush.msra.mxu0 %v1976
        %4885 = vmatpush.msra.mxu0 %v1972
        %4886 = vmatpush.msra.mxu0 %v1968
        %4887 = vmatpush.msra.mxu0 %v1964
        %4888 = vmatpush.msra.mxu0 %v1960
        %4889 = vmatpush.msra.mxu0 %v1956
        %4890 = vmatpush.msra.mxu0 %v1952
        %4891 = vmatpush.msra.mxu0 %v1948
        %4892 = vmatpush.msra.mxu0 %v1944
        %4893 = vmatpush.msra.mxu0 %v1940
        %4894 = vmatpush.msra.mxu0 %v1936
        %4895 = vmatpush.msra.mxu0 %v1932
        %4896 = vmatpush.msra.mxu0 %v1928
        %4897 = vmatpush.msra.mxu0 %v1924
        %4898 = vmatpush.msra.mxu0 %v1920
        %4899 = vmatmul.f32.gmra.mxu0 %v436
        %v4900 = vpop.f32.mrf.mxu0
        %v4901 = vadd.f32 %v4881, %v4900
        %4902 = vdwg.mxu0
        %4903 = vmatpush.msra.mxu0 %v2044
        %4904 = vmatpush.msra.mxu0 %v2040
        %4905 = vmatpush.msra.mxu0 %v2036
        %4906 = vmatpush.msra.mxu0 %v2032
        %4907 = vmatpush.msra.mxu0 %v2028
        %4908 = vmatpush.msra.mxu0 %v2024
        %4909 = vmatpush.msra.mxu0 %v2020
        %4910 = vmatpush.msra.mxu0 %v2016
        %4911 = vmatpush.msra.mxu0 %v2012
        %4912 = vmatpush.msra.mxu0 %v2008
        %4913 = vmatpush.msra.mxu0 %v2004
        %4914 = vmatpush.msra.mxu0 %v2000
        %4915 = vmatpush.msra.mxu0 %v1996
        %4916 = vmatpush.msra.mxu0 %v1992
        %4917 = vmatpush.msra.mxu0 %v1988
        %4918 = vmatpush.msra.mxu0 %v1984
        %4919 = vmatmul.f32.gmra.mxu0 %v437
        %v4920 = vpop.f32.mrf.mxu0
        %v4921 = vadd.f32 %v4901, %v4920
        %4922 = vdwg.mxu0
        %4923 = vmatpush.msra.mxu0 %v2108
        %4924 = vmatpush.msra.mxu0 %v2104
        %4925 = vmatpush.msra.mxu0 %v2100
        %4926 = vmatpush.msra.mxu0 %v2096
        %4927 = vmatpush.msra.mxu0 %v2092
        %4928 = vmatpush.msra.mxu0 %v2088
        %4929 = vmatpush.msra.mxu0 %v2084
        %4930 = vmatpush.msra.mxu0 %v2080
        %4931 = vmatpush.msra.mxu0 %v2076
        %4932 = vmatpush.msra.mxu0 %v2072
        %4933 = vmatpush.msra.mxu0 %v2068
        %4934 = vmatpush.msra.mxu0 %v2064
        %4935 = vmatpush.msra.mxu0 %v2060
        %4936 = vmatpush.msra.mxu0 %v2056
        %4937 = vmatpush.msra.mxu0 %v2052
        %4938 = vmatpush.msra.mxu0 %v2048
        %4939 = vmatmul.f32.gmra.mxu0 %v438
        %v4940 = vpop.f32.mrf.mxu0
        %v4941 = vadd.f32 %v4921, %v4940
        %4942 = vdwg.mxu0
        %4943 = vmatpush.msra.mxu0 %v2172
        %4944 = vmatpush.msra.mxu0 %v2168
        %4945 = vmatpush.msra.mxu0 %v2164
        %4946 = vmatpush.msra.mxu0 %v2160
        %4947 = vmatpush.msra.mxu0 %v2156
        %4948 = vmatpush.msra.mxu0 %v2152
        %4949 = vmatpush.msra.mxu0 %v2148
        %4950 = vmatpush.msra.mxu0 %v2144
        %4951 = vmatpush.msra.mxu0 %v2140
        %4952 = vmatpush.msra.mxu0 %v2136
        %4953 = vmatpush.msra.mxu0 %v2132
        %4954 = vmatpush.msra.mxu0 %v2128
        %4955 = vmatpush.msra.mxu0 %v2124
        %4956 = vmatpush.msra.mxu0 %v2120
        %4957 = vmatpush.msra.mxu0 %v2116
        %4958 = vmatpush.msra.mxu0 %v2112
        %4959 = vmatmul.f32.gmra.mxu0 %v439
        %v4960 = vpop.f32.mrf.mxu0
        %v4961 = vadd.f32 %v4941, %v4960
        %4962 = vdwg.mxu0
        %4963 = vmatpush.msra.mxu0 %v2236
        %4964 = vmatpush.msra.mxu0 %v2232
        %4965 = vmatpush.msra.mxu0 %v2228
        %4966 = vmatpush.msra.mxu0 %v2224
        %4967 = vmatpush.msra.mxu0 %v2220
        %4968 = vmatpush.msra.mxu0 %v2216
        %4969 = vmatpush.msra.mxu0 %v2212
        %4970 = vmatpush.msra.mxu0 %v2208
        %4971 = vmatpush.msra.mxu0 %v2204
        %4972 = vmatpush.msra.mxu0 %v2200
        %4973 = vmatpush.msra.mxu0 %v2196
        %4974 = vmatpush.msra.mxu0 %v2192
        %4975 = vmatpush.msra.mxu0 %v2188
        %4976 = vmatpush.msra.mxu0 %v2184
        %4977 = vmatpush.msra.mxu0 %v2180
        %4978 = vmatpush.msra.mxu0 %v2176
        %4979 = vmatmul.f32.gmra.mxu0 %v440
        %v4980 = vpop.f32.mrf.mxu0
        %v4981 = vadd.f32 %v4961, %v4980
        %4982 = vdwg.mxu0
        %4983 = vmatpush.msra.mxu0 %v2300
        %4984 = vmatpush.msra.mxu0 %v2296
        %4985 = vmatpush.msra.mxu0 %v2292
        %4986 = vmatpush.msra.mxu0 %v2288
        %4987 = vmatpush.msra.mxu0 %v2284
        %4988 = vmatpush.msra.mxu0 %v2280
        %4989 = vmatpush.msra.mxu0 %v2276
        %4990 = vmatpush.msra.mxu0 %v2272
        %4991 = vmatpush.msra.mxu0 %v2268
        %4992 = vmatpush.msra.mxu0 %v2264
        %4993 = vmatpush.msra.mxu0 %v2260
        %4994 = vmatpush.msra.mxu0 %v2256
        %4995 = vmatpush.msra.mxu0 %v2252
        %4996 = vmatpush.msra.mxu0 %v2248
        %4997 = vmatpush.msra.mxu0 %v2244
        %4998 = vmatpush.msra.mxu0 %v2240
        %4999 = vmatmul.f32.gmra.mxu0 %v441
        %v5000 = vpop.f32.mrf.mxu0
        %v5001 = vadd.f32 %v4981, %v5000
        %5002 = vdwg.mxu0
        %5003 = vmatpush.msra.mxu0 %v2364
        %5004 = vmatpush.msra.mxu0 %v2360
        %5005 = vmatpush.msra.mxu0 %v2356
        %5006 = vmatpush.msra.mxu0 %v2352
        %5007 = vmatpush.msra.mxu0 %v2348
        %5008 = vmatpush.msra.mxu0 %v2344
        %5009 = vmatpush.msra.mxu0 %v2340
        %5010 = vmatpush.msra.mxu0 %v2336
        %5011 = vmatpush.msra.mxu0 %v2332
        %5012 = vmatpush.msra.mxu0 %v2328
        %5013 = vmatpush.msra.mxu0 %v2324
        %5014 = vmatpush.msra.mxu0 %v2320
        %5015 = vmatpush.msra.mxu0 %v2316
        %5016 = vmatpush.msra.mxu0 %v2312
        %5017 = vmatpush.msra.mxu0 %v2308
        %5018 = vmatpush.msra.mxu0 %v2304
        %5019 = vmatmul.f32.gmra.mxu0 %v442
        %v5020 = vpop.f32.mrf.mxu0
        %v5021 = vadd.f32 %v5001, %v5020
        %5022 = vdwg.mxu0
        %5023 = vmatpush.msra.mxu0 %v2428
        %5024 = vmatpush.msra.mxu0 %v2424
        %5025 = vmatpush.msra.mxu0 %v2420
        %5026 = vmatpush.msra.mxu0 %v2416
        %5027 = vmatpush.msra.mxu0 %v2412
        %5028 = vmatpush.msra.mxu0 %v2408
        %5029 = vmatpush.msra.mxu0 %v2404
        %5030 = vmatpush.msra.mxu0 %v2400
        %5031 = vmatpush.msra.mxu0 %v2396
        %5032 = vmatpush.msra.mxu0 %v2392
        %5033 = vmatpush.msra.mxu0 %v2388
        %5034 = vmatpush.msra.mxu0 %v2384
        %5035 = vmatpush.msra.mxu0 %v2380
        %5036 = vmatpush.msra.mxu0 %v2376
        %5037 = vmatpush.msra.mxu0 %v2372
        %5038 = vmatpush.msra.mxu0 %v2368
        %5039 = vmatmul.f32.gmra.mxu0 %v443
        %v5040 = vpop.f32.mrf.mxu0
        %v5041 = vadd.f32 %v5021, %v5040
        %5042 = vdwg.mxu0
        %5043 = vmatpush.msra.mxu0 %v2492
        %5044 = vmatpush.msra.mxu0 %v2488
        %5045 = vmatpush.msra.mxu0 %v2484
        %5046 = vmatpush.msra.mxu0 %v2480
        %5047 = vmatpush.msra.mxu0 %v2476
        %5048 = vmatpush.msra.mxu0 %v2472
        %5049 = vmatpush.msra.mxu0 %v2468
        %5050 = vmatpush.msra.mxu0 %v2464
        %5051 = vmatpush.msra.mxu0 %v2460
        %5052 = vmatpush.msra.mxu0 %v2456
        %5053 = vmatpush.msra.mxu0 %v2452
        %5054 = vmatpush.msra.mxu0 %v2448
        %5055 = vmatpush.msra.mxu0 %v2444
        %5056 = vmatpush.msra.mxu0 %v2440
        %5057 = vmatpush.msra.mxu0 %v2436
        %5058 = vmatpush.msra.mxu0 %v2432
        %5059 = vmatmul.f32.gmra.mxu0 %v444
        %v5060 = vpop.f32.mrf.mxu0
        %v5061 = vadd.f32 %v5041, %v5060
        %5062 = vdwg.mxu0
        %v5063 = vmax.f32 %v3141, 0.0
        %v5064 = vmax.f32 %v3781, 0.0
        %v5065 = vmax.f32 %v4421, 0.0
        %v5066 = vmax.f32 %v5061, 0.0
        %v5067 = vld [vmem:[%s389] sm:$0xff]
        %v5068 = vld [vmem:[%s389 + $0x8] sm:$0xff]
        %v5069 = vld [vmem:[%s389 + $0x10] sm:$0xff]
        %v5070 = vld [vmem:[%s389 + $0x18] sm:$0xff]
        %v5071 = vmul.f32 %v5063, %v5067
        %v5072 = vmul.f32 %v5064, %v5068
        %v5073 = vmul.f32 %v5065, %v5069
        %v5074 = vmul.f32 %v5066, %v5070
        %v5075 = vld [vmem:[#allocation2] sm:$0xff]
        %v5076 = vld [vmem:[#allocation2 + $0x8] sm:$0xff]
        %v5077 = vld [vmem:[#allocation2 + $0x10] sm:$0xff]
        %v5078 = vld [vmem:[#allocation2 + $0x18] sm:$0xff]
        %v5079 = vld [vmem:[#allocation2 + $0x20] sm:$0xff]
        %v5080 = vld [vmem:[#allocation2 + $0x28] sm:$0xff]
        %v5081 = vld [vmem:[#allocation2 + $0x30] sm:$0xff]
        %v5082 = vld [vmem:[#allocation2 + $0x38] sm:$0xff]
        %v5083 = vld [vmem:[%s332] sm:$0xff]
        %v5084 = vld [vmem:[%s332 + $0x8] sm:$0xff]
        %v5085 = vld [vmem:[%s332 + $0x10] sm:$0xff]
        %v5086 = vld [vmem:[%s332 + $0x18] sm:$0xff]
        %v5087 = vld [vmem:[%s332 + $0x20] sm:$0xff]
        %v5088 = vld [vmem:[%s332 + $0x28] sm:$0xff]
        %v5089 = vld [vmem:[%s332 + $0x30] sm:$0xff]
        %v5090 = vld [vmem:[%s332 + $0x38] sm:$0xff]
        %v5091 = vld [vmem:[%s332 + $0x40] sm:$0xff]
        %v5092 = vld [vmem:[%s332 + $0x48] sm:$0xff]
        %v5093 = vld [vmem:[%s332 + $0x50] sm:$0xff]
        %v5094 = vld [vmem:[%s332 + $0x58] sm:$0xff]
        %v5095 = vld [vmem:[%s332 + $0x60] sm:$0xff]
        %v5096 = vld [vmem:[%s332 + $0x68] sm:$0xff]
        %v5097 = vld [vmem:[%s332 + $0x70] sm:$0xff]
        %v5098 = vld [vmem:[%s332 + $0x78] sm:$0xff]
        %v5099 = vld [vmem:[%s332 + $0x80] sm:$0xff]
        %v5100 = vld [vmem:[%s332 + $0x88] sm:$0xff]
        %v5101 = vld [vmem:[%s332 + $0x90] sm:$0xff]
        %v5102 = vld [vmem:[%s332 + $0x98] sm:$0xff]
        %v5103 = vld [vmem:[%s332 + $0xa0] sm:$0xff]
        %v5104 = vld [vmem:[%s332 + $0xa8] sm:$0xff]
        %v5105 = vld [vmem:[%s332 + $0xb0] sm:$0xff]
        %v5106 = vld [vmem:[%s332 + $0xb8] sm:$0xff]
        %v5107 = vld [vmem:[%s332 + $0xc0] sm:$0xff]
        %v5108 = vld [vmem:[%s332 + $0xc8] sm:$0xff]
        %v5109 = vld [vmem:[%s332 + $0xd0] sm:$0xff]
        %v5110 = vld [vmem:[%s332 + $0xd8] sm:$0xff]
        %v5111 = vld [vmem:[%s332 + $0xe0] sm:$0xff]
        %v5112 = vld [vmem:[%s332 + $0xe8] sm:$0xff]
        %v5113 = vld [vmem:[%s332 + $0xf0] sm:$0xff]
        %v5114 = vld [vmem:[%s332 + $0xf8] sm:$0xff]
        %v5115 = vld [vmem:[%s332 + $0x100] sm:$0xff]
        %v5116 = vld [vmem:[%s332 + $0x108] sm:$0xff]
        %v5117 = vld [vmem:[%s332 + $0x110] sm:$0xff]
        %v5118 = vld [vmem:[%s332 + $0x118] sm:$0xff]
        %v5119 = vld [vmem:[%s332 + $0x120] sm:$0xff]
        %v5120 = vld [vmem:[%s332 + $0x128] sm:$0xff]
        %v5121 = vld [vmem:[%s332 + $0x130] sm:$0xff]
        %v5122 = vld [vmem:[%s332 + $0x138] sm:$0xff]
        %v5123 = vld [vmem:[%s332 + $0x140] sm:$0xff]
        %v5124 = vld [vmem:[%s332 + $0x148] sm:$0xff]
        %v5125 = vld [vmem:[%s332 + $0x150] sm:$0xff]
        %v5126 = vld [vmem:[%s332 + $0x158] sm:$0xff]
        %v5127 = vld [vmem:[%s332 + $0x160] sm:$0xff]
        %v5128 = vld [vmem:[%s332 + $0x168] sm:$0xff]
        %v5129 = vld [vmem:[%s332 + $0x170] sm:$0xff]
        %v5130 = vld [vmem:[%s332 + $0x178] sm:$0xff]
        %v5131 = vld [vmem:[%s332 + $0x180] sm:$0xff]
        %v5132 = vld [vmem:[%s332 + $0x188] sm:$0xff]
        %v5133 = vld [vmem:[%s332 + $0x190] sm:$0xff]
        %v5134 = vld [vmem:[%s332 + $0x198] sm:$0xff]
        %v5135 = vld [vmem:[%s332 + $0x1a0] sm:$0xff]
        %v5136 = vld [vmem:[%s332 + $0x1a8] sm:$0xff]
        %v5137 = vld [vmem:[%s332 + $0x1b0] sm:$0xff]
        %v5138 = vld [vmem:[%s332 + $0x1b8] sm:$0xff]
        %v5139 = vld [vmem:[%s332 + $0x1c0] sm:$0xff]
        %v5140 = vld [vmem:[%s332 + $0x1c8] sm:$0xff]
        %v5141 = vld [vmem:[%s332 + $0x1d0] sm:$0xff]
        %v5142 = vld [vmem:[%s332 + $0x1d8] sm:$0xff]
        %v5143 = vld [vmem:[%s332 + $0x1e0] sm:$0xff]
        %v5144 = vld [vmem:[%s332 + $0x1e8] sm:$0xff]
        %v5145 = vld [vmem:[%s332 + $0x1f0] sm:$0xff]
        %v5146 = vld [vmem:[%s332 + $0x1f8] sm:$0xff]
        %v5147 = vld [vmem:[%s332 + $0x200] sm:$0xff]
        %v5148 = vld [vmem:[%s332 + $0x208] sm:$0xff]
        %v5149 = vld [vmem:[%s332 + $0x210] sm:$0xff]
        %v5150 = vld [vmem:[%s332 + $0x218] sm:$0xff]
        %v5151 = vld [vmem:[%s332 + $0x220] sm:$0xff]
        %v5152 = vld [vmem:[%s332 + $0x228] sm:$0xff]
        %v5153 = vld [vmem:[%s332 + $0x230] sm:$0xff]
        %v5154 = vld [vmem:[%s332 + $0x238] sm:$0xff]
        %v5155 = vld [vmem:[%s332 + $0x240] sm:$0xff]
        %v5156 = vld [vmem:[%s332 + $0x248] sm:$0xff]
        %v5157 = vld [vmem:[%s332 + $0x250] sm:$0xff]
        %v5158 = vld [vmem:[%s332 + $0x258] sm:$0xff]
        %v5159 = vld [vmem:[%s332 + $0x260] sm:$0xff]
        %v5160 = vld [vmem:[%s332 + $0x268] sm:$0xff]
        %v5161 = vld [vmem:[%s332 + $0x270] sm:$0xff]
        %v5162 = vld [vmem:[%s332 + $0x278] sm:$0xff]
        %v5163 = vld [vmem:[%s332 + $0x280] sm:$0xff]
        %v5164 = vld [vmem:[%s332 + $0x288] sm:$0xff]
        %v5165 = vld [vmem:[%s332 + $0x290] sm:$0xff]
        %v5166 = vld [vmem:[%s332 + $0x298] sm:$0xff]
        %v5167 = vld [vmem:[%s332 + $0x2a0] sm:$0xff]
        %v5168 = vld [vmem:[%s332 + $0x2a8] sm:$0xff]
        %v5169 = vld [vmem:[%s332 + $0x2b0] sm:$0xff]
        %v5170 = vld [vmem:[%s332 + $0x2b8] sm:$0xff]
        %v5171 = vld [vmem:[%s332 + $0x2c0] sm:$0xff]
        %v5172 = vld [vmem:[%s332 + $0x2c8] sm:$0xff]
        %v5173 = vld [vmem:[%s332 + $0x2d0] sm:$0xff]
        %v5174 = vld [vmem:[%s332 + $0x2d8] sm:$0xff]
        %v5175 = vld [vmem:[%s332 + $0x2e0] sm:$0xff]
        %v5176 = vld [vmem:[%s332 + $0x2e8] sm:$0xff]
        %v5177 = vld [vmem:[%s332 + $0x2f0] sm:$0xff]
        %v5178 = vld [vmem:[%s332 + $0x2f8] sm:$0xff]
        %v5179 = vld [vmem:[%s332 + $0x300] sm:$0xff]
        %v5180 = vld [vmem:[%s332 + $0x308] sm:$0xff]
        %v5181 = vld [vmem:[%s332 + $0x310] sm:$0xff]
        %v5182 = vld [vmem:[%s332 + $0x318] sm:$0xff]
        %v5183 = vld [vmem:[%s332 + $0x320] sm:$0xff]
        %v5184 = vld [vmem:[%s332 + $0x328] sm:$0xff]
        %v5185 = vld [vmem:[%s332 + $0x330] sm:$0xff]
        %v5186 = vld [vmem:[%s332 + $0x338] sm:$0xff]
        %v5187 = vld [vmem:[%s332 + $0x340] sm:$0xff]
        %v5188 = vld [vmem:[%s332 + $0x348] sm:$0xff]
        %v5189 = vld [vmem:[%s332 + $0x350] sm:$0xff]
        %v5190 = vld [vmem:[%s332 + $0x358] sm:$0xff]
        %v5191 = vld [vmem:[%s332 + $0x360] sm:$0xff]
        %v5192 = vld [vmem:[%s332 + $0x368] sm:$0xff]
        %v5193 = vld [vmem:[%s332 + $0x370] sm:$0xff]
        %v5194 = vld [vmem:[%s332 + $0x378] sm:$0xff]
        %v5195 = vld [vmem:[%s332 + $0x380] sm:$0xff]
        %v5196 = vld [vmem:[%s332 + $0x388] sm:$0xff]
        %v5197 = vld [vmem:[%s332 + $0x390] sm:$0xff]
        %v5198 = vld [vmem:[%s332 + $0x398] sm:$0xff]
        %v5199 = vld [vmem:[%s332 + $0x3a0] sm:$0xff]
        %v5200 = vld [vmem:[%s332 + $0x3a8] sm:$0xff]
        %v5201 = vld [vmem:[%s332 + $0x3b0] sm:$0xff]
        %v5202 = vld [vmem:[%s332 + $0x3b8] sm:$0xff]
        %v5203 = vld [vmem:[%s332 + $0x3c0] sm:$0xff]
        %v5204 = vld [vmem:[%s332 + $0x3c8] sm:$0xff]
        %v5205 = vld [vmem:[%s332 + $0x3d0] sm:$0xff]
        %v5206 = vld [vmem:[%s332 + $0x3d8] sm:$0xff]
        %v5207 = vld [vmem:[%s332 + $0x3e0] sm:$0xff]
        %v5208 = vld [vmem:[%s332 + $0x3e8] sm:$0xff]
        %v5209 = vld [vmem:[%s332 + $0x3f0] sm:$0xff]
        %v5210 = vld [vmem:[%s332 + $0x3f8] sm:$0xff]
        %v5211 = vld [vmem:[%s332 + $0x400] sm:$0xff]
        %v5212 = vld [vmem:[%s332 + $0x408] sm:$0xff]
        %v5213 = vld [vmem:[%s332 + $0x410] sm:$0xff]
        %v5214 = vld [vmem:[%s332 + $0x418] sm:$0xff]
        %v5215 = vld [vmem:[%s332 + $0x420] sm:$0xff]
        %v5216 = vld [vmem:[%s332 + $0x428] sm:$0xff]
        %v5217 = vld [vmem:[%s332 + $0x430] sm:$0xff]
        %v5218 = vld [vmem:[%s332 + $0x438] sm:$0xff]
        %v5219 = vld [vmem:[%s332 + $0x440] sm:$0xff]
        %v5220 = vld [vmem:[%s332 + $0x448] sm:$0xff]
        %v5221 = vld [vmem:[%s332 + $0x450] sm:$0xff]
        %v5222 = vld [vmem:[%s332 + $0x458] sm:$0xff]
        %v5223 = vld [vmem:[%s332 + $0x460] sm:$0xff]
        %v5224 = vld [vmem:[%s332 + $0x468] sm:$0xff]
        %v5225 = vld [vmem:[%s332 + $0x470] sm:$0xff]
        %v5226 = vld [vmem:[%s332 + $0x478] sm:$0xff]
        %v5227 = vld [vmem:[%s332 + $0x480] sm:$0xff]
        %v5228 = vld [vmem:[%s332 + $0x488] sm:$0xff]
        %v5229 = vld [vmem:[%s332 + $0x490] sm:$0xff]
        %v5230 = vld [vmem:[%s332 + $0x498] sm:$0xff]
        %v5231 = vld [vmem:[%s332 + $0x4a0] sm:$0xff]
        %v5232 = vld [vmem:[%s332 + $0x4a8] sm:$0xff]
        %v5233 = vld [vmem:[%s332 + $0x4b0] sm:$0xff]
        %v5234 = vld [vmem:[%s332 + $0x4b8] sm:$0xff]
        %v5235 = vld [vmem:[%s332 + $0x4c0] sm:$0xff]
        %v5236 = vld [vmem:[%s332 + $0x4c8] sm:$0xff]
        %v5237 = vld [vmem:[%s332 + $0x4d0] sm:$0xff]
        %v5238 = vld [vmem:[%s332 + $0x4d8] sm:$0xff]
        %v5239 = vld [vmem:[%s332 + $0x4e0] sm:$0xff]
        %v5240 = vld [vmem:[%s332 + $0x4e8] sm:$0xff]
        %v5241 = vld [vmem:[%s332 + $0x4f0] sm:$0xff]
        %v5242 = vld [vmem:[%s332 + $0x4f8] sm:$0xff]
        %v5243 = vld [vmem:[%s332 + $0x500] sm:$0xff]
        %v5244 = vld [vmem:[%s332 + $0x508] sm:$0xff]
        %v5245 = vld [vmem:[%s332 + $0x510] sm:$0xff]
        %v5246 = vld [vmem:[%s332 + $0x518] sm:$0xff]
        %v5247 = vld [vmem:[%s332 + $0x520] sm:$0xff]
        %v5248 = vld [vmem:[%s332 + $0x528] sm:$0xff]
        %v5249 = vld [vmem:[%s332 + $0x530] sm:$0xff]
        %v5250 = vld [vmem:[%s332 + $0x538] sm:$0xff]
        %v5251 = vld [vmem:[%s332 + $0x540] sm:$0xff]
        %v5252 = vld [vmem:[%s332 + $0x548] sm:$0xff]
        %v5253 = vld [vmem:[%s332 + $0x550] sm:$0xff]
        %v5254 = vld [vmem:[%s332 + $0x558] sm:$0xff]
        %v5255 = vld [vmem:[%s332 + $0x560] sm:$0xff]
        %v5256 = vld [vmem:[%s332 + $0x568] sm:$0xff]
        %v5257 = vld [vmem:[%s332 + $0x570] sm:$0xff]
        %v5258 = vld [vmem:[%s332 + $0x578] sm:$0xff]
        %v5259 = vld [vmem:[%s332 + $0x580] sm:$0xff]
        %v5260 = vld [vmem:[%s332 + $0x588] sm:$0xff]
        %v5261 = vld [vmem:[%s332 + $0x590] sm:$0xff]
        %v5262 = vld [vmem:[%s332 + $0x598] sm:$0xff]
        %v5263 = vld [vmem:[%s332 + $0x5a0] sm:$0xff]
        %v5264 = vld [vmem:[%s332 + $0x5a8] sm:$0xff]
        %v5265 = vld [vmem:[%s332 + $0x5b0] sm:$0xff]
        %v5266 = vld [vmem:[%s332 + $0x5b8] sm:$0xff]
        %v5267 = vld [vmem:[%s332 + $0x5c0] sm:$0xff]
        %v5268 = vld [vmem:[%s332 + $0x5c8] sm:$0xff]
        %v5269 = vld [vmem:[%s332 + $0x5d0] sm:$0xff]
        %v5270 = vld [vmem:[%s332 + $0x5d8] sm:$0xff]
        %v5271 = vld [vmem:[%s332 + $0x5e0] sm:$0xff]
        %v5272 = vld [vmem:[%s332 + $0x5e8] sm:$0xff]
        %v5273 = vld [vmem:[%s332 + $0x5f0] sm:$0xff]
        %v5274 = vld [vmem:[%s332 + $0x5f8] sm:$0xff]
        %v5275 = vld [vmem:[%s332 + $0x600] sm:$0xff]
        %v5276 = vld [vmem:[%s332 + $0x608] sm:$0xff]
        %v5277 = vld [vmem:[%s332 + $0x610] sm:$0xff]
        %v5278 = vld [vmem:[%s332 + $0x618] sm:$0xff]
        %v5279 = vld [vmem:[%s332 + $0x620] sm:$0xff]
        %v5280 = vld [vmem:[%s332 + $0x628] sm:$0xff]
        %v5281 = vld [vmem:[%s332 + $0x630] sm:$0xff]
        %v5282 = vld [vmem:[%s332 + $0x638] sm:$0xff]
        %v5283 = vld [vmem:[%s332 + $0x640] sm:$0xff]
        %v5284 = vld [vmem:[%s332 + $0x648] sm:$0xff]
        %v5285 = vld [vmem:[%s332 + $0x650] sm:$0xff]
        %v5286 = vld [vmem:[%s332 + $0x658] sm:$0xff]
        %v5287 = vld [vmem:[%s332 + $0x660] sm:$0xff]
        %v5288 = vld [vmem:[%s332 + $0x668] sm:$0xff]
        %v5289 = vld [vmem:[%s332 + $0x670] sm:$0xff]
        %v5290 = vld [vmem:[%s332 + $0x678] sm:$0xff]
        %v5291 = vld [vmem:[%s332 + $0x680] sm:$0xff]
        %v5292 = vld [vmem:[%s332 + $0x688] sm:$0xff]
        %v5293 = vld [vmem:[%s332 + $0x690] sm:$0xff]
        %v5294 = vld [vmem:[%s332 + $0x698] sm:$0xff]
        %v5295 = vld [vmem:[%s332 + $0x6a0] sm:$0xff]
        %v5296 = vld [vmem:[%s332 + $0x6a8] sm:$0xff]
        %v5297 = vld [vmem:[%s332 + $0x6b0] sm:$0xff]
        %v5298 = vld [vmem:[%s332 + $0x6b8] sm:$0xff]
        %v5299 = vld [vmem:[%s332 + $0x6c0] sm:$0xff]
        %v5300 = vld [vmem:[%s332 + $0x6c8] sm:$0xff]
        %v5301 = vld [vmem:[%s332 + $0x6d0] sm:$0xff]
        %v5302 = vld [vmem:[%s332 + $0x6d8] sm:$0xff]
        %v5303 = vld [vmem:[%s332 + $0x6e0] sm:$0xff]
        %v5304 = vld [vmem:[%s332 + $0x6e8] sm:$0xff]
        %v5305 = vld [vmem:[%s332 + $0x6f0] sm:$0xff]
        %v5306 = vld [vmem:[%s332 + $0x6f8] sm:$0xff]
        %v5307 = vld [vmem:[%s332 + $0x700] sm:$0xff]
        %v5308 = vld [vmem:[%s332 + $0x708] sm:$0xff]
        %v5309 = vld [vmem:[%s332 + $0x710] sm:$0xff]
        %v5310 = vld [vmem:[%s332 + $0x718] sm:$0xff]
        %v5311 = vld [vmem:[%s332 + $0x720] sm:$0xff]
        %v5312 = vld [vmem:[%s332 + $0x728] sm:$0xff]
        %v5313 = vld [vmem:[%s332 + $0x730] sm:$0xff]
        %v5314 = vld [vmem:[%s332 + $0x738] sm:$0xff]
        %v5315 = vld [vmem:[%s332 + $0x740] sm:$0xff]
        %v5316 = vld [vmem:[%s332 + $0x748] sm:$0xff]
        %v5317 = vld [vmem:[%s332 + $0x750] sm:$0xff]
        %v5318 = vld [vmem:[%s332 + $0x758] sm:$0xff]
        %v5319 = vld [vmem:[%s332 + $0x760] sm:$0xff]
        %v5320 = vld [vmem:[%s332 + $0x768] sm:$0xff]
        %v5321 = vld [vmem:[%s332 + $0x770] sm:$0xff]
        %v5322 = vld [vmem:[%s332 + $0x778] sm:$0xff]
        %v5323 = vld [vmem:[%s332 + $0x780] sm:$0xff]
        %v5324 = vld [vmem:[%s332 + $0x788] sm:$0xff]
        %v5325 = vld [vmem:[%s332 + $0x790] sm:$0xff]
        %v5326 = vld [vmem:[%s332 + $0x798] sm:$0xff]
        %v5327 = vld [vmem:[%s332 + $0x7a0] sm:$0xff]
        %v5328 = vld [vmem:[%s332 + $0x7a8] sm:$0xff]
        %v5329 = vld [vmem:[%s332 + $0x7b0] sm:$0xff]
        %v5330 = vld [vmem:[%s332 + $0x7b8] sm:$0xff]
        %v5331 = vld [vmem:[%s332 + $0x7c0] sm:$0xff]
        %v5332 = vld [vmem:[%s332 + $0x7c8] sm:$0xff]
        %v5333 = vld [vmem:[%s332 + $0x7d0] sm:$0xff]
        %v5334 = vld [vmem:[%s332 + $0x7d8] sm:$0xff]
        %v5335 = vld [vmem:[%s332 + $0x7e0] sm:$0xff]
        %v5336 = vld [vmem:[%s332 + $0x7e8] sm:$0xff]
        %v5337 = vld [vmem:[%s332 + $0x7f0] sm:$0xff]
        %v5338 = vld [vmem:[%s332 + $0x7f8] sm:$0xff]
        %v5339 = vld [vmem:[%s332 + $0x800] sm:$0xff]
        %v5340 = vld [vmem:[%s332 + $0x808] sm:$0xff]
        %v5341 = vld [vmem:[%s332 + $0x810] sm:$0xff]
        %v5342 = vld [vmem:[%s332 + $0x818] sm:$0xff]
        %v5343 = vld [vmem:[%s332 + $0x820] sm:$0xff]
        %v5344 = vld [vmem:[%s332 + $0x828] sm:$0xff]
        %v5345 = vld [vmem:[%s332 + $0x830] sm:$0xff]
        %v5346 = vld [vmem:[%s332 + $0x838] sm:$0xff]
        %v5347 = vld [vmem:[%s332 + $0x840] sm:$0xff]
        %v5348 = vld [vmem:[%s332 + $0x848] sm:$0xff]
        %v5349 = vld [vmem:[%s332 + $0x850] sm:$0xff]
        %v5350 = vld [vmem:[%s332 + $0x858] sm:$0xff]
        %v5351 = vld [vmem:[%s332 + $0x860] sm:$0xff]
        %v5352 = vld [vmem:[%s332 + $0x868] sm:$0xff]
        %v5353 = vld [vmem:[%s332 + $0x870] sm:$0xff]
        %v5354 = vld [vmem:[%s332 + $0x878] sm:$0xff]
        %v5355 = vld [vmem:[%s332 + $0x880] sm:$0xff]
        %v5356 = vld [vmem:[%s332 + $0x888] sm:$0xff]
        %v5357 = vld [vmem:[%s332 + $0x890] sm:$0xff]
        %v5358 = vld [vmem:[%s332 + $0x898] sm:$0xff]
        %v5359 = vld [vmem:[%s332 + $0x8a0] sm:$0xff]
        %v5360 = vld [vmem:[%s332 + $0x8a8] sm:$0xff]
        %v5361 = vld [vmem:[%s332 + $0x8b0] sm:$0xff]
        %v5362 = vld [vmem:[%s332 + $0x8b8] sm:$0xff]
        %v5363 = vld [vmem:[%s332 + $0x8c0] sm:$0xff]
        %v5364 = vld [vmem:[%s332 + $0x8c8] sm:$0xff]
        %v5365 = vld [vmem:[%s332 + $0x8d0] sm:$0xff]
        %v5366 = vld [vmem:[%s332 + $0x8d8] sm:$0xff]
        %v5367 = vld [vmem:[%s332 + $0x8e0] sm:$0xff]
        %v5368 = vld [vmem:[%s332 + $0x8e8] sm:$0xff]
        %v5369 = vld [vmem:[%s332 + $0x8f0] sm:$0xff]
        %v5370 = vld [vmem:[%s332 + $0x8f8] sm:$0xff]
        %v5371 = vld [vmem:[%s332 + $0x900] sm:$0xff]
        %v5372 = vld [vmem:[%s332 + $0x908] sm:$0xff]
        %v5373 = vld [vmem:[%s332 + $0x910] sm:$0xff]
        %v5374 = vld [vmem:[%s332 + $0x918] sm:$0xff]
        %v5375 = vld [vmem:[%s332 + $0x920] sm:$0xff]
        %v5376 = vld [vmem:[%s332 + $0x928] sm:$0xff]
        %v5377 = vld [vmem:[%s332 + $0x930] sm:$0xff]
        %v5378 = vld [vmem:[%s332 + $0x938] sm:$0xff]
        %v5379 = vld [vmem:[%s332 + $0x940] sm:$0xff]
        %v5380 = vld [vmem:[%s332 + $0x948] sm:$0xff]
        %v5381 = vld [vmem:[%s332 + $0x950] sm:$0xff]
        %v5382 = vld [vmem:[%s332 + $0x958] sm:$0xff]
        %v5383 = vld [vmem:[%s332 + $0x960] sm:$0xff]
        %v5384 = vld [vmem:[%s332 + $0x968] sm:$0xff]
        %v5385 = vld [vmem:[%s332 + $0x970] sm:$0xff]
        %v5386 = vld [vmem:[%s332 + $0x978] sm:$0xff]
        %v5387 = vld [vmem:[%s332 + $0x980] sm:$0xff]
        %v5388 = vld [vmem:[%s332 + $0x988] sm:$0xff]
        %v5389 = vld [vmem:[%s332 + $0x990] sm:$0xff]
        %v5390 = vld [vmem:[%s332 + $0x998] sm:$0xff]
        %v5391 = vld [vmem:[%s332 + $0x9a0] sm:$0xff]
        %v5392 = vld [vmem:[%s332 + $0x9a8] sm:$0xff]
        %v5393 = vld [vmem:[%s332 + $0x9b0] sm:$0xff]
        %v5394 = vld [vmem:[%s332 + $0x9b8] sm:$0xff]
        %v5395 = vld [vmem:[%s332 + $0x9c0] sm:$0xff]
        %v5396 = vld [vmem:[%s332 + $0x9c8] sm:$0xff]
        %v5397 = vld [vmem:[%s332 + $0x9d0] sm:$0xff]
        %v5398 = vld [vmem:[%s332 + $0x9d8] sm:$0xff]
        %v5399 = vld [vmem:[%s332 + $0x9e0] sm:$0xff]
        %v5400 = vld [vmem:[%s332 + $0x9e8] sm:$0xff]
        %v5401 = vld [vmem:[%s332 + $0x9f0] sm:$0xff]
        %v5402 = vld [vmem:[%s332 + $0x9f8] sm:$0xff]
        %v5403 = vld [vmem:[%s332 + $0xa00] sm:$0xff]
        %v5404 = vld [vmem:[%s332 + $0xa08] sm:$0xff]
        %v5405 = vld [vmem:[%s332 + $0xa10] sm:$0xff]
        %v5406 = vld [vmem:[%s332 + $0xa18] sm:$0xff]
        %v5407 = vld [vmem:[%s332 + $0xa20] sm:$0xff]
        %v5408 = vld [vmem:[%s332 + $0xa28] sm:$0xff]
        %v5409 = vld [vmem:[%s332 + $0xa30] sm:$0xff]
        %v5410 = vld [vmem:[%s332 + $0xa38] sm:$0xff]
        %v5411 = vld [vmem:[%s332 + $0xa40] sm:$0xff]
        %v5412 = vld [vmem:[%s332 + $0xa48] sm:$0xff]
        %v5413 = vld [vmem:[%s332 + $0xa50] sm:$0xff]
        %v5414 = vld [vmem:[%s332 + $0xa58] sm:$0xff]
        %v5415 = vld [vmem:[%s332 + $0xa60] sm:$0xff]
        %v5416 = vld [vmem:[%s332 + $0xa68] sm:$0xff]
        %v5417 = vld [vmem:[%s332 + $0xa70] sm:$0xff]
        %v5418 = vld [vmem:[%s332 + $0xa78] sm:$0xff]
        %v5419 = vld [vmem:[%s332 + $0xa80] sm:$0xff]
        %v5420 = vld [vmem:[%s332 + $0xa88] sm:$0xff]
        %v5421 = vld [vmem:[%s332 + $0xa90] sm:$0xff]
        %v5422 = vld [vmem:[%s332 + $0xa98] sm:$0xff]
        %v5423 = vld [vmem:[%s332 + $0xaa0] sm:$0xff]
        %v5424 = vld [vmem:[%s332 + $0xaa8] sm:$0xff]
        %v5425 = vld [vmem:[%s332 + $0xab0] sm:$0xff]
        %v5426 = vld [vmem:[%s332 + $0xab8] sm:$0xff]
        %v5427 = vld [vmem:[%s332 + $0xac0] sm:$0xff]
        %v5428 = vld [vmem:[%s332 + $0xac8] sm:$0xff]
        %v5429 = vld [vmem:[%s332 + $0xad0] sm:$0xff]
        %v5430 = vld [vmem:[%s332 + $0xad8] sm:$0xff]
        %v5431 = vld [vmem:[%s332 + $0xae0] sm:$0xff]
        %v5432 = vld [vmem:[%s332 + $0xae8] sm:$0xff]
        %v5433 = vld [vmem:[%s332 + $0xaf0] sm:$0xff]
        %v5434 = vld [vmem:[%s332 + $0xaf8] sm:$0xff]
        %v5435 = vld [vmem:[%s332 + $0xb00] sm:$0xff]
        %v5436 = vld [vmem:[%s332 + $0xb08] sm:$0xff]
        %v5437 = vld [vmem:[%s332 + $0xb10] sm:$0xff]
        %v5438 = vld [vmem:[%s332 + $0xb18] sm:$0xff]
        %v5439 = vld [vmem:[%s332 + $0xb20] sm:$0xff]
        %v5440 = vld [vmem:[%s332 + $0xb28] sm:$0xff]
        %v5441 = vld [vmem:[%s332 + $0xb30] sm:$0xff]
        %v5442 = vld [vmem:[%s332 + $0xb38] sm:$0xff]
        %v5443 = vld [vmem:[%s332 + $0xb40] sm:$0xff]
        %v5444 = vld [vmem:[%s332 + $0xb48] sm:$0xff]
        %v5445 = vld [vmem:[%s332 + $0xb50] sm:$0xff]
        %v5446 = vld [vmem:[%s332 + $0xb58] sm:$0xff]
        %v5447 = vld [vmem:[%s332 + $0xb60] sm:$0xff]
        %v5448 = vld [vmem:[%s332 + $0xb68] sm:$0xff]
        %v5449 = vld [vmem:[%s332 + $0xb70] sm:$0xff]
        %v5450 = vld [vmem:[%s332 + $0xb78] sm:$0xff]
        %v5451 = vld [vmem:[%s332 + $0xb80] sm:$0xff]
        %v5452 = vld [vmem:[%s332 + $0xb88] sm:$0xff]
        %v5453 = vld [vmem:[%s332 + $0xb90] sm:$0xff]
        %v5454 = vld [vmem:[%s332 + $0xb98] sm:$0xff]
        %v5455 = vld [vmem:[%s332 + $0xba0] sm:$0xff]
        %v5456 = vld [vmem:[%s332 + $0xba8] sm:$0xff]
        %v5457 = vld [vmem:[%s332 + $0xbb0] sm:$0xff]
        %v5458 = vld [vmem:[%s332 + $0xbb8] sm:$0xff]
        %v5459 = vld [vmem:[%s332 + $0xbc0] sm:$0xff]
        %v5460 = vld [vmem:[%s332 + $0xbc8] sm:$0xff]
        %v5461 = vld [vmem:[%s332 + $0xbd0] sm:$0xff]
        %v5462 = vld [vmem:[%s332 + $0xbd8] sm:$0xff]
        %v5463 = vld [vmem:[%s332 + $0xbe0] sm:$0xff]
        %v5464 = vld [vmem:[%s332 + $0xbe8] sm:$0xff]
        %v5465 = vld [vmem:[%s332 + $0xbf0] sm:$0xff]
        %v5466 = vld [vmem:[%s332 + $0xbf8] sm:$0xff]
        %v5467 = vld [vmem:[%s332 + $0xc00] sm:$0xff]
        %v5468 = vld [vmem:[%s332 + $0xc08] sm:$0xff]
        %v5469 = vld [vmem:[%s332 + $0xc10] sm:$0xff]
        %v5470 = vld [vmem:[%s332 + $0xc18] sm:$0xff]
        %v5471 = vld [vmem:[%s332 + $0xc20] sm:$0xff]
        %v5472 = vld [vmem:[%s332 + $0xc28] sm:$0xff]
        %v5473 = vld [vmem:[%s332 + $0xc30] sm:$0xff]
        %v5474 = vld [vmem:[%s332 + $0xc38] sm:$0xff]
        %v5475 = vld [vmem:[%s332 + $0xc40] sm:$0xff]
        %v5476 = vld [vmem:[%s332 + $0xc48] sm:$0xff]
        %v5477 = vld [vmem:[%s332 + $0xc50] sm:$0xff]
        %v5478 = vld [vmem:[%s332 + $0xc58] sm:$0xff]
        %v5479 = vld [vmem:[%s332 + $0xc60] sm:$0xff]
        %v5480 = vld [vmem:[%s332 + $0xc68] sm:$0xff]
        %v5481 = vld [vmem:[%s332 + $0xc70] sm:$0xff]
        %v5482 = vld [vmem:[%s332 + $0xc78] sm:$0xff]
        %v5483 = vld [vmem:[%s332 + $0xc80] sm:$0xff]
        %v5484 = vld [vmem:[%s332 + $0xc88] sm:$0xff]
        %v5485 = vld [vmem:[%s332 + $0xc90] sm:$0xff]
        %v5486 = vld [vmem:[%s332 + $0xc98] sm:$0xff]
        %v5487 = vld [vmem:[%s332 + $0xca0] sm:$0xff]
        %v5488 = vld [vmem:[%s332 + $0xca8] sm:$0xff]
        %v5489 = vld [vmem:[%s332 + $0xcb0] sm:$0xff]
        %v5490 = vld [vmem:[%s332 + $0xcb8] sm:$0xff]
        %v5491 = vld [vmem:[%s332 + $0xcc0] sm:$0xff]
        %v5492 = vld [vmem:[%s332 + $0xcc8] sm:$0xff]
        %v5493 = vld [vmem:[%s332 + $0xcd0] sm:$0xff]
        %v5494 = vld [vmem:[%s332 + $0xcd8] sm:$0xff]
        %v5495 = vld [vmem:[%s332 + $0xce0] sm:$0xff]
        %v5496 = vld [vmem:[%s332 + $0xce8] sm:$0xff]
        %v5497 = vld [vmem:[%s332 + $0xcf0] sm:$0xff]
        %v5498 = vld [vmem:[%s332 + $0xcf8] sm:$0xff]
        %v5499 = vld [vmem:[%s332 + $0xd00] sm:$0xff]
        %v5500 = vld [vmem:[%s332 + $0xd08] sm:$0xff]
        %v5501 = vld [vmem:[%s332 + $0xd10] sm:$0xff]
        %v5502 = vld [vmem:[%s332 + $0xd18] sm:$0xff]
        %v5503 = vld [vmem:[%s332 + $0xd20] sm:$0xff]
        %v5504 = vld [vmem:[%s332 + $0xd28] sm:$0xff]
        %v5505 = vld [vmem:[%s332 + $0xd30] sm:$0xff]
        %v5506 = vld [vmem:[%s332 + $0xd38] sm:$0xff]
        %v5507 = vld [vmem:[%s332 + $0xd40] sm:$0xff]
        %v5508 = vld [vmem:[%s332 + $0xd48] sm:$0xff]
        %v5509 = vld [vmem:[%s332 + $0xd50] sm:$0xff]
        %v5510 = vld [vmem:[%s332 + $0xd58] sm:$0xff]
        %v5511 = vld [vmem:[%s332 + $0xd60] sm:$0xff]
        %v5512 = vld [vmem:[%s332 + $0xd68] sm:$0xff]
        %v5513 = vld [vmem:[%s332 + $0xd70] sm:$0xff]
        %v5514 = vld [vmem:[%s332 + $0xd78] sm:$0xff]
        %v5515 = vld [vmem:[%s332 + $0xd80] sm:$0xff]
        %v5516 = vld [vmem:[%s332 + $0xd88] sm:$0xff]
        %v5517 = vld [vmem:[%s332 + $0xd90] sm:$0xff]
        %v5518 = vld [vmem:[%s332 + $0xd98] sm:$0xff]
        %v5519 = vld [vmem:[%s332 + $0xda0] sm:$0xff]
        %v5520 = vld [vmem:[%s332 + $0xda8] sm:$0xff]
        %v5521 = vld [vmem:[%s332 + $0xdb0] sm:$0xff]
        %v5522 = vld [vmem:[%s332 + $0xdb8] sm:$0xff]
        %v5523 = vld [vmem:[%s332 + $0xdc0] sm:$0xff]
        %v5524 = vld [vmem:[%s332 + $0xdc8] sm:$0xff]
        %v5525 = vld [vmem:[%s332 + $0xdd0] sm:$0xff]
        %v5526 = vld [vmem:[%s332 + $0xdd8] sm:$0xff]
        %v5527 = vld [vmem:[%s332 + $0xde0] sm:$0xff]
        %v5528 = vld [vmem:[%s332 + $0xde8] sm:$0xff]
        %v5529 = vld [vmem:[%s332 + $0xdf0] sm:$0xff]
        %v5530 = vld [vmem:[%s332 + $0xdf8] sm:$0xff]
        %v5531 = vld [vmem:[%s332 + $0xe00] sm:$0xff]
        %v5532 = vld [vmem:[%s332 + $0xe08] sm:$0xff]
        %v5533 = vld [vmem:[%s332 + $0xe10] sm:$0xff]
        %v5534 = vld [vmem:[%s332 + $0xe18] sm:$0xff]
        %v5535 = vld [vmem:[%s332 + $0xe20] sm:$0xff]
        %v5536 = vld [vmem:[%s332 + $0xe28] sm:$0xff]
        %v5537 = vld [vmem:[%s332 + $0xe30] sm:$0xff]
        %v5538 = vld [vmem:[%s332 + $0xe38] sm:$0xff]
        %v5539 = vld [vmem:[%s332 + $0xe40] sm:$0xff]
        %v5540 = vld [vmem:[%s332 + $0xe48] sm:$0xff]
        %v5541 = vld [vmem:[%s332 + $0xe50] sm:$0xff]
        %v5542 = vld [vmem:[%s332 + $0xe58] sm:$0xff]
        %v5543 = vld [vmem:[%s332 + $0xe60] sm:$0xff]
        %v5544 = vld [vmem:[%s332 + $0xe68] sm:$0xff]
        %v5545 = vld [vmem:[%s332 + $0xe70] sm:$0xff]
        %v5546 = vld [vmem:[%s332 + $0xe78] sm:$0xff]
        %v5547 = vld [vmem:[%s332 + $0xe80] sm:$0xff]
        %v5548 = vld [vmem:[%s332 + $0xe88] sm:$0xff]
        %v5549 = vld [vmem:[%s332 + $0xe90] sm:$0xff]
        %v5550 = vld [vmem:[%s332 + $0xe98] sm:$0xff]
        %v5551 = vld [vmem:[%s332 + $0xea0] sm:$0xff]
        %v5552 = vld [vmem:[%s332 + $0xea8] sm:$0xff]
        %v5553 = vld [vmem:[%s332 + $0xeb0] sm:$0xff]
        %v5554 = vld [vmem:[%s332 + $0xeb8] sm:$0xff]
        %v5555 = vld [vmem:[%s332 + $0xec0] sm:$0xff]
        %v5556 = vld [vmem:[%s332 + $0xec8] sm:$0xff]
        %v5557 = vld [vmem:[%s332 + $0xed0] sm:$0xff]
        %v5558 = vld [vmem:[%s332 + $0xed8] sm:$0xff]
        %v5559 = vld [vmem:[%s332 + $0xee0] sm:$0xff]
        %v5560 = vld [vmem:[%s332 + $0xee8] sm:$0xff]
        %v5561 = vld [vmem:[%s332 + $0xef0] sm:$0xff]
        %v5562 = vld [vmem:[%s332 + $0xef8] sm:$0xff]
        %v5563 = vld [vmem:[%s332 + $0xf00] sm:$0xff]
        %v5564 = vld [vmem:[%s332 + $0xf08] sm:$0xff]
        %v5565 = vld [vmem:[%s332 + $0xf10] sm:$0xff]
        %v5566 = vld [vmem:[%s332 + $0xf18] sm:$0xff]
        %v5567 = vld [vmem:[%s332 + $0xf20] sm:$0xff]
        %v5568 = vld [vmem:[%s332 + $0xf28] sm:$0xff]
        %v5569 = vld [vmem:[%s332 + $0xf30] sm:$0xff]
        %v5570 = vld [vmem:[%s332 + $0xf38] sm:$0xff]
        %v5571 = vld [vmem:[%s332 + $0xf40] sm:$0xff]
        %v5572 = vld [vmem:[%s332 + $0xf48] sm:$0xff]
        %v5573 = vld [vmem:[%s332 + $0xf50] sm:$0xff]
        %v5574 = vld [vmem:[%s332 + $0xf58] sm:$0xff]
        %v5575 = vld [vmem:[%s332 + $0xf60] sm:$0xff]
        %v5576 = vld [vmem:[%s332 + $0xf68] sm:$0xff]
        %v5577 = vld [vmem:[%s332 + $0xf70] sm:$0xff]
        %v5578 = vld [vmem:[%s332 + $0xf78] sm:$0xff]
        %v5579 = vld [vmem:[%s332 + $0xf80] sm:$0xff]
        %v5580 = vld [vmem:[%s332 + $0xf88] sm:$0xff]
        %v5581 = vld [vmem:[%s332 + $0xf90] sm:$0xff]
        %v5582 = vld [vmem:[%s332 + $0xf98] sm:$0xff]
        %v5583 = vld [vmem:[%s332 + $0xfa0] sm:$0xff]
        %v5584 = vld [vmem:[%s332 + $0xfa8] sm:$0xff]
        %v5585 = vld [vmem:[%s332 + $0xfb0] sm:$0xff]
        %v5586 = vld [vmem:[%s332 + $0xfb8] sm:$0xff]
        %v5587 = vld [vmem:[%s332 + $0xfc0] sm:$0xff]
        %v5588 = vld [vmem:[%s332 + $0xfc8] sm:$0xff]
        %v5589 = vld [vmem:[%s332 + $0xfd0] sm:$0xff]
        %v5590 = vld [vmem:[%s332 + $0xfd8] sm:$0xff]
        %v5591 = vld [vmem:[%s332 + $0xfe0] sm:$0xff]
        %v5592 = vld [vmem:[%s332 + $0xfe8] sm:$0xff]
        %v5593 = vld [vmem:[%s332 + $0xff0] sm:$0xff]
        %v5594 = vld [vmem:[%s332 + $0xff8] sm:$0xff]
        %5595 = vmatpush.msra.mxu0 %v5203
        %5596 = vmatpush.msra.mxu0 %v5195
        %5597 = vmatpush.msra.mxu0 %v5187
        %5598 = vmatpush.msra.mxu0 %v5179
        %5599 = vmatpush.msra.mxu0 %v5171
        %5600 = vmatpush.msra.mxu0 %v5163
        %5601 = vmatpush.msra.mxu0 %v5155
        %5602 = vmatpush.msra.mxu0 %v5147
        %5603 = vmatpush.msra.mxu0 %v5139
        %5604 = vmatpush.msra.mxu0 %v5131
        %5605 = vmatpush.msra.mxu0 %v5123
        %5606 = vmatpush.msra.mxu0 %v5115
        %5607 = vmatpush.msra.mxu0 %v5107
        %5608 = vmatpush.msra.mxu0 %v5099
        %5609 = vmatpush.msra.mxu0 %v5091
        %5610 = vmatpush.msra.mxu0 %v5083
        %5611 = vmatmul.f32.gmra.mxu0 %v5071
        %v5612 = vpop.f32.mrf.mxu0
        %v5613 = vadd.f32 0.0, %v5612
        %5614 = vdwg.mxu0
        %5615 = vmatpush.msra.mxu0 %v5331
        %5616 = vmatpush.msra.mxu0 %v5323
        %5617 = vmatpush.msra.mxu0 %v5315
        %5618 = vmatpush.msra.mxu0 %v5307
        %5619 = vmatpush.msra.mxu0 %v5299
        %5620 = vmatpush.msra.mxu0 %v5291
        %5621 = vmatpush.msra.mxu0 %v5283
        %5622 = vmatpush.msra.mxu0 %v5275
        %5623 = vmatpush.msra.mxu0 %v5267
        %5624 = vmatpush.msra.mxu0 %v5259
        %5625 = vmatpush.msra.mxu0 %v5251
        %5626 = vmatpush.msra.mxu0 %v5243
        %5627 = vmatpush.msra.mxu0 %v5235
        %5628 = vmatpush.msra.mxu0 %v5227
        %5629 = vmatpush.msra.mxu0 %v5219
        %5630 = vmatpush.msra.mxu0 %v5211
        %5631 = vmatmul.f32.gmra.mxu0 %v5072
        %v5632 = vpop.f32.mrf.mxu0
        %v5633 = vadd.f32 %v5613, %v5632
        %5634 = vdwg.mxu0
        %5635 = vmatpush.msra.mxu0 %v5459
        %5636 = vmatpush.msra.mxu0 %v5451
        %5637 = vmatpush.msra.mxu0 %v5443
        %5638 = vmatpush.msra.mxu0 %v5435
        %5639 = vmatpush.msra.mxu0 %v5427
        %5640 = vmatpush.msra.mxu0 %v5419
        %5641 = vmatpush.msra.mxu0 %v5411
        %5642 = vmatpush.msra.mxu0 %v5403
        %5643 = vmatpush.msra.mxu0 %v5395
        %5644 = vmatpush.msra.mxu0 %v5387
        %5645 = vmatpush.msra.mxu0 %v5379
        %5646 = vmatpush.msra.mxu0 %v5371
        %5647 = vmatpush.msra.mxu0 %v5363
        %5648 = vmatpush.msra.mxu0 %v5355
        %5649 = vmatpush.msra.mxu0 %v5347
        %5650 = vmatpush.msra.mxu0 %v5339
        %5651 = vmatmul.f32.gmra.mxu0 %v5073
        %v5652 = vpop.f32.mrf.mxu0
        %v5653 = vadd.f32 %v5633, %v5652
        %5654 = vdwg.mxu0
        %5655 = vmatpush.msra.mxu0 %v5587
        %5656 = vmatpush.msra.mxu0 %v5579
        %5657 = vmatpush.msra.mxu0 %v5571
        %5658 = vmatpush.msra.mxu0 %v5563
        %5659 = vmatpush.msra.mxu0 %v5555
        %5660 = vmatpush.msra.mxu0 %v5547
        %5661 = vmatpush.msra.mxu0 %v5539
        %5662 = vmatpush.msra.mxu0 %v5531
        %5663 = vmatpush.msra.mxu0 %v5523
        %5664 = vmatpush.msra.mxu0 %v5515
        %5665 = vmatpush.msra.mxu0 %v5507
        %5666 = vmatpush.msra.mxu0 %v5499
        %5667 = vmatpush.msra.mxu0 %v5491
        %5668 = vmatpush.msra.mxu0 %v5483
        %5669 = vmatpush.msra.mxu0 %v5475
        %5670 = vmatpush.msra.mxu0 %v5467
        %5671 = vmatmul.f32.gmra.mxu0 %v5074
        %v5672 = vpop.f32.mrf.mxu0
        %v5673 = vadd.f32 %v5653, %v5672
        %5674 = vdwg.mxu0
        %5675 = vmatpush.msra.mxu0 %v5204
        %5676 = vmatpush.msra.mxu0 %v5196
        %5677 = vmatpush.msra.mxu0 %v5188
        %5678 = vmatpush.msra.mxu0 %v5180
        %5679 = vmatpush.msra.mxu0 %v5172
        %5680 = vmatpush.msra.mxu0 %v5164
        %5681 = vmatpush.msra.mxu0 %v5156
        %5682 = vmatpush.msra.mxu0 %v5148
        %5683 = vmatpush.msra.mxu0 %v5140
        %5684 = vmatpush.msra.mxu0 %v5132
        %5685 = vmatpush.msra.mxu0 %v5124
        %5686 = vmatpush.msra.mxu0 %v5116
        %5687 = vmatpush.msra.mxu0 %v5108
        %5688 = vmatpush.msra.mxu0 %v5100
        %5689 = vmatpush.msra.mxu0 %v5092
        %5690 = vmatpush.msra.mxu0 %v5084
        %5691 = vmatmul.f32.gmra.mxu0 %v5071
        %v5692 = vpop.f32.mrf.mxu0
        %v5693 = vadd.f32 0.0, %v5692
        %5694 = vdwg.mxu0
        %5695 = vmatpush.msra.mxu0 %v5332
        %5696 = vmatpush.msra.mxu0 %v5324
        %5697 = vmatpush.msra.mxu0 %v5316
        %5698 = vmatpush.msra.mxu0 %v5308
        %5699 = vmatpush.msra.mxu0 %v5300
        %5700 = vmatpush.msra.mxu0 %v5292
        %5701 = vmatpush.msra.mxu0 %v5284
        %5702 = vmatpush.msra.mxu0 %v5276
        %5703 = vmatpush.msra.mxu0 %v5268
        %5704 = vmatpush.msra.mxu0 %v5260
        %5705 = vmatpush.msra.mxu0 %v5252
        %5706 = vmatpush.msra.mxu0 %v5244
        %5707 = vmatpush.msra.mxu0 %v5236
        %5708 = vmatpush.msra.mxu0 %v5228
        %5709 = vmatpush.msra.mxu0 %v5220
        %5710 = vmatpush.msra.mxu0 %v5212
        %5711 = vmatmul.f32.gmra.mxu0 %v5072
        %v5712 = vpop.f32.mrf.mxu0
        %v5713 = vadd.f32 %v5693, %v5712
        %5714 = vdwg.mxu0
        %5715 = vmatpush.msra.mxu0 %v5460
        %5716 = vmatpush.msra.mxu0 %v5452
        %5717 = vmatpush.msra.mxu0 %v5444
        %5718 = vmatpush.msra.mxu0 %v5436
        %5719 = vmatpush.msra.mxu0 %v5428
        %5720 = vmatpush.msra.mxu0 %v5420
        %5721 = vmatpush.msra.mxu0 %v5412
        %5722 = vmatpush.msra.mxu0 %v5404
        %5723 = vmatpush.msra.mxu0 %v5396
        %5724 = vmatpush.msra.mxu0 %v5388
        %5725 = vmatpush.msra.mxu0 %v5380
        %5726 = vmatpush.msra.mxu0 %v5372
        %5727 = vmatpush.msra.mxu0 %v5364
        %5728 = vmatpush.msra.mxu0 %v5356
        %5729 = vmatpush.msra.mxu0 %v5348
        %5730 = vmatpush.msra.mxu0 %v5340
        %5731 = vmatmul.f32.gmra.mxu0 %v5073
        %v5732 = vpop.f32.mrf.mxu0
        %v5733 = vadd.f32 %v5713, %v5732
        %5734 = vdwg.mxu0
        %5735 = vmatpush.msra.mxu0 %v5588
        %5736 = vmatpush.msra.mxu0 %v5580
        %5737 = vmatpush.msra.mxu0 %v5572
        %5738 = vmatpush.msra.mxu0 %v5564
        %5739 = vmatpush.msra.mxu0 %v5556
        %5740 = vmatpush.msra.mxu0 %v5548
        %5741 = vmatpush.msra.mxu0 %v5540
        %5742 = vmatpush.msra.mxu0 %v5532
        %5743 = vmatpush.msra.mxu0 %v5524
        %5744 = vmatpush.msra.mxu0 %v5516
        %5745 = vmatpush.msra.mxu0 %v5508
        %5746 = vmatpush.msra.mxu0 %v5500
        %5747 = vmatpush.msra.mxu0 %v5492
        %5748 = vmatpush.msra.mxu0 %v5484
        %5749 = vmatpush.msra.mxu0 %v5476
        %5750 = vmatpush.msra.mxu0 %v5468
        %5751 = vmatmul.f32.gmra.mxu0 %v5074
        %v5752 = vpop.f32.mrf.mxu0
        %v5753 = vadd.f32 %v5733, %v5752
        %5754 = vdwg.mxu0
        %5755 = vmatpush.msra.mxu0 %v5205
        %5756 = vmatpush.msra.mxu0 %v5197
        %5757 = vmatpush.msra.mxu0 %v5189
        %5758 = vmatpush.msra.mxu0 %v5181
        %5759 = vmatpush.msra.mxu0 %v5173
        %5760 = vmatpush.msra.mxu0 %v5165
        %5761 = vmatpush.msra.mxu0 %v5157
        %5762 = vmatpush.msra.mxu0 %v5149
        %5763 = vmatpush.msra.mxu0 %v5141
        %5764 = vmatpush.msra.mxu0 %v5133
        %5765 = vmatpush.msra.mxu0 %v5125
        %5766 = vmatpush.msra.mxu0 %v5117
        %5767 = vmatpush.msra.mxu0 %v5109
        %5768 = vmatpush.msra.mxu0 %v5101
        %5769 = vmatpush.msra.mxu0 %v5093
        %5770 = vmatpush.msra.mxu0 %v5085
        %5771 = vmatmul.f32.gmra.mxu0 %v5071
        %v5772 = vpop.f32.mrf.mxu0
        %v5773 = vadd.f32 0.0, %v5772
        %5774 = vdwg.mxu0
        %5775 = vmatpush.msra.mxu0 %v5333
        %5776 = vmatpush.msra.mxu0 %v5325
        %5777 = vmatpush.msra.mxu0 %v5317
        %5778 = vmatpush.msra.mxu0 %v5309
        %5779 = vmatpush.msra.mxu0 %v5301
        %5780 = vmatpush.msra.mxu0 %v5293
        %5781 = vmatpush.msra.mxu0 %v5285
        %5782 = vmatpush.msra.mxu0 %v5277
        %5783 = vmatpush.msra.mxu0 %v5269
        %5784 = vmatpush.msra.mxu0 %v5261
        %5785 = vmatpush.msra.mxu0 %v5253
        %5786 = vmatpush.msra.mxu0 %v5245
        %5787 = vmatpush.msra.mxu0 %v5237
        %5788 = vmatpush.msra.mxu0 %v5229
        %5789 = vmatpush.msra.mxu0 %v5221
        %5790 = vmatpush.msra.mxu0 %v5213
        %5791 = vmatmul.f32.gmra.mxu0 %v5072
        %v5792 = vpop.f32.mrf.mxu0
        %v5793 = vadd.f32 %v5773, %v5792
        %5794 = vdwg.mxu0
        %5795 = vmatpush.msra.mxu0 %v5461
        %5796 = vmatpush.msra.mxu0 %v5453
        %5797 = vmatpush.msra.mxu0 %v5445
        %5798 = vmatpush.msra.mxu0 %v5437
        %5799 = vmatpush.msra.mxu0 %v5429
        %5800 = vmatpush.msra.mxu0 %v5421
        %5801 = vmatpush.msra.mxu0 %v5413
        %5802 = vmatpush.msra.mxu0 %v5405
        %5803 = vmatpush.msra.mxu0 %v5397
        %5804 = vmatpush.msra.mxu0 %v5389
        %5805 = vmatpush.msra.mxu0 %v5381
        %5806 = vmatpush.msra.mxu0 %v5373
        %5807 = vmatpush.msra.mxu0 %v5365
        %5808 = vmatpush.msra.mxu0 %v5357
        %5809 = vmatpush.msra.mxu0 %v5349
        %5810 = vmatpush.msra.mxu0 %v5341
        %5811 = vmatmul.f32.gmra.mxu0 %v5073
        %v5812 = vpop.f32.mrf.mxu0
        %v5813 = vadd.f32 %v5793, %v5812
        %5814 = vdwg.mxu0
        %5815 = vmatpush.msra.mxu0 %v5589
        %5816 = vmatpush.msra.mxu0 %v5581
        %5817 = vmatpush.msra.mxu0 %v5573
        %5818 = vmatpush.msra.mxu0 %v5565
        %5819 = vmatpush.msra.mxu0 %v5557
        %5820 = vmatpush.msra.mxu0 %v5549
        %5821 = vmatpush.msra.mxu0 %v5541
        %5822 = vmatpush.msra.mxu0 %v5533
        %5823 = vmatpush.msra.mxu0 %v5525
        %5824 = vmatpush.msra.mxu0 %v5517
        %5825 = vmatpush.msra.mxu0 %v5509
        %5826 = vmatpush.msra.mxu0 %v5501
        %5827 = vmatpush.msra.mxu0 %v5493
        %5828 = vmatpush.msra.mxu0 %v5485
        %5829 = vmatpush.msra.mxu0 %v5477
        %5830 = vmatpush.msra.mxu0 %v5469
        %5831 = vmatmul.f32.gmra.mxu0 %v5074
        %v5832 = vpop.f32.mrf.mxu0
        %v5833 = vadd.f32 %v5813, %v5832
        %5834 = vdwg.mxu0
        %5835 = vmatpush.msra.mxu0 %v5206
        %5836 = vmatpush.msra.mxu0 %v5198
        %5837 = vmatpush.msra.mxu0 %v5190
        %5838 = vmatpush.msra.mxu0 %v5182
        %5839 = vmatpush.msra.mxu0 %v5174
        %5840 = vmatpush.msra.mxu0 %v5166
        %5841 = vmatpush.msra.mxu0 %v5158
        %5842 = vmatpush.msra.mxu0 %v5150
        %5843 = vmatpush.msra.mxu0 %v5142
        %5844 = vmatpush.msra.mxu0 %v5134
        %5845 = vmatpush.msra.mxu0 %v5126
        %5846 = vmatpush.msra.mxu0 %v5118
        %5847 = vmatpush.msra.mxu0 %v5110
        %5848 = vmatpush.msra.mxu0 %v5102
        %5849 = vmatpush.msra.mxu0 %v5094
        %5850 = vmatpush.msra.mxu0 %v5086
        %5851 = vmatmul.f32.gmra.mxu0 %v5071
        %v5852 = vpop.f32.mrf.mxu0
        %v5853 = vadd.f32 0.0, %v5852
        %5854 = vdwg.mxu0
        %5855 = vmatpush.msra.mxu0 %v5334
        %5856 = vmatpush.msra.mxu0 %v5326
        %5857 = vmatpush.msra.mxu0 %v5318
        %5858 = vmatpush.msra.mxu0 %v5310
        %5859 = vmatpush.msra.mxu0 %v5302
        %5860 = vmatpush.msra.mxu0 %v5294
        %5861 = vmatpush.msra.mxu0 %v5286
        %5862 = vmatpush.msra.mxu0 %v5278
        %5863 = vmatpush.msra.mxu0 %v5270
        %5864 = vmatpush.msra.mxu0 %v5262
        %5865 = vmatpush.msra.mxu0 %v5254
        %5866 = vmatpush.msra.mxu0 %v5246
        %5867 = vmatpush.msra.mxu0 %v5238
        %5868 = vmatpush.msra.mxu0 %v5230
        %5869 = vmatpush.msra.mxu0 %v5222
        %5870 = vmatpush.msra.mxu0 %v5214
        %5871 = vmatmul.f32.gmra.mxu0 %v5072
        %v5872 = vpop.f32.mrf.mxu0
        %v5873 = vadd.f32 %v5853, %v5872
        %5874 = vdwg.mxu0
        %5875 = vmatpush.msra.mxu0 %v5462
        %5876 = vmatpush.msra.mxu0 %v5454
        %5877 = vmatpush.msra.mxu0 %v5446
        %5878 = vmatpush.msra.mxu0 %v5438
        %5879 = vmatpush.msra.mxu0 %v5430
        %5880 = vmatpush.msra.mxu0 %v5422
        %5881 = vmatpush.msra.mxu0 %v5414
        %5882 = vmatpush.msra.mxu0 %v5406
        %5883 = vmatpush.msra.mxu0 %v5398
        %5884 = vmatpush.msra.mxu0 %v5390
        %5885 = vmatpush.msra.mxu0 %v5382
        %5886 = vmatpush.msra.mxu0 %v5374
        %5887 = vmatpush.msra.mxu0 %v5366
        %5888 = vmatpush.msra.mxu0 %v5358
        %5889 = vmatpush.msra.mxu0 %v5350
        %5890 = vmatpush.msra.mxu0 %v5342
        %5891 = vmatmul.f32.gmra.mxu0 %v5073
        %v5892 = vpop.f32.mrf.mxu0
        %v5893 = vadd.f32 %v5873, %v5892
        %5894 = vdwg.mxu0
        %5895 = vmatpush.msra.mxu0 %v5590
        %5896 = vmatpush.msra.mxu0 %v5582
        %5897 = vmatpush.msra.mxu0 %v5574
        %5898 = vmatpush.msra.mxu0 %v5566
        %5899 = vmatpush.msra.mxu0 %v5558
        %5900 = vmatpush.msra.mxu0 %v5550
        %5901 = vmatpush.msra.mxu0 %v5542
        %5902 = vmatpush.msra.mxu0 %v5534
        %5903 = vmatpush.msra.mxu0 %v5526
        %5904 = vmatpush.msra.mxu0 %v5518
        %5905 = vmatpush.msra.mxu0 %v5510
        %5906 = vmatpush.msra.mxu0 %v5502
        %5907 = vmatpush.msra.mxu0 %v5494
        %5908 = vmatpush.msra.mxu0 %v5486
        %5909 = vmatpush.msra.mxu0 %v5478
        %5910 = vmatpush.msra.mxu0 %v5470
        %5911 = vmatmul.f32.gmra.mxu0 %v5074
        %v5912 = vpop.f32.mrf.mxu0
        %v5913 = vadd.f32 %v5893, %v5912
        %5914 = vdwg.mxu0
        %5915 = vmatpush.msra.mxu0 %v5207
        %5916 = vmatpush.msra.mxu0 %v5199
        %5917 = vmatpush.msra.mxu0 %v5191
        %5918 = vmatpush.msra.mxu0 %v5183
        %5919 = vmatpush.msra.mxu0 %v5175
        %5920 = vmatpush.msra.mxu0 %v5167
        %5921 = vmatpush.msra.mxu0 %v5159
        %5922 = vmatpush.msra.mxu0 %v5151
        %5923 = vmatpush.msra.mxu0 %v5143
        %5924 = vmatpush.msra.mxu0 %v5135
        %5925 = vmatpush.msra.mxu0 %v5127
        %5926 = vmatpush.msra.mxu0 %v5119
        %5927 = vmatpush.msra.mxu0 %v5111
        %5928 = vmatpush.msra.mxu0 %v5103
        %5929 = vmatpush.msra.mxu0 %v5095
        %5930 = vmatpush.msra.mxu0 %v5087
        %5931 = vmatmul.f32.gmra.mxu0 %v5071
        %v5932 = vpop.f32.mrf.mxu0
        %v5933 = vadd.f32 0.0, %v5932
        %5934 = vdwg.mxu0
        %5935 = vmatpush.msra.mxu0 %v5335
        %5936 = vmatpush.msra.mxu0 %v5327
        %5937 = vmatpush.msra.mxu0 %v5319
        %5938 = vmatpush.msra.mxu0 %v5311
        %5939 = vmatpush.msra.mxu0 %v5303
        %5940 = vmatpush.msra.mxu0 %v5295
        %5941 = vmatpush.msra.mxu0 %v5287
        %5942 = vmatpush.msra.mxu0 %v5279
        %5943 = vmatpush.msra.mxu0 %v5271
        %5944 = vmatpush.msra.mxu0 %v5263
        %5945 = vmatpush.msra.mxu0 %v5255
        %5946 = vmatpush.msra.mxu0 %v5247
        %5947 = vmatpush.msra.mxu0 %v5239
        %5948 = vmatpush.msra.mxu0 %v5231
        %5949 = vmatpush.msra.mxu0 %v5223
        %5950 = vmatpush.msra.mxu0 %v5215
        %5951 = vmatmul.f32.gmra.mxu0 %v5072
        %v5952 = vpop.f32.mrf.mxu0
        %v5953 = vadd.f32 %v5933, %v5952
        %5954 = vdwg.mxu0
        %5955 = vmatpush.msra.mxu0 %v5463
        %5956 = vmatpush.msra.mxu0 %v5455
        %5957 = vmatpush.msra.mxu0 %v5447
        %5958 = vmatpush.msra.mxu0 %v5439
        %5959 = vmatpush.msra.mxu0 %v5431
        %5960 = vmatpush.msra.mxu0 %v5423
        %5961 = vmatpush.msra.mxu0 %v5415
        %5962 = vmatpush.msra.mxu0 %v5407
        %5963 = vmatpush.msra.mxu0 %v5399
        %5964 = vmatpush.msra.mxu0 %v5391
        %5965 = vmatpush.msra.mxu0 %v5383
        %5966 = vmatpush.msra.mxu0 %v5375
        %5967 = vmatpush.msra.mxu0 %v5367
        %5968 = vmatpush.msra.mxu0 %v5359
        %5969 = vmatpush.msra.mxu0 %v5351
        %5970 = vmatpush.msra.mxu0 %v5343
        %5971 = vmatmul.f32.gmra.mxu0 %v5073
        %v5972 = vpop.f32.mrf.mxu0
        %v5973 = vadd.f32 %v5953, %v5972
        %5974 = vdwg.mxu0
        %5975 = vmatpush.msra.mxu0 %v5591
        %5976 = vmatpush.msra.mxu0 %v5583
        %5977 = vmatpush.msra.mxu0 %v5575
        %5978 = vmatpush.msra.mxu0 %v5567
        %5979 = vmatpush.msra.mxu0 %v5559
        %5980 = vmatpush.msra.mxu0 %v5551
        %5981 = vmatpush.msra.mxu0 %v5543
        %5982 = vmatpush.msra.mxu0 %v5535
        %5983 = vmatpush.msra.mxu0 %v5527
        %5984 = vmatpush.msra.mxu0 %v5519
        %5985 = vmatpush.msra.mxu0 %v5511
        %5986 = vmatpush.msra.mxu0 %v5503
        %5987 = vmatpush.msra.mxu0 %v5495
        %5988 = vmatpush.msra.mxu0 %v5487
        %5989 = vmatpush.msra.mxu0 %v5479
        %5990 = vmatpush.msra.mxu0 %v5471
        %5991 = vmatmul.f32.gmra.mxu0 %v5074
        %v5992 = vpop.f32.mrf.mxu0
        %v5993 = vadd.f32 %v5973, %v5992
        %5994 = vdwg.mxu0
        %5995 = vmatpush.msra.mxu0 %v5208
        %5996 = vmatpush.msra.mxu0 %v5200
        %5997 = vmatpush.msra.mxu0 %v5192
        %5998 = vmatpush.msra.mxu0 %v5184
        %5999 = vmatpush.msra.mxu0 %v5176
        %6000 = vmatpush.msra.mxu0 %v5168
        %6001 = vmatpush.msra.mxu0 %v5160
        %6002 = vmatpush.msra.mxu0 %v5152
        %6003 = vmatpush.msra.mxu0 %v5144
        %6004 = vmatpush.msra.mxu0 %v5136
        %6005 = vmatpush.msra.mxu0 %v5128
        %6006 = vmatpush.msra.mxu0 %v5120
        %6007 = vmatpush.msra.mxu0 %v5112
        %6008 = vmatpush.msra.mxu0 %v5104
        %6009 = vmatpush.msra.mxu0 %v5096
        %6010 = vmatpush.msra.mxu0 %v5088
        %6011 = vmatmul.f32.gmra.mxu0 %v5071
        %v6012 = vpop.f32.mrf.mxu0
        %v6013 = vadd.f32 0.0, %v6012
        %6014 = vdwg.mxu0
        %6015 = vmatpush.msra.mxu0 %v5336
        %6016 = vmatpush.msra.mxu0 %v5328
        %6017 = vmatpush.msra.mxu0 %v5320
        %6018 = vmatpush.msra.mxu0 %v5312
        %6019 = vmatpush.msra.mxu0 %v5304
        %6020 = vmatpush.msra.mxu0 %v5296
        %6021 = vmatpush.msra.mxu0 %v5288
        %6022 = vmatpush.msra.mxu0 %v5280
        %6023 = vmatpush.msra.mxu0 %v5272
        %6024 = vmatpush.msra.mxu0 %v5264
        %6025 = vmatpush.msra.mxu0 %v5256
        %6026 = vmatpush.msra.mxu0 %v5248
        %6027 = vmatpush.msra.mxu0 %v5240
        %6028 = vmatpush.msra.mxu0 %v5232
        %6029 = vmatpush.msra.mxu0 %v5224
        %6030 = vmatpush.msra.mxu0 %v5216
        %6031 = vmatmul.f32.gmra.mxu0 %v5072
        %v6032 = vpop.f32.mrf.mxu0
        %v6033 = vadd.f32 %v6013, %v6032
        %6034 = vdwg.mxu0
        %6035 = vmatpush.msra.mxu0 %v5464
        %6036 = vmatpush.msra.mxu0 %v5456
        %6037 = vmatpush.msra.mxu0 %v5448
        %6038 = vmatpush.msra.mxu0 %v5440
        %6039 = vmatpush.msra.mxu0 %v5432
        %6040 = vmatpush.msra.mxu0 %v5424
        %6041 = vmatpush.msra.mxu0 %v5416
        %6042 = vmatpush.msra.mxu0 %v5408
        %6043 = vmatpush.msra.mxu0 %v5400
        %6044 = vmatpush.msra.mxu0 %v5392
        %6045 = vmatpush.msra.mxu0 %v5384
        %6046 = vmatpush.msra.mxu0 %v5376
        %6047 = vmatpush.msra.mxu0 %v5368
        %6048 = vmatpush.msra.mxu0 %v5360
        %6049 = vmatpush.msra.mxu0 %v5352
        %6050 = vmatpush.msra.mxu0 %v5344
        %6051 = vmatmul.f32.gmra.mxu0 %v5073
        %v6052 = vpop.f32.mrf.mxu0
        %v6053 = vadd.f32 %v6033, %v6052
        %6054 = vdwg.mxu0
        %6055 = vmatpush.msra.mxu0 %v5592
        %6056 = vmatpush.msra.mxu0 %v5584
        %6057 = vmatpush.msra.mxu0 %v5576
        %6058 = vmatpush.msra.mxu0 %v5568
        %6059 = vmatpush.msra.mxu0 %v5560
        %6060 = vmatpush.msra.mxu0 %v5552
        %6061 = vmatpush.msra.mxu0 %v5544
        %6062 = vmatpush.msra.mxu0 %v5536
        %6063 = vmatpush.msra.mxu0 %v5528
        %6064 = vmatpush.msra.mxu0 %v5520
        %6065 = vmatpush.msra.mxu0 %v5512
        %6066 = vmatpush.msra.mxu0 %v5504
        %6067 = vmatpush.msra.mxu0 %v5496
        %6068 = vmatpush.msra.mxu0 %v5488
        %6069 = vmatpush.msra.mxu0 %v5480
        %6070 = vmatpush.msra.mxu0 %v5472
        %6071 = vmatmul.f32.gmra.mxu0 %v5074
        %v6072 = vpop.f32.mrf.mxu0
        %v6073 = vadd.f32 %v6053, %v6072
        %6074 = vdwg.mxu0
        %6075 = vmatpush.msra.mxu0 %v5209
        %6076 = vmatpush.msra.mxu0 %v5201
        %6077 = vmatpush.msra.mxu0 %v5193
        %6078 = vmatpush.msra.mxu0 %v5185
        %6079 = vmatpush.msra.mxu0 %v5177
        %6080 = vmatpush.msra.mxu0 %v5169
        %6081 = vmatpush.msra.mxu0 %v5161
        %6082 = vmatpush.msra.mxu0 %v5153
        %6083 = vmatpush.msra.mxu0 %v5145
        %6084 = vmatpush.msra.mxu0 %v5137
        %6085 = vmatpush.msra.mxu0 %v5129
        %6086 = vmatpush.msra.mxu0 %v5121
        %6087 = vmatpush.msra.mxu0 %v5113
        %6088 = vmatpush.msra.mxu0 %v5105
        %6089 = vmatpush.msra.mxu0 %v5097
        %6090 = vmatpush.msra.mxu0 %v5089
        %6091 = vmatmul.f32.gmra.mxu0 %v5071
        %v6092 = vpop.f32.mrf.mxu0
        %v6093 = vadd.f32 0.0, %v6092
        %6094 = vdwg.mxu0
        %6095 = vmatpush.msra.mxu0 %v5337
        %6096 = vmatpush.msra.mxu0 %v5329
        %6097 = vmatpush.msra.mxu0 %v5321
        %6098 = vmatpush.msra.mxu0 %v5313
        %6099 = vmatpush.msra.mxu0 %v5305
        %6100 = vmatpush.msra.mxu0 %v5297
        %6101 = vmatpush.msra.mxu0 %v5289
        %6102 = vmatpush.msra.mxu0 %v5281
        %6103 = vmatpush.msra.mxu0 %v5273
        %6104 = vmatpush.msra.mxu0 %v5265
        %6105 = vmatpush.msra.mxu0 %v5257
        %6106 = vmatpush.msra.mxu0 %v5249
        %6107 = vmatpush.msra.mxu0 %v5241
        %6108 = vmatpush.msra.mxu0 %v5233
        %6109 = vmatpush.msra.mxu0 %v5225
        %6110 = vmatpush.msra.mxu0 %v5217
        %6111 = vmatmul.f32.gmra.mxu0 %v5072
        %v6112 = vpop.f32.mrf.mxu0
        %v6113 = vadd.f32 %v6093, %v6112
        %6114 = vdwg.mxu0
        %6115 = vmatpush.msra.mxu0 %v5465
        %6116 = vmatpush.msra.mxu0 %v5457
        %6117 = vmatpush.msra.mxu0 %v5449
        %6118 = vmatpush.msra.mxu0 %v5441
        %6119 = vmatpush.msra.mxu0 %v5433
        %6120 = vmatpush.msra.mxu0 %v5425
        %6121 = vmatpush.msra.mxu0 %v5417
        %6122 = vmatpush.msra.mxu0 %v5409
        %6123 = vmatpush.msra.mxu0 %v5401
        %6124 = vmatpush.msra.mxu0 %v5393
        %6125 = vmatpush.msra.mxu0 %v5385
        %6126 = vmatpush.msra.mxu0 %v5377
        %6127 = vmatpush.msra.mxu0 %v5369
        %6128 = vmatpush.msra.mxu0 %v5361
        %6129 = vmatpush.msra.mxu0 %v5353
        %6130 = vmatpush.msra.mxu0 %v5345
        %6131 = vmatmul.f32.gmra.mxu0 %v5073
        %v6132 = vpop.f32.mrf.mxu0
        %v6133 = vadd.f32 %v6113, %v6132
        %6134 = vdwg.mxu0
        %6135 = vmatpush.msra.mxu0 %v5593
        %6136 = vmatpush.msra.mxu0 %v5585
        %6137 = vmatpush.msra.mxu0 %v5577
        %6138 = vmatpush.msra.mxu0 %v5569
        %6139 = vmatpush.msra.mxu0 %v5561
        %6140 = vmatpush.msra.mxu0 %v5553
        %6141 = vmatpush.msra.mxu0 %v5545
        %6142 = vmatpush.msra.mxu0 %v5537
        %6143 = vmatpush.msra.mxu0 %v5529
        %6144 = vmatpush.msra.mxu0 %v5521
        %6145 = vmatpush.msra.mxu0 %v5513
        %6146 = vmatpush.msra.mxu0 %v5505
        %6147 = vmatpush.msra.mxu0 %v5497
        %6148 = vmatpush.msra.mxu0 %v5489
        %6149 = vmatpush.msra.mxu0 %v5481
        %6150 = vmatpush.msra.mxu0 %v5473
        %6151 = vmatmul.f32.gmra.mxu0 %v5074
        %v6152 = vpop.f32.mrf.mxu0
        %v6153 = vadd.f32 %v6133, %v6152
        %6154 = vdwg.mxu0
        %6155 = vmatpush.msra.mxu0 %v5210
        %6156 = vmatpush.msra.mxu0 %v5202
        %6157 = vmatpush.msra.mxu0 %v5194
        %6158 = vmatpush.msra.mxu0 %v5186
        %6159 = vmatpush.msra.mxu0 %v5178
        %6160 = vmatpush.msra.mxu0 %v5170
        %6161 = vmatpush.msra.mxu0 %v5162
        %6162 = vmatpush.msra.mxu0 %v5154
        %6163 = vmatpush.msra.mxu0 %v5146
        %6164 = vmatpush.msra.mxu0 %v5138
        %6165 = vmatpush.msra.mxu0 %v5130
        %6166 = vmatpush.msra.mxu0 %v5122
        %6167 = vmatpush.msra.mxu0 %v5114
        %6168 = vmatpush.msra.mxu0 %v5106
        %6169 = vmatpush.msra.mxu0 %v5098
        %6170 = vmatpush.msra.mxu0 %v5090
        %6171 = vmatmul.f32.gmra.mxu0 %v5071
        %v6172 = vpop.f32.mrf.mxu0
        %v6173 = vadd.f32 0.0, %v6172
        %6174 = vdwg.mxu0
        %6175 = vmatpush.msra.mxu0 %v5338
        %6176 = vmatpush.msra.mxu0 %v5330
        %6177 = vmatpush.msra.mxu0 %v5322
        %6178 = vmatpush.msra.mxu0 %v5314
        %6179 = vmatpush.msra.mxu0 %v5306
        %6180 = vmatpush.msra.mxu0 %v5298
        %6181 = vmatpush.msra.mxu0 %v5290
        %6182 = vmatpush.msra.mxu0 %v5282
        %6183 = vmatpush.msra.mxu0 %v5274
        %6184 = vmatpush.msra.mxu0 %v5266
        %6185 = vmatpush.msra.mxu0 %v5258
        %6186 = vmatpush.msra.mxu0 %v5250
        %6187 = vmatpush.msra.mxu0 %v5242
        %6188 = vmatpush.msra.mxu0 %v5234
        %6189 = vmatpush.msra.mxu0 %v5226
        %6190 = vmatpush.msra.mxu0 %v5218
        %6191 = vmatmul.f32.gmra.mxu0 %v5072
        %v6192 = vpop.f32.mrf.mxu0
        %v6193 = vadd.f32 %v6173, %v6192
        %6194 = vdwg.mxu0
        %6195 = vmatpush.msra.mxu0 %v5466
        %6196 = vmatpush.msra.mxu0 %v5458
        %6197 = vmatpush.msra.mxu0 %v5450
        %6198 = vmatpush.msra.mxu0 %v5442
        %6199 = vmatpush.msra.mxu0 %v5434
        %6200 = vmatpush.msra.mxu0 %v5426
        %6201 = vmatpush.msra.mxu0 %v5418
        %6202 = vmatpush.msra.mxu0 %v5410
        %6203 = vmatpush.msra.mxu0 %v5402
        %6204 = vmatpush.msra.mxu0 %v5394
        %6205 = vmatpush.msra.mxu0 %v5386
        %6206 = vmatpush.msra.mxu0 %v5378
        %6207 = vmatpush.msra.mxu0 %v5370
        %6208 = vmatpush.msra.mxu0 %v5362
        %6209 = vmatpush.msra.mxu0 %v5354
        %6210 = vmatpush.msra.mxu0 %v5346
        %6211 = vmatmul.f32.gmra.mxu0 %v5073
        %v6212 = vpop.f32.mrf.mxu0
        %v6213 = vadd.f32 %v6193, %v6212
        %6214 = vdwg.mxu0
        %6215 = vmatpush.msra.mxu0 %v5594
        %6216 = vmatpush.msra.mxu0 %v5586
        %6217 = vmatpush.msra.mxu0 %v5578
        %6218 = vmatpush.msra.mxu0 %v5570
        %6219 = vmatpush.msra.mxu0 %v5562
        %6220 = vmatpush.msra.mxu0 %v5554
        %6221 = vmatpush.msra.mxu0 %v5546
        %6222 = vmatpush.msra.mxu0 %v5538
        %6223 = vmatpush.msra.mxu0 %v5530
        %6224 = vmatpush.msra.mxu0 %v5522
        %6225 = vmatpush.msra.mxu0 %v5514
        %6226 = vmatpush.msra.mxu0 %v5506
        %6227 = vmatpush.msra.mxu0 %v5498
        %6228 = vmatpush.msra.mxu0 %v5490
        %6229 = vmatpush.msra.mxu0 %v5482
        %6230 = vmatpush.msra.mxu0 %v5474
        %6231 = vmatmul.f32.gmra.mxu0 %v5074
        %v6232 = vpop.f32.mrf.mxu0
        %v6233 = vadd.f32 %v6213, %v6232
        %6234 = vdwg.mxu0
        %v6235 = vadd.f32 %v5075, %v5673
        %v6236 = vadd.f32 %v5076, %v5753
        %v6237 = vadd.f32 %v5077, %v5833
        %v6238 = vadd.f32 %v5078, %v5913
        %v6239 = vadd.f32 %v5079, %v5993
        %v6240 = vadd.f32 %v5080, %v6073
        %v6241 = vadd.f32 %v5081, %v6153
        %v6242 = vadd.f32 %v5082, %v6233
        %6243 = vst [vmem:[#allocation2] sm:$0xff] %v6235
        %6244 = vst [vmem:[#allocation2 + $0x8] sm:$0xff] %v6236
        %6245 = vst [vmem:[#allocation2 + $0x10] sm:$0xff] %v6237
        %6246 = vst [vmem:[#allocation2 + $0x18] sm:$0xff] %v6238
        %6247 = vst [vmem:[#allocation2 + $0x20] sm:$0xff] %v6239
        %6248 = vst [vmem:[#allocation2 + $0x28] sm:$0xff] %v6240
        %6249 = vst [vmem:[#allocation2 + $0x30] sm:$0xff] %v6241
        %6250 = vst [vmem:[#allocation2 + $0x38] sm:$0xff] %v6242
        %p6251 = scmp.eq.s32.totalorder %s27, 3
        // Predicated region
        $region57: #{model_forward.1} parent=39 // pred_check
          %p6252 = pneg %p6251
        $region58: #{model_forward.1} parent=39 // pred_check_branch
          %6254 = sbr.rel (%p6252) target = $region60
        $region59: #{model_forward.1} parent=39 // pred_region
          %v6255 = vld [vmem:[#allocation2] sm:$0xff]
          %v6256 = vld [vmem:[#allocation2 + $0x8] sm:$0xff]
          %v6257 = vld [vmem:[#allocation2 + $0x10] sm:$0xff]
          %v6258 = vld [vmem:[#allocation2 + $0x18] sm:$0xff]
          %v6259 = vld [vmem:[#allocation2 + $0x20] sm:$0xff]
          %v6260 = vld [vmem:[#allocation2 + $0x28] sm:$0xff]
          %v6261 = vld [vmem:[#allocation2 + $0x30] sm:$0xff]
          %v6262 = vld [vmem:[#allocation2 + $0x38] sm:$0xff]
          %6263 = vst [vmem:[%s400] sm:$0xff] %v6255
          %6264 = vst [vmem:[%s400 + $0x8] sm:$0xff] %v6256
          %6265 = vst [vmem:[%s400 + $0x10] sm:$0xff] %v6257
          %6266 = vst [vmem:[%s400 + $0x18] sm:$0xff] %v6258
          %6267 = vst [vmem:[%s400 + $0x20] sm:$0xff] %v6259
          %6268 = vst [vmem:[%s400 + $0x28] sm:$0xff] %v6260
          %6269 = vst [vmem:[%s400 + $0x30] sm:$0xff] %v6261
          %6270 = vst [vmem:[%s400 + $0x38] sm:$0xff] %v6262
        $region60: #{model_forward.1} parent=39 // pred_fallthru
          _
        %p6271 = scmp.lt.s32.totalorder %s26, 1
        %s6272 = scalar_select %p6271, %s26, 1
        %s6273 = smul.addr %s6272, 8
        %s6274 = smul.addr %s6273, 8
        %s6275 = scalar_lea.vmem %s5, %s6274
        // Predicated region
        $region61: #{model_forward.1} parent=39 // pred_check
          %p6276 = pneg %p193
        $region62: #{model_forward.1} parent=39 // pred_check_branch
          %6278 = sbr.rel (%p6276) target = $region64
        $region63: #{model_forward.1} parent=39 // pred_region
          _
        $region64: #{model_forward.1} parent=39 // pred_fallthru
          _
      $region40: #{model_forward.1} parent=5 // pred_fallthru
        _
      %p6279 = scmp.le.s32.totalorder 2, %s17
      // Predicated region
      $region65: #{model_forward.1} parent=5 // pred_check
        %p6280 = pneg %p6279
      $region66: #{model_forward.1} parent=5 // pred_check_branch
        %6282 = sbr.rel (%p6280) target = $region68
      $region67: #{model_forward.1} parent=5 // pred_region
        %s6283 = ssub.s32 %s17, 2
        // Predicated region
        $region69: #{model_forward.1} parent=67 // pred_check
          %p6284 = pneg %p199
        $region70: #{model_forward.1} parent=67 // pred_check_branch
          %6286 = sbr.rel (%p6284) target = $region72
        $region71: #{model_forward.1} parent=67 // pred_region
          %p6287 = scmp.lt.s32.totalorder %s28, 1
          %s6288 = scalar_select %p6287, %s28, 1
          %s6289 = smul.addr %s6288, 8
          %s6290 = smul.addr %s6289, 8
          %s6291 = scalar_lea.vmem %s5, %s6290
        $region72: #{model_forward.1} parent=67 // pred_fallthru
          _
      $region68: #{model_forward.1} parent=5 // pred_fallthru
        _
    $region6: #{model_forward.1} parent=1 // loop_footer
      %s21 = sadd.s32 1, %s17
    $region7: #{model_forward.1} parent=1 // loop_footer_branch
      %16 = sbr.rel target = $region3
    $region8: #{model_forward.1} parent=1 // loop_exit
      _
    %6292 = vsyncpa [#allocation4], 1
    %s6293 = scalar_lea.sflag [#allocation4], 1
    %6294 = vsyncpa %s6293, 1
    %6295 = vsyncpa [#allocation6], 1
    %s6296 = scalar_lea.sflag [#allocation6], 1
    %6297 = vsyncpa %s6296, 1

</llo_original>
